<compile_context>
chip_gen: v5e
topology: v5e:2x2
jax: 0.10.0
libtpu: 0.0.40
codegen_flags: <defaults>
</compile_context>

<pallas_src>
import functools

import jax
import jax.numpy as jnp
from jax import lax
from jax.experimental import pallas as pl
from jax.experimental.pallas import tpu as pltpu


def _round_up(x, m):
    return ((x + m - 1) // m) * m


def _pick_row_tile(m, target=1024):
    """Largest multiple of 128 that divides m and is <= target.

    Falls back to the full per-image spatial extent m (allowed as a block dim
    because it equals the array dim) when m has no 128-aligned divisor.
    """
    best = 0
    t = 128
    while t <= min(target, m):
        if m % t == 0:
            best = t
        t += 128
    return best if best else m


def _pick_batch_block(n, ohw, cin, cpad, hp, wp, ktot,
                      row_target=512, budget_bytes=6 << 20):
    """Smallest divisor of n whose phase-1 block reaches `row_target` matmul
    rows, subject to a per-step VMEM footprint budget (double-buffered x / y
    blocks + lhs scratch + f32 accumulator).  Keeps blocks well inside even
    v5e's 16 MiB default scoped VMEM."""
    best = 1
    for nb in range(1, n + 1):
        if n % nb:
            continue
        rows = nb * ohw
        foot = (2 * nb * hp * wp * cin * 2      # x block, bf16, double-buffered
                + 2 * rows * cpad * 2           # y block, bf16, double-buffered
                + rows * ktot * 2               # lhs scratch, bf16
                + rows * cpad * 4)              # f32 accumulator value
        if foot > budget_bytes:
            break
        best = nb
        if rows >= row_target:
            break
    return best


# -----------------------------------------------------------------------------
# Phase 1: implicit-GEMM convolution (single fused-tap matmul) + per-block
#          centered BN partial statistics.
# -----------------------------------------------------------------------------
def _conv_stats_kernel(x_ref, w_ref, y_ref, sum_ref, ssq_ref, lhs_ref, *,
                       kh, kw, stride, oh, ow, nb, cin):
    # x_ref  : (nb, Hp, Wp, Cin)       bf16, nb spatially padded NHWC images
    # w_ref  : (kh*kw*cin, Cpad)       bf16, resident across the grid
    # y_ref  : (nb, oh*ow, Cpad)       bf16, conv output (pre-BN)
    # sum_ref/ssq_ref : (1, Cpad)      f32, per-block sum / centered sum-of-sq
    # lhs_ref: (nb*oh*ow, kh*kw*cin)   bf16 VMEM scratch (im2col slab)
    m = nb * oh * ow

    # Unfold KHxKW taps into the scratch: one narrow lane-slice store per tap,
    # then a single MXU matmul with contraction depth K = kh*kw*cin.
    for ki in range(kh):
        for kj in range(kw):
            if stride == 1:
                xs = x_ref[:, pl.ds(ki, oh), pl.ds(kj, ow), :]
            else:
                xs = x_ref[:, pl.ds(ki, oh, stride=stride),
                           pl.ds(kj, ow, stride=stride), :]
            t = ki * kw + kj
            lhs_ref[:, t * cin:(t + 1) * cin] = xs.reshape(m, cin)

    acc = jnp.dot(lhs_ref[...], w_ref[...],
                  preferred_element_type=jnp.float32)        # (m, Cpad) f32

    # bf16 intermediate store; statistics from the f32 accumulator.
    y_ref[...] = acc.reshape(nb, oh * ow, acc.shape[-1]).astype(y_ref.dtype)

    s = jnp.sum(acc, axis=0, keepdims=True)                   # (1, Cpad)
    mu = s * (1.0 / m)
    c = acc - mu                                              # centered
    sum_ref[...] = s
    ssq_ref[...] = jnp.sum(c * c, axis=0, keepdims=True)


# -----------------------------------------------------------------------------
# Phase 2: channel-major relayout (identity-selector MXU matmul) + fused BN
#          affine (precomputed scale/shift) + LeakyReLU -> NCHW output.
# -----------------------------------------------------------------------------
def _bn_lrelu_kernel(y_ref, scale_ref, shift_ref, sel_ref, o_ref, *, neg_slope):
    # y_ref    : (1, tm, Cpad)  bf16
    # scale_ref: (Cout, 1)      f32
    # shift_ref: (Cout, 1)      f32
    # sel_ref  : (Cout, Cpad)   bf16 0/1 selector (identity)
    # o_ref    : (1, Cout, tm)  f32  -> lane-dense NCHW block
    # Exact transpose+channel-slice on the MXU (selector entries are 0/1, so
    # the f32-accumulated result is the bf16 y values exactly).
    yt = lax.dot_general(sel_ref[...], y_ref[0],
                         (((1,), (1,)), ((), ())),
                         preferred_element_type=jnp.float32)   # (Cout, tm)
    z = yt * scale_ref[...] + shift_ref[...]
    o_ref[0] = jnp.where(z > 0, z, neg_slope * z).astype(o_ref.dtype)


def bnlrcnn_forward(x_nchw, w, b, gamma, beta, *, stride, padding,
                    eps=1e-5, neg_slope=0.2):
    """x_nchw: (N, Cin, H, W); w: (Cout, Cin, KH, KW) (PyTorch layouts)."""
    # Training-mode BN subtracts the batch mean, which exactly cancels the conv
    # bias, so it is accepted for API parity but never applied.
    # TODO(synk): if this module is ever run with eval-mode running statistics,
    # the bias must be applied before normalization.
    del b

    N, Cin, H, W = x_nchw.shape
    Cout, _, KH, KW = w.shape
    OH = (H + 2 * padding - KH) // stride + 1
    OW = (W + 2 * padding - KW) // stride + 1
    OHW = OH * OW
    M = N * OHW
    Cpad = _round_up(Cout, 128)             # lane-dense channel dimension
    Ktot = KH * KW * Cin
    Hp, Wp = H + 2 * padding, W + 2 * padding

    # ---- layout glue: bf16 NHWC padded input, single bf16 weight slab ----
    x_pad = jnp.pad(
        jnp.transpose(x_nchw, (0, 2, 3, 1)).astype(jnp.bfloat16),
        ((0, 0), (padding, padding), (padding, padding), (0, 0)))
    # (Cout, Cin, KH, KW) -> (KH, KW, Cin, Cout) -> (Ktot, Cpad): tap-major,
    # cin-minor (matches the in-kernel unfold order), lane-dense, bf16.
    w_flat = jnp.transpose(w, (2, 3, 1, 0)).reshape(Ktot, Cout)
    w_flat = jnp.pad(w_flat, ((0, 0), (0, Cpad - Cout))).astype(jnp.bfloat16)

    Nb = _pick_batch_block(N, OHW, Cin, Cpad, Hp, Wp, Ktot)
    nblk = N // Nb
    m_blk = Nb * OHW

    # ---- phase 1: fused-tap convolution + centered partial BN statistics ----
    k1 = functools.partial(_conv_stats_kernel, kh=KH, kw=KW, stride=stride,
                           oh=OH, ow=OW, nb=Nb, cin=Cin)
    flops1 = 2 * M * Ktot * Cpad
    bytes1 = x_pad.size * 2 + w_flat.size * 2 + M * Cpad * 2 + 2 * nblk * Cpad * 4
    y3, psum, pssq = pl.pallas_call(
        k1,
        grid=(nblk,),
        in_specs=[
            pl.BlockSpec((Nb, Hp, Wp, Cin), lambda n: (n, 0, 0, 0)),
            pl.BlockSpec((Ktot, Cpad), lambda n: (0, 0)),
        ],
        out_specs=[
            pl.BlockSpec((Nb, OHW, Cpad), lambda n: (n, 0, 0)),
            pl.BlockSpec((1, Cpad), lambda n: (n, 0)),
            pl.BlockSpec((1, Cpad), lambda n: (n, 0)),
        ],
        out_shape=[
            jax.ShapeDtypeStruct((N, OHW, Cpad), jnp.bfloat16),
            jax.ShapeDtypeStruct((nblk, Cpad), jnp.float32),
            jax.ShapeDtypeStruct((nblk, Cpad), jnp.float32),
        ],
        scratch_shapes=[pltpu.VMEM((m_blk, Ktot), jnp.bfloat16)],
        compiler_params=pltpu.CompilerParams(
            dimension_semantics=("parallel",),
            vmem_limit_bytes=48 * 1024 * 1024),
        cost_estimate=pl.CostEstimate(flops=flops1, transcendentals=0,
                                      bytes_accessed=bytes1),
    )(x_pad, w_flat)

    # ---- tiny glue: combine centered per-block stats (Chan's formula) and
    #      fold BN (biased batch statistics) into one per-channel scale/shift.
    mean = jnp.sum(psum, axis=0) / M                              # (Cpad,)
    mu_b = psum / m_blk                                           # (nblk, Cpad)
    m2 = jnp.sum(pssq, axis=0) + m_blk * jnp.sum((mu_b - mean) ** 2, axis=0)
    var = jnp.maximum(m2 / M, 0.0)                                # (Cpad,)

    scale_c = (gamma.astype(jnp.float32)
               * lax.rsqrt(var[:Cout] + eps)).reshape(Cout, 1)
    shift_c = (beta.astype(jnp.float32)
               - mean[:Cout] * scale_c[:, 0]).reshape(Cout, 1)
    sel = jnp.eye(Cout, Cpad, dtype=jnp.bfloat16)

    # ---- phase 2: relayout to NCHW + BN affine + LeakyReLU, spatial tiles ----
    tm = _pick_row_tile(OHW, target=1024)
    k2 = functools.partial(_bn_lrelu_kernel, neg_slope=neg_slope)
    flops2 = 2 * M * Cpad * Cout + 3 * M * Cout
    bytes2 = M * Cpad * 2 + M * Cout * 4 + sel.size * 2 + 2 * Cout * 4
    out3 = pl.pallas_call(
        k2,
        grid=(N, OHW // tm),
        in_specs=[
            pl.BlockSpec((1, tm, Cpad), lambda n, i: (n, i, 0)),
            pl.BlockSpec((Cout, 1), lambda n, i: (0, 0)),
            pl.BlockSpec((Cout, 1), lambda n, i: (0, 0)),
            pl.BlockSpec((Cout, Cpad), lambda n, i: (0, 0)),
        ],
        out_specs=pl.BlockSpec((1, Cout, tm), lambda n, i: (n, 0, i)),
        out_shape=jax.ShapeDtypeStruct((N, Cout, OHW), jnp.float32),
        compiler_params=pltpu.CompilerParams(
            dimension_semantics=("parallel", "parallel"),
            vmem_limit_bytes=48 * 1024 * 1024),
        cost_estimate=pl.CostEstimate(flops=flops2, transcendentals=0,
                                      bytes_accessed=bytes2),
    )(y3, scale_c, shift_c, sel)

    # Trailing-dim split only (no data movement): (N, Cout, OH*OW) -> NCHW.
    return out3.reshape(N, Cout, OH, OW)


def _reference(x, w, b, gamma, beta, *, stride, padding, eps=1e-5,
               neg_slope=0.2, match_kernel_dtypes=False):
    """Pure-JAX reference mirroring the PyTorch module (training-mode BN).

    With match_kernel_dtypes=True the conv inputs are rounded to bf16 (matching
    the MXU operands) and the bias is skipped (it is mathematically cancelled
    by the batch-mean subtraction; skipping it matches the kernel's rounding
    points).  The conv output is kept in f32 here, so the remaining difference
    vs. the kernel is the kernel's bf16 storage of the conv intermediate.
    """
    xc = x.astype(jnp.float32)
    wc = w.astype(jnp.float32)
    if match_kernel_dtypes:
        xc = xc.astype(jnp.bfloat16).astype(jnp.float32)
        wc = wc.astype(jnp.bfloat16).astype(jnp.float32)
    y = lax.conv_general_dilated(
        xc, wc, window_strides=(stride, stride),
        padding=[(padding, padding), (padding, padding)],
        dimension_numbers=("NCHW", "OIHW", "NCHW"),
        precision=lax.Precision.HIGHEST)
    if not match_kernel_dtypes:
        y = y + b.reshape(1, -1, 1, 1)
    mean = jnp.mean(y, axis=(0, 2, 3), keepdims=True)
    var = jnp.mean((y - mean) ** 2, axis=(0, 2, 3), keepdims=True)
    z = (y - mean) * lax.rsqrt(var + eps)
    z = z * gamma.reshape(1, -1, 1, 1) + beta.reshape(1, -1, 1, 1)
    return jnp.where(z > 0, z, neg_slope * z)


if __name__ == "__main__":
    # Small shapes consistent with BNLRCNN(4, 8, 3, stride=1, padding=1).
    N, Cin, H, W = 2, 4, 16, 16
    Cout, KH, KW = 8, 3, 3
    stride, padding = 1, 1

    key = jax.random.PRNGKey(0)
    kx, kw_ = jax.random.split(key)
    x = jax.random.normal(kx, (N, Cin, H, W), dtype=jnp.float32)
    w = 0.1 * jax.random.normal(kw_, (Cout, Cin, KH, KW), dtype=jnp.float32)
    b = 0.01 * jnp.arange(Cout, dtype=jnp.float32)
    gamma = 1.0 + 0.1 * jnp.arange(Cout, dtype=jnp.float32)
    beta = -0.05 * jnp.arange(Cout, dtype=jnp.float32)

    fwd = jax.jit(functools.partial(bnlrcnn_forward,
                                    stride=stride, padding=padding))
    out = jax.block_until_ready(fwd(x, w, b, gamma, beta))
    assert out.shape == (N, Cout, H, W), out.shape

    # Near-matched check: reference with bf16-rounded conv inputs; tolerance
    # covers the kernel's bf16 storage of the conv intermediate (|dy| <~ ulp)
    # amplified by the BN scale (gamma / batch-std).
    ref_m = _reference(x, w, b, gamma, beta, stride=stride, padding=padding,
                       match_kernel_dtypes=True)
    err = float(jnp.max(jnp.abs(out - ref_m)))
    assert err < 4e-2, f"bf16-matched reference mismatch: {err}"

    # Sanity check vs the full-f32 reference (adds bf16 rounding of x and w).
    ref_f = _reference(x, w, b, gamma, beta, stride=stride, padding=padding)
    err32 = float(jnp.max(jnp.abs(out - ref_f)))
    assert err32 < 1e-1, f"f32 reference mismatch: {err32}"

    print("KERNEL_OK")
</pallas_src>

<mosaic_0001>
module attributes {stable_mosaic.version = 11 : i64} {
  func.func @_bn_lrelu_kernel(%arg0: i32, %arg1: i32, %arg2: memref<1x256x128xbf16, #tpu.memory_space<vmem>>, %arg3: memref<8x1xf32, #tpu.memory_space<vmem>>, %arg4: memref<8x1xf32, #tpu.memory_space<vmem>>, %arg5: memref<8x128xbf16, #tpu.memory_space<vmem>>, %arg6: memref<1x8x256xf32, #tpu.memory_space<vmem>>) attributes {dimension_semantics = [#tpu.dimension_semantics<parallel>, #tpu.dimension_semantics<parallel>], iteration_bounds = array<i64: 2, 1>, scalar_prefetch = 0 : i64, scratch_operands = 0 : i64, tpu.core_type = #tpu.core_type<tc>, window_params = [{transform_indices = @transform_0, window_bounds = array<i64: 1, 256, 128>}, {pipeline_mode = #tpu.pipeline_mode<synchronous>, transform_indices = @transform_1, window_bounds = array<i64: 8, 1>}, {pipeline_mode = #tpu.pipeline_mode<synchronous>, transform_indices = @transform_2, window_bounds = array<i64: 8, 1>}, {pipeline_mode = #tpu.pipeline_mode<synchronous>, transform_indices = @transform_3, window_bounds = array<i64: 8, 128>}, {transform_indices = @transform_4, window_bounds = array<i64: 1, 8, 256>}]} {
    %c0 = arith.constant 0 : index
    %c0_0 = arith.constant 0 : index
    %0 = vector.load %arg5[%c0, %c0_0] : memref<8x128xbf16, #tpu.memory_space<vmem>>, vector<8x128xbf16>
    %c0_1 = arith.constant 0 : index
    %c0_2 = arith.constant 0 : index
    %c0_3 = arith.constant 0 : index
    %1 = vector.load %arg2[%c0_1, %c0_2, %c0_3] : memref<1x256x128xbf16, #tpu.memory_space<vmem>>, vector<1x256x128xbf16>
    %2 = vector.shape_cast %1 : vector<1x256x128xbf16> to vector<256x128xbf16>
    %cst = arith.constant dense<0.000000e+00> : vector<8x256xf32>
    %3 = tpu.matmul %0, %2, %cst {dimension_numbers = #tpu.dot_dimension_numbers<[1], [1], [0], [0], [0, 0, 1, 0], [], []>} : vector<8x128xbf16>, vector<256x128xbf16>, vector<8x256xf32> -> vector<8x256xf32>
    %c0_4 = arith.constant 0 : index
    %c0_5 = arith.constant 0 : index
    %4 = vector.load %arg3[%c0_4, %c0_5] : memref<8x1xf32, #tpu.memory_space<vmem>>, vector<8x1xf32>
    %5 = vector.broadcast %4 : vector<8x1xf32> to vector<8x256xf32>
    %6 = arith.mulf %3, %5 : vector<8x256xf32>
    %c0_6 = arith.constant 0 : index
    %c0_7 = arith.constant 0 : index
    %7 = vector.load %arg4[%c0_6, %c0_7] : memref<8x1xf32, #tpu.memory_space<vmem>>, vector<8x1xf32>
    %8 = vector.broadcast %7 : vector<8x1xf32> to vector<8x256xf32>
    %9 = arith.addf %6, %8 : vector<8x256xf32>
    %cst_8 = arith.constant 0.000000e+00 : f32
    %10 = vector.broadcast %cst_8 : f32 to vector<8x256xf32>
    %11 = arith.cmpf ogt, %9, %10 : vector<8x256xf32>
    %cst_9 = arith.constant 2.000000e-01 : f32
    %12 = vector.broadcast %cst_9 : f32 to vector<8x256xf32>
    %13 = arith.mulf %12, %9 : vector<8x256xf32>
    %14 = arith.select %11, %9, %13 : vector<8x256xi1>, vector<8x256xf32>
    %c0_10 = arith.constant 0 : index
    %c0_11 = arith.constant 0 : index
    %c0_12 = arith.constant 0 : index
    %15 = vector.load %arg6[%c0_10, %c0_11, %c0_12] : memref<1x8x256xf32, #tpu.memory_space<vmem>>, vector<1x8x256xf32>
    %16 = vector.shape_cast %15 : vector<1x8x256xf32> to vector<8x256xf32>
    %17 = vector.shape_cast %14 : vector<8x256xf32> to vector<1x8x256xf32>
    tpu.vector_store %arg6[%c0_10, %c0_11, %c0_12], %17 {strides = array<i32>} : memref<1x8x256xf32, #tpu.memory_space<vmem>>, vector<1x8x256xf32>,
    return
  }
  func.func @transform_0(%arg0: i32, %arg1: i32) -> (i32, i32, i32) {
    %c0_i32 = arith.constant 0 : i32
    %c0_i32_0 = arith.constant 0 : i32
    return %arg0, %arg1, %c0_i32 : i32, i32, i32
  }
  func.func @transform_1(%arg0: i32, %arg1: i32) -> (i32, i32) {
    %c0_i32 = arith.constant 0 : i32
    %c0_i32_0 = arith.constant 0 : i32
    %c0_i32_1 = arith.constant 0 : i32
    return %c0_i32, %c0_i32_0 : i32, i32
  }
  func.func @transform_2(%arg0: i32, %arg1: i32) -> (i32, i32) {
    %c0_i32 = arith.constant 0 : i32
    %c0_i32_0 = arith.constant 0 : i32
    %c0_i32_1 = arith.constant 0 : i32
    return %c0_i32, %c0_i32_0 : i32, i32
  }
  func.func @transform_3(%arg0: i32, %arg1: i32) -> (i32, i32) {
    %c0_i32 = arith.constant 0 : i32
    %c0_i32_0 = arith.constant 0 : i32
    %c0_i32_1 = arith.constant 0 : i32
    return %c0_i32, %c0_i32_0 : i32, i32
  }
  func.func @transform_4(%arg0: i32, %arg1: i32) -> (i32, i32, i32) {
    %c0_i32 = arith.constant 0 : i32
    %c0_i32_0 = arith.constant 0 : i32
    return %arg0, %c0_i32, %arg1 : i32, i32, i32
  }
}

module attributes {stable_mosaic.version = 11 : i64} {
  func.func @_conv_stats_kernel(%arg0: i32, %arg1: memref<2x18x18x4xbf16, #tpu.memory_space<vmem>>, %arg2: memref<36x128xbf16, #tpu.memory_space<vmem>>, %arg3: memref<2x256x128xbf16, #tpu.memory_space<vmem>>, %arg4: memref<1x128xf32, #tpu.memory_space<vmem>>, %arg5: memref<1x128xf32, #tpu.memory_space<vmem>>, %arg6: memref<512x36xbf16, #tpu.memory_space<vmem>>) attributes {dimension_semantics = [#tpu.dimension_semantics<parallel>], iteration_bounds = array<i64: 1>, scalar_prefetch = 0 : i64, scratch_operands = 1 : i64, tpu.core_type = #tpu.core_type<tc>, window_params = [{transform_indices = @transform_0, window_bounds = array<i64: 2, 18, 18, 4>}, {pipeline_mode = #tpu.pipeline_mode<synchronous>, transform_indices = @transform_1, window_bounds = array<i64: 36, 128>}, {transform_indices = @transform_2, window_bounds = array<i64: 2, 256, 128>}, {transform_indices = @transform_3, window_bounds = array<i64: 1, 128>}, {transform_indices = @transform_4, window_bounds = array<i64: 1, 128>}]} {
    %c0 = arith.constant 0 : index
    %c0_0 = arith.constant 0 : index
    %c0_1 = arith.constant 0 : index
    %c0_2 = arith.constant 0 : index
    %0 = vector.load %arg1[%c0, %c0_0, %c0_1, %c0_2] : memref<2x18x18x4xbf16, #tpu.memory_space<vmem>>, vector<2x16x16x4xbf16>
    %1 = vector.shape_cast %0 : vector<2x16x16x4xbf16> to vector<512x4xbf16>
    %c0_3 = arith.constant 0 : index
    %c0_4 = arith.constant 0 : index
    %2 = vector.load %arg6[%c0_3, %c0_4] : memref<512x36xbf16, #tpu.memory_space<vmem>>, vector<512x4xbf16>
    tpu.vector_store %arg6[%c0_3, %c0_4], %1 {strides = array<i32>} : memref<512x36xbf16, #tpu.memory_space<vmem>>, vector<512x4xbf16>,
    %c0_5 = arith.constant 0 : index
    %c0_6 = arith.constant 0 : index
    %c1 = arith.constant 1 : index
    %c0_7 = arith.constant 0 : index
    %3 = vector.load %arg1[%c0_5, %c0_6, %c1, %c0_7] : memref<2x18x18x4xbf16, #tpu.memory_space<vmem>>, vector<2x16x16x4xbf16>
    %4 = vector.shape_cast %3 : vector<2x16x16x4xbf16> to vector<512x4xbf16>
    %c0_8 = arith.constant 0 : index
    %c4 = arith.constant 4 : index
    %5 = vector.load %arg6[%c0_8, %c4] : memref<512x36xbf16, #tpu.memory_space<vmem>>, vector<512x4xbf16>
    tpu.vector_store %arg6[%c0_8, %c4], %4 {strides = array<i32>} : memref<512x36xbf16, #tpu.memory_space<vmem>>, vector<512x4xbf16>,
    %c0_9 = arith.constant 0 : index
    %c0_10 = arith.constant 0 : index
    %c2 = arith.constant 2 : index
    %c0_11 = arith.constant 0 : index
    %6 = vector.load %arg1[%c0_9, %c0_10, %c2, %c0_11] : memref<2x18x18x4xbf16, #tpu.memory_space<vmem>>, vector<2x16x16x4xbf16>
    %7 = vector.shape_cast %6 : vector<2x16x16x4xbf16> to vector<512x4xbf16>
    %c0_12 = arith.constant 0 : index
    %c8 = arith.constant 8 : index
    %8 = vector.load %arg6[%c0_12, %c8] : memref<512x36xbf16, #tpu.memory_space<vmem>>, vector<512x4xbf16>
    tpu.vector_store %arg6[%c0_12, %c8], %7 {strides = array<i32>} : memref<512x36xbf16, #tpu.memory_space<vmem>>, vector<512x4xbf16>,
    %c0_13 = arith.constant 0 : index
    %c1_14 = arith.constant 1 : index
    %c0_15 = arith.constant 0 : index
    %c0_16 = arith.constant 0 : index
    %9 = vector.load %arg1[%c0_13, %c1_14, %c0_15, %c0_16] : memref<2x18x18x4xbf16, #tpu.memory_space<vmem>>, vector<2x16x16x4xbf16>
    %10 = vector.shape_cast %9 : vector<2x16x16x4xbf16> to vector<512x4xbf16>
    %c0_17 = arith.constant 0 : index
    %c12 = arith.constant 12 : index
    %11 = vector.load %arg6[%c0_17, %c12] : memref<512x36xbf16, #tpu.memory_space<vmem>>, vector<512x4xbf16>
    tpu.vector_store %arg6[%c0_17, %c12], %10 {strides = array<i32>} : memref<512x36xbf16, #tpu.memory_space<vmem>>, vector<512x4xbf16>,
    %c0_18 = arith.constant 0 : index
    %c1_19 = arith.constant 1 : index
    %c1_20 = arith.constant 1 : index
    %c0_21 = arith.constant 0 : index
    %12 = vector.load %arg1[%c0_18, %c1_19, %c1_20, %c0_21] : memref<2x18x18x4xbf16, #tpu.memory_space<vmem>>, vector<2x16x16x4xbf16>
    %13 = vector.shape_cast %12 : vector<2x16x16x4xbf16> to vector<512x4xbf16>
    %c0_22 = arith.constant 0 : index
    %c16 = arith.constant 16 : index
    %14 = vector.load %arg6[%c0_22, %c16] : memref<512x36xbf16, #tpu.memory_space<vmem>>, vector<512x4xbf16>
    tpu.vector_store %arg6[%c0_22, %c16], %13 {strides = array<i32>} : memref<512x36xbf16, #tpu.memory_space<vmem>>, vector<512x4xbf16>,
    %c0_23 = arith.constant 0 : index
    %c1_24 = arith.constant 1 : index
    %c2_25 = arith.constant 2 : index
    %c0_26 = arith.constant 0 : index
    %15 = vector.load %arg1[%c0_23, %c1_24, %c2_25, %c0_26] : memref<2x18x18x4xbf16, #tpu.memory_space<vmem>>, vector<2x16x16x4xbf16>
    %16 = vector.shape_cast %15 : vector<2x16x16x4xbf16> to vector<512x4xbf16>
    %c0_27 = arith.constant 0 : index
    %c20 = arith.constant 20 : index
    %17 = vector.load %arg6[%c0_27, %c20] : memref<512x36xbf16, #tpu.memory_space<vmem>>, vector<512x4xbf16>
    tpu.vector_store %arg6[%c0_27, %c20], %16 {strides = array<i32>} : memref<512x36xbf16, #tpu.memory_space<vmem>>, vector<512x4xbf16>,
    %c0_28 = arith.constant 0 : index
    %c2_29 = arith.constant 2 : index
    %c0_30 = arith.constant 0 : index
    %c0_31 = arith.constant 0 : index
    %18 = vector.load %arg1[%c0_28, %c2_29, %c0_30, %c0_31] : memref<2x18x18x4xbf16, #tpu.memory_space<vmem>>, vector<2x16x16x4xbf16>
    %19 = vector.shape_cast %18 : vector<2x16x16x4xbf16> to vector<512x4xbf16>
    %c0_32 = arith.constant 0 : index
    %c24 = arith.constant 24 : index
    %20 = vector.load %arg6[%c0_32, %c24] : memref<512x36xbf16, #tpu.memory_space<vmem>>, vector<512x4xbf16>
    tpu.vector_store %arg6[%c0_32, %c24], %19 {strides = array<i32>} : memref<512x36xbf16, #tpu.memory_space<vmem>>, vector<512x4xbf16>,
    %c0_33 = arith.constant 0 : index
    %c2_34 = arith.constant 2 : index
    %c1_35 = arith.constant 1 : index
    %c0_36 = arith.constant 0 : index
    %21 = vector.load %arg1[%c0_33, %c2_34, %c1_35, %c0_36] : memref<2x18x18x4xbf16, #tpu.memory_space<vmem>>, vector<2x16x16x4xbf16>
    %22 = vector.shape_cast %21 : vector<2x16x16x4xbf16> to vector<512x4xbf16>
    %c0_37 = arith.constant 0 : index
    %c28 = arith.constant 28 : index
    %23 = vector.load %arg6[%c0_37, %c28] : memref<512x36xbf16, #tpu.memory_space<vmem>>, vector<512x4xbf16>
    tpu.vector_store %arg6[%c0_37, %c28], %22 {strides = array<i32>} : memref<512x36xbf16, #tpu.memory_space<vmem>>, vector<512x4xbf16>,
    %c0_38 = arith.constant 0 : index
    %c2_39 = arith.constant 2 : index
    %c2_40 = arith.constant 2 : index
    %c0_41 = arith.constant 0 : index
    %24 = vector.load %arg1[%c0_38, %c2_39, %c2_40, %c0_41] : memref<2x18x18x4xbf16, #tpu.memory_space<vmem>>, vector<2x16x16x4xbf16>
    %25 = vector.shape_cast %24 : vector<2x16x16x4xbf16> to vector<512x4xbf16>
    %c0_42 = arith.constant 0 : index
    %c32 = arith.constant 32 : index
    %26 = vector.load %arg6[%c0_42, %c32] : memref<512x36xbf16, #tpu.memory_space<vmem>>, vector<512x4xbf16>
    tpu.vector_store %arg6[%c0_42, %c32], %25 {strides = array<i32>} : memref<512x36xbf16, #tpu.memory_space<vmem>>, vector<512x4xbf16>,
    %c0_43 = arith.constant 0 : index
    %c0_44 = arith.constant 0 : index
    %27 = vector.load %arg6[%c0_43, %c0_44] : memref<512x36xbf16, #tpu.memory_space<vmem>>, vector<512x36xbf16>
    %c0_45 = arith.constant 0 : index
    %c0_46 = arith.constant 0 : index
    %28 = vector.load %arg2[%c0_45, %c0_46] : memref<36x128xbf16, #tpu.memory_space<vmem>>, vector<36x128xbf16>
    %cst = arith.constant dense<0.000000e+00> : vector<512x128xf32>
    %29 = tpu.matmul %27, %28, %cst {dimension_numbers = #tpu.dot_dimension_numbers<[1], [0], [0], [1], [0, 0, 1, 1], [], []>} : vector<512x36xbf16>, vector<36x128xbf16>, vector<512x128xf32> -> vector<512x128xf32>
    %30 = vector.shape_cast %29 : vector<512x128xf32> to vector<2x256x128xf32>
    %31 = arith.truncf %30 : vector<2x256x128xf32> to vector<2x256x128xbf16>
    %c0_47 = arith.constant 0 : index
    %c0_48 = arith.constant 0 : index
    %c0_49 = arith.constant 0 : index
    %32 = vector.load %arg3[%c0_47, %c0_48, %c0_49] : memref<2x256x128xbf16, #tpu.memory_space<vmem>>, vector<2x256x128xbf16>
    tpu.vector_store %arg3[%c0_47, %c0_48, %c0_49], %31 {strides = array<i32>} : memref<2x256x128xbf16, #tpu.memory_space<vmem>>, vector<2x256x128xbf16>,
    %cst_50 = arith.constant dense<0.000000e+00> : vector<128xf32>
    %33 = vector.multi_reduction <add>, %29, %cst_50 [0] : vector<512x128xf32> to vector<128xf32>
    %34 = vector.shape_cast %33 : vector<128xf32> to vector<1x128xf32>
    %cst_51 = arith.constant 0.001953125 : f32
    %35 = vector.broadcast %cst_51 : f32 to vector<1x128xf32>
    %36 = arith.mulf %34, %35 : vector<1x128xf32>
    %37 = vector.broadcast %36 : vector<1x128xf32> to vector<512x128xf32>
    %38 = arith.subf %29, %37 : vector<512x128xf32>
    %c0_52 = arith.constant 0 : index
    %c0_53 = arith.constant 0 : index
    %39 = vector.load %arg4[%c0_52, %c0_53] : memref<1x128xf32, #tpu.memory_space<vmem>>, vector<1x128xf32>
    tpu.vector_store %arg4[%c0_52, %c0_53], %34 {strides = array<i32>} : memref<1x128xf32, #tpu.memory_space<vmem>>, vector<1x128xf32>,
    %40 = arith.mulf %38, %38 : vector<512x128xf32>
    %cst_54 = arith.constant dense<0.000000e+00> : vector<128xf32>
    %41 = vector.multi_reduction <add>, %40, %cst_54 [0] : vector<512x128xf32> to vector<128xf32>
    %42 = vector.shape_cast %41 : vector<128xf32> to vector<1x128xf32>
    %c0_55 = arith.constant 0 : index
    %c0_56 = arith.constant 0 : index
    %43 = vector.load %arg5[%c0_55, %c0_56] : memref<1x128xf32, #tpu.memory_space<vmem>>, vector<1x128xf32>
    tpu.vector_store %arg5[%c0_55, %c0_56], %42 {strides = array<i32>} : memref<1x128xf32, #tpu.memory_space<vmem>>, vector<1x128xf32>,
    return
  }
  func.func @transform_0(%arg0: i32) -> (i32, i32, i32, i32) {
    %c0_i32 = arith.constant 0 : i32
    %c0_i32_0 = arith.constant 0 : i32
    %c0_i32_1 = arith.constant 0 : i32
    %c0_i32_2 = arith.constant 0 : i32
    return %arg0, %c0_i32, %c0_i32_0, %c0_i32_1 : i32, i32, i32, i32
  }
  func.func @transform_1(%arg0: i32) -> (i32, i32) {
    %c0_i32 = arith.constant 0 : i32
    %c0_i32_0 = arith.constant 0 : i32
    %c0_i32_1 = arith.constant 0 : i32
    return %c0_i32, %c0_i32_0 : i32, i32
  }
  func.func @transform_2(%arg0: i32) -> (i32, i32, i32) {
    %c0_i32 = arith.constant 0 : i32
    %c0_i32_0 = arith.constant 0 : i32
    %c0_i32_1 = arith.constant 0 : i32
    return %arg0, %c0_i32, %c0_i32_0 : i32, i32, i32
  }
  func.func @transform_3(%arg0: i32) -> (i32, i32) {
    %c0_i32 = arith.constant 0 : i32
    %c0_i32_0 = arith.constant 0 : i32
    return %arg0, %c0_i32 : i32, i32
  }
  func.func @transform_4(%arg0: i32) -> (i32, i32) {
    %c0_i32 = arith.constant 0 : i32
    %c0_i32_0 = arith.constant 0 : i32
    return %arg0, %c0_i32 : i32, i32
  }
}

</mosaic_0001>

<llo_original>
// kernel: bnlrcnn_forward.3
$region0: #{bnlrcnn_forward.3}
  #allocation0 [shape = 'u32[]', space=smem, size = 0x4, offset = 0x4, fixed_abs, tag = 'smem constant byte address 0x4 - core index']
  #allocation1 [shape = 'u32[72,128]{1,0:T(1,128)}', space=vmem, size = 0x9000, scoped, tag = 'internal scratch']
  %s0 = inlined_call_operand.vmem [shape: bf16[2,256,128], index: 0, kind: input, shape index: {}]
  %s1 = inlined_call_operand.vmem [shape: f32[8,1], index: 1, kind: input, shape index: {}]
  %s2 = inlined_call_operand.vmem [shape: f32[8,1], index: 2, kind: input, shape index: {}]
  %s3 = inlined_call_operand.vmem [shape: bf16[8,128], index: 3, kind: input, shape index: {}]
  %s4 = inlined_call_operand.vmem [shape: f32[2,8,256], index: 4, kind: output, shape index: {}]
  %s5 = sld [smem:[#allocation0]]
  $region49: #{bnlrcnn_forward.3} parent=0
    _
  %s7 = ssub.s32 1, %s5
  %s8 = scalar_select 0, %s7, %s5
  loop: start=0, step=1, limit=4
  $region2: #{bnlrcnn_forward.3} parent=0 // loop_pre_header
    _
  $region3: #{bnlrcnn_forward.3} parent=0 // loop_header
    %s10 = sphi 0, %s14
    %p11 = scmp.ge.s32.totalorder %s10, 4
    %s17 = sphi 0, %s29
    %s18 = sphi 0, %s25
    %s19 = sphi 0, %s17
    %s20 = sphi 0, %s18
    %s21 = sphi 0, %s19
    %s22 = sphi 0, %s20
    %s34 = sphi 0, %s36
    %s37 = sphi 0, %s34
    %s38 = sphi 0, %s37
    %s54 = sphi 0, %s38
    %s58 = sphi 0, %s58
    %s60 = sphi 0, %s58
    %s61 = sphi 0, %s60
    %s75 = sphi 0, %s61
    %s79 = sphi 0, %s79
    %s81 = sphi 0, %s79
    %s82 = sphi 0, %s81
    %s96 = sphi 0, %s82
    %s100 = sphi 0, %s100
    %s102 = sphi 0, %s100
    %s103 = sphi 0, %s102
    %s117 = sphi 0, %s103
    %s125 = sphi 0, %s127
    %s128 = sphi 0, %s125
    %s129 = sphi 0, %s128
    %s145 = sphi 0, %s129
  $region4: #{bnlrcnn_forward.3} parent=0 // loop_header_branch
    %13 = sbr.rel (%p11) target = $region8
  $region5: #{bnlrcnn_forward.3} parent=0 // loop_body
    %s15 = ssub.s32 %s10, 1
    %s16 = ssub.s32 %s10, 2
    %s23 = sadd.s32 1, %s18
    %p24 = scmp.ge.s32.totalorder %s23, 1
    %s25 = scalar_select %p24, 0, %s23
    %s26 = sadd.s32 1, %s17
    %s27 = scalar_select %p24, %s26, %s17
    %p28 = scmp.ge.s32.totalorder %s27, 2
    %s29 = scalar_select %p28, 0, %s27
    %s30 = ssub.s32 %s17, %s29
    %s31 = ssub.s32 %s18, %s25
    %s32 = sor.u32 %s30, %s31
    %p33 = scmp.eq.s32.totalorder %s32, 0
    %s35 = sadd.s32 %s34, 1
    %s36 = scalar_select %p33, %s34, %s35
    %p39 = pneg %p33
    %p40 = scmp.eq.s32.totalorder %s10, 1
    %p41 = por %p39, %p40
    %p42 = scmp.ne.s32.totalorder %s34, %s37
    %p43 = scmp.eq.s32.totalorder %s10, 0
    %p44 = por %p42, %p43
    %p45 = scmp.ne.s32.totalorder %s34, %s37
    %p46 = scmp.eq.s32.totalorder %s15, 1
    %p47 = por %p45, %p46
    %p48 = scmp.ne.s32.totalorder %s37, %s38
    %p49 = scmp.eq.s32.totalorder %s15, 0
    %p50 = por %p48, %p49
    %p51 = scmp.ne.s32.totalorder %s37, %s38
    %p52 = scmp.eq.s32.totalorder %s16, 1
    %p53 = por %p51, %p52
    %p55 = scmp.ne.s32.totalorder %s38, %s54
    %p56 = scmp.eq.s32.totalorder %s16, 0
    %p57 = por %p55, %p56
    %s59 = sadd.s32 %s58, 1
    %p62 = scmp.eq.s32.totalorder %s10, 1
    %p63 = scmp.ne.s32.totalorder %s58, %s60
    %p64 = scmp.eq.s32.totalorder %s10, 0
    %p65 = por %p63, %p64
    %p66 = scmp.ne.s32.totalorder %s58, %s60
    %p67 = scmp.eq.s32.totalorder %s15, 1
    %p68 = por %p66, %p67
    %p69 = scmp.ne.s32.totalorder %s60, %s61
    %p70 = scmp.eq.s32.totalorder %s15, 0
    %p71 = por %p69, %p70
    %p72 = scmp.ne.s32.totalorder %s60, %s61
    %p73 = scmp.eq.s32.totalorder %s16, 1
    %p74 = por %p72, %p73
    %p76 = scmp.ne.s32.totalorder %s61, %s75
    %p77 = scmp.eq.s32.totalorder %s16, 0
    %p78 = por %p76, %p77
    %s80 = sadd.s32 %s79, 1
    %p83 = scmp.eq.s32.totalorder %s10, 1
    %p84 = scmp.ne.s32.totalorder %s79, %s81
    %p85 = scmp.eq.s32.totalorder %s10, 0
    %p86 = por %p84, %p85
    %p87 = scmp.ne.s32.totalorder %s79, %s81
    %p88 = scmp.eq.s32.totalorder %s15, 1
    %p89 = por %p87, %p88
    %p90 = scmp.ne.s32.totalorder %s81, %s82
    %p91 = scmp.eq.s32.totalorder %s15, 0
    %p92 = por %p90, %p91
    %p93 = scmp.ne.s32.totalorder %s81, %s82
    %p94 = scmp.eq.s32.totalorder %s16, 1
    %p95 = por %p93, %p94
    %p97 = scmp.ne.s32.totalorder %s82, %s96
    %p98 = scmp.eq.s32.totalorder %s16, 0
    %p99 = por %p97, %p98
    %s101 = sadd.s32 %s100, 1
    %p104 = scmp.eq.s32.totalorder %s10, 1
    %p105 = scmp.ne.s32.totalorder %s100, %s102
    %p106 = scmp.eq.s32.totalorder %s10, 0
    %p107 = por %p105, %p106
    %p108 = scmp.ne.s32.totalorder %s100, %s102
    %p109 = scmp.eq.s32.totalorder %s15, 1
    %p110 = por %p108, %p109
    %p111 = scmp.ne.s32.totalorder %s102, %s103
    %p112 = scmp.eq.s32.totalorder %s15, 0
    %p113 = por %p111, %p112
    %p114 = scmp.ne.s32.totalorder %s102, %s103
    %p115 = scmp.eq.s32.totalorder %s16, 1
    %p116 = por %p114, %p115
    %p118 = scmp.ne.s32.totalorder %s103, %s117
    %p119 = scmp.eq.s32.totalorder %s16, 0
    %p120 = por %p118, %p119
    %s121 = ssub.s32 %s17, %s29
    %s122 = ssub.s32 %s18, %s25
    %s123 = sor.u32 %s121, %s122
    %p124 = scmp.eq.s32.totalorder %s123, 0
    %s126 = sadd.s32 %s125, 1
    %s127 = scalar_select %p124, %s125, %s126
    %p130 = pneg %p124
    %p131 = scmp.eq.s32.totalorder %s10, 1
    %p132 = por %p130, %p131
    %p133 = scmp.ne.s32.totalorder %s125, %s128
    %p134 = scmp.eq.s32.totalorder %s10, 0
    %p135 = por %p133, %p134
    %p136 = scmp.ne.s32.totalorder %s125, %s128
    %p137 = scmp.eq.s32.totalorder %s15, 1
    %p138 = por %p136, %p137
    %p139 = scmp.ne.s32.totalorder %s128, %s129
    %p140 = scmp.eq.s32.totalorder %s15, 0
    %p141 = por %p139, %p140
    %p142 = scmp.ne.s32.totalorder %s128, %s129
    %p143 = scmp.eq.s32.totalorder %s16, 1
    %p144 = por %p142, %p143
    %p146 = scmp.ne.s32.totalorder %s129, %s145
    %p147 = scmp.eq.s32.totalorder %s16, 0
    %p148 = por %p146, %p147
    %p149 = scmp.le.s32.totalorder 1, %s10
    %p150 = scmp.lt.s32.totalorder %s10, 3
    %p151 = pnand %p149, %p150
    %p152 = pneg %p151
    // Predicated region
    $region9: #{bnlrcnn_forward.3} parent=5 // pred_check
      _
    $region10: #{bnlrcnn_forward.3} parent=5 // pred_check_branch
      %154 = sbr.rel (%p151) target = $region12
    $region11: #{bnlrcnn_forward.3} parent=5 // pred_region
      %s155 = ssub.s32 %s10, 1
      // Predicated region
      $region13: #{bnlrcnn_forward.3} parent=11 // pred_check
        %p156 = pneg %p71
      $region14: #{bnlrcnn_forward.3} parent=11 // pred_check_branch
        %158 = sbr.rel (%p156) target = $region16
      $region15: #{bnlrcnn_forward.3} parent=11 // pred_region
        _
      $region16: #{bnlrcnn_forward.3} parent=11 // pred_fallthru
        _
      // Predicated region
      $region17: #{bnlrcnn_forward.3} parent=11 // pred_check
        %p159 = pneg %p92
      $region18: #{bnlrcnn_forward.3} parent=11 // pred_check_branch
        %161 = sbr.rel (%p159) target = $region20
      $region19: #{bnlrcnn_forward.3} parent=11 // pred_region
        _
      $region20: #{bnlrcnn_forward.3} parent=11 // pred_fallthru
        _
      // Predicated region
      $region21: #{bnlrcnn_forward.3} parent=11 // pred_check
        %p162 = pneg %p113
      $region22: #{bnlrcnn_forward.3} parent=11 // pred_check_branch
        %164 = sbr.rel (%p162) target = $region24
      $region23: #{bnlrcnn_forward.3} parent=11 // pred_region
        _
      $region24: #{bnlrcnn_forward.3} parent=11 // pred_fallthru
        _
    $region12: #{bnlrcnn_forward.3} parent=5 // pred_fallthru
      _
    %p165 = scmp.lt.s32.totalorder %s10, 2
    // Predicated region
    $region25: #{bnlrcnn_forward.3} parent=5 // pred_check
      %p166 = pneg %p165
    $region26: #{bnlrcnn_forward.3} parent=5 // pred_check_branch
      %168 = sbr.rel (%p166) target = $region28
    $region27: #{bnlrcnn_forward.3} parent=5 // pred_region
      // Predicated region
      $region29: #{bnlrcnn_forward.3} parent=27 // pred_check
        %p169 = pneg %p44
      $region30: #{bnlrcnn_forward.3} parent=27 // pred_check_branch
        %171 = sbr.rel (%p169) target = $region32
      $region31: #{bnlrcnn_forward.3} parent=27 // pred_region
        %s172 = smul.u32 32, %s18
        %p173 = scmp.lt.s32.totalorder %s17, 1
        %s174 = scalar_select %p173, %s17, 1
        %p175 = scmp.lt.s32.totalorder %s172, 31
        %s176 = scalar_select %p175, %s172, 31
        %s177 = smul.addr %s174, 32
        %s178 = sadd.s32 %s176, %s177
        %s179 = smul.addr %s178, 4
        %s180 = scalar_lea.vmem %s0, %s179
        %s181 = smul.u32 32, %s18
      $region32: #{bnlrcnn_forward.3} parent=27 // pred_fallthru
        _
    $region28: #{bnlrcnn_forward.3} parent=5 // pred_fallthru
      _
    %p182 = scmp.le.s32.totalorder 1, %s10
    %p183 = scmp.lt.s32.totalorder %s10, 3
    %p184 = pnand %p182, %p183
    %p185 = pneg %p184
    // Predicated region
    $region33: #{bnlrcnn_forward.3} parent=5 // pred_check
      _
    $region34: #{bnlrcnn_forward.3} parent=5 // pred_check_branch
      %187 = sbr.rel (%p184) target = $region36
    $region35: #{bnlrcnn_forward.3} parent=5 // pred_region
      %s188 = ssub.s32 %s10, 1
      %s189 = smul.u32 32, %s20
      %p190 = scmp.lt.s32.totalorder %s19, 1
      %s191 = scalar_select %p190, %s19, 1
      %p192 = scmp.lt.s32.totalorder %s189, 31
      %s193 = scalar_select %p192, %s189, 31
      %s194 = smul.addr %s191, 32
      %s195 = sadd.s32 %s193, %s194
      %s196 = smul.addr %s195, 4
      %s197 = scalar_lea.vmem %s0, %s196
      %p198 = pneg %p50
      %p199 = pneg %p47
      %p200 = pneg %p71
      %p201 = pneg %p68
      %p202 = pneg %p92
      %p203 = pneg %p89
      %p204 = pneg %p113
      %p205 = pneg %p110
      %p206 = pneg %p141
      %p207 = pneg %p138
      %s208 = smul.u32 2, %s20
      %p209 = scmp.lt.s32.totalorder %s19, 1
      %s210 = scalar_select %p209, %s19, 1
      %p211 = scmp.lt.s32.totalorder %s208, 1
      %s212 = scalar_select %p211, %s208, 1
      %s213 = smul.addr %s210, 2
      %s214 = sadd.s32 %s212, %s213
      %s215 = smul.addr %s214, 8
      %s216 = scalar_lea.vmem %s4, %s215
      %s217 = smul.u32 32, %s20
      %p218 = scmp.lt.s32.totalorder %s19, 1
      %s219 = scalar_select %p218, %s19, 1
      %p220 = scmp.lt.s32.totalorder %s217, 31
      %s221 = scalar_select %p220, %s217, 31
      %s222 = smul.addr %s219, 32
      %s223 = sadd.s32 %s221, %s222
      %s224 = smul.addr %s223, 4
      %s225 = scalar_lea.vmem %s0, %s224
      %s226 = smul.u32 32, %s20
      %s227 = smul.u32 2, %s20
      %p228 = scmp.lt.s32.totalorder %s19, 1
      %s229 = scalar_select %p228, %s19, 1
      %p230 = scmp.lt.s32.totalorder %s227, 1
      %s231 = scalar_select %p230, %s227, 1
      %s232 = smul.addr %s229, 2
      %s233 = sadd.s32 %s231, %s232
      %s234 = smul.addr %s233, 8
      %s235 = scalar_lea.vmem %s4, %s234
      %s236 = smul.u32 2, %s20
      %v237 = vld [vmem:[%s3] sm:$0xf]
      %v238 = vld [vmem:[%s225] sm:$0xf]
      %v239 = vld [vmem:[%s225 + $0x4] sm:$0xf]
      %v240 = vld [vmem:[%s225 + $0x8] sm:$0xf]
      %v241 = vld [vmem:[%s225 + $0xc] sm:$0xf]
      %v242 = vld [vmem:[%s225 + $0x10] sm:$0xf]
      %v243 = vld [vmem:[%s225 + $0x14] sm:$0xf]
      %v244 = vld [vmem:[%s225 + $0x18] sm:$0xf]
      %v245 = vld [vmem:[%s225 + $0x1c] sm:$0xf]
      %v246 = vld [vmem:[%s225 + $0x20] sm:$0xf]
      %v247 = vld [vmem:[%s225 + $0x24] sm:$0xf]
      %v248 = vld [vmem:[%s225 + $0x28] sm:$0xf]
      %v249 = vld [vmem:[%s225 + $0x2c] sm:$0xf]
      %v250 = vld [vmem:[%s225 + $0x30] sm:$0xf]
      %v251 = vld [vmem:[%s225 + $0x34] sm:$0xf]
      %v252 = vld [vmem:[%s225 + $0x38] sm:$0xf]
      %v253 = vld [vmem:[%s225 + $0x3c] sm:$0xf]
      %v254 = vld [vmem:[%s225 + $0x40] sm:$0xf]
      %v255 = vld [vmem:[%s225 + $0x44] sm:$0xf]
      %v256 = vld [vmem:[%s225 + $0x48] sm:$0xf]
      %v257 = vld [vmem:[%s225 + $0x4c] sm:$0xf]
      %v258 = vld [vmem:[%s225 + $0x50] sm:$0xf]
      %v259 = vld [vmem:[%s225 + $0x54] sm:$0xf]
      %v260 = vld [vmem:[%s225 + $0x58] sm:$0xf]
      %v261 = vld [vmem:[%s225 + $0x5c] sm:$0xf]
      %v262 = vld [vmem:[%s225 + $0x60] sm:$0xf]
      %v263 = vld [vmem:[%s225 + $0x64] sm:$0xf]
      %v264 = vld [vmem:[%s225 + $0x68] sm:$0xf]
      %v265 = vld [vmem:[%s225 + $0x6c] sm:$0xf]
      %v266 = vld [vmem:[%s225 + $0x70] sm:$0xf]
      %v267 = vld [vmem:[%s225 + $0x74] sm:$0xf]
      %v268 = vld [vmem:[%s225 + $0x78] sm:$0xf]
      %v269 = vld [vmem:[%s225 + $0x7c] sm:$0xf]
      %v302 = vunpack.c.l.b16 %v238
      %v303 = vunpack.c.l.b16 %v239
      %v304 = vunpack.c.l.b16 %v240
      %v305 = vunpack.c.l.b16 %v241
      %v306 = vunpack.c.l.b16 %v242
      %v307 = vunpack.c.l.b16 %v243
      %v308 = vunpack.c.l.b16 %v244
      %v309 = vunpack.c.l.b16 %v245
      %v310 = vunpack.c.l.b16 %v246
      %v311 = vunpack.c.l.b16 %v247
      %v312 = vunpack.c.l.b16 %v248
      %v313 = vunpack.c.l.b16 %v249
      %v314 = vunpack.c.l.b16 %v250
      %v315 = vunpack.c.l.b16 %v251
      %v316 = vunpack.c.l.b16 %v252
      %v317 = vunpack.c.l.b16 %v253
      %v318 = vunpack.c.l.b16 %v254
      %v319 = vunpack.c.l.b16 %v255
      %v320 = vunpack.c.l.b16 %v256
      %v321 = vunpack.c.l.b16 %v257
      %v322 = vunpack.c.l.b16 %v258
      %v323 = vunpack.c.l.b16 %v259
      %v324 = vunpack.c.l.b16 %v260
      %v325 = vunpack.c.l.b16 %v261
      %v326 = vunpack.c.l.b16 %v262
      %v327 = vunpack.c.l.b16 %v263
      %v328 = vunpack.c.l.b16 %v264
      %v329 = vunpack.c.l.b16 %v265
      %v330 = vunpack.c.l.b16 %v266
      %v331 = vunpack.c.l.b16 %v267
      %v332 = vunpack.c.l.b16 %v268
      %v333 = vunpack.c.l.b16 %v269
      %v334 = vpack.c.b16 %v303, %v302
      %v335 = vpack.c.b16 %v305, %v304
      %v336 = vpack.c.b16 %v307, %v306
      %v337 = vpack.c.b16 %v309, %v308
      %v338 = vpack.c.b16 %v311, %v310
      %v339 = vpack.c.b16 %v313, %v312
      %v340 = vpack.c.b16 %v315, %v314
      %v341 = vpack.c.b16 %v317, %v316
      %v342 = vpack.c.b16 %v319, %v318
      %v343 = vpack.c.b16 %v321, %v320
      %v344 = vpack.c.b16 %v323, %v322
      %v345 = vpack.c.b16 %v325, %v324
      %v346 = vpack.c.b16 %v327, %v326
      %v347 = vpack.c.b16 %v329, %v328
      %v348 = vpack.c.b16 %v331, %v330
      %v349 = vpack.c.b16 %v333, %v332
      %366 = vmatpush.bf16.xpose.msra.mxu0 %v341
      %367 = vmatpush.bf16.xpose.msra.mxu0 %v340
      %368 = vmatpush.bf16.xpose.msra.mxu0 %v339
      %369 = vmatpush.bf16.xpose.msra.mxu0 %v338
      %370 = vmatpush.bf16.xpose.msra.mxu0 %v337
      %371 = vmatpush.bf16.xpose.msra.mxu0 %v336
      %372 = vmatpush.bf16.xpose.msra.mxu0 %v335
      %373 = vmatpush.bf16.xpose.msra.mxu0 %v334
      %374 = vmatmul.bf16.gmra.mxu0 %v237
      %v375 = vpop.f32.mrf.mxu0
      %v376 = vadd.f32 0.0, %v375
      %v377 = vpop.f32.mrf.mxu0
      %378 = vdwg.mxu0
      %379 = vmatpush.bf16.xpose.msra.mxu0 %v349
      %380 = vmatpush.bf16.xpose.msra.mxu0 %v348
      %381 = vmatpush.bf16.xpose.msra.mxu0 %v347
      %382 = vmatpush.bf16.xpose.msra.mxu0 %v346
      %383 = vmatpush.bf16.xpose.msra.mxu0 %v345
      %384 = vmatpush.bf16.xpose.msra.mxu0 %v344
      %385 = vmatpush.bf16.xpose.msra.mxu0 %v343
      %386 = vmatpush.bf16.xpose.msra.mxu0 %v342
      %387 = vmatmul.bf16.gmra.mxu0 %v237
      %v388 = vpop.f32.mrf.mxu0
      %v389 = vadd.f32 0.0, %v388
      %v390 = vpop.f32.mrf.mxu0
      %391 = vdwg.mxu0
      %v392 = vld [vmem:[%s1] sm:$0xff]
      %394 = vset.pattern.permute.xlu0 0
      %395 = vperm.xlu0 %394, %v392
      %v396 = vpop.permute.xlu0 %395
      %v398 = vmul.f32 %v376, %v396
      %v399 = vmul.f32 %v389, %v396
      %v400 = vld [vmem:[%s2] sm:$0xff]
      %402 = vset.pattern.permute.xlu0 0
      %403 = vperm.xlu0 %402, %v400
      %v404 = vpop.permute.xlu0 %403
      %v406 = vadd.f32 %v398, %v404
      %v407 = vadd.f32 %v399, %v404
      %vm408 = vcmp.gt.f32.partialorder %v406, 0.0
      %vm409 = vcmp.gt.f32.partialorder %v407, 0.0
      %v410 = vmul.f32 %v406, 0.2
      %v411 = vmul.f32 %v407, 0.2
      %v412 = vsel %vm408, %v406, %v410
      %v413 = vsel %vm409, %v407, %v411
      %414 = vst [vmem:[%s235] sm:$0xff] %v412
      %415 = vst [vmem:[%s235 + $0x8] sm:$0xff] %v413
      %s416 = smul.u32 2, %s20
      %p417 = scmp.lt.s32.totalorder %s19, 1
      %s418 = scalar_select %p417, %s19, 1
      %p419 = scmp.lt.s32.totalorder %s416, 1
      %s420 = scalar_select %p419, %s416, 1
      %s421 = smul.addr %s418, 2
      %s422 = sadd.s32 %s420, %s421
      %s423 = smul.addr %s422, 8
      %s424 = scalar_lea.vmem %s4, %s423
      // Predicated region
      $region37: #{bnlrcnn_forward.3} parent=35 // pred_check
        %p425 = pneg %p138
      $region38: #{bnlrcnn_forward.3} parent=35 // pred_check_branch
        %427 = sbr.rel (%p425) target = $region40
      $region39: #{bnlrcnn_forward.3} parent=35 // pred_region
        %s428 = smul.u32 2, %s20
      $region40: #{bnlrcnn_forward.3} parent=35 // pred_fallthru
        _
    $region36: #{bnlrcnn_forward.3} parent=5 // pred_fallthru
      _
    %p429 = scmp.le.s32.totalorder 2, %s10
    // Predicated region
    $region41: #{bnlrcnn_forward.3} parent=5 // pred_check
      %p430 = pneg %p429
    $region42: #{bnlrcnn_forward.3} parent=5 // pred_check_branch
      %432 = sbr.rel (%p430) target = $region44
    $region43: #{bnlrcnn_forward.3} parent=5 // pred_region
      %s433 = ssub.s32 %s10, 2
      // Predicated region
      $region45: #{bnlrcnn_forward.3} parent=43 // pred_check
        %p434 = pneg %p144
      $region46: #{bnlrcnn_forward.3} parent=43 // pred_check_branch
        %436 = sbr.rel (%p434) target = $region48
      $region47: #{bnlrcnn_forward.3} parent=43 // pred_region
        %s437 = smul.u32 2, %s22
        %p438 = scmp.lt.s32.totalorder %s21, 1
        %s439 = scalar_select %p438, %s21, 1
        %p440 = scmp.lt.s32.totalorder %s437, 1
        %s441 = scalar_select %p440, %s437, 1
        %s442 = smul.addr %s439, 2
        %s443 = sadd.s32 %s441, %s442
        %s444 = smul.addr %s443, 8
        %s445 = scalar_lea.vmem %s4, %s444
      $region48: #{bnlrcnn_forward.3} parent=43 // pred_fallthru
        _
    $region44: #{bnlrcnn_forward.3} parent=5 // pred_fallthru
      _
  $region6: #{bnlrcnn_forward.3} parent=0 // loop_footer
    %s14 = sadd.s32 1, %s10
  $region7: #{bnlrcnn_forward.3} parent=0 // loop_footer_branch
    %9 = sbr.rel target = $region3
  $region8: #{bnlrcnn_forward.3} parent=0 // loop_exit
    _

// kernel: bnlrcnn_forward.2
$region0: #{bnlrcnn_forward.2}
  #allocation0 [shape = 'u32[]', space=smem, size = 0x4, offset = 0x4, fixed_abs, tag = 'smem constant byte address 0x4 - core index']
  #allocation1 [shape = 'u32[72,128]{1,0:T(1,128)}', space=vmem, size = 0x9000, scoped, tag = 'internal scratch']
  #allocation2 [shape = 'bf16[512,36]{1,0:T(8,128)(2,1)}', space=vmem, size = 0x20000, scoped, tag = 'scratch operand']
  %s0 = inlined_call_operand.vmem [shape: bf16[2,18,18,4], index: 0, kind: input, shape index: {}]
  %s1 = inlined_call_operand.vmem [shape: bf16[36,128], index: 1, kind: input, shape index: {}]
  %s2 = inlined_call_operand.vmem [shape: bf16[2,256,128], index: 2, kind: output, shape index: {0}]
  %s3 = inlined_call_operand.vmem [shape: f32[1,128], index: 3, kind: output, shape index: {1}]
  %s4 = inlined_call_operand.vmem [shape: f32[1,128], index: 4, kind: output, shape index: {2}]
  %5 = xla_tuple %s2, %s3, %s4
  %s6 = sld [smem:[#allocation0]]
  $region34: #{bnlrcnn_forward.2} parent=0
    _
  %s8 = ssub.s32 1, %s6
  %s9 = scalar_select 0, %s8, %s6
  // Predicated region
  $region2: #{bnlrcnn_forward.2} parent=0 // pred_check
    _
  $region3: #{bnlrcnn_forward.2} parent=0 // pred_check_branch
    %11 = sbr.rel (0) target = $region5
  $region4: #{bnlrcnn_forward.2} parent=0 // pred_region
    _
  $region5: #{bnlrcnn_forward.2} parent=0 // pred_fallthru
    _
  // Predicated region
  $region6: #{bnlrcnn_forward.2} parent=0 // pred_check
    _
  $region7: #{bnlrcnn_forward.2} parent=0 // pred_check_branch
    %13 = sbr.rel (0) target = $region9
  $region8: #{bnlrcnn_forward.2} parent=0 // pred_region
    _
  $region9: #{bnlrcnn_forward.2} parent=0 // pred_fallthru
    _
  %v15 = vld [vmem:[%s0] sm:$0xf]
  %v16 = vld [vmem:[%s0 + $0x4] sm:$0xf]
  %v17 = vld [vmem:[%s0 + $0xc] sm:$0xf]
  %v18 = vld [vmem:[%s0 + $0x10] sm:$0xf]
  %v19 = vld [vmem:[%s0 + $0x18] sm:$0xf]
  %v20 = vld [vmem:[%s0 + $0x1c] sm:$0xf]
  %v21 = vld [vmem:[%s0 + $0x24] sm:$0xf]
  %v22 = vld [vmem:[%s0 + $0x28] sm:$0xf]
  %v23 = vld [vmem:[%s0 + $0x30] sm:$0xf]
  %v24 = vld [vmem:[%s0 + $0x34] sm:$0xf]
  %v25 = vld [vmem:[%s0 + $0x3c] sm:$0xf]
  %v26 = vld [vmem:[%s0 + $0x40] sm:$0xf]
  %v27 = vld [vmem:[%s0 + $0x48] sm:$0xf]
  %v28 = vld [vmem:[%s0 + $0x4c] sm:$0xf]
  %v29 = vld [vmem:[%s0 + $0x54] sm:$0xf]
  %v30 = vld [vmem:[%s0 + $0x58] sm:$0xf]
  %v31 = vld [vmem:[%s0 + $0x60] sm:$0xf]
  %v32 = vld [vmem:[%s0 + $0x64] sm:$0xf]
  %v33 = vld [vmem:[%s0 + $0x6c] sm:$0xf]
  %v34 = vld [vmem:[%s0 + $0x70] sm:$0xf]
  %v35 = vld [vmem:[%s0 + $0x78] sm:$0xf]
  %v36 = vld [vmem:[%s0 + $0x7c] sm:$0xf]
  %v37 = vld [vmem:[%s0 + $0x84] sm:$0xf]
  %v38 = vld [vmem:[%s0 + $0x88] sm:$0xf]
  %v39 = vld [vmem:[%s0 + $0x90] sm:$0xf]
  %v40 = vld [vmem:[%s0 + $0x94] sm:$0xf]
  %v41 = vld [vmem:[%s0 + $0x9c] sm:$0xf]
  %v42 = vld [vmem:[%s0 + $0xa0] sm:$0xf]
  %v43 = vld [vmem:[%s0 + $0xa8] sm:$0xf]
  %v44 = vld [vmem:[%s0 + $0xac] sm:$0xf]
  %v45 = vld [vmem:[%s0 + $0xb4] sm:$0xf]
  %v46 = vld [vmem:[%s0 + $0xb8] sm:$0xf]
  %v47 = vld [vmem:[%s0 + $0xd8] sm:$0xf]
  %v48 = vld [vmem:[%s0 + $0xdc] sm:$0xf]
  %v49 = vld [vmem:[%s0 + $0xe4] sm:$0xf]
  %v50 = vld [vmem:[%s0 + $0xe8] sm:$0xf]
  %v51 = vld [vmem:[%s0 + $0xf0] sm:$0xf]
  %v52 = vld [vmem:[%s0 + $0xf4] sm:$0xf]
  %v53 = vld [vmem:[%s0 + $0xfc] sm:$0xf]
  %v54 = vld [vmem:[%s0 + $0x100] sm:$0xf]
  %v55 = vld [vmem:[%s0 + $0x108] sm:$0xf]
  %v56 = vld [vmem:[%s0 + $0x10c] sm:$0xf]
  %v57 = vld [vmem:[%s0 + $0x114] sm:$0xf]
  %v58 = vld [vmem:[%s0 + $0x118] sm:$0xf]
  %v59 = vld [vmem:[%s0 + $0x120] sm:$0xf]
  %v60 = vld [vmem:[%s0 + $0x124] sm:$0xf]
  %v61 = vld [vmem:[%s0 + $0x12c] sm:$0xf]
  %v62 = vld [vmem:[%s0 + $0x130] sm:$0xf]
  %v63 = vld [vmem:[%s0 + $0x138] sm:$0xf]
  %v64 = vld [vmem:[%s0 + $0x13c] sm:$0xf]
  %v65 = vld [vmem:[%s0 + $0x144] sm:$0xf]
  %v66 = vld [vmem:[%s0 + $0x148] sm:$0xf]
  %v67 = vld [vmem:[%s0 + $0x150] sm:$0xf]
  %v68 = vld [vmem:[%s0 + $0x154] sm:$0xf]
  %v69 = vld [vmem:[%s0 + $0x15c] sm:$0xf]
  %v70 = vld [vmem:[%s0 + $0x160] sm:$0xf]
  %v71 = vld [vmem:[%s0 + $0x168] sm:$0xf]
  %v72 = vld [vmem:[%s0 + $0x16c] sm:$0xf]
  %v73 = vld [vmem:[%s0 + $0x174] sm:$0xf]
  %v74 = vld [vmem:[%s0 + $0x178] sm:$0xf]
  %v75 = vld [vmem:[%s0 + $0x180] sm:$0xf]
  %v76 = vld [vmem:[%s0 + $0x184] sm:$0xf]
  %v77 = vld [vmem:[%s0 + $0x18c] sm:$0xf]
  %v78 = vld [vmem:[%s0 + $0x190] sm:$0xf]
  %vm79 = vcmask 27648
  %80 = vst.msk [vmem:[#allocation2] sm:$0xf] %vm79, %v15
  %81 = vst.msk [vmem:[#allocation2 + $0x4] sm:$0xf] %vm79, %v16
  %82 = vst.msk [vmem:[#allocation2 + $0x8] sm:$0xf] %vm79, %v17
  %83 = vst.msk [vmem:[#allocation2 + $0xc] sm:$0xf] %vm79, %v18
  %84 = vst.msk [vmem:[#allocation2 + $0x10] sm:$0xf] %vm79, %v19
  %85 = vst.msk [vmem:[#allocation2 + $0x14] sm:$0xf] %vm79, %v20
  %86 = vst.msk [vmem:[#allocation2 + $0x18] sm:$0xf] %vm79, %v21
  %87 = vst.msk [vmem:[#allocation2 + $0x1c] sm:$0xf] %vm79, %v22
  %88 = vst.msk [vmem:[#allocation2 + $0x20] sm:$0xf] %vm79, %v23
  %89 = vst.msk [vmem:[#allocation2 + $0x24] sm:$0xf] %vm79, %v24
  %90 = vst.msk [vmem:[#allocation2 + $0x28] sm:$0xf] %vm79, %v25
  %91 = vst.msk [vmem:[#allocation2 + $0x2c] sm:$0xf] %vm79, %v26
  %92 = vst.msk [vmem:[#allocation2 + $0x30] sm:$0xf] %vm79, %v27
  %93 = vst.msk [vmem:[#allocation2 + $0x34] sm:$0xf] %vm79, %v28
  %94 = vst.msk [vmem:[#allocation2 + $0x38] sm:$0xf] %vm79, %v29
  %95 = vst.msk [vmem:[#allocation2 + $0x3c] sm:$0xf] %vm79, %v30
  %96 = vst.msk [vmem:[#allocation2 + $0x40] sm:$0xf] %vm79, %v31
  %97 = vst.msk [vmem:[#allocation2 + $0x44] sm:$0xf] %vm79, %v32
  %98 = vst.msk [vmem:[#allocation2 + $0x48] sm:$0xf] %vm79, %v33
  %99 = vst.msk [vmem:[#allocation2 + $0x4c] sm:$0xf] %vm79, %v34
  %100 = vst.msk [vmem:[#allocation2 + $0x50] sm:$0xf] %vm79, %v35
  %101 = vst.msk [vmem:[#allocation2 + $0x54] sm:$0xf] %vm79, %v36
  %102 = vst.msk [vmem:[#allocation2 + $0x58] sm:$0xf] %vm79, %v37
  %103 = vst.msk [vmem:[#allocation2 + $0x5c] sm:$0xf] %vm79, %v38
  %104 = vst.msk [vmem:[#allocation2 + $0x60] sm:$0xf] %vm79, %v39
  %105 = vst.msk [vmem:[#allocation2 + $0x64] sm:$0xf] %vm79, %v40
  %106 = vst.msk [vmem:[#allocation2 + $0x68] sm:$0xf] %vm79, %v41
  %107 = vst.msk [vmem:[#allocation2 + $0x6c] sm:$0xf] %vm79, %v42
  %108 = vst.msk [vmem:[#allocation2 + $0x70] sm:$0xf] %vm79, %v43
  %109 = vst.msk [vmem:[#allocation2 + $0x74] sm:$0xf] %vm79, %v44
  %110 = vst.msk [vmem:[#allocation2 + $0x78] sm:$0xf] %vm79, %v45
  %111 = vst.msk [vmem:[#allocation2 + $0x7c] sm:$0xf] %vm79, %v46
  %112 = vst.msk [vmem:[#allocation2 + $0x80] sm:$0xf] %vm79, %v47
  %113 = vst.msk [vmem:[#allocation2 + $0x84] sm:$0xf] %vm79, %v48
  %114 = vst.msk [vmem:[#allocation2 + $0x88] sm:$0xf] %vm79, %v49
  %115 = vst.msk [vmem:[#allocation2 + $0x8c] sm:$0xf] %vm79, %v50
  %116 = vst.msk [vmem:[#allocation2 + $0x90] sm:$0xf] %vm79, %v51
  %117 = vst.msk [vmem:[#allocation2 + $0x94] sm:$0xf] %vm79, %v52
  %118 = vst.msk [vmem:[#allocation2 + $0x98] sm:$0xf] %vm79, %v53
  %119 = vst.msk [vmem:[#allocation2 + $0x9c] sm:$0xf] %vm79, %v54
  %120 = vst.msk [vmem:[#allocation2 + $0xa0] sm:$0xf] %vm79, %v55
  %121 = vst.msk [vmem:[#allocation2 + $0xa4] sm:$0xf] %vm79, %v56
  %122 = vst.msk [vmem:[#allocation2 + $0xa8] sm:$0xf] %vm79, %v57
  %123 = vst.msk [vmem:[#allocation2 + $0xac] sm:$0xf] %vm79, %v58
  %124 = vst.msk [vmem:[#allocation2 + $0xb0] sm:$0xf] %vm79, %v59
  %125 = vst.msk [vmem:[#allocation2 + $0xb4] sm:$0xf] %vm79, %v60
  %126 = vst.msk [vmem:[#allocation2 + $0xb8] sm:$0xf] %vm79, %v61
  %127 = vst.msk [vmem:[#allocation2 + $0xbc] sm:$0xf] %vm79, %v62
  %128 = vst.msk [vmem:[#allocation2 + $0xc0] sm:$0xf] %vm79, %v63
  %129 = vst.msk [vmem:[#allocation2 + $0xc4] sm:$0xf] %vm79, %v64
  %130 = vst.msk [vmem:[#allocation2 + $0xc8] sm:$0xf] %vm79, %v65
  %131 = vst.msk [vmem:[#allocation2 + $0xcc] sm:$0xf] %vm79, %v66
  %132 = vst.msk [vmem:[#allocation2 + $0xd0] sm:$0xf] %vm79, %v67
  %133 = vst.msk [vmem:[#allocation2 + $0xd4] sm:$0xf] %vm79, %v68
  %134 = vst.msk [vmem:[#allocation2 + $0xd8] sm:$0xf] %vm79, %v69
  %135 = vst.msk [vmem:[#allocation2 + $0xdc] sm:$0xf] %vm79, %v70
  %136 = vst.msk [vmem:[#allocation2 + $0xe0] sm:$0xf] %vm79, %v71
  %137 = vst.msk [vmem:[#allocation2 + $0xe4] sm:$0xf] %vm79, %v72
  %138 = vst.msk [vmem:[#allocation2 + $0xe8] sm:$0xf] %vm79, %v73
  %139 = vst.msk [vmem:[#allocation2 + $0xec] sm:$0xf] %vm79, %v74
  %140 = vst.msk [vmem:[#allocation2 + $0xf0] sm:$0xf] %vm79, %v75
  %141 = vst.msk [vmem:[#allocation2 + $0xf4] sm:$0xf] %vm79, %v76
  %142 = vst.msk [vmem:[#allocation2 + $0xf8] sm:$0xf] %vm79, %v77
  %143 = vst.msk [vmem:[#allocation2 + $0xfc] sm:$0xf] %vm79, %v78
  %v144 = vld [vmem:[%s0] sm:$0xf]
  %v145 = vld [vmem:[%s0 + $0x4] sm:$0xf]
  %v146 = vld [vmem:[%s0 + $0x8] sm:$0x1]
  %v147 = vld [vmem:[%s0 + $0xc] sm:$0xf]
  %v148 = vld [vmem:[%s0 + $0x10] sm:$0xf]
  %v149 = vld [vmem:[%s0 + $0x14] sm:$0x1]
  %v150 = vld [vmem:[%s0 + $0x18] sm:$0xf]
  %v151 = vld [vmem:[%s0 + $0x1c] sm:$0xf]
  %v152 = vld [vmem:[%s0 + $0x20] sm:$0x1]
  %v153 = vld [vmem:[%s0 + $0x24] sm:$0xf]
  %v154 = vld [vmem:[%s0 + $0x28] sm:$0xf]
  %v155 = vld [vmem:[%s0 + $0x2c] sm:$0x1]
  %v156 = vld [vmem:[%s0 + $0x30] sm:$0xf]
  %v157 = vld [vmem:[%s0 + $0x34] sm:$0xf]
  %v158 = vld [vmem:[%s0 + $0x38] sm:$0x1]
  %v159 = vld [vmem:[%s0 + $0x3c] sm:$0xf]
  %v160 = vld [vmem:[%s0 + $0x40] sm:$0xf]
  %v161 = vld [vmem:[%s0 + $0x44] sm:$0x1]
  %v162 = vld [vmem:[%s0 + $0x48] sm:$0xf]
  %v163 = vld [vmem:[%s0 + $0x4c] sm:$0xf]
  %v164 = vld [vmem:[%s0 + $0x50] sm:$0x1]
  %v165 = vld [vmem:[%s0 + $0x54] sm:$0xf]
  %v166 = vld [vmem:[%s0 + $0x58] sm:$0xf]
  %v167 = vld [vmem:[%s0 + $0x5c] sm:$0x1]
  %v168 = vld [vmem:[%s0 + $0x60] sm:$0xf]
  %v169 = vld [vmem:[%s0 + $0x64] sm:$0xf]
  %v170 = vld [vmem:[%s0 + $0x68] sm:$0x1]
  %v171 = vld [vmem:[%s0 + $0x6c] sm:$0xf]
  %v172 = vld [vmem:[%s0 + $0x70] sm:$0xf]
  %v173 = vld [vmem:[%s0 + $0x74] sm:$0x1]
  %v174 = vld [vmem:[%s0 + $0x78] sm:$0xf]
  %v175 = vld [vmem:[%s0 + $0x7c] sm:$0xf]
  %v176 = vld [vmem:[%s0 + $0x80] sm:$0x1]
  %v177 = vld [vmem:[%s0 + $0x84] sm:$0xf]
  %v178 = vld [vmem:[%s0 + $0x88] sm:$0xf]
  %v179 = vld [vmem:[%s0 + $0x8c] sm:$0x1]
  %v180 = vld [vmem:[%s0 + $0x90] sm:$0xf]
  %v181 = vld [vmem:[%s0 + $0x94] sm:$0xf]
  %v182 = vld [vmem:[%s0 + $0x98] sm:$0x1]
  %v183 = vld [vmem:[%s0 + $0x9c] sm:$0xf]
  %v184 = vld [vmem:[%s0 + $0xa0] sm:$0xf]
  %v185 = vld [vmem:[%s0 + $0xa4] sm:$0x1]
  %v186 = vld [vmem:[%s0 + $0xa8] sm:$0xf]
  %v187 = vld [vmem:[%s0 + $0xac] sm:$0xf]
  %v188 = vld [vmem:[%s0 + $0xb0] sm:$0x1]
  %v189 = vld [vmem:[%s0 + $0xb4] sm:$0xf]
  %v190 = vld [vmem:[%s0 + $0xb8] sm:$0xf]
  %v191 = vld [vmem:[%s0 + $0xbc] sm:$0x1]
  %v192 = vld [vmem:[%s0 + $0xd8] sm:$0xf]
  %v193 = vld [vmem:[%s0 + $0xdc] sm:$0xf]
  %v194 = vld [vmem:[%s0 + $0xe0] sm:$0x1]
  %v195 = vld [vmem:[%s0 + $0xe4] sm:$0xf]
  %v196 = vld [vmem:[%s0 + $0xe8] sm:$0xf]
  %v197 = vld [vmem:[%s0 + $0xec] sm:$0x1]
  %v198 = vld [vmem:[%s0 + $0xf0] sm:$0xf]
  %v199 = vld [vmem:[%s0 + $0xf4] sm:$0xf]
  %v200 = vld [vmem:[%s0 + $0xf8] sm:$0x1]
  %v201 = vld [vmem:[%s0 + $0xfc] sm:$0xf]
  %v202 = vld [vmem:[%s0 + $0x100] sm:$0xf]
  %v203 = vld [vmem:[%s0 + $0x104] sm:$0x1]
  %v204 = vld [vmem:[%s0 + $0x108] sm:$0xf]
  %v205 = vld [vmem:[%s0 + $0x10c] sm:$0xf]
  %v206 = vld [vmem:[%s0 + $0x110] sm:$0x1]
  %v207 = vld [vmem:[%s0 + $0x114] sm:$0xf]
  %v208 = vld [vmem:[%s0 + $0x118] sm:$0xf]
  %v209 = vld [vmem:[%s0 + $0x11c] sm:$0x1]
  %v210 = vld [vmem:[%s0 + $0x120] sm:$0xf]
  %v211 = vld [vmem:[%s0 + $0x124] sm:$0xf]
  %v212 = vld [vmem:[%s0 + $0x128] sm:$0x1]
  %v213 = vld [vmem:[%s0 + $0x12c] sm:$0xf]
  %v214 = vld [vmem:[%s0 + $0x130] sm:$0xf]
  %v215 = vld [vmem:[%s0 + $0x134] sm:$0x1]
  %v216 = vld [vmem:[%s0 + $0x138] sm:$0xf]
  %v217 = vld [vmem:[%s0 + $0x13c] sm:$0xf]
  %v218 = vld [vmem:[%s0 + $0x140] sm:$0x1]
  %v219 = vld [vmem:[%s0 + $0x144] sm:$0xf]
  %v220 = vld [vmem:[%s0 + $0x148] sm:$0xf]
  %v221 = vld [vmem:[%s0 + $0x14c] sm:$0x1]
  %v222 = vld [vmem:[%s0 + $0x150] sm:$0xf]
  %v223 = vld [vmem:[%s0 + $0x154] sm:$0xf]
  %v224 = vld [vmem:[%s0 + $0x158] sm:$0x1]
  %v225 = vld [vmem:[%s0 + $0x15c] sm:$0xf]
  %v226 = vld [vmem:[%s0 + $0x160] sm:$0xf]
  %v227 = vld [vmem:[%s0 + $0x164] sm:$0x1]
  %v228 = vld [vmem:[%s0 + $0x168] sm:$0xf]
  %v229 = vld [vmem:[%s0 + $0x16c] sm:$0xf]
  %v230 = vld [vmem:[%s0 + $0x170] sm:$0x1]
  %v231 = vld [vmem:[%s0 + $0x174] sm:$0xf]
  %v232 = vld [vmem:[%s0 + $0x178] sm:$0xf]
  %v233 = vld [vmem:[%s0 + $0x17c] sm:$0x1]
  %v234 = vld [vmem:[%s0 + $0x180] sm:$0xf]
  %v235 = vld [vmem:[%s0 + $0x184] sm:$0xf]
  %v236 = vld [vmem:[%s0 + $0x188] sm:$0x1]
  %v237 = vld [vmem:[%s0 + $0x18c] sm:$0xf]
  %v238 = vld [vmem:[%s0 + $0x190] sm:$0xf]
  %v239 = vld [vmem:[%s0 + $0x194] sm:$0x1]
  %vm240 = vsmask.f32 3328
  %vm241 = vsmask.f32 7440
  %vm242 = vmor %vm240, %vm241
  %v244 = vshrl.u32 %v144, 16
  %v246 = vrot.slane %v244, 4
  %v247 = vshll.u32 %v144, 16
  %v249 = vrot.slane %v247, 5
  %v250 = vor.u32 %v246, %v249
  %v251 = vrot.slane %v250, 4
  %v253 = vshll.u32 %v145, 16
  %v255 = vrot.slane %v253, 5
  %v256 = vsel %vm242, %v251, %v255
  %v257 = vshrl.u32 %v145, 16
  %v259 = vrot.slane %v257, 4
  %v260 = vor.u32 %v259, %v255
  %v261 = vrot.slane %v260, 4
  %v263 = vshll.u32 %v146, 16
  %v265 = vrot.slane %v263, 5
  %v266 = vsel %vm242, %v261, %v265
  %v268 = vshrl.u32 %v147, 16
  %v270 = vrot.slane %v268, 4
  %v271 = vshll.u32 %v147, 16
  %v273 = vrot.slane %v271, 5
  %v274 = vor.u32 %v270, %v273
  %v275 = vrot.slane %v274, 4
  %v277 = vshll.u32 %v148, 16
  %v279 = vrot.slane %v277, 5
  %v280 = vsel %vm242, %v275, %v279
  %v281 = vshrl.u32 %v148, 16
  %v283 = vrot.slane %v281, 4
  %v284 = vor.u32 %v283, %v279
  %v285 = vrot.slane %v284, 4
  %v287 = vshll.u32 %v149, 16
  %v289 = vrot.slane %v287, 5
  %v290 = vsel %vm242, %v285, %v289
  %v292 = vshrl.u32 %v150, 16
  %v294 = vrot.slane %v292, 4
  %v295 = vshll.u32 %v150, 16
  %v297 = vrot.slane %v295, 5
  %v298 = vor.u32 %v294, %v297
  %v299 = vrot.slane %v298, 4
  %v301 = vshll.u32 %v151, 16
  %v303 = vrot.slane %v301, 5
  %v304 = vsel %vm242, %v299, %v303
  %v305 = vshrl.u32 %v151, 16
  %v307 = vrot.slane %v305, 4
  %v308 = vor.u32 %v307, %v303
  %v309 = vrot.slane %v308, 4
  %v311 = vshll.u32 %v152, 16
  %v313 = vrot.slane %v311, 5
  %v314 = vsel %vm242, %v309, %v313
  %v316 = vshrl.u32 %v153, 16
  %v318 = vrot.slane %v316, 4
  %v319 = vshll.u32 %v153, 16
  %v321 = vrot.slane %v319, 5
  %v322 = vor.u32 %v318, %v321
  %v323 = vrot.slane %v322, 4
  %v325 = vshll.u32 %v154, 16
  %v327 = vrot.slane %v325, 5
  %v328 = vsel %vm242, %v323, %v327
  %v329 = vshrl.u32 %v154, 16
  %v331 = vrot.slane %v329, 4
  %v332 = vor.u32 %v331, %v327
  %v333 = vrot.slane %v332, 4
  %v335 = vshll.u32 %v155, 16
  %v337 = vrot.slane %v335, 5
  %v338 = vsel %vm242, %v333, %v337
  %v340 = vshrl.u32 %v156, 16
  %v342 = vrot.slane %v340, 4
  %v343 = vshll.u32 %v156, 16
  %v345 = vrot.slane %v343, 5
  %v346 = vor.u32 %v342, %v345
  %v347 = vrot.slane %v346, 4
  %v349 = vshll.u32 %v157, 16
  %v351 = vrot.slane %v349, 5
  %v352 = vsel %vm242, %v347, %v351
  %v353 = vshrl.u32 %v157, 16
  %v355 = vrot.slane %v353, 4
  %v356 = vor.u32 %v355, %v351
  %v357 = vrot.slane %v356, 4
  %v359 = vshll.u32 %v158, 16
  %v361 = vrot.slane %v359, 5
  %v362 = vsel %vm242, %v357, %v361
  %v364 = vshrl.u32 %v159, 16
  %v366 = vrot.slane %v364, 4
  %v367 = vshll.u32 %v159, 16
  %v369 = vrot.slane %v367, 5
  %v370 = vor.u32 %v366, %v369
  %v371 = vrot.slane %v370, 4
  %v373 = vshll.u32 %v160, 16
  %v375 = vrot.slane %v373, 5
  %v376 = vsel %vm242, %v371, %v375
  %v377 = vshrl.u32 %v160, 16
  %v379 = vrot.slane %v377, 4
  %v380 = vor.u32 %v379, %v375
  %v381 = vrot.slane %v380, 4
  %v383 = vshll.u32 %v161, 16
  %v385 = vrot.slane %v383, 5
  %v386 = vsel %vm242, %v381, %v385
  %v388 = vshrl.u32 %v162, 16
  %v390 = vrot.slane %v388, 4
  %v391 = vshll.u32 %v162, 16
  %v393 = vrot.slane %v391, 5
  %v394 = vor.u32 %v390, %v393
  %v395 = vrot.slane %v394, 4
  %v397 = vshll.u32 %v163, 16
  %v399 = vrot.slane %v397, 5
  %v400 = vsel %vm242, %v395, %v399
  %v401 = vshrl.u32 %v163, 16
  %v403 = vrot.slane %v401, 4
  %v404 = vor.u32 %v403, %v399
  %v405 = vrot.slane %v404, 4
  %v407 = vshll.u32 %v164, 16
  %v409 = vrot.slane %v407, 5
  %v410 = vsel %vm242, %v405, %v409
  %v412 = vshrl.u32 %v165, 16
  %v414 = vrot.slane %v412, 4
  %v415 = vshll.u32 %v165, 16
  %v417 = vrot.slane %v415, 5
  %v418 = vor.u32 %v414, %v417
  %v419 = vrot.slane %v418, 4
  %v421 = vshll.u32 %v166, 16
  %v423 = vrot.slane %v421, 5
  %v424 = vsel %vm242, %v419, %v423
  %v425 = vshrl.u32 %v166, 16
  %v427 = vrot.slane %v425, 4
  %v428 = vor.u32 %v427, %v423
  %v429 = vrot.slane %v428, 4
  %v431 = vshll.u32 %v167, 16
  %v433 = vrot.slane %v431, 5
  %v434 = vsel %vm242, %v429, %v433
  %v436 = vshrl.u32 %v168, 16
  %v438 = vrot.slane %v436, 4
  %v439 = vshll.u32 %v168, 16
  %v441 = vrot.slane %v439, 5
  %v442 = vor.u32 %v438, %v441
  %v443 = vrot.slane %v442, 4
  %v445 = vshll.u32 %v169, 16
  %v447 = vrot.slane %v445, 5
  %v448 = vsel %vm242, %v443, %v447
  %v449 = vshrl.u32 %v169, 16
  %v451 = vrot.slane %v449, 4
  %v452 = vor.u32 %v451, %v447
  %v453 = vrot.slane %v452, 4
  %v455 = vshll.u32 %v170, 16
  %v457 = vrot.slane %v455, 5
  %v458 = vsel %vm242, %v453, %v457
  %v460 = vshrl.u32 %v171, 16
  %v462 = vrot.slane %v460, 4
  %v463 = vshll.u32 %v171, 16
  %v465 = vrot.slane %v463, 5
  %v466 = vor.u32 %v462, %v465
  %v467 = vrot.slane %v466, 4
  %v469 = vshll.u32 %v172, 16
  %v471 = vrot.slane %v469, 5
  %v472 = vsel %vm242, %v467, %v471
  %v473 = vshrl.u32 %v172, 16
  %v475 = vrot.slane %v473, 4
  %v476 = vor.u32 %v475, %v471
  %v477 = vrot.slane %v476, 4
  %v479 = vshll.u32 %v173, 16
  %v481 = vrot.slane %v479, 5
  %v482 = vsel %vm242, %v477, %v481
  %v484 = vshrl.u32 %v174, 16
  %v486 = vrot.slane %v484, 4
  %v487 = vshll.u32 %v174, 16
  %v489 = vrot.slane %v487, 5
  %v490 = vor.u32 %v486, %v489
  %v491 = vrot.slane %v490, 4
  %v493 = vshll.u32 %v175, 16
  %v495 = vrot.slane %v493, 5
  %v496 = vsel %vm242, %v491, %v495
  %v497 = vshrl.u32 %v175, 16
  %v499 = vrot.slane %v497, 4
  %v500 = vor.u32 %v499, %v495
  %v501 = vrot.slane %v500, 4
  %v503 = vshll.u32 %v176, 16
  %v505 = vrot.slane %v503, 5
  %v506 = vsel %vm242, %v501, %v505
  %v508 = vshrl.u32 %v177, 16
  %v510 = vrot.slane %v508, 4
  %v511 = vshll.u32 %v177, 16
  %v513 = vrot.slane %v511, 5
  %v514 = vor.u32 %v510, %v513
  %v515 = vrot.slane %v514, 4
  %v517 = vshll.u32 %v178, 16
  %v519 = vrot.slane %v517, 5
  %v520 = vsel %vm242, %v515, %v519
  %v521 = vshrl.u32 %v178, 16
  %v523 = vrot.slane %v521, 4
  %v524 = vor.u32 %v523, %v519
  %v525 = vrot.slane %v524, 4
  %v527 = vshll.u32 %v179, 16
  %v529 = vrot.slane %v527, 5
  %v530 = vsel %vm242, %v525, %v529
  %v532 = vshrl.u32 %v180, 16
  %v534 = vrot.slane %v532, 4
  %v535 = vshll.u32 %v180, 16
  %v537 = vrot.slane %v535, 5
  %v538 = vor.u32 %v534, %v537
  %v539 = vrot.slane %v538, 4
  %v541 = vshll.u32 %v181, 16
  %v543 = vrot.slane %v541, 5
  %v544 = vsel %vm242, %v539, %v543
  %v545 = vshrl.u32 %v181, 16
  %v547 = vrot.slane %v545, 4
  %v548 = vor.u32 %v547, %v543
  %v549 = vrot.slane %v548, 4
  %v551 = vshll.u32 %v182, 16
  %v553 = vrot.slane %v551, 5
  %v554 = vsel %vm242, %v549, %v553
  %v556 = vshrl.u32 %v183, 16
  %v558 = vrot.slane %v556, 4
  %v559 = vshll.u32 %v183, 16
  %v561 = vrot.slane %v559, 5
  %v562 = vor.u32 %v558, %v561
  %v563 = vrot.slane %v562, 4
  %v565 = vshll.u32 %v184, 16
  %v567 = vrot.slane %v565, 5
  %v568 = vsel %vm242, %v563, %v567
  %v569 = vshrl.u32 %v184, 16
  %v571 = vrot.slane %v569, 4
  %v572 = vor.u32 %v571, %v567
  %v573 = vrot.slane %v572, 4
  %v575 = vshll.u32 %v185, 16
  %v577 = vrot.slane %v575, 5
  %v578 = vsel %vm242, %v573, %v577
  %v580 = vshrl.u32 %v186, 16
  %v582 = vrot.slane %v580, 4
  %v583 = vshll.u32 %v186, 16
  %v585 = vrot.slane %v583, 5
  %v586 = vor.u32 %v582, %v585
  %v587 = vrot.slane %v586, 4
  %v589 = vshll.u32 %v187, 16
  %v591 = vrot.slane %v589, 5
  %v592 = vsel %vm242, %v587, %v591
  %v593 = vshrl.u32 %v187, 16
  %v595 = vrot.slane %v593, 4
  %v596 = vor.u32 %v595, %v591
  %v597 = vrot.slane %v596, 4
  %v599 = vshll.u32 %v188, 16
  %v601 = vrot.slane %v599, 5
  %v602 = vsel %vm242, %v597, %v601
  %v604 = vshrl.u32 %v189, 16
  %v606 = vrot.slane %v604, 4
  %v607 = vshll.u32 %v189, 16
  %v609 = vrot.slane %v607, 5
  %v610 = vor.u32 %v606, %v609
  %v611 = vrot.slane %v610, 4
  %v613 = vshll.u32 %v190, 16
  %v615 = vrot.slane %v613, 5
  %v616 = vsel %vm242, %v611, %v615
  %v617 = vshrl.u32 %v190, 16
  %v619 = vrot.slane %v617, 4
  %v620 = vor.u32 %v619, %v615
  %v621 = vrot.slane %v620, 4
  %v623 = vshll.u32 %v191, 16
  %v625 = vrot.slane %v623, 5
  %v626 = vsel %vm242, %v621, %v625
  %v628 = vshrl.u32 %v192, 16
  %v630 = vrot.slane %v628, 4
  %v631 = vshll.u32 %v192, 16
  %v633 = vrot.slane %v631, 5
  %v634 = vor.u32 %v630, %v633
  %v635 = vrot.slane %v634, 4
  %v637 = vshll.u32 %v193, 16
  %v639 = vrot.slane %v637, 5
  %v640 = vsel %vm242, %v635, %v639
  %v641 = vshrl.u32 %v193, 16
  %v643 = vrot.slane %v641, 4
  %v644 = vor.u32 %v643, %v639
  %v645 = vrot.slane %v644, 4
  %v647 = vshll.u32 %v194, 16
  %v649 = vrot.slane %v647, 5
  %v650 = vsel %vm242, %v645, %v649
  %v652 = vshrl.u32 %v195, 16
  %v654 = vrot.slane %v652, 4
  %v655 = vshll.u32 %v195, 16
  %v657 = vrot.slane %v655, 5
  %v658 = vor.u32 %v654, %v657
  %v659 = vrot.slane %v658, 4
  %v661 = vshll.u32 %v196, 16
  %v663 = vrot.slane %v661, 5
  %v664 = vsel %vm242, %v659, %v663
  %v665 = vshrl.u32 %v196, 16
  %v667 = vrot.slane %v665, 4
  %v668 = vor.u32 %v667, %v663
  %v669 = vrot.slane %v668, 4
  %v671 = vshll.u32 %v197, 16
  %v673 = vrot.slane %v671, 5
  %v674 = vsel %vm242, %v669, %v673
  %v676 = vshrl.u32 %v198, 16
  %v678 = vrot.slane %v676, 4
  %v679 = vshll.u32 %v198, 16
  %v681 = vrot.slane %v679, 5
  %v682 = vor.u32 %v678, %v681
  %v683 = vrot.slane %v682, 4
  %v685 = vshll.u32 %v199, 16
  %v687 = vrot.slane %v685, 5
  %v688 = vsel %vm242, %v683, %v687
  %v689 = vshrl.u32 %v199, 16
  %v691 = vrot.slane %v689, 4
  %v692 = vor.u32 %v691, %v687
  %v693 = vrot.slane %v692, 4
  %v695 = vshll.u32 %v200, 16
  %v697 = vrot.slane %v695, 5
  %v698 = vsel %vm242, %v693, %v697
  %v700 = vshrl.u32 %v201, 16
  %v702 = vrot.slane %v700, 4
  %v703 = vshll.u32 %v201, 16
  %v705 = vrot.slane %v703, 5
  %v706 = vor.u32 %v702, %v705
  %v707 = vrot.slane %v706, 4
  %v709 = vshll.u32 %v202, 16
  %v711 = vrot.slane %v709, 5
  %v712 = vsel %vm242, %v707, %v711
  %v713 = vshrl.u32 %v202, 16
  %v715 = vrot.slane %v713, 4
  %v716 = vor.u32 %v715, %v711
  %v717 = vrot.slane %v716, 4
  %v719 = vshll.u32 %v203, 16
  %v721 = vrot.slane %v719, 5
  %v722 = vsel %vm242, %v717, %v721
  %v724 = vshrl.u32 %v204, 16
  %v726 = vrot.slane %v724, 4
  %v727 = vshll.u32 %v204, 16
  %v729 = vrot.slane %v727, 5
  %v730 = vor.u32 %v726, %v729
  %v731 = vrot.slane %v730, 4
  %v733 = vshll.u32 %v205, 16
  %v735 = vrot.slane %v733, 5
  %v736 = vsel %vm242, %v731, %v735
  %v737 = vshrl.u32 %v205, 16
  %v739 = vrot.slane %v737, 4
  %v740 = vor.u32 %v739, %v735
  %v741 = vrot.slane %v740, 4
  %v743 = vshll.u32 %v206, 16
  %v745 = vrot.slane %v743, 5
  %v746 = vsel %vm242, %v741, %v745
  %v748 = vshrl.u32 %v207, 16
  %v750 = vrot.slane %v748, 4
  %v751 = vshll.u32 %v207, 16
  %v753 = vrot.slane %v751, 5
  %v754 = vor.u32 %v750, %v753
  %v755 = vrot.slane %v754, 4
  %v757 = vshll.u32 %v208, 16
  %v759 = vrot.slane %v757, 5
  %v760 = vsel %vm242, %v755, %v759
  %v761 = vshrl.u32 %v208, 16
  %v763 = vrot.slane %v761, 4
  %v764 = vor.u32 %v763, %v759
  %v765 = vrot.slane %v764, 4
  %v767 = vshll.u32 %v209, 16
  %v769 = vrot.slane %v767, 5
  %v770 = vsel %vm242, %v765, %v769
  %v772 = vshrl.u32 %v210, 16
  %v774 = vrot.slane %v772, 4
  %v775 = vshll.u32 %v210, 16
  %v777 = vrot.slane %v775, 5
  %v778 = vor.u32 %v774, %v777
  %v779 = vrot.slane %v778, 4
  %v781 = vshll.u32 %v211, 16
  %v783 = vrot.slane %v781, 5
  %v784 = vsel %vm242, %v779, %v783
  %v785 = vshrl.u32 %v211, 16
  %v787 = vrot.slane %v785, 4
  %v788 = vor.u32 %v787, %v783
  %v789 = vrot.slane %v788, 4
  %v791 = vshll.u32 %v212, 16
  %v793 = vrot.slane %v791, 5
  %v794 = vsel %vm242, %v789, %v793
  %v796 = vshrl.u32 %v213, 16
  %v798 = vrot.slane %v796, 4
  %v799 = vshll.u32 %v213, 16
  %v801 = vrot.slane %v799, 5
  %v802 = vor.u32 %v798, %v801
  %v803 = vrot.slane %v802, 4
  %v805 = vshll.u32 %v214, 16
  %v807 = vrot.slane %v805, 5
  %v808 = vsel %vm242, %v803, %v807
  %v809 = vshrl.u32 %v214, 16
  %v811 = vrot.slane %v809, 4
  %v812 = vor.u32 %v811, %v807
  %v813 = vrot.slane %v812, 4
  %v815 = vshll.u32 %v215, 16
  %v817 = vrot.slane %v815, 5
  %v818 = vsel %vm242, %v813, %v817
  %v820 = vshrl.u32 %v216, 16
  %v822 = vrot.slane %v820, 4
  %v823 = vshll.u32 %v216, 16
  %v825 = vrot.slane %v823, 5
  %v826 = vor.u32 %v822, %v825
  %v827 = vrot.slane %v826, 4
  %v829 = vshll.u32 %v217, 16
  %v831 = vrot.slane %v829, 5
  %v832 = vsel %vm242, %v827, %v831
  %v833 = vshrl.u32 %v217, 16
  %v835 = vrot.slane %v833, 4
  %v836 = vor.u32 %v835, %v831
  %v837 = vrot.slane %v836, 4
  %v839 = vshll.u32 %v218, 16
  %v841 = vrot.slane %v839, 5
  %v842 = vsel %vm242, %v837, %v841
  %v844 = vshrl.u32 %v219, 16
  %v846 = vrot.slane %v844, 4
  %v847 = vshll.u32 %v219, 16
  %v849 = vrot.slane %v847, 5
  %v850 = vor.u32 %v846, %v849
  %v851 = vrot.slane %v850, 4
  %v853 = vshll.u32 %v220, 16
  %v855 = vrot.slane %v853, 5
  %v856 = vsel %vm242, %v851, %v855
  %v857 = vshrl.u32 %v220, 16
  %v859 = vrot.slane %v857, 4
  %v860 = vor.u32 %v859, %v855
  %v861 = vrot.slane %v860, 4
  %v863 = vshll.u32 %v221, 16
  %v865 = vrot.slane %v863, 5
  %v866 = vsel %vm242, %v861, %v865
  %v868 = vshrl.u32 %v222, 16
  %v870 = vrot.slane %v868, 4
  %v871 = vshll.u32 %v222, 16
  %v873 = vrot.slane %v871, 5
  %v874 = vor.u32 %v870, %v873
  %v875 = vrot.slane %v874, 4
  %v877 = vshll.u32 %v223, 16
  %v879 = vrot.slane %v877, 5
  %v880 = vsel %vm242, %v875, %v879
  %v881 = vshrl.u32 %v223, 16
  %v883 = vrot.slane %v881, 4
  %v884 = vor.u32 %v883, %v879
  %v885 = vrot.slane %v884, 4
  %v887 = vshll.u32 %v224, 16
  %v889 = vrot.slane %v887, 5
  %v890 = vsel %vm242, %v885, %v889
  %v892 = vshrl.u32 %v225, 16
  %v894 = vrot.slane %v892, 4
  %v895 = vshll.u32 %v225, 16
  %v897 = vrot.slane %v895, 5
  %v898 = vor.u32 %v894, %v897
  %v899 = vrot.slane %v898, 4
  %v901 = vshll.u32 %v226, 16
  %v903 = vrot.slane %v901, 5
  %v904 = vsel %vm242, %v899, %v903
  %v905 = vshrl.u32 %v226, 16
  %v907 = vrot.slane %v905, 4
  %v908 = vor.u32 %v907, %v903
  %v909 = vrot.slane %v908, 4
  %v911 = vshll.u32 %v227, 16
  %v913 = vrot.slane %v911, 5
  %v914 = vsel %vm242, %v909, %v913
  %v916 = vshrl.u32 %v228, 16
  %v918 = vrot.slane %v916, 4
  %v919 = vshll.u32 %v228, 16
  %v921 = vrot.slane %v919, 5
  %v922 = vor.u32 %v918, %v921
  %v923 = vrot.slane %v922, 4
  %v925 = vshll.u32 %v229, 16
  %v927 = vrot.slane %v925, 5
  %v928 = vsel %vm242, %v923, %v927
  %v929 = vshrl.u32 %v229, 16
  %v931 = vrot.slane %v929, 4
  %v932 = vor.u32 %v931, %v927
  %v933 = vrot.slane %v932, 4
  %v935 = vshll.u32 %v230, 16
  %v937 = vrot.slane %v935, 5
  %v938 = vsel %vm242, %v933, %v937
  %v940 = vshrl.u32 %v231, 16
  %v942 = vrot.slane %v940, 4
  %v943 = vshll.u32 %v231, 16
  %v945 = vrot.slane %v943, 5
  %v946 = vor.u32 %v942, %v945
  %v947 = vrot.slane %v946, 4
  %v949 = vshll.u32 %v232, 16
  %v951 = vrot.slane %v949, 5
  %v952 = vsel %vm242, %v947, %v951
  %v953 = vshrl.u32 %v232, 16
  %v955 = vrot.slane %v953, 4
  %v956 = vor.u32 %v955, %v951
  %v957 = vrot.slane %v956, 4
  %v959 = vshll.u32 %v233, 16
  %v961 = vrot.slane %v959, 5
  %v962 = vsel %vm242, %v957, %v961
  %v964 = vshrl.u32 %v234, 16
  %v966 = vrot.slane %v964, 4
  %v967 = vshll.u32 %v234, 16
  %v969 = vrot.slane %v967, 5
  %v970 = vor.u32 %v966, %v969
  %v971 = vrot.slane %v970, 4
  %v973 = vshll.u32 %v235, 16
  %v975 = vrot.slane %v973, 5
  %v976 = vsel %vm242, %v971, %v975
  %v977 = vshrl.u32 %v235, 16
  %v979 = vrot.slane %v977, 4
  %v980 = vor.u32 %v979, %v975
  %v981 = vrot.slane %v980, 4
  %v983 = vshll.u32 %v236, 16
  %v985 = vrot.slane %v983, 5
  %v986 = vsel %vm242, %v981, %v985
  %v988 = vshrl.u32 %v237, 16
  %v990 = vrot.slane %v988, 4
  %v991 = vshll.u32 %v237, 16
  %v993 = vrot.slane %v991, 5
  %v994 = vor.u32 %v990, %v993
  %v995 = vrot.slane %v994, 4
  %v997 = vshll.u32 %v238, 16
  %v999 = vrot.slane %v997, 5
  %v1000 = vsel %vm242, %v995, %v999
  %v1001 = vshrl.u32 %v238, 16
  %v1003 = vrot.slane %v1001, 4
  %v1004 = vor.u32 %v1003, %v999
  %v1005 = vrot.slane %v1004, 4
  %v1007 = vshll.u32 %v239, 16
  %v1009 = vrot.slane %v1007, 5
  %v1010 = vsel %vm242, %v1005, %v1009
  %1011 = vrot.lane.b32.xlu0 %v256, 4
  %v1012 = vpop.permute.xlu0 %1011
  %1013 = vrot.lane.b32.xlu0 %v266, 4
  %v1014 = vpop.permute.xlu0 %1013
  %1015 = vrot.lane.b32.xlu0 %v280, 4
  %v1016 = vpop.permute.xlu0 %1015
  %1017 = vrot.lane.b32.xlu0 %v290, 4
  %v1018 = vpop.permute.xlu0 %1017
  %1019 = vrot.lane.b32.xlu0 %v304, 4
  %v1020 = vpop.permute.xlu0 %1019
  %1021 = vrot.lane.b32.xlu0 %v314, 4
  %v1022 = vpop.permute.xlu0 %1021
  %1023 = vrot.lane.b32.xlu0 %v328, 4
  %v1024 = vpop.permute.xlu0 %1023
  %1025 = vrot.lane.b32.xlu0 %v338, 4
  %v1026 = vpop.permute.xlu0 %1025
  %1027 = vrot.lane.b32.xlu0 %v352, 4
  %v1028 = vpop.permute.xlu0 %1027
  %1029 = vrot.lane.b32.xlu0 %v362, 4
  %v1030 = vpop.permute.xlu0 %1029
  %1031 = vrot.lane.b32.xlu0 %v376, 4
  %v1032 = vpop.permute.xlu0 %1031
  %1033 = vrot.lane.b32.xlu0 %v386, 4
  %v1034 = vpop.permute.xlu0 %1033
  %1035 = vrot.lane.b32.xlu0 %v400, 4
  %v1036 = vpop.permute.xlu0 %1035
  %1037 = vrot.lane.b32.xlu0 %v410, 4
  %v1038 = vpop.permute.xlu0 %1037
  %1039 = vrot.lane.b32.xlu0 %v424, 4
  %v1040 = vpop.permute.xlu0 %1039
  %1041 = vrot.lane.b32.xlu0 %v434, 4
  %v1042 = vpop.permute.xlu0 %1041
  %1043 = vrot.lane.b32.xlu0 %v448, 4
  %v1044 = vpop.permute.xlu0 %1043
  %1045 = vrot.lane.b32.xlu0 %v458, 4
  %v1046 = vpop.permute.xlu0 %1045
  %1047 = vrot.lane.b32.xlu0 %v472, 4
  %v1048 = vpop.permute.xlu0 %1047
  %1049 = vrot.lane.b32.xlu0 %v482, 4
  %v1050 = vpop.permute.xlu0 %1049
  %1051 = vrot.lane.b32.xlu0 %v496, 4
  %v1052 = vpop.permute.xlu0 %1051
  %1053 = vrot.lane.b32.xlu0 %v506, 4
  %v1054 = vpop.permute.xlu0 %1053
  %1055 = vrot.lane.b32.xlu0 %v520, 4
  %v1056 = vpop.permute.xlu0 %1055
  %1057 = vrot.lane.b32.xlu0 %v530, 4
  %v1058 = vpop.permute.xlu0 %1057
  %1059 = vrot.lane.b32.xlu0 %v544, 4
  %v1060 = vpop.permute.xlu0 %1059
  %1061 = vrot.lane.b32.xlu0 %v554, 4
  %v1062 = vpop.permute.xlu0 %1061
  %1063 = vrot.lane.b32.xlu0 %v568, 4
  %v1064 = vpop.permute.xlu0 %1063
  %1065 = vrot.lane.b32.xlu0 %v578, 4
  %v1066 = vpop.permute.xlu0 %1065
  %1067 = vrot.lane.b32.xlu0 %v592, 4
  %v1068 = vpop.permute.xlu0 %1067
  %1069 = vrot.lane.b32.xlu0 %v602, 4
  %v1070 = vpop.permute.xlu0 %1069
  %1071 = vrot.lane.b32.xlu0 %v616, 4
  %v1072 = vpop.permute.xlu0 %1071
  %1073 = vrot.lane.b32.xlu0 %v626, 4
  %v1074 = vpop.permute.xlu0 %1073
  %1075 = vrot.lane.b32.xlu0 %v640, 4
  %v1076 = vpop.permute.xlu0 %1075
  %1077 = vrot.lane.b32.xlu0 %v650, 4
  %v1078 = vpop.permute.xlu0 %1077
  %1079 = vrot.lane.b32.xlu0 %v664, 4
  %v1080 = vpop.permute.xlu0 %1079
  %1081 = vrot.lane.b32.xlu0 %v674, 4
  %v1082 = vpop.permute.xlu0 %1081
  %1083 = vrot.lane.b32.xlu0 %v688, 4
  %v1084 = vpop.permute.xlu0 %1083
  %1085 = vrot.lane.b32.xlu0 %v698, 4
  %v1086 = vpop.permute.xlu0 %1085
  %1087 = vrot.lane.b32.xlu0 %v712, 4
  %v1088 = vpop.permute.xlu0 %1087
  %1089 = vrot.lane.b32.xlu0 %v722, 4
  %v1090 = vpop.permute.xlu0 %1089
  %1091 = vrot.lane.b32.xlu0 %v736, 4
  %v1092 = vpop.permute.xlu0 %1091
  %1093 = vrot.lane.b32.xlu0 %v746, 4
  %v1094 = vpop.permute.xlu0 %1093
  %1095 = vrot.lane.b32.xlu0 %v760, 4
  %v1096 = vpop.permute.xlu0 %1095
  %1097 = vrot.lane.b32.xlu0 %v770, 4
  %v1098 = vpop.permute.xlu0 %1097
  %1099 = vrot.lane.b32.xlu0 %v784, 4
  %v1100 = vpop.permute.xlu0 %1099
  %1101 = vrot.lane.b32.xlu0 %v794, 4
  %v1102 = vpop.permute.xlu0 %1101
  %1103 = vrot.lane.b32.xlu0 %v808, 4
  %v1104 = vpop.permute.xlu0 %1103
  %1105 = vrot.lane.b32.xlu0 %v818, 4
  %v1106 = vpop.permute.xlu0 %1105
  %1107 = vrot.lane.b32.xlu0 %v832, 4
  %v1108 = vpop.permute.xlu0 %1107
  %1109 = vrot.lane.b32.xlu0 %v842, 4
  %v1110 = vpop.permute.xlu0 %1109
  %1111 = vrot.lane.b32.xlu0 %v856, 4
  %v1112 = vpop.permute.xlu0 %1111
  %1113 = vrot.lane.b32.xlu0 %v866, 4
  %v1114 = vpop.permute.xlu0 %1113
  %1115 = vrot.lane.b32.xlu0 %v880, 4
  %v1116 = vpop.permute.xlu0 %1115
  %1117 = vrot.lane.b32.xlu0 %v890, 4
  %v1118 = vpop.permute.xlu0 %1117
  %1119 = vrot.lane.b32.xlu0 %v904, 4
  %v1120 = vpop.permute.xlu0 %1119
  %1121 = vrot.lane.b32.xlu0 %v914, 4
  %v1122 = vpop.permute.xlu0 %1121
  %1123 = vrot.lane.b32.xlu0 %v928, 4
  %v1124 = vpop.permute.xlu0 %1123
  %1125 = vrot.lane.b32.xlu0 %v938, 4
  %v1126 = vpop.permute.xlu0 %1125
  %1127 = vrot.lane.b32.xlu0 %v952, 4
  %v1128 = vpop.permute.xlu0 %1127
  %1129 = vrot.lane.b32.xlu0 %v962, 4
  %v1130 = vpop.permute.xlu0 %1129
  %1131 = vrot.lane.b32.xlu0 %v976, 4
  %v1132 = vpop.permute.xlu0 %1131
  %1133 = vrot.lane.b32.xlu0 %v986, 4
  %v1134 = vpop.permute.xlu0 %1133
  %1135 = vrot.lane.b32.xlu0 %v1000, 4
  %v1136 = vpop.permute.xlu0 %1135
  %1137 = vrot.lane.b32.xlu0 %v1010, 4
  %v1138 = vpop.permute.xlu0 %1137
  %vm1203 = vcmask 60448
  %1204 = vst.msk [vmem:[#allocation2] sm:$0xf] %vm1203, %v1012
  %1205 = vst.msk [vmem:[#allocation2 + $0x4] sm:$0xf] %vm1203, %v1014
  %1206 = vst.msk [vmem:[#allocation2 + $0x8] sm:$0xf] %vm1203, %v1016
  %1207 = vst.msk [vmem:[#allocation2 + $0xc] sm:$0xf] %vm1203, %v1018
  %1208 = vst.msk [vmem:[#allocation2 + $0x10] sm:$0xf] %vm1203, %v1020
  %1209 = vst.msk [vmem:[#allocation2 + $0x14] sm:$0xf] %vm1203, %v1022
  %1210 = vst.msk [vmem:[#allocation2 + $0x18] sm:$0xf] %vm1203, %v1024
  %1211 = vst.msk [vmem:[#allocation2 + $0x1c] sm:$0xf] %vm1203, %v1026
  %1212 = vst.msk [vmem:[#allocation2 + $0x20] sm:$0xf] %vm1203, %v1028
  %1213 = vst.msk [vmem:[#allocation2 + $0x24] sm:$0xf] %vm1203, %v1030
  %1214 = vst.msk [vmem:[#allocation2 + $0x28] sm:$0xf] %vm1203, %v1032
  %1215 = vst.msk [vmem:[#allocation2 + $0x2c] sm:$0xf] %vm1203, %v1034
  %1216 = vst.msk [vmem:[#allocation2 + $0x30] sm:$0xf] %vm1203, %v1036
  %1217 = vst.msk [vmem:[#allocation2 + $0x34] sm:$0xf] %vm1203, %v1038
  %1218 = vst.msk [vmem:[#allocation2 + $0x38] sm:$0xf] %vm1203, %v1040
  %1219 = vst.msk [vmem:[#allocation2 + $0x3c] sm:$0xf] %vm1203, %v1042
  %1220 = vst.msk [vmem:[#allocation2 + $0x40] sm:$0xf] %vm1203, %v1044
  %1221 = vst.msk [vmem:[#allocation2 + $0x44] sm:$0xf] %vm1203, %v1046
  %1222 = vst.msk [vmem:[#allocation2 + $0x48] sm:$0xf] %vm1203, %v1048
  %1223 = vst.msk [vmem:[#allocation2 + $0x4c] sm:$0xf] %vm1203, %v1050
  %1224 = vst.msk [vmem:[#allocation2 + $0x50] sm:$0xf] %vm1203, %v1052
  %1225 = vst.msk [vmem:[#allocation2 + $0x54] sm:$0xf] %vm1203, %v1054
  %1226 = vst.msk [vmem:[#allocation2 + $0x58] sm:$0xf] %vm1203, %v1056
  %1227 = vst.msk [vmem:[#allocation2 + $0x5c] sm:$0xf] %vm1203, %v1058
  %1228 = vst.msk [vmem:[#allocation2 + $0x60] sm:$0xf] %vm1203, %v1060
  %1229 = vst.msk [vmem:[#allocation2 + $0x64] sm:$0xf] %vm1203, %v1062
  %1230 = vst.msk [vmem:[#allocation2 + $0x68] sm:$0xf] %vm1203, %v1064
  %1231 = vst.msk [vmem:[#allocation2 + $0x6c] sm:$0xf] %vm1203, %v1066
  %1232 = vst.msk [vmem:[#allocation2 + $0x70] sm:$0xf] %vm1203, %v1068
  %1233 = vst.msk [vmem:[#allocation2 + $0x74] sm:$0xf] %vm1203, %v1070
  %1234 = vst.msk [vmem:[#allocation2 + $0x78] sm:$0xf] %vm1203, %v1072
  %1235 = vst.msk [vmem:[#allocation2 + $0x7c] sm:$0xf] %vm1203, %v1074
  %1236 = vst.msk [vmem:[#allocation2 + $0x80] sm:$0xf] %vm1203, %v1076
  %1237 = vst.msk [vmem:[#allocation2 + $0x84] sm:$0xf] %vm1203, %v1078
  %1238 = vst.msk [vmem:[#allocation2 + $0x88] sm:$0xf] %vm1203, %v1080
  %1239 = vst.msk [vmem:[#allocation2 + $0x8c] sm:$0xf] %vm1203, %v1082
  %1240 = vst.msk [vmem:[#allocation2 + $0x90] sm:$0xf] %vm1203, %v1084
  %1241 = vst.msk [vmem:[#allocation2 + $0x94] sm:$0xf] %vm1203, %v1086
  %1242 = vst.msk [vmem:[#allocation2 + $0x98] sm:$0xf] %vm1203, %v1088
  %1243 = vst.msk [vmem:[#allocation2 + $0x9c] sm:$0xf] %vm1203, %v1090
  %1244 = vst.msk [vmem:[#allocation2 + $0xa0] sm:$0xf] %vm1203, %v1092
  %1245 = vst.msk [vmem:[#allocation2 + $0xa4] sm:$0xf] %vm1203, %v1094
  %1246 = vst.msk [vmem:[#allocation2 + $0xa8] sm:$0xf] %vm1203, %v1096
  %1247 = vst.msk [vmem:[#allocation2 + $0xac] sm:$0xf] %vm1203, %v1098
  %1248 = vst.msk [vmem:[#allocation2 + $0xb0] sm:$0xf] %vm1203, %v1100
  %1249 = vst.msk [vmem:[#allocation2 + $0xb4] sm:$0xf] %vm1203, %v1102
  %1250 = vst.msk [vmem:[#allocation2 + $0xb8] sm:$0xf] %vm1203, %v1104
  %1251 = vst.msk [vmem:[#allocation2 + $0xbc] sm:$0xf] %vm1203, %v1106
  %1252 = vst.msk [vmem:[#allocation2 + $0xc0] sm:$0xf] %vm1203, %v1108
  %1253 = vst.msk [vmem:[#allocation2 + $0xc4] sm:$0xf] %vm1203, %v1110
  %1254 = vst.msk [vmem:[#allocation2 + $0xc8] sm:$0xf] %vm1203, %v1112
  %1255 = vst.msk [vmem:[#allocation2 + $0xcc] sm:$0xf] %vm1203, %v1114
  %1256 = vst.msk [vmem:[#allocation2 + $0xd0] sm:$0xf] %vm1203, %v1116
  %1257 = vst.msk [vmem:[#allocation2 + $0xd4] sm:$0xf] %vm1203, %v1118
  %1258 = vst.msk [vmem:[#allocation2 + $0xd8] sm:$0xf] %vm1203, %v1120
  %1259 = vst.msk [vmem:[#allocation2 + $0xdc] sm:$0xf] %vm1203, %v1122
  %1260 = vst.msk [vmem:[#allocation2 + $0xe0] sm:$0xf] %vm1203, %v1124
  %1261 = vst.msk [vmem:[#allocation2 + $0xe4] sm:$0xf] %vm1203, %v1126
  %1262 = vst.msk [vmem:[#allocation2 + $0xe8] sm:$0xf] %vm1203, %v1128
  %1263 = vst.msk [vmem:[#allocation2 + $0xec] sm:$0xf] %vm1203, %v1130
  %1264 = vst.msk [vmem:[#allocation2 + $0xf0] sm:$0xf] %vm1203, %v1132
  %1265 = vst.msk [vmem:[#allocation2 + $0xf4] sm:$0xf] %vm1203, %v1134
  %1266 = vst.msk [vmem:[#allocation2 + $0xf8] sm:$0xf] %vm1203, %v1136
  %1267 = vst.msk [vmem:[#allocation2 + $0xfc] sm:$0xf] %vm1203, %v1138
  %v1268 = vld [vmem:[%s0] sm:$0xe]
  %v1269 = vld [vmem:[%s0 + $0x4] sm:$0xf]
  %v1270 = vld [vmem:[%s0 + $0x8] sm:$0x1]
  %v1271 = vld [vmem:[%s0 + $0xc] sm:$0xe]
  %v1272 = vld [vmem:[%s0 + $0x10] sm:$0xf]
  %v1273 = vld [vmem:[%s0 + $0x14] sm:$0x1]
  %v1274 = vld [vmem:[%s0 + $0x18] sm:$0xe]
  %v1275 = vld [vmem:[%s0 + $0x1c] sm:$0xf]
  %v1276 = vld [vmem:[%s0 + $0x20] sm:$0x1]
  %v1277 = vld [vmem:[%s0 + $0x24] sm:$0xe]
  %v1278 = vld [vmem:[%s0 + $0x28] sm:$0xf]
  %v1279 = vld [vmem:[%s0 + $0x2c] sm:$0x1]
  %v1280 = vld [vmem:[%s0 + $0x30] sm:$0xe]
  %v1281 = vld [vmem:[%s0 + $0x34] sm:$0xf]
  %v1282 = vld [vmem:[%s0 + $0x38] sm:$0x1]
  %v1283 = vld [vmem:[%s0 + $0x3c] sm:$0xe]
  %v1284 = vld [vmem:[%s0 + $0x40] sm:$0xf]
  %v1285 = vld [vmem:[%s0 + $0x44] sm:$0x1]
  %v1286 = vld [vmem:[%s0 + $0x48] sm:$0xe]
  %v1287 = vld [vmem:[%s0 + $0x4c] sm:$0xf]
  %v1288 = vld [vmem:[%s0 + $0x50] sm:$0x1]
  %v1289 = vld [vmem:[%s0 + $0x54] sm:$0xe]
  %v1290 = vld [vmem:[%s0 + $0x58] sm:$0xf]
  %v1291 = vld [vmem:[%s0 + $0x5c] sm:$0x1]
  %v1292 = vld [vmem:[%s0 + $0x60] sm:$0xe]
  %v1293 = vld [vmem:[%s0 + $0x64] sm:$0xf]
  %v1294 = vld [vmem:[%s0 + $0x68] sm:$0x1]
  %v1295 = vld [vmem:[%s0 + $0x6c] sm:$0xe]
  %v1296 = vld [vmem:[%s0 + $0x70] sm:$0xf]
  %v1297 = vld [vmem:[%s0 + $0x74] sm:$0x1]
  %v1298 = vld [vmem:[%s0 + $0x78] sm:$0xe]
  %v1299 = vld [vmem:[%s0 + $0x7c] sm:$0xf]
  %v1300 = vld [vmem:[%s0 + $0x80] sm:$0x1]
  %v1301 = vld [vmem:[%s0 + $0x84] sm:$0xe]
  %v1302 = vld [vmem:[%s0 + $0x88] sm:$0xf]
  %v1303 = vld [vmem:[%s0 + $0x8c] sm:$0x1]
  %v1304 = vld [vmem:[%s0 + $0x90] sm:$0xe]
  %v1305 = vld [vmem:[%s0 + $0x94] sm:$0xf]
  %v1306 = vld [vmem:[%s0 + $0x98] sm:$0x1]
  %v1307 = vld [vmem:[%s0 + $0x9c] sm:$0xe]
  %v1308 = vld [vmem:[%s0 + $0xa0] sm:$0xf]
  %v1309 = vld [vmem:[%s0 + $0xa4] sm:$0x1]
  %v1310 = vld [vmem:[%s0 + $0xa8] sm:$0xe]
  %v1311 = vld [vmem:[%s0 + $0xac] sm:$0xf]
  %v1312 = vld [vmem:[%s0 + $0xb0] sm:$0x1]
  %v1313 = vld [vmem:[%s0 + $0xb4] sm:$0xe]
  %v1314 = vld [vmem:[%s0 + $0xb8] sm:$0xf]
  %v1315 = vld [vmem:[%s0 + $0xbc] sm:$0x1]
  %v1316 = vld [vmem:[%s0 + $0xd8] sm:$0xe]
  %v1317 = vld [vmem:[%s0 + $0xdc] sm:$0xf]
  %v1318 = vld [vmem:[%s0 + $0xe0] sm:$0x1]
  %v1319 = vld [vmem:[%s0 + $0xe4] sm:$0xe]
  %v1320 = vld [vmem:[%s0 + $0xe8] sm:$0xf]
  %v1321 = vld [vmem:[%s0 + $0xec] sm:$0x1]
  %v1322 = vld [vmem:[%s0 + $0xf0] sm:$0xe]
  %v1323 = vld [vmem:[%s0 + $0xf4] sm:$0xf]
  %v1324 = vld [vmem:[%s0 + $0xf8] sm:$0x1]
  %v1325 = vld [vmem:[%s0 + $0xfc] sm:$0xe]
  %v1326 = vld [vmem:[%s0 + $0x100] sm:$0xf]
  %v1327 = vld [vmem:[%s0 + $0x104] sm:$0x1]
  %v1328 = vld [vmem:[%s0 + $0x108] sm:$0xe]
  %v1329 = vld [vmem:[%s0 + $0x10c] sm:$0xf]
  %v1330 = vld [vmem:[%s0 + $0x110] sm:$0x1]
  %v1331 = vld [vmem:[%s0 + $0x114] sm:$0xe]
  %v1332 = vld [vmem:[%s0 + $0x118] sm:$0xf]
  %v1333 = vld [vmem:[%s0 + $0x11c] sm:$0x1]
  %v1334 = vld [vmem:[%s0 + $0x120] sm:$0xe]
  %v1335 = vld [vmem:[%s0 + $0x124] sm:$0xf]
  %v1336 = vld [vmem:[%s0 + $0x128] sm:$0x1]
  %v1337 = vld [vmem:[%s0 + $0x12c] sm:$0xe]
  %v1338 = vld [vmem:[%s0 + $0x130] sm:$0xf]
  %v1339 = vld [vmem:[%s0 + $0x134] sm:$0x1]
  %v1340 = vld [vmem:[%s0 + $0x138] sm:$0xe]
  %v1341 = vld [vmem:[%s0 + $0x13c] sm:$0xf]
  %v1342 = vld [vmem:[%s0 + $0x140] sm:$0x1]
  %v1343 = vld [vmem:[%s0 + $0x144] sm:$0xe]
  %v1344 = vld [vmem:[%s0 + $0x148] sm:$0xf]
  %v1345 = vld [vmem:[%s0 + $0x14c] sm:$0x1]
  %v1346 = vld [vmem:[%s0 + $0x150] sm:$0xe]
  %v1347 = vld [vmem:[%s0 + $0x154] sm:$0xf]
  %v1348 = vld [vmem:[%s0 + $0x158] sm:$0x1]
  %v1349 = vld [vmem:[%s0 + $0x15c] sm:$0xe]
  %v1350 = vld [vmem:[%s0 + $0x160] sm:$0xf]
  %v1351 = vld [vmem:[%s0 + $0x164] sm:$0x1]
  %v1352 = vld [vmem:[%s0 + $0x168] sm:$0xe]
  %v1353 = vld [vmem:[%s0 + $0x16c] sm:$0xf]
  %v1354 = vld [vmem:[%s0 + $0x170] sm:$0x1]
  %v1355 = vld [vmem:[%s0 + $0x174] sm:$0xe]
  %v1356 = vld [vmem:[%s0 + $0x178] sm:$0xf]
  %v1357 = vld [vmem:[%s0 + $0x17c] sm:$0x1]
  %v1358 = vld [vmem:[%s0 + $0x180] sm:$0xe]
  %v1359 = vld [vmem:[%s0 + $0x184] sm:$0xf]
  %v1360 = vld [vmem:[%s0 + $0x188] sm:$0x1]
  %v1361 = vld [vmem:[%s0 + $0x18c] sm:$0xe]
  %v1362 = vld [vmem:[%s0 + $0x190] sm:$0xf]
  %v1363 = vld [vmem:[%s0 + $0x194] sm:$0x1]
  %vm1460 = vcmask 1042432
  %vm1461 = vcmask 1046532
  %vm1462 = vmor %vm1460, %vm1461
  %v1463 = vrot.slane %v1268, 5
  %v1464 = vrot.slane %v1463, 4
  %v1465 = vrot.slane %v1269, 5
  %v1466 = vsel %vm1462, %v1464, %v1465
  %v1467 = vrot.slane %v1465, 4
  %v1468 = vrot.slane %v1270, 5
  %v1469 = vsel %vm1462, %v1467, %v1468
  %v1470 = vrot.slane %v1271, 5
  %v1471 = vrot.slane %v1470, 4
  %v1472 = vrot.slane %v1272, 5
  %v1473 = vsel %vm1462, %v1471, %v1472
  %v1474 = vrot.slane %v1472, 4
  %v1475 = vrot.slane %v1273, 5
  %v1476 = vsel %vm1462, %v1474, %v1475
  %v1477 = vrot.slane %v1274, 5
  %v1478 = vrot.slane %v1477, 4
  %v1479 = vrot.slane %v1275, 5
  %v1480 = vsel %vm1462, %v1478, %v1479
  %v1481 = vrot.slane %v1479, 4
  %v1482 = vrot.slane %v1276, 5
  %v1483 = vsel %vm1462, %v1481, %v1482
  %v1484 = vrot.slane %v1277, 5
  %v1485 = vrot.slane %v1484, 4
  %v1486 = vrot.slane %v1278, 5
  %v1487 = vsel %vm1462, %v1485, %v1486
  %v1488 = vrot.slane %v1486, 4
  %v1489 = vrot.slane %v1279, 5
  %v1490 = vsel %vm1462, %v1488, %v1489
  %v1491 = vrot.slane %v1280, 5
  %v1492 = vrot.slane %v1491, 4
  %v1493 = vrot.slane %v1281, 5
  %v1494 = vsel %vm1462, %v1492, %v1493
  %v1495 = vrot.slane %v1493, 4
  %v1496 = vrot.slane %v1282, 5
  %v1497 = vsel %vm1462, %v1495, %v1496
  %v1498 = vrot.slane %v1283, 5
  %v1499 = vrot.slane %v1498, 4
  %v1500 = vrot.slane %v1284, 5
  %v1501 = vsel %vm1462, %v1499, %v1500
  %v1502 = vrot.slane %v1500, 4
  %v1503 = vrot.slane %v1285, 5
  %v1504 = vsel %vm1462, %v1502, %v1503
  %v1505 = vrot.slane %v1286, 5
  %v1506 = vrot.slane %v1505, 4
  %v1507 = vrot.slane %v1287, 5
  %v1508 = vsel %vm1462, %v1506, %v1507
  %v1509 = vrot.slane %v1507, 4
  %v1510 = vrot.slane %v1288, 5
  %v1511 = vsel %vm1462, %v1509, %v1510
  %v1512 = vrot.slane %v1289, 5
  %v1513 = vrot.slane %v1512, 4
  %v1514 = vrot.slane %v1290, 5
  %v1515 = vsel %vm1462, %v1513, %v1514
  %v1516 = vrot.slane %v1514, 4
  %v1517 = vrot.slane %v1291, 5
  %v1518 = vsel %vm1462, %v1516, %v1517
  %v1519 = vrot.slane %v1292, 5
  %v1520 = vrot.slane %v1519, 4
  %v1521 = vrot.slane %v1293, 5
  %v1522 = vsel %vm1462, %v1520, %v1521
  %v1523 = vrot.slane %v1521, 4
  %v1524 = vrot.slane %v1294, 5
  %v1525 = vsel %vm1462, %v1523, %v1524
  %v1526 = vrot.slane %v1295, 5
  %v1527 = vrot.slane %v1526, 4
  %v1528 = vrot.slane %v1296, 5
  %v1529 = vsel %vm1462, %v1527, %v1528
  %v1530 = vrot.slane %v1528, 4
  %v1531 = vrot.slane %v1297, 5
  %v1532 = vsel %vm1462, %v1530, %v1531
  %v1533 = vrot.slane %v1298, 5
  %v1534 = vrot.slane %v1533, 4
  %v1535 = vrot.slane %v1299, 5
  %v1536 = vsel %vm1462, %v1534, %v1535
  %v1537 = vrot.slane %v1535, 4
  %v1538 = vrot.slane %v1300, 5
  %v1539 = vsel %vm1462, %v1537, %v1538
  %v1540 = vrot.slane %v1301, 5
  %v1541 = vrot.slane %v1540, 4
  %v1542 = vrot.slane %v1302, 5
  %v1543 = vsel %vm1462, %v1541, %v1542
  %v1544 = vrot.slane %v1542, 4
  %v1545 = vrot.slane %v1303, 5
  %v1546 = vsel %vm1462, %v1544, %v1545
  %v1547 = vrot.slane %v1304, 5
  %v1548 = vrot.slane %v1547, 4
  %v1549 = vrot.slane %v1305, 5
  %v1550 = vsel %vm1462, %v1548, %v1549
  %v1551 = vrot.slane %v1549, 4
  %v1552 = vrot.slane %v1306, 5
  %v1553 = vsel %vm1462, %v1551, %v1552
  %v1554 = vrot.slane %v1307, 5
  %v1555 = vrot.slane %v1554, 4
  %v1556 = vrot.slane %v1308, 5
  %v1557 = vsel %vm1462, %v1555, %v1556
  %v1558 = vrot.slane %v1556, 4
  %v1559 = vrot.slane %v1309, 5
  %v1560 = vsel %vm1462, %v1558, %v1559
  %v1561 = vrot.slane %v1310, 5
  %v1562 = vrot.slane %v1561, 4
  %v1563 = vrot.slane %v1311, 5
  %v1564 = vsel %vm1462, %v1562, %v1563
  %v1565 = vrot.slane %v1563, 4
  %v1566 = vrot.slane %v1312, 5
  %v1567 = vsel %vm1462, %v1565, %v1566
  %v1568 = vrot.slane %v1313, 5
  %v1569 = vrot.slane %v1568, 4
  %v1570 = vrot.slane %v1314, 5
  %v1571 = vsel %vm1462, %v1569, %v1570
  %v1572 = vrot.slane %v1570, 4
  %v1573 = vrot.slane %v1315, 5
  %v1574 = vsel %vm1462, %v1572, %v1573
  %v1575 = vrot.slane %v1316, 5
  %v1576 = vrot.slane %v1575, 4
  %v1577 = vrot.slane %v1317, 5
  %v1578 = vsel %vm1462, %v1576, %v1577
  %v1579 = vrot.slane %v1577, 4
  %v1580 = vrot.slane %v1318, 5
  %v1581 = vsel %vm1462, %v1579, %v1580
  %v1582 = vrot.slane %v1319, 5
  %v1583 = vrot.slane %v1582, 4
  %v1584 = vrot.slane %v1320, 5
  %v1585 = vsel %vm1462, %v1583, %v1584
  %v1586 = vrot.slane %v1584, 4
  %v1587 = vrot.slane %v1321, 5
  %v1588 = vsel %vm1462, %v1586, %v1587
  %v1589 = vrot.slane %v1322, 5
  %v1590 = vrot.slane %v1589, 4
  %v1591 = vrot.slane %v1323, 5
  %v1592 = vsel %vm1462, %v1590, %v1591
  %v1593 = vrot.slane %v1591, 4
  %v1594 = vrot.slane %v1324, 5
  %v1595 = vsel %vm1462, %v1593, %v1594
  %v1596 = vrot.slane %v1325, 5
  %v1597 = vrot.slane %v1596, 4
  %v1598 = vrot.slane %v1326, 5
  %v1599 = vsel %vm1462, %v1597, %v1598
  %v1600 = vrot.slane %v1598, 4
  %v1601 = vrot.slane %v1327, 5
  %v1602 = vsel %vm1462, %v1600, %v1601
  %v1603 = vrot.slane %v1328, 5
  %v1604 = vrot.slane %v1603, 4
  %v1605 = vrot.slane %v1329, 5
  %v1606 = vsel %vm1462, %v1604, %v1605
  %v1607 = vrot.slane %v1605, 4
  %v1608 = vrot.slane %v1330, 5
  %v1609 = vsel %vm1462, %v1607, %v1608
  %v1610 = vrot.slane %v1331, 5
  %v1611 = vrot.slane %v1610, 4
  %v1612 = vrot.slane %v1332, 5
  %v1613 = vsel %vm1462, %v1611, %v1612
  %v1614 = vrot.slane %v1612, 4
  %v1615 = vrot.slane %v1333, 5
  %v1616 = vsel %vm1462, %v1614, %v1615
  %v1617 = vrot.slane %v1334, 5
  %v1618 = vrot.slane %v1617, 4
  %v1619 = vrot.slane %v1335, 5
  %v1620 = vsel %vm1462, %v1618, %v1619
  %v1621 = vrot.slane %v1619, 4
  %v1622 = vrot.slane %v1336, 5
  %v1623 = vsel %vm1462, %v1621, %v1622
  %v1624 = vrot.slane %v1337, 5
  %v1625 = vrot.slane %v1624, 4
  %v1626 = vrot.slane %v1338, 5
  %v1627 = vsel %vm1462, %v1625, %v1626
  %v1628 = vrot.slane %v1626, 4
  %v1629 = vrot.slane %v1339, 5
  %v1630 = vsel %vm1462, %v1628, %v1629
  %v1631 = vrot.slane %v1340, 5
  %v1632 = vrot.slane %v1631, 4
  %v1633 = vrot.slane %v1341, 5
  %v1634 = vsel %vm1462, %v1632, %v1633
  %v1635 = vrot.slane %v1633, 4
  %v1636 = vrot.slane %v1342, 5
  %v1637 = vsel %vm1462, %v1635, %v1636
  %v1638 = vrot.slane %v1343, 5
  %v1639 = vrot.slane %v1638, 4
  %v1640 = vrot.slane %v1344, 5
  %v1641 = vsel %vm1462, %v1639, %v1640
  %v1642 = vrot.slane %v1640, 4
  %v1643 = vrot.slane %v1345, 5
  %v1644 = vsel %vm1462, %v1642, %v1643
  %v1645 = vrot.slane %v1346, 5
  %v1646 = vrot.slane %v1645, 4
  %v1647 = vrot.slane %v1347, 5
  %v1648 = vsel %vm1462, %v1646, %v1647
  %v1649 = vrot.slane %v1647, 4
  %v1650 = vrot.slane %v1348, 5
  %v1651 = vsel %vm1462, %v1649, %v1650
  %v1652 = vrot.slane %v1349, 5
  %v1653 = vrot.slane %v1652, 4
  %v1654 = vrot.slane %v1350, 5
  %v1655 = vsel %vm1462, %v1653, %v1654
  %v1656 = vrot.slane %v1654, 4
  %v1657 = vrot.slane %v1351, 5
  %v1658 = vsel %vm1462, %v1656, %v1657
  %v1659 = vrot.slane %v1352, 5
  %v1660 = vrot.slane %v1659, 4
  %v1661 = vrot.slane %v1353, 5
  %v1662 = vsel %vm1462, %v1660, %v1661
  %v1663 = vrot.slane %v1661, 4
  %v1664 = vrot.slane %v1354, 5
  %v1665 = vsel %vm1462, %v1663, %v1664
  %v1666 = vrot.slane %v1355, 5
  %v1667 = vrot.slane %v1666, 4
  %v1668 = vrot.slane %v1356, 5
  %v1669 = vsel %vm1462, %v1667, %v1668
  %v1670 = vrot.slane %v1668, 4
  %v1671 = vrot.slane %v1357, 5
  %v1672 = vsel %vm1462, %v1670, %v1671
  %v1673 = vrot.slane %v1358, 5
  %v1674 = vrot.slane %v1673, 4
  %v1675 = vrot.slane %v1359, 5
  %v1676 = vsel %vm1462, %v1674, %v1675
  %v1677 = vrot.slane %v1675, 4
  %v1678 = vrot.slane %v1360, 5
  %v1679 = vsel %vm1462, %v1677, %v1678
  %v1680 = vrot.slane %v1361, 5
  %v1681 = vrot.slane %v1680, 4
  %v1682 = vrot.slane %v1362, 5
  %v1683 = vsel %vm1462, %v1681, %v1682
  %v1684 = vrot.slane %v1682, 4
  %v1685 = vrot.slane %v1363, 5
  %v1686 = vsel %vm1462, %v1684, %v1685
  %1687 = vrot.lane.b32.xlu0 %v1466, 8
  %v1688 = vpop.permute.xlu0 %1687
  %1689 = vrot.lane.b32.xlu0 %v1469, 8
  %v1690 = vpop.permute.xlu0 %1689
  %1691 = vrot.lane.b32.xlu0 %v1473, 8
  %v1692 = vpop.permute.xlu0 %1691
  %1693 = vrot.lane.b32.xlu0 %v1476, 8
  %v1694 = vpop.permute.xlu0 %1693
  %1695 = vrot.lane.b32.xlu0 %v1480, 8
  %v1696 = vpop.permute.xlu0 %1695
  %1697 = vrot.lane.b32.xlu0 %v1483, 8
  %v1698 = vpop.permute.xlu0 %1697
  %1699 = vrot.lane.b32.xlu0 %v1487, 8
  %v1700 = vpop.permute.xlu0 %1699
  %1701 = vrot.lane.b32.xlu0 %v1490, 8
  %v1702 = vpop.permute.xlu0 %1701
  %1703 = vrot.lane.b32.xlu0 %v1494, 8
  %v1704 = vpop.permute.xlu0 %1703
  %1705 = vrot.lane.b32.xlu0 %v1497, 8
  %v1706 = vpop.permute.xlu0 %1705
  %1707 = vrot.lane.b32.xlu0 %v1501, 8
  %v1708 = vpop.permute.xlu0 %1707
  %1709 = vrot.lane.b32.xlu0 %v1504, 8
  %v1710 = vpop.permute.xlu0 %1709
  %1711 = vrot.lane.b32.xlu0 %v1508, 8
  %v1712 = vpop.permute.xlu0 %1711
  %1713 = vrot.lane.b32.xlu0 %v1511, 8
  %v1714 = vpop.permute.xlu0 %1713
  %1715 = vrot.lane.b32.xlu0 %v1515, 8
  %v1716 = vpop.permute.xlu0 %1715
  %1717 = vrot.lane.b32.xlu0 %v1518, 8
  %v1718 = vpop.permute.xlu0 %1717
  %1719 = vrot.lane.b32.xlu0 %v1522, 8
  %v1720 = vpop.permute.xlu0 %1719
  %1721 = vrot.lane.b32.xlu0 %v1525, 8
  %v1722 = vpop.permute.xlu0 %1721
  %1723 = vrot.lane.b32.xlu0 %v1529, 8
  %v1724 = vpop.permute.xlu0 %1723
  %1725 = vrot.lane.b32.xlu0 %v1532, 8
  %v1726 = vpop.permute.xlu0 %1725
  %1727 = vrot.lane.b32.xlu0 %v1536, 8
  %v1728 = vpop.permute.xlu0 %1727
  %1729 = vrot.lane.b32.xlu0 %v1539, 8
  %v1730 = vpop.permute.xlu0 %1729
  %1731 = vrot.lane.b32.xlu0 %v1543, 8
  %v1732 = vpop.permute.xlu0 %1731
  %1733 = vrot.lane.b32.xlu0 %v1546, 8
  %v1734 = vpop.permute.xlu0 %1733
  %1735 = vrot.lane.b32.xlu0 %v1550, 8
  %v1736 = vpop.permute.xlu0 %1735
  %1737 = vrot.lane.b32.xlu0 %v1553, 8
  %v1738 = vpop.permute.xlu0 %1737
  %1739 = vrot.lane.b32.xlu0 %v1557, 8
  %v1740 = vpop.permute.xlu0 %1739
  %1741 = vrot.lane.b32.xlu0 %v1560, 8
  %v1742 = vpop.permute.xlu0 %1741
  %1743 = vrot.lane.b32.xlu0 %v1564, 8
  %v1744 = vpop.permute.xlu0 %1743
  %1745 = vrot.lane.b32.xlu0 %v1567, 8
  %v1746 = vpop.permute.xlu0 %1745
  %1747 = vrot.lane.b32.xlu0 %v1571, 8
  %v1748 = vpop.permute.xlu0 %1747
  %1749 = vrot.lane.b32.xlu0 %v1574, 8
  %v1750 = vpop.permute.xlu0 %1749
  %1751 = vrot.lane.b32.xlu0 %v1578, 8
  %v1752 = vpop.permute.xlu0 %1751
  %1753 = vrot.lane.b32.xlu0 %v1581, 8
  %v1754 = vpop.permute.xlu0 %1753
  %1755 = vrot.lane.b32.xlu0 %v1585, 8
  %v1756 = vpop.permute.xlu0 %1755
  %1757 = vrot.lane.b32.xlu0 %v1588, 8
  %v1758 = vpop.permute.xlu0 %1757
  %1759 = vrot.lane.b32.xlu0 %v1592, 8
  %v1760 = vpop.permute.xlu0 %1759
  %1761 = vrot.lane.b32.xlu0 %v1595, 8
  %v1762 = vpop.permute.xlu0 %1761
  %1763 = vrot.lane.b32.xlu0 %v1599, 8
  %v1764 = vpop.permute.xlu0 %1763
  %1765 = vrot.lane.b32.xlu0 %v1602, 8
  %v1766 = vpop.permute.xlu0 %1765
  %1767 = vrot.lane.b32.xlu0 %v1606, 8
  %v1768 = vpop.permute.xlu0 %1767
  %1769 = vrot.lane.b32.xlu0 %v1609, 8
  %v1770 = vpop.permute.xlu0 %1769
  %1771 = vrot.lane.b32.xlu0 %v1613, 8
  %v1772 = vpop.permute.xlu0 %1771
  %1773 = vrot.lane.b32.xlu0 %v1616, 8
  %v1774 = vpop.permute.xlu0 %1773
  %1775 = vrot.lane.b32.xlu0 %v1620, 8
  %v1776 = vpop.permute.xlu0 %1775
  %1777 = vrot.lane.b32.xlu0 %v1623, 8
  %v1778 = vpop.permute.xlu0 %1777
  %1779 = vrot.lane.b32.xlu0 %v1627, 8
  %v1780 = vpop.permute.xlu0 %1779
  %1781 = vrot.lane.b32.xlu0 %v1630, 8
  %v1782 = vpop.permute.xlu0 %1781
  %1783 = vrot.lane.b32.xlu0 %v1634, 8
  %v1784 = vpop.permute.xlu0 %1783
  %1785 = vrot.lane.b32.xlu0 %v1637, 8
  %v1786 = vpop.permute.xlu0 %1785
  %1787 = vrot.lane.b32.xlu0 %v1641, 8
  %v1788 = vpop.permute.xlu0 %1787
  %1789 = vrot.lane.b32.xlu0 %v1644, 8
  %v1790 = vpop.permute.xlu0 %1789
  %1791 = vrot.lane.b32.xlu0 %v1648, 8
  %v1792 = vpop.permute.xlu0 %1791
  %1793 = vrot.lane.b32.xlu0 %v1651, 8
  %v1794 = vpop.permute.xlu0 %1793
  %1795 = vrot.lane.b32.xlu0 %v1655, 8
  %v1796 = vpop.permute.xlu0 %1795
  %1797 = vrot.lane.b32.xlu0 %v1658, 8
  %v1798 = vpop.permute.xlu0 %1797
  %1799 = vrot.lane.b32.xlu0 %v1662, 8
  %v1800 = vpop.permute.xlu0 %1799
  %1801 = vrot.lane.b32.xlu0 %v1665, 8
  %v1802 = vpop.permute.xlu0 %1801
  %1803 = vrot.lane.b32.xlu0 %v1669, 8
  %v1804 = vpop.permute.xlu0 %1803
  %1805 = vrot.lane.b32.xlu0 %v1672, 8
  %v1806 = vpop.permute.xlu0 %1805
  %1807 = vrot.lane.b32.xlu0 %v1676, 8
  %v1808 = vpop.permute.xlu0 %1807
  %1809 = vrot.lane.b32.xlu0 %v1679, 8
  %v1810 = vpop.permute.xlu0 %1809
  %1811 = vrot.lane.b32.xlu0 %v1683, 8
  %v1812 = vpop.permute.xlu0 %1811
  %1813 = vrot.lane.b32.xlu0 %v1686, 8
  %v1814 = vpop.permute.xlu0 %1813
  %vm1879 = vcmask 93248
  %1880 = vst.msk [vmem:[#allocation2] sm:$0xf] %vm1879, %v1688
  %1881 = vst.msk [vmem:[#allocation2 + $0x4] sm:$0xf] %vm1879, %v1690
  %1882 = vst.msk [vmem:[#allocation2 + $0x8] sm:$0xf] %vm1879, %v1692
  %1883 = vst.msk [vmem:[#allocation2 + $0xc] sm:$0xf] %vm1879, %v1694
  %1884 = vst.msk [vmem:[#allocation2 + $0x10] sm:$0xf] %vm1879, %v1696
  %1885 = vst.msk [vmem:[#allocation2 + $0x14] sm:$0xf] %vm1879, %v1698
  %1886 = vst.msk [vmem:[#allocation2 + $0x18] sm:$0xf] %vm1879, %v1700
  %1887 = vst.msk [vmem:[#allocation2 + $0x1c] sm:$0xf] %vm1879, %v1702
  %1888 = vst.msk [vmem:[#allocation2 + $0x20] sm:$0xf] %vm1879, %v1704
  %1889 = vst.msk [vmem:[#allocation2 + $0x24] sm:$0xf] %vm1879, %v1706
  %1890 = vst.msk [vmem:[#allocation2 + $0x28] sm:$0xf] %vm1879, %v1708
  %1891 = vst.msk [vmem:[#allocation2 + $0x2c] sm:$0xf] %vm1879, %v1710
  %1892 = vst.msk [vmem:[#allocation2 + $0x30] sm:$0xf] %vm1879, %v1712
  %1893 = vst.msk [vmem:[#allocation2 + $0x34] sm:$0xf] %vm1879, %v1714
  %1894 = vst.msk [vmem:[#allocation2 + $0x38] sm:$0xf] %vm1879, %v1716
  %1895 = vst.msk [vmem:[#allocation2 + $0x3c] sm:$0xf] %vm1879, %v1718
  %1896 = vst.msk [vmem:[#allocation2 + $0x40] sm:$0xf] %vm1879, %v1720
  %1897 = vst.msk [vmem:[#allocation2 + $0x44] sm:$0xf] %vm1879, %v1722
  %1898 = vst.msk [vmem:[#allocation2 + $0x48] sm:$0xf] %vm1879, %v1724
  %1899 = vst.msk [vmem:[#allocation2 + $0x4c] sm:$0xf] %vm1879, %v1726
  %1900 = vst.msk [vmem:[#allocation2 + $0x50] sm:$0xf] %vm1879, %v1728
  %1901 = vst.msk [vmem:[#allocation2 + $0x54] sm:$0xf] %vm1879, %v1730
  %1902 = vst.msk [vmem:[#allocation2 + $0x58] sm:$0xf] %vm1879, %v1732
  %1903 = vst.msk [vmem:[#allocation2 + $0x5c] sm:$0xf] %vm1879, %v1734
  %1904 = vst.msk [vmem:[#allocation2 + $0x60] sm:$0xf] %vm1879, %v1736
  %1905 = vst.msk [vmem:[#allocation2 + $0x64] sm:$0xf] %vm1879, %v1738
  %1906 = vst.msk [vmem:[#allocation2 + $0x68] sm:$0xf] %vm1879, %v1740
  %1907 = vst.msk [vmem:[#allocation2 + $0x6c] sm:$0xf] %vm1879, %v1742
  %1908 = vst.msk [vmem:[#allocation2 + $0x70] sm:$0xf] %vm1879, %v1744
  %1909 = vst.msk [vmem:[#allocation2 + $0x74] sm:$0xf] %vm1879, %v1746
  %1910 = vst.msk [vmem:[#allocation2 + $0x78] sm:$0xf] %vm1879, %v1748
  %1911 = vst.msk [vmem:[#allocation2 + $0x7c] sm:$0xf] %vm1879, %v1750
  %1912 = vst.msk [vmem:[#allocation2 + $0x80] sm:$0xf] %vm1879, %v1752
  %1913 = vst.msk [vmem:[#allocation2 + $0x84] sm:$0xf] %vm1879, %v1754
  %1914 = vst.msk [vmem:[#allocation2 + $0x88] sm:$0xf] %vm1879, %v1756
  %1915 = vst.msk [vmem:[#allocation2 + $0x8c] sm:$0xf] %vm1879, %v1758
  %1916 = vst.msk [vmem:[#allocation2 + $0x90] sm:$0xf] %vm1879, %v1760
  %1917 = vst.msk [vmem:[#allocation2 + $0x94] sm:$0xf] %vm1879, %v1762
  %1918 = vst.msk [vmem:[#allocation2 + $0x98] sm:$0xf] %vm1879, %v1764
  %1919 = vst.msk [vmem:[#allocation2 + $0x9c] sm:$0xf] %vm1879, %v1766
  %1920 = vst.msk [vmem:[#allocation2 + $0xa0] sm:$0xf] %vm1879, %v1768
  %1921 = vst.msk [vmem:[#allocation2 + $0xa4] sm:$0xf] %vm1879, %v1770
  %1922 = vst.msk [vmem:[#allocation2 + $0xa8] sm:$0xf] %vm1879, %v1772
  %1923 = vst.msk [vmem:[#allocation2 + $0xac] sm:$0xf] %vm1879, %v1774
  %1924 = vst.msk [vmem:[#allocation2 + $0xb0] sm:$0xf] %vm1879, %v1776
  %1925 = vst.msk [vmem:[#allocation2 + $0xb4] sm:$0xf] %vm1879, %v1778
  %1926 = vst.msk [vmem:[#allocation2 + $0xb8] sm:$0xf] %vm1879, %v1780
  %1927 = vst.msk [vmem:[#allocation2 + $0xbc] sm:$0xf] %vm1879, %v1782
  %1928 = vst.msk [vmem:[#allocation2 + $0xc0] sm:$0xf] %vm1879, %v1784
  %1929 = vst.msk [vmem:[#allocation2 + $0xc4] sm:$0xf] %vm1879, %v1786
  %1930 = vst.msk [vmem:[#allocation2 + $0xc8] sm:$0xf] %vm1879, %v1788
  %1931 = vst.msk [vmem:[#allocation2 + $0xcc] sm:$0xf] %vm1879, %v1790
  %1932 = vst.msk [vmem:[#allocation2 + $0xd0] sm:$0xf] %vm1879, %v1792
  %1933 = vst.msk [vmem:[#allocation2 + $0xd4] sm:$0xf] %vm1879, %v1794
  %1934 = vst.msk [vmem:[#allocation2 + $0xd8] sm:$0xf] %vm1879, %v1796
  %1935 = vst.msk [vmem:[#allocation2 + $0xdc] sm:$0xf] %vm1879, %v1798
  %1936 = vst.msk [vmem:[#allocation2 + $0xe0] sm:$0xf] %vm1879, %v1800
  %1937 = vst.msk [vmem:[#allocation2 + $0xe4] sm:$0xf] %vm1879, %v1802
  %1938 = vst.msk [vmem:[#allocation2 + $0xe8] sm:$0xf] %vm1879, %v1804
  %1939 = vst.msk [vmem:[#allocation2 + $0xec] sm:$0xf] %vm1879, %v1806
  %1940 = vst.msk [vmem:[#allocation2 + $0xf0] sm:$0xf] %vm1879, %v1808
  %1941 = vst.msk [vmem:[#allocation2 + $0xf4] sm:$0xf] %vm1879, %v1810
  %1942 = vst.msk [vmem:[#allocation2 + $0xf8] sm:$0xf] %vm1879, %v1812
  %1943 = vst.msk [vmem:[#allocation2 + $0xfc] sm:$0xf] %vm1879, %v1814
  %s1944 = scalar_lea.vmem %s0, 12
  %v1945 = vld [vmem:[%s1944] sm:$0xf]
  %v1946 = vld [vmem:[%s1944 + $0x4] sm:$0xf]
  %v1947 = vld [vmem:[%s1944 + $0xc] sm:$0xf]
  %v1948 = vld [vmem:[%s1944 + $0x10] sm:$0xf]
  %v1949 = vld [vmem:[%s1944 + $0x18] sm:$0xf]
  %v1950 = vld [vmem:[%s1944 + $0x1c] sm:$0xf]
  %v1951 = vld [vmem:[%s1944 + $0x24] sm:$0xf]
  %v1952 = vld [vmem:[%s1944 + $0x28] sm:$0xf]
  %v1953 = vld [vmem:[%s1944 + $0x30] sm:$0xf]
  %v1954 = vld [vmem:[%s1944 + $0x34] sm:$0xf]
  %v1955 = vld [vmem:[%s1944 + $0x3c] sm:$0xf]
  %v1956 = vld [vmem:[%s1944 + $0x40] sm:$0xf]
  %v1957 = vld [vmem:[%s1944 + $0x48] sm:$0xf]
  %v1958 = vld [vmem:[%s1944 + $0x4c] sm:$0xf]
  %v1959 = vld [vmem:[%s1944 + $0x54] sm:$0xf]
  %v1960 = vld [vmem:[%s1944 + $0x58] sm:$0xf]
  %v1961 = vld [vmem:[%s1944 + $0x60] sm:$0xf]
  %v1962 = vld [vmem:[%s1944 + $0x64] sm:$0xf]
  %v1963 = vld [vmem:[%s1944 + $0x6c] sm:$0xf]
  %v1964 = vld [vmem:[%s1944 + $0x70] sm:$0xf]
  %v1965 = vld [vmem:[%s1944 + $0x78] sm:$0xf]
  %v1966 = vld [vmem:[%s1944 + $0x7c] sm:$0xf]
  %v1967 = vld [vmem:[%s1944 + $0x84] sm:$0xf]
  %v1968 = vld [vmem:[%s1944 + $0x88] sm:$0xf]
  %v1969 = vld [vmem:[%s1944 + $0x90] sm:$0xf]
  %v1970 = vld [vmem:[%s1944 + $0x94] sm:$0xf]
  %v1971 = vld [vmem:[%s1944 + $0x9c] sm:$0xf]
  %v1972 = vld [vmem:[%s1944 + $0xa0] sm:$0xf]
  %v1973 = vld [vmem:[%s1944 + $0xa8] sm:$0xf]
  %v1974 = vld [vmem:[%s1944 + $0xac] sm:$0xf]
  %v1975 = vld [vmem:[%s1944 + $0xb4] sm:$0xf]
  %v1976 = vld [vmem:[%s1944 + $0xb8] sm:$0xf]
  %v1977 = vld [vmem:[%s1944 + $0xd8] sm:$0xf]
  %v1978 = vld [vmem:[%s1944 + $0xdc] sm:$0xf]
  %v1979 = vld [vmem:[%s1944 + $0xe4] sm:$0xf]
  %v1980 = vld [vmem:[%s1944 + $0xe8] sm:$0xf]
  %v1981 = vld [vmem:[%s1944 + $0xf0] sm:$0xf]
  %v1982 = vld [vmem:[%s1944 + $0xf4] sm:$0xf]
  %v1983 = vld [vmem:[%s1944 + $0xfc] sm:$0xf]
  %v1984 = vld [vmem:[%s1944 + $0x100] sm:$0xf]
  %v1985 = vld [vmem:[%s1944 + $0x108] sm:$0xf]
  %v1986 = vld [vmem:[%s1944 + $0x10c] sm:$0xf]
  %v1987 = vld [vmem:[%s1944 + $0x114] sm:$0xf]
  %v1988 = vld [vmem:[%s1944 + $0x118] sm:$0xf]
  %v1989 = vld [vmem:[%s1944 + $0x120] sm:$0xf]
  %v1990 = vld [vmem:[%s1944 + $0x124] sm:$0xf]
  %v1991 = vld [vmem:[%s1944 + $0x12c] sm:$0xf]
  %v1992 = vld [vmem:[%s1944 + $0x130] sm:$0xf]
  %v1993 = vld [vmem:[%s1944 + $0x138] sm:$0xf]
  %v1994 = vld [vmem:[%s1944 + $0x13c] sm:$0xf]
  %v1995 = vld [vmem:[%s1944 + $0x144] sm:$0xf]
  %v1996 = vld [vmem:[%s1944 + $0x148] sm:$0xf]
  %v1997 = vld [vmem:[%s1944 + $0x150] sm:$0xf]
  %v1998 = vld [vmem:[%s1944 + $0x154] sm:$0xf]
  %v1999 = vld [vmem:[%s1944 + $0x15c] sm:$0xf]
  %v2000 = vld [vmem:[%s1944 + $0x160] sm:$0xf]
  %v2001 = vld [vmem:[%s1944 + $0x168] sm:$0xf]
  %v2002 = vld [vmem:[%s1944 + $0x16c] sm:$0xf]
  %v2003 = vld [vmem:[%s1944 + $0x174] sm:$0xf]
  %v2004 = vld [vmem:[%s1944 + $0x178] sm:$0xf]
  %v2005 = vld [vmem:[%s1944 + $0x180] sm:$0xf]
  %v2006 = vld [vmem:[%s1944 + $0x184] sm:$0xf]
  %v2007 = vld [vmem:[%s1944 + $0x18c] sm:$0xf]
  %v2008 = vld [vmem:[%s1944 + $0x190] sm:$0xf]
  %2073 = vrot.lane.b32.xlu0 %v1945, 12
  %v2074 = vpop.permute.xlu0 %2073
  %2075 = vrot.lane.b32.xlu0 %v1946, 12
  %v2076 = vpop.permute.xlu0 %2075
  %2077 = vrot.lane.b32.xlu0 %v1947, 12
  %v2078 = vpop.permute.xlu0 %2077
  %2079 = vrot.lane.b32.xlu0 %v1948, 12
  %v2080 = vpop.permute.xlu0 %2079
  %2081 = vrot.lane.b32.xlu0 %v1949, 12
  %v2082 = vpop.permute.xlu0 %2081
  %2083 = vrot.lane.b32.xlu0 %v1950, 12
  %v2084 = vpop.permute.xlu0 %2083
  %2085 = vrot.lane.b32.xlu0 %v1951, 12
  %v2086 = vpop.permute.xlu0 %2085
  %2087 = vrot.lane.b32.xlu0 %v1952, 12
  %v2088 = vpop.permute.xlu0 %2087
  %2089 = vrot.lane.b32.xlu0 %v1953, 12
  %v2090 = vpop.permute.xlu0 %2089
  %2091 = vrot.lane.b32.xlu0 %v1954, 12
  %v2092 = vpop.permute.xlu0 %2091
  %2093 = vrot.lane.b32.xlu0 %v1955, 12
  %v2094 = vpop.permute.xlu0 %2093
  %2095 = vrot.lane.b32.xlu0 %v1956, 12
  %v2096 = vpop.permute.xlu0 %2095
  %2097 = vrot.lane.b32.xlu0 %v1957, 12
  %v2098 = vpop.permute.xlu0 %2097
  %2099 = vrot.lane.b32.xlu0 %v1958, 12
  %v2100 = vpop.permute.xlu0 %2099
  %2101 = vrot.lane.b32.xlu0 %v1959, 12
  %v2102 = vpop.permute.xlu0 %2101
  %2103 = vrot.lane.b32.xlu0 %v1960, 12
  %v2104 = vpop.permute.xlu0 %2103
  %2105 = vrot.lane.b32.xlu0 %v1961, 12
  %v2106 = vpop.permute.xlu0 %2105
  %2107 = vrot.lane.b32.xlu0 %v1962, 12
  %v2108 = vpop.permute.xlu0 %2107
  %2109 = vrot.lane.b32.xlu0 %v1963, 12
  %v2110 = vpop.permute.xlu0 %2109
  %2111 = vrot.lane.b32.xlu0 %v1964, 12
  %v2112 = vpop.permute.xlu0 %2111
  %2113 = vrot.lane.b32.xlu0 %v1965, 12
  %v2114 = vpop.permute.xlu0 %2113
  %2115 = vrot.lane.b32.xlu0 %v1966, 12
  %v2116 = vpop.permute.xlu0 %2115
  %2117 = vrot.lane.b32.xlu0 %v1967, 12
  %v2118 = vpop.permute.xlu0 %2117
  %2119 = vrot.lane.b32.xlu0 %v1968, 12
  %v2120 = vpop.permute.xlu0 %2119
  %2121 = vrot.lane.b32.xlu0 %v1969, 12
  %v2122 = vpop.permute.xlu0 %2121
  %2123 = vrot.lane.b32.xlu0 %v1970, 12
  %v2124 = vpop.permute.xlu0 %2123
  %2125 = vrot.lane.b32.xlu0 %v1971, 12
  %v2126 = vpop.permute.xlu0 %2125
  %2127 = vrot.lane.b32.xlu0 %v1972, 12
  %v2128 = vpop.permute.xlu0 %2127
  %2129 = vrot.lane.b32.xlu0 %v1973, 12
  %v2130 = vpop.permute.xlu0 %2129
  %2131 = vrot.lane.b32.xlu0 %v1974, 12
  %v2132 = vpop.permute.xlu0 %2131
  %2133 = vrot.lane.b32.xlu0 %v1975, 12
  %v2134 = vpop.permute.xlu0 %2133
  %2135 = vrot.lane.b32.xlu0 %v1976, 12
  %v2136 = vpop.permute.xlu0 %2135
  %2137 = vrot.lane.b32.xlu0 %v1977, 12
  %v2138 = vpop.permute.xlu0 %2137
  %2139 = vrot.lane.b32.xlu0 %v1978, 12
  %v2140 = vpop.permute.xlu0 %2139
  %2141 = vrot.lane.b32.xlu0 %v1979, 12
  %v2142 = vpop.permute.xlu0 %2141
  %2143 = vrot.lane.b32.xlu0 %v1980, 12
  %v2144 = vpop.permute.xlu0 %2143
  %2145 = vrot.lane.b32.xlu0 %v1981, 12
  %v2146 = vpop.permute.xlu0 %2145
  %2147 = vrot.lane.b32.xlu0 %v1982, 12
  %v2148 = vpop.permute.xlu0 %2147
  %2149 = vrot.lane.b32.xlu0 %v1983, 12
  %v2150 = vpop.permute.xlu0 %2149
  %2151 = vrot.lane.b32.xlu0 %v1984, 12
  %v2152 = vpop.permute.xlu0 %2151
  %2153 = vrot.lane.b32.xlu0 %v1985, 12
  %v2154 = vpop.permute.xlu0 %2153
  %2155 = vrot.lane.b32.xlu0 %v1986, 12
  %v2156 = vpop.permute.xlu0 %2155
  %2157 = vrot.lane.b32.xlu0 %v1987, 12
  %v2158 = vpop.permute.xlu0 %2157
  %2159 = vrot.lane.b32.xlu0 %v1988, 12
  %v2160 = vpop.permute.xlu0 %2159
  %2161 = vrot.lane.b32.xlu0 %v1989, 12
  %v2162 = vpop.permute.xlu0 %2161
  %2163 = vrot.lane.b32.xlu0 %v1990, 12
  %v2164 = vpop.permute.xlu0 %2163
  %2165 = vrot.lane.b32.xlu0 %v1991, 12
  %v2166 = vpop.permute.xlu0 %2165
  %2167 = vrot.lane.b32.xlu0 %v1992, 12
  %v2168 = vpop.permute.xlu0 %2167
  %2169 = vrot.lane.b32.xlu0 %v1993, 12
  %v2170 = vpop.permute.xlu0 %2169
  %2171 = vrot.lane.b32.xlu0 %v1994, 12
  %v2172 = vpop.permute.xlu0 %2171
  %2173 = vrot.lane.b32.xlu0 %v1995, 12
  %v2174 = vpop.permute.xlu0 %2173
  %2175 = vrot.lane.b32.xlu0 %v1996, 12
  %v2176 = vpop.permute.xlu0 %2175
  %2177 = vrot.lane.b32.xlu0 %v1997, 12
  %v2178 = vpop.permute.xlu0 %2177
  %2179 = vrot.lane.b32.xlu0 %v1998, 12
  %v2180 = vpop.permute.xlu0 %2179
  %2181 = vrot.lane.b32.xlu0 %v1999, 12
  %v2182 = vpop.permute.xlu0 %2181
  %2183 = vrot.lane.b32.xlu0 %v2000, 12
  %v2184 = vpop.permute.xlu0 %2183
  %2185 = vrot.lane.b32.xlu0 %v2001, 12
  %v2186 = vpop.permute.xlu0 %2185
  %2187 = vrot.lane.b32.xlu0 %v2002, 12
  %v2188 = vpop.permute.xlu0 %2187
  %2189 = vrot.lane.b32.xlu0 %v2003, 12
  %v2190 = vpop.permute.xlu0 %2189
  %2191 = vrot.lane.b32.xlu0 %v2004, 12
  %v2192 = vpop.permute.xlu0 %2191
  %2193 = vrot.lane.b32.xlu0 %v2005, 12
  %v2194 = vpop.permute.xlu0 %2193
  %2195 = vrot.lane.b32.xlu0 %v2006, 12
  %v2196 = vpop.permute.xlu0 %2195
  %2197 = vrot.lane.b32.xlu0 %v2007, 12
  %v2198 = vpop.permute.xlu0 %2197
  %2199 = vrot.lane.b32.xlu0 %v2008, 12
  %v2200 = vpop.permute.xlu0 %2199
  %vm2265 = vcmask 126048
  %2266 = vst.msk [vmem:[#allocation2] sm:$0xf] %vm2265, %v2074
  %2267 = vst.msk [vmem:[#allocation2 + $0x4] sm:$0xf] %vm2265, %v2076
  %2268 = vst.msk [vmem:[#allocation2 + $0x8] sm:$0xf] %vm2265, %v2078
  %2269 = vst.msk [vmem:[#allocation2 + $0xc] sm:$0xf] %vm2265, %v2080
  %2270 = vst.msk [vmem:[#allocation2 + $0x10] sm:$0xf] %vm2265, %v2082
  %2271 = vst.msk [vmem:[#allocation2 + $0x14] sm:$0xf] %vm2265, %v2084
  %2272 = vst.msk [vmem:[#allocation2 + $0x18] sm:$0xf] %vm2265, %v2086
  %2273 = vst.msk [vmem:[#allocation2 + $0x1c] sm:$0xf] %vm2265, %v2088
  %2274 = vst.msk [vmem:[#allocation2 + $0x20] sm:$0xf] %vm2265, %v2090
  %2275 = vst.msk [vmem:[#allocation2 + $0x24] sm:$0xf] %vm2265, %v2092
  %2276 = vst.msk [vmem:[#allocation2 + $0x28] sm:$0xf] %vm2265, %v2094
  %2277 = vst.msk [vmem:[#allocation2 + $0x2c] sm:$0xf] %vm2265, %v2096
  %2278 = vst.msk [vmem:[#allocation2 + $0x30] sm:$0xf] %vm2265, %v2098
  %2279 = vst.msk [vmem:[#allocation2 + $0x34] sm:$0xf] %vm2265, %v2100
  %2280 = vst.msk [vmem:[#allocation2 + $0x38] sm:$0xf] %vm2265, %v2102
  %2281 = vst.msk [vmem:[#allocation2 + $0x3c] sm:$0xf] %vm2265, %v2104
  %2282 = vst.msk [vmem:[#allocation2 + $0x40] sm:$0xf] %vm2265, %v2106
  %2283 = vst.msk [vmem:[#allocation2 + $0x44] sm:$0xf] %vm2265, %v2108
  %2284 = vst.msk [vmem:[#allocation2 + $0x48] sm:$0xf] %vm2265, %v2110
  %2285 = vst.msk [vmem:[#allocation2 + $0x4c] sm:$0xf] %vm2265, %v2112
  %2286 = vst.msk [vmem:[#allocation2 + $0x50] sm:$0xf] %vm2265, %v2114
  %2287 = vst.msk [vmem:[#allocation2 + $0x54] sm:$0xf] %vm2265, %v2116
  %2288 = vst.msk [vmem:[#allocation2 + $0x58] sm:$0xf] %vm2265, %v2118
  %2289 = vst.msk [vmem:[#allocation2 + $0x5c] sm:$0xf] %vm2265, %v2120
  %2290 = vst.msk [vmem:[#allocation2 + $0x60] sm:$0xf] %vm2265, %v2122
  %2291 = vst.msk [vmem:[#allocation2 + $0x64] sm:$0xf] %vm2265, %v2124
  %2292 = vst.msk [vmem:[#allocation2 + $0x68] sm:$0xf] %vm2265, %v2126
  %2293 = vst.msk [vmem:[#allocation2 + $0x6c] sm:$0xf] %vm2265, %v2128
  %2294 = vst.msk [vmem:[#allocation2 + $0x70] sm:$0xf] %vm2265, %v2130
  %2295 = vst.msk [vmem:[#allocation2 + $0x74] sm:$0xf] %vm2265, %v2132
  %2296 = vst.msk [vmem:[#allocation2 + $0x78] sm:$0xf] %vm2265, %v2134
  %2297 = vst.msk [vmem:[#allocation2 + $0x7c] sm:$0xf] %vm2265, %v2136
  %2298 = vst.msk [vmem:[#allocation2 + $0x80] sm:$0xf] %vm2265, %v2138
  %2299 = vst.msk [vmem:[#allocation2 + $0x84] sm:$0xf] %vm2265, %v2140
  %2300 = vst.msk [vmem:[#allocation2 + $0x88] sm:$0xf] %vm2265, %v2142
  %2301 = vst.msk [vmem:[#allocation2 + $0x8c] sm:$0xf] %vm2265, %v2144
  %2302 = vst.msk [vmem:[#allocation2 + $0x90] sm:$0xf] %vm2265, %v2146
  %2303 = vst.msk [vmem:[#allocation2 + $0x94] sm:$0xf] %vm2265, %v2148
  %2304 = vst.msk [vmem:[#allocation2 + $0x98] sm:$0xf] %vm2265, %v2150
  %2305 = vst.msk [vmem:[#allocation2 + $0x9c] sm:$0xf] %vm2265, %v2152
  %2306 = vst.msk [vmem:[#allocation2 + $0xa0] sm:$0xf] %vm2265, %v2154
  %2307 = vst.msk [vmem:[#allocation2 + $0xa4] sm:$0xf] %vm2265, %v2156
  %2308 = vst.msk [vmem:[#allocation2 + $0xa8] sm:$0xf] %vm2265, %v2158
  %2309 = vst.msk [vmem:[#allocation2 + $0xac] sm:$0xf] %vm2265, %v2160
  %2310 = vst.msk [vmem:[#allocation2 + $0xb0] sm:$0xf] %vm2265, %v2162
  %2311 = vst.msk [vmem:[#allocation2 + $0xb4] sm:$0xf] %vm2265, %v2164
  %2312 = vst.msk [vmem:[#allocation2 + $0xb8] sm:$0xf] %vm2265, %v2166
  %2313 = vst.msk [vmem:[#allocation2 + $0xbc] sm:$0xf] %vm2265, %v2168
  %2314 = vst.msk [vmem:[#allocation2 + $0xc0] sm:$0xf] %vm2265, %v2170
  %2315 = vst.msk [vmem:[#allocation2 + $0xc4] sm:$0xf] %vm2265, %v2172
  %2316 = vst.msk [vmem:[#allocation2 + $0xc8] sm:$0xf] %vm2265, %v2174
  %2317 = vst.msk [vmem:[#allocation2 + $0xcc] sm:$0xf] %vm2265, %v2176
  %2318 = vst.msk [vmem:[#allocation2 + $0xd0] sm:$0xf] %vm2265, %v2178
  %2319 = vst.msk [vmem:[#allocation2 + $0xd4] sm:$0xf] %vm2265, %v2180
  %2320 = vst.msk [vmem:[#allocation2 + $0xd8] sm:$0xf] %vm2265, %v2182
  %2321 = vst.msk [vmem:[#allocation2 + $0xdc] sm:$0xf] %vm2265, %v2184
  %2322 = vst.msk [vmem:[#allocation2 + $0xe0] sm:$0xf] %vm2265, %v2186
  %2323 = vst.msk [vmem:[#allocation2 + $0xe4] sm:$0xf] %vm2265, %v2188
  %2324 = vst.msk [vmem:[#allocation2 + $0xe8] sm:$0xf] %vm2265, %v2190
  %2325 = vst.msk [vmem:[#allocation2 + $0xec] sm:$0xf] %vm2265, %v2192
  %2326 = vst.msk [vmem:[#allocation2 + $0xf0] sm:$0xf] %vm2265, %v2194
  %2327 = vst.msk [vmem:[#allocation2 + $0xf4] sm:$0xf] %vm2265, %v2196
  %2328 = vst.msk [vmem:[#allocation2 + $0xf8] sm:$0xf] %vm2265, %v2198
  %2329 = vst.msk [vmem:[#allocation2 + $0xfc] sm:$0xf] %vm2265, %v2200
  %v2330 = vld [vmem:[%s1944] sm:$0xf]
  %v2331 = vld [vmem:[%s1944 + $0x4] sm:$0xf]
  %v2332 = vld [vmem:[%s1944 + $0x8] sm:$0x1]
  %v2333 = vld [vmem:[%s1944 + $0xc] sm:$0xf]
  %v2334 = vld [vmem:[%s1944 + $0x10] sm:$0xf]
  %v2335 = vld [vmem:[%s1944 + $0x14] sm:$0x1]
  %v2336 = vld [vmem:[%s1944 + $0x18] sm:$0xf]
  %v2337 = vld [vmem:[%s1944 + $0x1c] sm:$0xf]
  %v2338 = vld [vmem:[%s1944 + $0x20] sm:$0x1]
  %v2339 = vld [vmem:[%s1944 + $0x24] sm:$0xf]
  %v2340 = vld [vmem:[%s1944 + $0x28] sm:$0xf]
  %v2341 = vld [vmem:[%s1944 + $0x2c] sm:$0x1]
  %v2342 = vld [vmem:[%s1944 + $0x30] sm:$0xf]
  %v2343 = vld [vmem:[%s1944 + $0x34] sm:$0xf]
  %v2344 = vld [vmem:[%s1944 + $0x38] sm:$0x1]
  %v2345 = vld [vmem:[%s1944 + $0x3c] sm:$0xf]
  %v2346 = vld [vmem:[%s1944 + $0x40] sm:$0xf]
  %v2347 = vld [vmem:[%s1944 + $0x44] sm:$0x1]
  %v2348 = vld [vmem:[%s1944 + $0x48] sm:$0xf]
  %v2349 = vld [vmem:[%s1944 + $0x4c] sm:$0xf]
  %v2350 = vld [vmem:[%s1944 + $0x50] sm:$0x1]
  %v2351 = vld [vmem:[%s1944 + $0x54] sm:$0xf]
  %v2352 = vld [vmem:[%s1944 + $0x58] sm:$0xf]
  %v2353 = vld [vmem:[%s1944 + $0x5c] sm:$0x1]
  %v2354 = vld [vmem:[%s1944 + $0x60] sm:$0xf]
  %v2355 = vld [vmem:[%s1944 + $0x64] sm:$0xf]
  %v2356 = vld [vmem:[%s1944 + $0x68] sm:$0x1]
  %v2357 = vld [vmem:[%s1944 + $0x6c] sm:$0xf]
  %v2358 = vld [vmem:[%s1944 + $0x70] sm:$0xf]
  %v2359 = vld [vmem:[%s1944 + $0x74] sm:$0x1]
  %v2360 = vld [vmem:[%s1944 + $0x78] sm:$0xf]
  %v2361 = vld [vmem:[%s1944 + $0x7c] sm:$0xf]
  %v2362 = vld [vmem:[%s1944 + $0x80] sm:$0x1]
  %v2363 = vld [vmem:[%s1944 + $0x84] sm:$0xf]
  %v2364 = vld [vmem:[%s1944 + $0x88] sm:$0xf]
  %v2365 = vld [vmem:[%s1944 + $0x8c] sm:$0x1]
  %v2366 = vld [vmem:[%s1944 + $0x90] sm:$0xf]
  %v2367 = vld [vmem:[%s1944 + $0x94] sm:$0xf]
  %v2368 = vld [vmem:[%s1944 + $0x98] sm:$0x1]
  %v2369 = vld [vmem:[%s1944 + $0x9c] sm:$0xf]
  %v2370 = vld [vmem:[%s1944 + $0xa0] sm:$0xf]
  %v2371 = vld [vmem:[%s1944 + $0xa4] sm:$0x1]
  %v2372 = vld [vmem:[%s1944 + $0xa8] sm:$0xf]
  %v2373 = vld [vmem:[%s1944 + $0xac] sm:$0xf]
  %v2374 = vld [vmem:[%s1944 + $0xb0] sm:$0x1]
  %v2375 = vld [vmem:[%s1944 + $0xb4] sm:$0xf]
  %v2376 = vld [vmem:[%s1944 + $0xb8] sm:$0xf]
  %v2377 = vld [vmem:[%s1944 + $0xbc] sm:$0x1]
  %v2378 = vld [vmem:[%s1944 + $0xd8] sm:$0xf]
  %v2379 = vld [vmem:[%s1944 + $0xdc] sm:$0xf]
  %v2380 = vld [vmem:[%s1944 + $0xe0] sm:$0x1]
  %v2381 = vld [vmem:[%s1944 + $0xe4] sm:$0xf]
  %v2382 = vld [vmem:[%s1944 + $0xe8] sm:$0xf]
  %v2383 = vld [vmem:[%s1944 + $0xec] sm:$0x1]
  %v2384 = vld [vmem:[%s1944 + $0xf0] sm:$0xf]
  %v2385 = vld [vmem:[%s1944 + $0xf4] sm:$0xf]
  %v2386 = vld [vmem:[%s1944 + $0xf8] sm:$0x1]
  %v2387 = vld [vmem:[%s1944 + $0xfc] sm:$0xf]
  %v2388 = vld [vmem:[%s1944 + $0x100] sm:$0xf]
  %v2389 = vld [vmem:[%s1944 + $0x104] sm:$0x1]
  %v2390 = vld [vmem:[%s1944 + $0x108] sm:$0xf]
  %v2391 = vld [vmem:[%s1944 + $0x10c] sm:$0xf]
  %v2392 = vld [vmem:[%s1944 + $0x110] sm:$0x1]
  %v2393 = vld [vmem:[%s1944 + $0x114] sm:$0xf]
  %v2394 = vld [vmem:[%s1944 + $0x118] sm:$0xf]
  %v2395 = vld [vmem:[%s1944 + $0x11c] sm:$0x1]
  %v2396 = vld [vmem:[%s1944 + $0x120] sm:$0xf]
  %v2397 = vld [vmem:[%s1944 + $0x124] sm:$0xf]
  %v2398 = vld [vmem:[%s1944 + $0x128] sm:$0x1]
  %v2399 = vld [vmem:[%s1944 + $0x12c] sm:$0xf]
  %v2400 = vld [vmem:[%s1944 + $0x130] sm:$0xf]
  %v2401 = vld [vmem:[%s1944 + $0x134] sm:$0x1]
  %v2402 = vld [vmem:[%s1944 + $0x138] sm:$0xf]
  %v2403 = vld [vmem:[%s1944 + $0x13c] sm:$0xf]
  %v2404 = vld [vmem:[%s1944 + $0x140] sm:$0x1]
  %v2405 = vld [vmem:[%s1944 + $0x144] sm:$0xf]
  %v2406 = vld [vmem:[%s1944 + $0x148] sm:$0xf]
  %v2407 = vld [vmem:[%s1944 + $0x14c] sm:$0x1]
  %v2408 = vld [vmem:[%s1944 + $0x150] sm:$0xf]
  %v2409 = vld [vmem:[%s1944 + $0x154] sm:$0xf]
  %v2410 = vld [vmem:[%s1944 + $0x158] sm:$0x1]
  %v2411 = vld [vmem:[%s1944 + $0x15c] sm:$0xf]
  %v2412 = vld [vmem:[%s1944 + $0x160] sm:$0xf]
  %v2413 = vld [vmem:[%s1944 + $0x164] sm:$0x1]
  %v2414 = vld [vmem:[%s1944 + $0x168] sm:$0xf]
  %v2415 = vld [vmem:[%s1944 + $0x16c] sm:$0xf]
  %v2416 = vld [vmem:[%s1944 + $0x170] sm:$0x1]
  %v2417 = vld [vmem:[%s1944 + $0x174] sm:$0xf]
  %v2418 = vld [vmem:[%s1944 + $0x178] sm:$0xf]
  %v2419 = vld [vmem:[%s1944 + $0x17c] sm:$0x1]
  %v2420 = vld [vmem:[%s1944 + $0x180] sm:$0xf]
  %v2421 = vld [vmem:[%s1944 + $0x184] sm:$0xf]
  %v2422 = vld [vmem:[%s1944 + $0x188] sm:$0x1]
  %v2423 = vld [vmem:[%s1944 + $0x18c] sm:$0xf]
  %v2424 = vld [vmem:[%s1944 + $0x190] sm:$0xf]
  %v2425 = vld [vmem:[%s1944 + $0x194] sm:$0x1]
  %v2427 = vshrl.u32 %v2330, 16
  %v2429 = vrot.slane %v2427, 4
  %v2430 = vshll.u32 %v2330, 16
  %v2432 = vrot.slane %v2430, 5
  %v2433 = vor.u32 %v2429, %v2432
  %v2434 = vrot.slane %v2433, 4
  %v2436 = vshll.u32 %v2331, 16
  %v2438 = vrot.slane %v2436, 5
  %v2439 = vsel %vm242, %v2434, %v2438
  %v2440 = vshrl.u32 %v2331, 16
  %v2442 = vrot.slane %v2440, 4
  %v2443 = vor.u32 %v2442, %v2438
  %v2444 = vrot.slane %v2443, 4
  %v2446 = vshll.u32 %v2332, 16
  %v2448 = vrot.slane %v2446, 5
  %v2449 = vsel %vm242, %v2444, %v2448
  %v2451 = vshrl.u32 %v2333, 16
  %v2453 = vrot.slane %v2451, 4
  %v2454 = vshll.u32 %v2333, 16
  %v2456 = vrot.slane %v2454, 5
  %v2457 = vor.u32 %v2453, %v2456
  %v2458 = vrot.slane %v2457, 4
  %v2460 = vshll.u32 %v2334, 16
  %v2462 = vrot.slane %v2460, 5
  %v2463 = vsel %vm242, %v2458, %v2462
  %v2464 = vshrl.u32 %v2334, 16
  %v2466 = vrot.slane %v2464, 4
  %v2467 = vor.u32 %v2466, %v2462
  %v2468 = vrot.slane %v2467, 4
  %v2470 = vshll.u32 %v2335, 16
  %v2472 = vrot.slane %v2470, 5
  %v2473 = vsel %vm242, %v2468, %v2472
  %v2475 = vshrl.u32 %v2336, 16
  %v2477 = vrot.slane %v2475, 4
  %v2478 = vshll.u32 %v2336, 16
  %v2480 = vrot.slane %v2478, 5
  %v2481 = vor.u32 %v2477, %v2480
  %v2482 = vrot.slane %v2481, 4
  %v2484 = vshll.u32 %v2337, 16
  %v2486 = vrot.slane %v2484, 5
  %v2487 = vsel %vm242, %v2482, %v2486
  %v2488 = vshrl.u32 %v2337, 16
  %v2490 = vrot.slane %v2488, 4
  %v2491 = vor.u32 %v2490, %v2486
  %v2492 = vrot.slane %v2491, 4
  %v2494 = vshll.u32 %v2338, 16
  %v2496 = vrot.slane %v2494, 5
  %v2497 = vsel %vm242, %v2492, %v2496
  %v2499 = vshrl.u32 %v2339, 16
  %v2501 = vrot.slane %v2499, 4
  %v2502 = vshll.u32 %v2339, 16
  %v2504 = vrot.slane %v2502, 5
  %v2505 = vor.u32 %v2501, %v2504
  %v2506 = vrot.slane %v2505, 4
  %v2508 = vshll.u32 %v2340, 16
  %v2510 = vrot.slane %v2508, 5
  %v2511 = vsel %vm242, %v2506, %v2510
  %v2512 = vshrl.u32 %v2340, 16
  %v2514 = vrot.slane %v2512, 4
  %v2515 = vor.u32 %v2514, %v2510
  %v2516 = vrot.slane %v2515, 4
  %v2518 = vshll.u32 %v2341, 16
  %v2520 = vrot.slane %v2518, 5
  %v2521 = vsel %vm242, %v2516, %v2520
  %v2523 = vshrl.u32 %v2342, 16
  %v2525 = vrot.slane %v2523, 4
  %v2526 = vshll.u32 %v2342, 16
  %v2528 = vrot.slane %v2526, 5
  %v2529 = vor.u32 %v2525, %v2528
  %v2530 = vrot.slane %v2529, 4
  %v2532 = vshll.u32 %v2343, 16
  %v2534 = vrot.slane %v2532, 5
  %v2535 = vsel %vm242, %v2530, %v2534
  %v2536 = vshrl.u32 %v2343, 16
  %v2538 = vrot.slane %v2536, 4
  %v2539 = vor.u32 %v2538, %v2534
  %v2540 = vrot.slane %v2539, 4
  %v2542 = vshll.u32 %v2344, 16
  %v2544 = vrot.slane %v2542, 5
  %v2545 = vsel %vm242, %v2540, %v2544
  %v2547 = vshrl.u32 %v2345, 16
  %v2549 = vrot.slane %v2547, 4
  %v2550 = vshll.u32 %v2345, 16
  %v2552 = vrot.slane %v2550, 5
  %v2553 = vor.u32 %v2549, %v2552
  %v2554 = vrot.slane %v2553, 4
  %v2556 = vshll.u32 %v2346, 16
  %v2558 = vrot.slane %v2556, 5
  %v2559 = vsel %vm242, %v2554, %v2558
  %v2560 = vshrl.u32 %v2346, 16
  %v2562 = vrot.slane %v2560, 4
  %v2563 = vor.u32 %v2562, %v2558
  %v2564 = vrot.slane %v2563, 4
  %v2566 = vshll.u32 %v2347, 16
  %v2568 = vrot.slane %v2566, 5
  %v2569 = vsel %vm242, %v2564, %v2568
  %v2571 = vshrl.u32 %v2348, 16
  %v2573 = vrot.slane %v2571, 4
  %v2574 = vshll.u32 %v2348, 16
  %v2576 = vrot.slane %v2574, 5
  %v2577 = vor.u32 %v2573, %v2576
  %v2578 = vrot.slane %v2577, 4
  %v2580 = vshll.u32 %v2349, 16
  %v2582 = vrot.slane %v2580, 5
  %v2583 = vsel %vm242, %v2578, %v2582
  %v2584 = vshrl.u32 %v2349, 16
  %v2586 = vrot.slane %v2584, 4
  %v2587 = vor.u32 %v2586, %v2582
  %v2588 = vrot.slane %v2587, 4
  %v2590 = vshll.u32 %v2350, 16
  %v2592 = vrot.slane %v2590, 5
  %v2593 = vsel %vm242, %v2588, %v2592
  %v2595 = vshrl.u32 %v2351, 16
  %v2597 = vrot.slane %v2595, 4
  %v2598 = vshll.u32 %v2351, 16
  %v2600 = vrot.slane %v2598, 5
  %v2601 = vor.u32 %v2597, %v2600
  %v2602 = vrot.slane %v2601, 4
  %v2604 = vshll.u32 %v2352, 16
  %v2606 = vrot.slane %v2604, 5
  %v2607 = vsel %vm242, %v2602, %v2606
  %v2608 = vshrl.u32 %v2352, 16
  %v2610 = vrot.slane %v2608, 4
  %v2611 = vor.u32 %v2610, %v2606
  %v2612 = vrot.slane %v2611, 4
  %v2614 = vshll.u32 %v2353, 16
  %v2616 = vrot.slane %v2614, 5
  %v2617 = vsel %vm242, %v2612, %v2616
  %v2619 = vshrl.u32 %v2354, 16
  %v2621 = vrot.slane %v2619, 4
  %v2622 = vshll.u32 %v2354, 16
  %v2624 = vrot.slane %v2622, 5
  %v2625 = vor.u32 %v2621, %v2624
  %v2626 = vrot.slane %v2625, 4
  %v2628 = vshll.u32 %v2355, 16
  %v2630 = vrot.slane %v2628, 5
  %v2631 = vsel %vm242, %v2626, %v2630
  %v2632 = vshrl.u32 %v2355, 16
  %v2634 = vrot.slane %v2632, 4
  %v2635 = vor.u32 %v2634, %v2630
  %v2636 = vrot.slane %v2635, 4
  %v2638 = vshll.u32 %v2356, 16
  %v2640 = vrot.slane %v2638, 5
  %v2641 = vsel %vm242, %v2636, %v2640
  %v2643 = vshrl.u32 %v2357, 16
  %v2645 = vrot.slane %v2643, 4
  %v2646 = vshll.u32 %v2357, 16
  %v2648 = vrot.slane %v2646, 5
  %v2649 = vor.u32 %v2645, %v2648
  %v2650 = vrot.slane %v2649, 4
  %v2652 = vshll.u32 %v2358, 16
  %v2654 = vrot.slane %v2652, 5
  %v2655 = vsel %vm242, %v2650, %v2654
  %v2656 = vshrl.u32 %v2358, 16
  %v2658 = vrot.slane %v2656, 4
  %v2659 = vor.u32 %v2658, %v2654
  %v2660 = vrot.slane %v2659, 4
  %v2662 = vshll.u32 %v2359, 16
  %v2664 = vrot.slane %v2662, 5
  %v2665 = vsel %vm242, %v2660, %v2664
  %v2667 = vshrl.u32 %v2360, 16
  %v2669 = vrot.slane %v2667, 4
  %v2670 = vshll.u32 %v2360, 16
  %v2672 = vrot.slane %v2670, 5
  %v2673 = vor.u32 %v2669, %v2672
  %v2674 = vrot.slane %v2673, 4
  %v2676 = vshll.u32 %v2361, 16
  %v2678 = vrot.slane %v2676, 5
  %v2679 = vsel %vm242, %v2674, %v2678
  %v2680 = vshrl.u32 %v2361, 16
  %v2682 = vrot.slane %v2680, 4
  %v2683 = vor.u32 %v2682, %v2678
  %v2684 = vrot.slane %v2683, 4
  %v2686 = vshll.u32 %v2362, 16
  %v2688 = vrot.slane %v2686, 5
  %v2689 = vsel %vm242, %v2684, %v2688
  %v2691 = vshrl.u32 %v2363, 16
  %v2693 = vrot.slane %v2691, 4
  %v2694 = vshll.u32 %v2363, 16
  %v2696 = vrot.slane %v2694, 5
  %v2697 = vor.u32 %v2693, %v2696
  %v2698 = vrot.slane %v2697, 4
  %v2700 = vshll.u32 %v2364, 16
  %v2702 = vrot.slane %v2700, 5
  %v2703 = vsel %vm242, %v2698, %v2702
  %v2704 = vshrl.u32 %v2364, 16
  %v2706 = vrot.slane %v2704, 4
  %v2707 = vor.u32 %v2706, %v2702
  %v2708 = vrot.slane %v2707, 4
  %v2710 = vshll.u32 %v2365, 16
  %v2712 = vrot.slane %v2710, 5
  %v2713 = vsel %vm242, %v2708, %v2712
  %v2715 = vshrl.u32 %v2366, 16
  %v2717 = vrot.slane %v2715, 4
  %v2718 = vshll.u32 %v2366, 16
  %v2720 = vrot.slane %v2718, 5
  %v2721 = vor.u32 %v2717, %v2720
  %v2722 = vrot.slane %v2721, 4
  %v2724 = vshll.u32 %v2367, 16
  %v2726 = vrot.slane %v2724, 5
  %v2727 = vsel %vm242, %v2722, %v2726
  %v2728 = vshrl.u32 %v2367, 16
  %v2730 = vrot.slane %v2728, 4
  %v2731 = vor.u32 %v2730, %v2726
  %v2732 = vrot.slane %v2731, 4
  %v2734 = vshll.u32 %v2368, 16
  %v2736 = vrot.slane %v2734, 5
  %v2737 = vsel %vm242, %v2732, %v2736
  %v2739 = vshrl.u32 %v2369, 16
  %v2741 = vrot.slane %v2739, 4
  %v2742 = vshll.u32 %v2369, 16
  %v2744 = vrot.slane %v2742, 5
  %v2745 = vor.u32 %v2741, %v2744
  %v2746 = vrot.slane %v2745, 4
  %v2748 = vshll.u32 %v2370, 16
  %v2750 = vrot.slane %v2748, 5
  %v2751 = vsel %vm242, %v2746, %v2750
  %v2752 = vshrl.u32 %v2370, 16
  %v2754 = vrot.slane %v2752, 4
  %v2755 = vor.u32 %v2754, %v2750
  %v2756 = vrot.slane %v2755, 4
  %v2758 = vshll.u32 %v2371, 16
  %v2760 = vrot.slane %v2758, 5
  %v2761 = vsel %vm242, %v2756, %v2760
  %v2763 = vshrl.u32 %v2372, 16
  %v2765 = vrot.slane %v2763, 4
  %v2766 = vshll.u32 %v2372, 16
  %v2768 = vrot.slane %v2766, 5
  %v2769 = vor.u32 %v2765, %v2768
  %v2770 = vrot.slane %v2769, 4
  %v2772 = vshll.u32 %v2373, 16
  %v2774 = vrot.slane %v2772, 5
  %v2775 = vsel %vm242, %v2770, %v2774
  %v2776 = vshrl.u32 %v2373, 16
  %v2778 = vrot.slane %v2776, 4
  %v2779 = vor.u32 %v2778, %v2774
  %v2780 = vrot.slane %v2779, 4
  %v2782 = vshll.u32 %v2374, 16
  %v2784 = vrot.slane %v2782, 5
  %v2785 = vsel %vm242, %v2780, %v2784
  %v2787 = vshrl.u32 %v2375, 16
  %v2789 = vrot.slane %v2787, 4
  %v2790 = vshll.u32 %v2375, 16
  %v2792 = vrot.slane %v2790, 5
  %v2793 = vor.u32 %v2789, %v2792
  %v2794 = vrot.slane %v2793, 4
  %v2796 = vshll.u32 %v2376, 16
  %v2798 = vrot.slane %v2796, 5
  %v2799 = vsel %vm242, %v2794, %v2798
  %v2800 = vshrl.u32 %v2376, 16
  %v2802 = vrot.slane %v2800, 4
  %v2803 = vor.u32 %v2802, %v2798
  %v2804 = vrot.slane %v2803, 4
  %v2806 = vshll.u32 %v2377, 16
  %v2808 = vrot.slane %v2806, 5
  %v2809 = vsel %vm242, %v2804, %v2808
  %v2811 = vshrl.u32 %v2378, 16
  %v2813 = vrot.slane %v2811, 4
  %v2814 = vshll.u32 %v2378, 16
  %v2816 = vrot.slane %v2814, 5
  %v2817 = vor.u32 %v2813, %v2816
  %v2818 = vrot.slane %v2817, 4
  %v2820 = vshll.u32 %v2379, 16
  %v2822 = vrot.slane %v2820, 5
  %v2823 = vsel %vm242, %v2818, %v2822
  %v2824 = vshrl.u32 %v2379, 16
  %v2826 = vrot.slane %v2824, 4
  %v2827 = vor.u32 %v2826, %v2822
  %v2828 = vrot.slane %v2827, 4
  %v2830 = vshll.u32 %v2380, 16
  %v2832 = vrot.slane %v2830, 5
  %v2833 = vsel %vm242, %v2828, %v2832
  %v2835 = vshrl.u32 %v2381, 16
  %v2837 = vrot.slane %v2835, 4
  %v2838 = vshll.u32 %v2381, 16
  %v2840 = vrot.slane %v2838, 5
  %v2841 = vor.u32 %v2837, %v2840
  %v2842 = vrot.slane %v2841, 4
  %v2844 = vshll.u32 %v2382, 16
  %v2846 = vrot.slane %v2844, 5
  %v2847 = vsel %vm242, %v2842, %v2846
  %v2848 = vshrl.u32 %v2382, 16
  %v2850 = vrot.slane %v2848, 4
  %v2851 = vor.u32 %v2850, %v2846
  %v2852 = vrot.slane %v2851, 4
  %v2854 = vshll.u32 %v2383, 16
  %v2856 = vrot.slane %v2854, 5
  %v2857 = vsel %vm242, %v2852, %v2856
  %v2859 = vshrl.u32 %v2384, 16
  %v2861 = vrot.slane %v2859, 4
  %v2862 = vshll.u32 %v2384, 16
  %v2864 = vrot.slane %v2862, 5
  %v2865 = vor.u32 %v2861, %v2864
  %v2866 = vrot.slane %v2865, 4
  %v2868 = vshll.u32 %v2385, 16
  %v2870 = vrot.slane %v2868, 5
  %v2871 = vsel %vm242, %v2866, %v2870
  %v2872 = vshrl.u32 %v2385, 16
  %v2874 = vrot.slane %v2872, 4
  %v2875 = vor.u32 %v2874, %v2870
  %v2876 = vrot.slane %v2875, 4
  %v2878 = vshll.u32 %v2386, 16
  %v2880 = vrot.slane %v2878, 5
  %v2881 = vsel %vm242, %v2876, %v2880
  %v2883 = vshrl.u32 %v2387, 16
  %v2885 = vrot.slane %v2883, 4
  %v2886 = vshll.u32 %v2387, 16
  %v2888 = vrot.slane %v2886, 5
  %v2889 = vor.u32 %v2885, %v2888
  %v2890 = vrot.slane %v2889, 4
  %v2892 = vshll.u32 %v2388, 16
  %v2894 = vrot.slane %v2892, 5
  %v2895 = vsel %vm242, %v2890, %v2894
  %v2896 = vshrl.u32 %v2388, 16
  %v2898 = vrot.slane %v2896, 4
  %v2899 = vor.u32 %v2898, %v2894
  %v2900 = vrot.slane %v2899, 4
  %v2902 = vshll.u32 %v2389, 16
  %v2904 = vrot.slane %v2902, 5
  %v2905 = vsel %vm242, %v2900, %v2904
  %v2907 = vshrl.u32 %v2390, 16
  %v2909 = vrot.slane %v2907, 4
  %v2910 = vshll.u32 %v2390, 16
  %v2912 = vrot.slane %v2910, 5
  %v2913 = vor.u32 %v2909, %v2912
  %v2914 = vrot.slane %v2913, 4
  %v2916 = vshll.u32 %v2391, 16
  %v2918 = vrot.slane %v2916, 5
  %v2919 = vsel %vm242, %v2914, %v2918
  %v2920 = vshrl.u32 %v2391, 16
  %v2922 = vrot.slane %v2920, 4
  %v2923 = vor.u32 %v2922, %v2918
  %v2924 = vrot.slane %v2923, 4
  %v2926 = vshll.u32 %v2392, 16
  %v2928 = vrot.slane %v2926, 5
  %v2929 = vsel %vm242, %v2924, %v2928
  %v2931 = vshrl.u32 %v2393, 16
  %v2933 = vrot.slane %v2931, 4
  %v2934 = vshll.u32 %v2393, 16
  %v2936 = vrot.slane %v2934, 5
  %v2937 = vor.u32 %v2933, %v2936
  %v2938 = vrot.slane %v2937, 4
  %v2940 = vshll.u32 %v2394, 16
  %v2942 = vrot.slane %v2940, 5
  %v2943 = vsel %vm242, %v2938, %v2942
  %v2944 = vshrl.u32 %v2394, 16
  %v2946 = vrot.slane %v2944, 4
  %v2947 = vor.u32 %v2946, %v2942
  %v2948 = vrot.slane %v2947, 4
  %v2950 = vshll.u32 %v2395, 16
  %v2952 = vrot.slane %v2950, 5
  %v2953 = vsel %vm242, %v2948, %v2952
  %v2955 = vshrl.u32 %v2396, 16
  %v2957 = vrot.slane %v2955, 4
  %v2958 = vshll.u32 %v2396, 16
  %v2960 = vrot.slane %v2958, 5
  %v2961 = vor.u32 %v2957, %v2960
  %v2962 = vrot.slane %v2961, 4
  %v2964 = vshll.u32 %v2397, 16
  %v2966 = vrot.slane %v2964, 5
  %v2967 = vsel %vm242, %v2962, %v2966
  %v2968 = vshrl.u32 %v2397, 16
  %v2970 = vrot.slane %v2968, 4
  %v2971 = vor.u32 %v2970, %v2966
  %v2972 = vrot.slane %v2971, 4
  %v2974 = vshll.u32 %v2398, 16
  %v2976 = vrot.slane %v2974, 5
  %v2977 = vsel %vm242, %v2972, %v2976
  %v2979 = vshrl.u32 %v2399, 16
  %v2981 = vrot.slane %v2979, 4
  %v2982 = vshll.u32 %v2399, 16
  %v2984 = vrot.slane %v2982, 5
  %v2985 = vor.u32 %v2981, %v2984
  %v2986 = vrot.slane %v2985, 4
  %v2988 = vshll.u32 %v2400, 16
  %v2990 = vrot.slane %v2988, 5
  %v2991 = vsel %vm242, %v2986, %v2990
  %v2992 = vshrl.u32 %v2400, 16
  %v2994 = vrot.slane %v2992, 4
  %v2995 = vor.u32 %v2994, %v2990
  %v2996 = vrot.slane %v2995, 4
  %v2998 = vshll.u32 %v2401, 16
  %v3000 = vrot.slane %v2998, 5
  %v3001 = vsel %vm242, %v2996, %v3000
  %v3003 = vshrl.u32 %v2402, 16
  %v3005 = vrot.slane %v3003, 4
  %v3006 = vshll.u32 %v2402, 16
  %v3008 = vrot.slane %v3006, 5
  %v3009 = vor.u32 %v3005, %v3008
  %v3010 = vrot.slane %v3009, 4
  %v3012 = vshll.u32 %v2403, 16
  %v3014 = vrot.slane %v3012, 5
  %v3015 = vsel %vm242, %v3010, %v3014
  %v3016 = vshrl.u32 %v2403, 16
  %v3018 = vrot.slane %v3016, 4
  %v3019 = vor.u32 %v3018, %v3014
  %v3020 = vrot.slane %v3019, 4
  %v3022 = vshll.u32 %v2404, 16
  %v3024 = vrot.slane %v3022, 5
  %v3025 = vsel %vm242, %v3020, %v3024
  %v3027 = vshrl.u32 %v2405, 16
  %v3029 = vrot.slane %v3027, 4
  %v3030 = vshll.u32 %v2405, 16
  %v3032 = vrot.slane %v3030, 5
  %v3033 = vor.u32 %v3029, %v3032
  %v3034 = vrot.slane %v3033, 4
  %v3036 = vshll.u32 %v2406, 16
  %v3038 = vrot.slane %v3036, 5
  %v3039 = vsel %vm242, %v3034, %v3038
  %v3040 = vshrl.u32 %v2406, 16
  %v3042 = vrot.slane %v3040, 4
  %v3043 = vor.u32 %v3042, %v3038
  %v3044 = vrot.slane %v3043, 4
  %v3046 = vshll.u32 %v2407, 16
  %v3048 = vrot.slane %v3046, 5
  %v3049 = vsel %vm242, %v3044, %v3048
  %v3051 = vshrl.u32 %v2408, 16
  %v3053 = vrot.slane %v3051, 4
  %v3054 = vshll.u32 %v2408, 16
  %v3056 = vrot.slane %v3054, 5
  %v3057 = vor.u32 %v3053, %v3056
  %v3058 = vrot.slane %v3057, 4
  %v3060 = vshll.u32 %v2409, 16
  %v3062 = vrot.slane %v3060, 5
  %v3063 = vsel %vm242, %v3058, %v3062
  %v3064 = vshrl.u32 %v2409, 16
  %v3066 = vrot.slane %v3064, 4
  %v3067 = vor.u32 %v3066, %v3062
  %v3068 = vrot.slane %v3067, 4
  %v3070 = vshll.u32 %v2410, 16
  %v3072 = vrot.slane %v3070, 5
  %v3073 = vsel %vm242, %v3068, %v3072
  %v3075 = vshrl.u32 %v2411, 16
  %v3077 = vrot.slane %v3075, 4
  %v3078 = vshll.u32 %v2411, 16
  %v3080 = vrot.slane %v3078, 5
  %v3081 = vor.u32 %v3077, %v3080
  %v3082 = vrot.slane %v3081, 4
  %v3084 = vshll.u32 %v2412, 16
  %v3086 = vrot.slane %v3084, 5
  %v3087 = vsel %vm242, %v3082, %v3086
  %v3088 = vshrl.u32 %v2412, 16
  %v3090 = vrot.slane %v3088, 4
  %v3091 = vor.u32 %v3090, %v3086
  %v3092 = vrot.slane %v3091, 4
  %v3094 = vshll.u32 %v2413, 16
  %v3096 = vrot.slane %v3094, 5
  %v3097 = vsel %vm242, %v3092, %v3096
  %v3099 = vshrl.u32 %v2414, 16
  %v3101 = vrot.slane %v3099, 4
  %v3102 = vshll.u32 %v2414, 16
  %v3104 = vrot.slane %v3102, 5
  %v3105 = vor.u32 %v3101, %v3104
  %v3106 = vrot.slane %v3105, 4
  %v3108 = vshll.u32 %v2415, 16
  %v3110 = vrot.slane %v3108, 5
  %v3111 = vsel %vm242, %v3106, %v3110
  %v3112 = vshrl.u32 %v2415, 16
  %v3114 = vrot.slane %v3112, 4
  %v3115 = vor.u32 %v3114, %v3110
  %v3116 = vrot.slane %v3115, 4
  %v3118 = vshll.u32 %v2416, 16
  %v3120 = vrot.slane %v3118, 5
  %v3121 = vsel %vm242, %v3116, %v3120
  %v3123 = vshrl.u32 %v2417, 16
  %v3125 = vrot.slane %v3123, 4
  %v3126 = vshll.u32 %v2417, 16
  %v3128 = vrot.slane %v3126, 5
  %v3129 = vor.u32 %v3125, %v3128
  %v3130 = vrot.slane %v3129, 4
  %v3132 = vshll.u32 %v2418, 16
  %v3134 = vrot.slane %v3132, 5
  %v3135 = vsel %vm242, %v3130, %v3134
  %v3136 = vshrl.u32 %v2418, 16
  %v3138 = vrot.slane %v3136, 4
  %v3139 = vor.u32 %v3138, %v3134
  %v3140 = vrot.slane %v3139, 4
  %v3142 = vshll.u32 %v2419, 16
  %v3144 = vrot.slane %v3142, 5
  %v3145 = vsel %vm242, %v3140, %v3144
  %v3147 = vshrl.u32 %v2420, 16
  %v3149 = vrot.slane %v3147, 4
  %v3150 = vshll.u32 %v2420, 16
  %v3152 = vrot.slane %v3150, 5
  %v3153 = vor.u32 %v3149, %v3152
  %v3154 = vrot.slane %v3153, 4
  %v3156 = vshll.u32 %v2421, 16
  %v3158 = vrot.slane %v3156, 5
  %v3159 = vsel %vm242, %v3154, %v3158
  %v3160 = vshrl.u32 %v2421, 16
  %v3162 = vrot.slane %v3160, 4
  %v3163 = vor.u32 %v3162, %v3158
  %v3164 = vrot.slane %v3163, 4
  %v3166 = vshll.u32 %v2422, 16
  %v3168 = vrot.slane %v3166, 5
  %v3169 = vsel %vm242, %v3164, %v3168
  %v3171 = vshrl.u32 %v2423, 16
  %v3173 = vrot.slane %v3171, 4
  %v3174 = vshll.u32 %v2423, 16
  %v3176 = vrot.slane %v3174, 5
  %v3177 = vor.u32 %v3173, %v3176
  %v3178 = vrot.slane %v3177, 4
  %v3180 = vshll.u32 %v2424, 16
  %v3182 = vrot.slane %v3180, 5
  %v3183 = vsel %vm242, %v3178, %v3182
  %v3184 = vshrl.u32 %v2424, 16
  %v3186 = vrot.slane %v3184, 4
  %v3187 = vor.u32 %v3186, %v3182
  %v3188 = vrot.slane %v3187, 4
  %v3190 = vshll.u32 %v2425, 16
  %v3192 = vrot.slane %v3190, 5
  %v3193 = vsel %vm242, %v3188, %v3192
  %3194 = vrot.lane.b32.xlu0 %v2439, 16
  %v3195 = vpop.permute.xlu0 %3194
  %3196 = vrot.lane.b32.xlu0 %v2449, 16
  %v3197 = vpop.permute.xlu0 %3196
  %3198 = vrot.lane.b32.xlu0 %v2463, 16
  %v3199 = vpop.permute.xlu0 %3198
  %3200 = vrot.lane.b32.xlu0 %v2473, 16
  %v3201 = vpop.permute.xlu0 %3200
  %3202 = vrot.lane.b32.xlu0 %v2487, 16
  %v3203 = vpop.permute.xlu0 %3202
  %3204 = vrot.lane.b32.xlu0 %v2497, 16
  %v3205 = vpop.permute.xlu0 %3204
  %3206 = vrot.lane.b32.xlu0 %v2511, 16
  %v3207 = vpop.permute.xlu0 %3206
  %3208 = vrot.lane.b32.xlu0 %v2521, 16
  %v3209 = vpop.permute.xlu0 %3208
  %3210 = vrot.lane.b32.xlu0 %v2535, 16
  %v3211 = vpop.permute.xlu0 %3210
  %3212 = vrot.lane.b32.xlu0 %v2545, 16
  %v3213 = vpop.permute.xlu0 %3212
  %3214 = vrot.lane.b32.xlu0 %v2559, 16
  %v3215 = vpop.permute.xlu0 %3214
  %3216 = vrot.lane.b32.xlu0 %v2569, 16
  %v3217 = vpop.permute.xlu0 %3216
  %3218 = vrot.lane.b32.xlu0 %v2583, 16
  %v3219 = vpop.permute.xlu0 %3218
  %3220 = vrot.lane.b32.xlu0 %v2593, 16
  %v3221 = vpop.permute.xlu0 %3220
  %3222 = vrot.lane.b32.xlu0 %v2607, 16
  %v3223 = vpop.permute.xlu0 %3222
  %3224 = vrot.lane.b32.xlu0 %v2617, 16
  %v3225 = vpop.permute.xlu0 %3224
  %3226 = vrot.lane.b32.xlu0 %v2631, 16
  %v3227 = vpop.permute.xlu0 %3226
  %3228 = vrot.lane.b32.xlu0 %v2641, 16
  %v3229 = vpop.permute.xlu0 %3228
  %3230 = vrot.lane.b32.xlu0 %v2655, 16
  %v3231 = vpop.permute.xlu0 %3230
  %3232 = vrot.lane.b32.xlu0 %v2665, 16
  %v3233 = vpop.permute.xlu0 %3232
  %3234 = vrot.lane.b32.xlu0 %v2679, 16
  %v3235 = vpop.permute.xlu0 %3234
  %3236 = vrot.lane.b32.xlu0 %v2689, 16
  %v3237 = vpop.permute.xlu0 %3236
  %3238 = vrot.lane.b32.xlu0 %v2703, 16
  %v3239 = vpop.permute.xlu0 %3238
  %3240 = vrot.lane.b32.xlu0 %v2713, 16
  %v3241 = vpop.permute.xlu0 %3240
  %3242 = vrot.lane.b32.xlu0 %v2727, 16
  %v3243 = vpop.permute.xlu0 %3242
  %3244 = vrot.lane.b32.xlu0 %v2737, 16
  %v3245 = vpop.permute.xlu0 %3244
  %3246 = vrot.lane.b32.xlu0 %v2751, 16
  %v3247 = vpop.permute.xlu0 %3246
  %3248 = vrot.lane.b32.xlu0 %v2761, 16
  %v3249 = vpop.permute.xlu0 %3248
  %3250 = vrot.lane.b32.xlu0 %v2775, 16
  %v3251 = vpop.permute.xlu0 %3250
  %3252 = vrot.lane.b32.xlu0 %v2785, 16
  %v3253 = vpop.permute.xlu0 %3252
  %3254 = vrot.lane.b32.xlu0 %v2799, 16
  %v3255 = vpop.permute.xlu0 %3254
  %3256 = vrot.lane.b32.xlu0 %v2809, 16
  %v3257 = vpop.permute.xlu0 %3256
  %3258 = vrot.lane.b32.xlu0 %v2823, 16
  %v3259 = vpop.permute.xlu0 %3258
  %3260 = vrot.lane.b32.xlu0 %v2833, 16
  %v3261 = vpop.permute.xlu0 %3260
  %3262 = vrot.lane.b32.xlu0 %v2847, 16
  %v3263 = vpop.permute.xlu0 %3262
  %3264 = vrot.lane.b32.xlu0 %v2857, 16
  %v3265 = vpop.permute.xlu0 %3264
  %3266 = vrot.lane.b32.xlu0 %v2871, 16
  %v3267 = vpop.permute.xlu0 %3266
  %3268 = vrot.lane.b32.xlu0 %v2881, 16
  %v3269 = vpop.permute.xlu0 %3268
  %3270 = vrot.lane.b32.xlu0 %v2895, 16
  %v3271 = vpop.permute.xlu0 %3270
  %3272 = vrot.lane.b32.xlu0 %v2905, 16
  %v3273 = vpop.permute.xlu0 %3272
  %3274 = vrot.lane.b32.xlu0 %v2919, 16
  %v3275 = vpop.permute.xlu0 %3274
  %3276 = vrot.lane.b32.xlu0 %v2929, 16
  %v3277 = vpop.permute.xlu0 %3276
  %3278 = vrot.lane.b32.xlu0 %v2943, 16
  %v3279 = vpop.permute.xlu0 %3278
  %3280 = vrot.lane.b32.xlu0 %v2953, 16
  %v3281 = vpop.permute.xlu0 %3280
  %3282 = vrot.lane.b32.xlu0 %v2967, 16
  %v3283 = vpop.permute.xlu0 %3282
  %3284 = vrot.lane.b32.xlu0 %v2977, 16
  %v3285 = vpop.permute.xlu0 %3284
  %3286 = vrot.lane.b32.xlu0 %v2991, 16
  %v3287 = vpop.permute.xlu0 %3286
  %3288 = vrot.lane.b32.xlu0 %v3001, 16
  %v3289 = vpop.permute.xlu0 %3288
  %3290 = vrot.lane.b32.xlu0 %v3015, 16
  %v3291 = vpop.permute.xlu0 %3290
  %3292 = vrot.lane.b32.xlu0 %v3025, 16
  %v3293 = vpop.permute.xlu0 %3292
  %3294 = vrot.lane.b32.xlu0 %v3039, 16
  %v3295 = vpop.permute.xlu0 %3294
  %3296 = vrot.lane.b32.xlu0 %v3049, 16
  %v3297 = vpop.permute.xlu0 %3296
  %3298 = vrot.lane.b32.xlu0 %v3063, 16
  %v3299 = vpop.permute.xlu0 %3298
  %3300 = vrot.lane.b32.xlu0 %v3073, 16
  %v3301 = vpop.permute.xlu0 %3300
  %3302 = vrot.lane.b32.xlu0 %v3087, 16
  %v3303 = vpop.permute.xlu0 %3302
  %3304 = vrot.lane.b32.xlu0 %v3097, 16
  %v3305 = vpop.permute.xlu0 %3304
  %3306 = vrot.lane.b32.xlu0 %v3111, 16
  %v3307 = vpop.permute.xlu0 %3306
  %3308 = vrot.lane.b32.xlu0 %v3121, 16
  %v3309 = vpop.permute.xlu0 %3308
  %3310 = vrot.lane.b32.xlu0 %v3135, 16
  %v3311 = vpop.permute.xlu0 %3310
  %3312 = vrot.lane.b32.xlu0 %v3145, 16
  %v3313 = vpop.permute.xlu0 %3312
  %3314 = vrot.lane.b32.xlu0 %v3159, 16
  %v3315 = vpop.permute.xlu0 %3314
  %3316 = vrot.lane.b32.xlu0 %v3169, 16
  %v3317 = vpop.permute.xlu0 %3316
  %3318 = vrot.lane.b32.xlu0 %v3183, 16
  %v3319 = vpop.permute.xlu0 %3318
  %3320 = vrot.lane.b32.xlu0 %v3193, 16
  %v3321 = vpop.permute.xlu0 %3320
  %vm3386 = vcmask 158848
  %3387 = vst.msk [vmem:[#allocation2] sm:$0xf] %vm3386, %v3195
  %3388 = vst.msk [vmem:[#allocation2 + $0x4] sm:$0xf] %vm3386, %v3197
  %3389 = vst.msk [vmem:[#allocation2 + $0x8] sm:$0xf] %vm3386, %v3199
  %3390 = vst.msk [vmem:[#allocation2 + $0xc] sm:$0xf] %vm3386, %v3201
  %3391 = vst.msk [vmem:[#allocation2 + $0x10] sm:$0xf] %vm3386, %v3203
  %3392 = vst.msk [vmem:[#allocation2 + $0x14] sm:$0xf] %vm3386, %v3205
  %3393 = vst.msk [vmem:[#allocation2 + $0x18] sm:$0xf] %vm3386, %v3207
  %3394 = vst.msk [vmem:[#allocation2 + $0x1c] sm:$0xf] %vm3386, %v3209
  %3395 = vst.msk [vmem:[#allocation2 + $0x20] sm:$0xf] %vm3386, %v3211
  %3396 = vst.msk [vmem:[#allocation2 + $0x24] sm:$0xf] %vm3386, %v3213
  %3397 = vst.msk [vmem:[#allocation2 + $0x28] sm:$0xf] %vm3386, %v3215
  %3398 = vst.msk [vmem:[#allocation2 + $0x2c] sm:$0xf] %vm3386, %v3217
  %3399 = vst.msk [vmem:[#allocation2 + $0x30] sm:$0xf] %vm3386, %v3219
  %3400 = vst.msk [vmem:[#allocation2 + $0x34] sm:$0xf] %vm3386, %v3221
  %3401 = vst.msk [vmem:[#allocation2 + $0x38] sm:$0xf] %vm3386, %v3223
  %3402 = vst.msk [vmem:[#allocation2 + $0x3c] sm:$0xf] %vm3386, %v3225
  %3403 = vst.msk [vmem:[#allocation2 + $0x40] sm:$0xf] %vm3386, %v3227
  %3404 = vst.msk [vmem:[#allocation2 + $0x44] sm:$0xf] %vm3386, %v3229
  %3405 = vst.msk [vmem:[#allocation2 + $0x48] sm:$0xf] %vm3386, %v3231
  %3406 = vst.msk [vmem:[#allocation2 + $0x4c] sm:$0xf] %vm3386, %v3233
  %3407 = vst.msk [vmem:[#allocation2 + $0x50] sm:$0xf] %vm3386, %v3235
  %3408 = vst.msk [vmem:[#allocation2 + $0x54] sm:$0xf] %vm3386, %v3237
  %3409 = vst.msk [vmem:[#allocation2 + $0x58] sm:$0xf] %vm3386, %v3239
  %3410 = vst.msk [vmem:[#allocation2 + $0x5c] sm:$0xf] %vm3386, %v3241
  %3411 = vst.msk [vmem:[#allocation2 + $0x60] sm:$0xf] %vm3386, %v3243
  %3412 = vst.msk [vmem:[#allocation2 + $0x64] sm:$0xf] %vm3386, %v3245
  %3413 = vst.msk [vmem:[#allocation2 + $0x68] sm:$0xf] %vm3386, %v3247
  %3414 = vst.msk [vmem:[#allocation2 + $0x6c] sm:$0xf] %vm3386, %v3249
  %3415 = vst.msk [vmem:[#allocation2 + $0x70] sm:$0xf] %vm3386, %v3251
  %3416 = vst.msk [vmem:[#allocation2 + $0x74] sm:$0xf] %vm3386, %v3253
  %3417 = vst.msk [vmem:[#allocation2 + $0x78] sm:$0xf] %vm3386, %v3255
  %3418 = vst.msk [vmem:[#allocation2 + $0x7c] sm:$0xf] %vm3386, %v3257
  %3419 = vst.msk [vmem:[#allocation2 + $0x80] sm:$0xf] %vm3386, %v3259
  %3420 = vst.msk [vmem:[#allocation2 + $0x84] sm:$0xf] %vm3386, %v3261
  %3421 = vst.msk [vmem:[#allocation2 + $0x88] sm:$0xf] %vm3386, %v3263
  %3422 = vst.msk [vmem:[#allocation2 + $0x8c] sm:$0xf] %vm3386, %v3265
  %3423 = vst.msk [vmem:[#allocation2 + $0x90] sm:$0xf] %vm3386, %v3267
  %3424 = vst.msk [vmem:[#allocation2 + $0x94] sm:$0xf] %vm3386, %v3269
  %3425 = vst.msk [vmem:[#allocation2 + $0x98] sm:$0xf] %vm3386, %v3271
  %3426 = vst.msk [vmem:[#allocation2 + $0x9c] sm:$0xf] %vm3386, %v3273
  %3427 = vst.msk [vmem:[#allocation2 + $0xa0] sm:$0xf] %vm3386, %v3275
  %3428 = vst.msk [vmem:[#allocation2 + $0xa4] sm:$0xf] %vm3386, %v3277
  %3429 = vst.msk [vmem:[#allocation2 + $0xa8] sm:$0xf] %vm3386, %v3279
  %3430 = vst.msk [vmem:[#allocation2 + $0xac] sm:$0xf] %vm3386, %v3281
  %3431 = vst.msk [vmem:[#allocation2 + $0xb0] sm:$0xf] %vm3386, %v3283
  %3432 = vst.msk [vmem:[#allocation2 + $0xb4] sm:$0xf] %vm3386, %v3285
  %3433 = vst.msk [vmem:[#allocation2 + $0xb8] sm:$0xf] %vm3386, %v3287
  %3434 = vst.msk [vmem:[#allocation2 + $0xbc] sm:$0xf] %vm3386, %v3289
  %3435 = vst.msk [vmem:[#allocation2 + $0xc0] sm:$0xf] %vm3386, %v3291
  %3436 = vst.msk [vmem:[#allocation2 + $0xc4] sm:$0xf] %vm3386, %v3293
  %3437 = vst.msk [vmem:[#allocation2 + $0xc8] sm:$0xf] %vm3386, %v3295
  %3438 = vst.msk [vmem:[#allocation2 + $0xcc] sm:$0xf] %vm3386, %v3297
  %3439 = vst.msk [vmem:[#allocation2 + $0xd0] sm:$0xf] %vm3386, %v3299
  %3440 = vst.msk [vmem:[#allocation2 + $0xd4] sm:$0xf] %vm3386, %v3301
  %3441 = vst.msk [vmem:[#allocation2 + $0xd8] sm:$0xf] %vm3386, %v3303
  %3442 = vst.msk [vmem:[#allocation2 + $0xdc] sm:$0xf] %vm3386, %v3305
  %3443 = vst.msk [vmem:[#allocation2 + $0xe0] sm:$0xf] %vm3386, %v3307
  %3444 = vst.msk [vmem:[#allocation2 + $0xe4] sm:$0xf] %vm3386, %v3309
  %3445 = vst.msk [vmem:[#allocation2 + $0xe8] sm:$0xf] %vm3386, %v3311
  %3446 = vst.msk [vmem:[#allocation2 + $0xec] sm:$0xf] %vm3386, %v3313
  %3447 = vst.msk [vmem:[#allocation2 + $0xf0] sm:$0xf] %vm3386, %v3315
  %3448 = vst.msk [vmem:[#allocation2 + $0xf4] sm:$0xf] %vm3386, %v3317
  %3449 = vst.msk [vmem:[#allocation2 + $0xf8] sm:$0xf] %vm3386, %v3319
  %3450 = vst.msk [vmem:[#allocation2 + $0xfc] sm:$0xf] %vm3386, %v3321
  %v3451 = vld [vmem:[%s1944] sm:$0xe]
  %v3452 = vld [vmem:[%s1944 + $0x4] sm:$0xf]
  %v3453 = vld [vmem:[%s1944 + $0x8] sm:$0x1]
  %v3454 = vld [vmem:[%s1944 + $0xc] sm:$0xe]
  %v3455 = vld [vmem:[%s1944 + $0x10] sm:$0xf]
  %v3456 = vld [vmem:[%s1944 + $0x14] sm:$0x1]
  %v3457 = vld [vmem:[%s1944 + $0x18] sm:$0xe]
  %v3458 = vld [vmem:[%s1944 + $0x1c] sm:$0xf]
  %v3459 = vld [vmem:[%s1944 + $0x20] sm:$0x1]
  %v3460 = vld [vmem:[%s1944 + $0x24] sm:$0xe]
  %v3461 = vld [vmem:[%s1944 + $0x28] sm:$0xf]
  %v3462 = vld [vmem:[%s1944 + $0x2c] sm:$0x1]
  %v3463 = vld [vmem:[%s1944 + $0x30] sm:$0xe]
  %v3464 = vld [vmem:[%s1944 + $0x34] sm:$0xf]
  %v3465 = vld [vmem:[%s1944 + $0x38] sm:$0x1]
  %v3466 = vld [vmem:[%s1944 + $0x3c] sm:$0xe]
  %v3467 = vld [vmem:[%s1944 + $0x40] sm:$0xf]
  %v3468 = vld [vmem:[%s1944 + $0x44] sm:$0x1]
  %v3469 = vld [vmem:[%s1944 + $0x48] sm:$0xe]
  %v3470 = vld [vmem:[%s1944 + $0x4c] sm:$0xf]
  %v3471 = vld [vmem:[%s1944 + $0x50] sm:$0x1]
  %v3472 = vld [vmem:[%s1944 + $0x54] sm:$0xe]
  %v3473 = vld [vmem:[%s1944 + $0x58] sm:$0xf]
  %v3474 = vld [vmem:[%s1944 + $0x5c] sm:$0x1]
  %v3475 = vld [vmem:[%s1944 + $0x60] sm:$0xe]
  %v3476 = vld [vmem:[%s1944 + $0x64] sm:$0xf]
  %v3477 = vld [vmem:[%s1944 + $0x68] sm:$0x1]
  %v3478 = vld [vmem:[%s1944 + $0x6c] sm:$0xe]
  %v3479 = vld [vmem:[%s1944 + $0x70] sm:$0xf]
  %v3480 = vld [vmem:[%s1944 + $0x74] sm:$0x1]
  %v3481 = vld [vmem:[%s1944 + $0x78] sm:$0xe]
  %v3482 = vld [vmem:[%s1944 + $0x7c] sm:$0xf]
  %v3483 = vld [vmem:[%s1944 + $0x80] sm:$0x1]
  %v3484 = vld [vmem:[%s1944 + $0x84] sm:$0xe]
  %v3485 = vld [vmem:[%s1944 + $0x88] sm:$0xf]
  %v3486 = vld [vmem:[%s1944 + $0x8c] sm:$0x1]
  %v3487 = vld [vmem:[%s1944 + $0x90] sm:$0xe]
  %v3488 = vld [vmem:[%s1944 + $0x94] sm:$0xf]
  %v3489 = vld [vmem:[%s1944 + $0x98] sm:$0x1]
  %v3490 = vld [vmem:[%s1944 + $0x9c] sm:$0xe]
  %v3491 = vld [vmem:[%s1944 + $0xa0] sm:$0xf]
  %v3492 = vld [vmem:[%s1944 + $0xa4] sm:$0x1]
  %v3493 = vld [vmem:[%s1944 + $0xa8] sm:$0xe]
  %v3494 = vld [vmem:[%s1944 + $0xac] sm:$0xf]
  %v3495 = vld [vmem:[%s1944 + $0xb0] sm:$0x1]
  %v3496 = vld [vmem:[%s1944 + $0xb4] sm:$0xe]
  %v3497 = vld [vmem:[%s1944 + $0xb8] sm:$0xf]
  %v3498 = vld [vmem:[%s1944 + $0xbc] sm:$0x1]
  %v3499 = vld [vmem:[%s1944 + $0xd8] sm:$0xe]
  %v3500 = vld [vmem:[%s1944 + $0xdc] sm:$0xf]
  %v3501 = vld [vmem:[%s1944 + $0xe0] sm:$0x1]
  %v3502 = vld [vmem:[%s1944 + $0xe4] sm:$0xe]
  %v3503 = vld [vmem:[%s1944 + $0xe8] sm:$0xf]
  %v3504 = vld [vmem:[%s1944 + $0xec] sm:$0x1]
  %v3505 = vld [vmem:[%s1944 + $0xf0] sm:$0xe]
  %v3506 = vld [vmem:[%s1944 + $0xf4] sm:$0xf]
  %v3507 = vld [vmem:[%s1944 + $0xf8] sm:$0x1]
  %v3508 = vld [vmem:[%s1944 + $0xfc] sm:$0xe]
  %v3509 = vld [vmem:[%s1944 + $0x100] sm:$0xf]
  %v3510 = vld [vmem:[%s1944 + $0x104] sm:$0x1]
  %v3511 = vld [vmem:[%s1944 + $0x108] sm:$0xe]
  %v3512 = vld [vmem:[%s1944 + $0x10c] sm:$0xf]
  %v3513 = vld [vmem:[%s1944 + $0x110] sm:$0x1]
  %v3514 = vld [vmem:[%s1944 + $0x114] sm:$0xe]
  %v3515 = vld [vmem:[%s1944 + $0x118] sm:$0xf]
  %v3516 = vld [vmem:[%s1944 + $0x11c] sm:$0x1]
  %v3517 = vld [vmem:[%s1944 + $0x120] sm:$0xe]
  %v3518 = vld [vmem:[%s1944 + $0x124] sm:$0xf]
  %v3519 = vld [vmem:[%s1944 + $0x128] sm:$0x1]
  %v3520 = vld [vmem:[%s1944 + $0x12c] sm:$0xe]
  %v3521 = vld [vmem:[%s1944 + $0x130] sm:$0xf]
  %v3522 = vld [vmem:[%s1944 + $0x134] sm:$0x1]
  %v3523 = vld [vmem:[%s1944 + $0x138] sm:$0xe]
  %v3524 = vld [vmem:[%s1944 + $0x13c] sm:$0xf]
  %v3525 = vld [vmem:[%s1944 + $0x140] sm:$0x1]
  %v3526 = vld [vmem:[%s1944 + $0x144] sm:$0xe]
  %v3527 = vld [vmem:[%s1944 + $0x148] sm:$0xf]
  %v3528 = vld [vmem:[%s1944 + $0x14c] sm:$0x1]
  %v3529 = vld [vmem:[%s1944 + $0x150] sm:$0xe]
  %v3530 = vld [vmem:[%s1944 + $0x154] sm:$0xf]
  %v3531 = vld [vmem:[%s1944 + $0x158] sm:$0x1]
  %v3532 = vld [vmem:[%s1944 + $0x15c] sm:$0xe]
  %v3533 = vld [vmem:[%s1944 + $0x160] sm:$0xf]
  %v3534 = vld [vmem:[%s1944 + $0x164] sm:$0x1]
  %v3535 = vld [vmem:[%s1944 + $0x168] sm:$0xe]
  %v3536 = vld [vmem:[%s1944 + $0x16c] sm:$0xf]
  %v3537 = vld [vmem:[%s1944 + $0x170] sm:$0x1]
  %v3538 = vld [vmem:[%s1944 + $0x174] sm:$0xe]
  %v3539 = vld [vmem:[%s1944 + $0x178] sm:$0xf]
  %v3540 = vld [vmem:[%s1944 + $0x17c] sm:$0x1]
  %v3541 = vld [vmem:[%s1944 + $0x180] sm:$0xe]
  %v3542 = vld [vmem:[%s1944 + $0x184] sm:$0xf]
  %v3543 = vld [vmem:[%s1944 + $0x188] sm:$0x1]
  %v3544 = vld [vmem:[%s1944 + $0x18c] sm:$0xe]
  %v3545 = vld [vmem:[%s1944 + $0x190] sm:$0xf]
  %v3546 = vld [vmem:[%s1944 + $0x194] sm:$0x1]
  %v3643 = vrot.slane %v3451, 5
  %v3644 = vrot.slane %v3643, 4
  %v3645 = vrot.slane %v3452, 5
  %v3646 = vsel %vm1462, %v3644, %v3645
  %v3647 = vrot.slane %v3645, 4
  %v3648 = vrot.slane %v3453, 5
  %v3649 = vsel %vm1462, %v3647, %v3648
  %v3650 = vrot.slane %v3454, 5
  %v3651 = vrot.slane %v3650, 4
  %v3652 = vrot.slane %v3455, 5
  %v3653 = vsel %vm1462, %v3651, %v3652
  %v3654 = vrot.slane %v3652, 4
  %v3655 = vrot.slane %v3456, 5
  %v3656 = vsel %vm1462, %v3654, %v3655
  %v3657 = vrot.slane %v3457, 5
  %v3658 = vrot.slane %v3657, 4
  %v3659 = vrot.slane %v3458, 5
  %v3660 = vsel %vm1462, %v3658, %v3659
  %v3661 = vrot.slane %v3659, 4
  %v3662 = vrot.slane %v3459, 5
  %v3663 = vsel %vm1462, %v3661, %v3662
  %v3664 = vrot.slane %v3460, 5
  %v3665 = vrot.slane %v3664, 4
  %v3666 = vrot.slane %v3461, 5
  %v3667 = vsel %vm1462, %v3665, %v3666
  %v3668 = vrot.slane %v3666, 4
  %v3669 = vrot.slane %v3462, 5
  %v3670 = vsel %vm1462, %v3668, %v3669
  %v3671 = vrot.slane %v3463, 5
  %v3672 = vrot.slane %v3671, 4
  %v3673 = vrot.slane %v3464, 5
  %v3674 = vsel %vm1462, %v3672, %v3673
  %v3675 = vrot.slane %v3673, 4
  %v3676 = vrot.slane %v3465, 5
  %v3677 = vsel %vm1462, %v3675, %v3676
  %v3678 = vrot.slane %v3466, 5
  %v3679 = vrot.slane %v3678, 4
  %v3680 = vrot.slane %v3467, 5
  %v3681 = vsel %vm1462, %v3679, %v3680
  %v3682 = vrot.slane %v3680, 4
  %v3683 = vrot.slane %v3468, 5
  %v3684 = vsel %vm1462, %v3682, %v3683
  %v3685 = vrot.slane %v3469, 5
  %v3686 = vrot.slane %v3685, 4
  %v3687 = vrot.slane %v3470, 5
  %v3688 = vsel %vm1462, %v3686, %v3687
  %v3689 = vrot.slane %v3687, 4
  %v3690 = vrot.slane %v3471, 5
  %v3691 = vsel %vm1462, %v3689, %v3690
  %v3692 = vrot.slane %v3472, 5
  %v3693 = vrot.slane %v3692, 4
  %v3694 = vrot.slane %v3473, 5
  %v3695 = vsel %vm1462, %v3693, %v3694
  %v3696 = vrot.slane %v3694, 4
  %v3697 = vrot.slane %v3474, 5
  %v3698 = vsel %vm1462, %v3696, %v3697
  %v3699 = vrot.slane %v3475, 5
  %v3700 = vrot.slane %v3699, 4
  %v3701 = vrot.slane %v3476, 5
  %v3702 = vsel %vm1462, %v3700, %v3701
  %v3703 = vrot.slane %v3701, 4
  %v3704 = vrot.slane %v3477, 5
  %v3705 = vsel %vm1462, %v3703, %v3704
  %v3706 = vrot.slane %v3478, 5
  %v3707 = vrot.slane %v3706, 4
  %v3708 = vrot.slane %v3479, 5
  %v3709 = vsel %vm1462, %v3707, %v3708
  %v3710 = vrot.slane %v3708, 4
  %v3711 = vrot.slane %v3480, 5
  %v3712 = vsel %vm1462, %v3710, %v3711
  %v3713 = vrot.slane %v3481, 5
  %v3714 = vrot.slane %v3713, 4
  %v3715 = vrot.slane %v3482, 5
  %v3716 = vsel %vm1462, %v3714, %v3715
  %v3717 = vrot.slane %v3715, 4
  %v3718 = vrot.slane %v3483, 5
  %v3719 = vsel %vm1462, %v3717, %v3718
  %v3720 = vrot.slane %v3484, 5
  %v3721 = vrot.slane %v3720, 4
  %v3722 = vrot.slane %v3485, 5
  %v3723 = vsel %vm1462, %v3721, %v3722
  %v3724 = vrot.slane %v3722, 4
  %v3725 = vrot.slane %v3486, 5
  %v3726 = vsel %vm1462, %v3724, %v3725
  %v3727 = vrot.slane %v3487, 5
  %v3728 = vrot.slane %v3727, 4
  %v3729 = vrot.slane %v3488, 5
  %v3730 = vsel %vm1462, %v3728, %v3729
  %v3731 = vrot.slane %v3729, 4
  %v3732 = vrot.slane %v3489, 5
  %v3733 = vsel %vm1462, %v3731, %v3732
  %v3734 = vrot.slane %v3490, 5
  %v3735 = vrot.slane %v3734, 4
  %v3736 = vrot.slane %v3491, 5
  %v3737 = vsel %vm1462, %v3735, %v3736
  %v3738 = vrot.slane %v3736, 4
  %v3739 = vrot.slane %v3492, 5
  %v3740 = vsel %vm1462, %v3738, %v3739
  %v3741 = vrot.slane %v3493, 5
  %v3742 = vrot.slane %v3741, 4
  %v3743 = vrot.slane %v3494, 5
  %v3744 = vsel %vm1462, %v3742, %v3743
  %v3745 = vrot.slane %v3743, 4
  %v3746 = vrot.slane %v3495, 5
  %v3747 = vsel %vm1462, %v3745, %v3746
  %v3748 = vrot.slane %v3496, 5
  %v3749 = vrot.slane %v3748, 4
  %v3750 = vrot.slane %v3497, 5
  %v3751 = vsel %vm1462, %v3749, %v3750
  %v3752 = vrot.slane %v3750, 4
  %v3753 = vrot.slane %v3498, 5
  %v3754 = vsel %vm1462, %v3752, %v3753
  %v3755 = vrot.slane %v3499, 5
  %v3756 = vrot.slane %v3755, 4
  %v3757 = vrot.slane %v3500, 5
  %v3758 = vsel %vm1462, %v3756, %v3757
  %v3759 = vrot.slane %v3757, 4
  %v3760 = vrot.slane %v3501, 5
  %v3761 = vsel %vm1462, %v3759, %v3760
  %v3762 = vrot.slane %v3502, 5
  %v3763 = vrot.slane %v3762, 4
  %v3764 = vrot.slane %v3503, 5
  %v3765 = vsel %vm1462, %v3763, %v3764
  %v3766 = vrot.slane %v3764, 4
  %v3767 = vrot.slane %v3504, 5
  %v3768 = vsel %vm1462, %v3766, %v3767
  %v3769 = vrot.slane %v3505, 5
  %v3770 = vrot.slane %v3769, 4
  %v3771 = vrot.slane %v3506, 5
  %v3772 = vsel %vm1462, %v3770, %v3771
  %v3773 = vrot.slane %v3771, 4
  %v3774 = vrot.slane %v3507, 5
  %v3775 = vsel %vm1462, %v3773, %v3774
  %v3776 = vrot.slane %v3508, 5
  %v3777 = vrot.slane %v3776, 4
  %v3778 = vrot.slane %v3509, 5
  %v3779 = vsel %vm1462, %v3777, %v3778
  %v3780 = vrot.slane %v3778, 4
  %v3781 = vrot.slane %v3510, 5
  %v3782 = vsel %vm1462, %v3780, %v3781
  %v3783 = vrot.slane %v3511, 5
  %v3784 = vrot.slane %v3783, 4
  %v3785 = vrot.slane %v3512, 5
  %v3786 = vsel %vm1462, %v3784, %v3785
  %v3787 = vrot.slane %v3785, 4
  %v3788 = vrot.slane %v3513, 5
  %v3789 = vsel %vm1462, %v3787, %v3788
  %v3790 = vrot.slane %v3514, 5
  %v3791 = vrot.slane %v3790, 4
  %v3792 = vrot.slane %v3515, 5
  %v3793 = vsel %vm1462, %v3791, %v3792
  %v3794 = vrot.slane %v3792, 4
  %v3795 = vrot.slane %v3516, 5
  %v3796 = vsel %vm1462, %v3794, %v3795
  %v3797 = vrot.slane %v3517, 5
  %v3798 = vrot.slane %v3797, 4
  %v3799 = vrot.slane %v3518, 5
  %v3800 = vsel %vm1462, %v3798, %v3799
  %v3801 = vrot.slane %v3799, 4
  %v3802 = vrot.slane %v3519, 5
  %v3803 = vsel %vm1462, %v3801, %v3802
  %v3804 = vrot.slane %v3520, 5
  %v3805 = vrot.slane %v3804, 4
  %v3806 = vrot.slane %v3521, 5
  %v3807 = vsel %vm1462, %v3805, %v3806
  %v3808 = vrot.slane %v3806, 4
  %v3809 = vrot.slane %v3522, 5
  %v3810 = vsel %vm1462, %v3808, %v3809
  %v3811 = vrot.slane %v3523, 5
  %v3812 = vrot.slane %v3811, 4
  %v3813 = vrot.slane %v3524, 5
  %v3814 = vsel %vm1462, %v3812, %v3813
  %v3815 = vrot.slane %v3813, 4
  %v3816 = vrot.slane %v3525, 5
  %v3817 = vsel %vm1462, %v3815, %v3816
  %v3818 = vrot.slane %v3526, 5
  %v3819 = vrot.slane %v3818, 4
  %v3820 = vrot.slane %v3527, 5
  %v3821 = vsel %vm1462, %v3819, %v3820
  %v3822 = vrot.slane %v3820, 4
  %v3823 = vrot.slane %v3528, 5
  %v3824 = vsel %vm1462, %v3822, %v3823
  %v3825 = vrot.slane %v3529, 5
  %v3826 = vrot.slane %v3825, 4
  %v3827 = vrot.slane %v3530, 5
  %v3828 = vsel %vm1462, %v3826, %v3827
  %v3829 = vrot.slane %v3827, 4
  %v3830 = vrot.slane %v3531, 5
  %v3831 = vsel %vm1462, %v3829, %v3830
  %v3832 = vrot.slane %v3532, 5
  %v3833 = vrot.slane %v3832, 4
  %v3834 = vrot.slane %v3533, 5
  %v3835 = vsel %vm1462, %v3833, %v3834
  %v3836 = vrot.slane %v3834, 4
  %v3837 = vrot.slane %v3534, 5
  %v3838 = vsel %vm1462, %v3836, %v3837
  %v3839 = vrot.slane %v3535, 5
  %v3840 = vrot.slane %v3839, 4
  %v3841 = vrot.slane %v3536, 5
  %v3842 = vsel %vm1462, %v3840, %v3841
  %v3843 = vrot.slane %v3841, 4
  %v3844 = vrot.slane %v3537, 5
  %v3845 = vsel %vm1462, %v3843, %v3844
  %v3846 = vrot.slane %v3538, 5
  %v3847 = vrot.slane %v3846, 4
  %v3848 = vrot.slane %v3539, 5
  %v3849 = vsel %vm1462, %v3847, %v3848
  %v3850 = vrot.slane %v3848, 4
  %v3851 = vrot.slane %v3540, 5
  %v3852 = vsel %vm1462, %v3850, %v3851
  %v3853 = vrot.slane %v3541, 5
  %v3854 = vrot.slane %v3853, 4
  %v3855 = vrot.slane %v3542, 5
  %v3856 = vsel %vm1462, %v3854, %v3855
  %v3857 = vrot.slane %v3855, 4
  %v3858 = vrot.slane %v3543, 5
  %v3859 = vsel %vm1462, %v3857, %v3858
  %v3860 = vrot.slane %v3544, 5
  %v3861 = vrot.slane %v3860, 4
  %v3862 = vrot.slane %v3545, 5
  %v3863 = vsel %vm1462, %v3861, %v3862
  %v3864 = vrot.slane %v3862, 4
  %v3865 = vrot.slane %v3546, 5
  %v3866 = vsel %vm1462, %v3864, %v3865
  %3867 = vrot.lane.b32.xlu0 %v3646, 20
  %v3868 = vpop.permute.xlu0 %3867
  %3869 = vrot.lane.b32.xlu0 %v3649, 20
  %v3870 = vpop.permute.xlu0 %3869
  %3871 = vrot.lane.b32.xlu0 %v3653, 20
  %v3872 = vpop.permute.xlu0 %3871
  %3873 = vrot.lane.b32.xlu0 %v3656, 20
  %v3874 = vpop.permute.xlu0 %3873
  %3875 = vrot.lane.b32.xlu0 %v3660, 20
  %v3876 = vpop.permute.xlu0 %3875
  %3877 = vrot.lane.b32.xlu0 %v3663, 20
  %v3878 = vpop.permute.xlu0 %3877
  %3879 = vrot.lane.b32.xlu0 %v3667, 20
  %v3880 = vpop.permute.xlu0 %3879
  %3881 = vrot.lane.b32.xlu0 %v3670, 20
  %v3882 = vpop.permute.xlu0 %3881
  %3883 = vrot.lane.b32.xlu0 %v3674, 20
  %v3884 = vpop.permute.xlu0 %3883
  %3885 = vrot.lane.b32.xlu0 %v3677, 20
  %v3886 = vpop.permute.xlu0 %3885
  %3887 = vrot.lane.b32.xlu0 %v3681, 20
  %v3888 = vpop.permute.xlu0 %3887
  %3889 = vrot.lane.b32.xlu0 %v3684, 20
  %v3890 = vpop.permute.xlu0 %3889
  %3891 = vrot.lane.b32.xlu0 %v3688, 20
  %v3892 = vpop.permute.xlu0 %3891
  %3893 = vrot.lane.b32.xlu0 %v3691, 20
  %v3894 = vpop.permute.xlu0 %3893
  %3895 = vrot.lane.b32.xlu0 %v3695, 20
  %v3896 = vpop.permute.xlu0 %3895
  %3897 = vrot.lane.b32.xlu0 %v3698, 20
  %v3898 = vpop.permute.xlu0 %3897
  %3899 = vrot.lane.b32.xlu0 %v3702, 20
  %v3900 = vpop.permute.xlu0 %3899
  %3901 = vrot.lane.b32.xlu0 %v3705, 20
  %v3902 = vpop.permute.xlu0 %3901
  %3903 = vrot.lane.b32.xlu0 %v3709, 20
  %v3904 = vpop.permute.xlu0 %3903
  %3905 = vrot.lane.b32.xlu0 %v3712, 20
  %v3906 = vpop.permute.xlu0 %3905
  %3907 = vrot.lane.b32.xlu0 %v3716, 20
  %v3908 = vpop.permute.xlu0 %3907
  %3909 = vrot.lane.b32.xlu0 %v3719, 20
  %v3910 = vpop.permute.xlu0 %3909
  %3911 = vrot.lane.b32.xlu0 %v3723, 20
  %v3912 = vpop.permute.xlu0 %3911
  %3913 = vrot.lane.b32.xlu0 %v3726, 20
  %v3914 = vpop.permute.xlu0 %3913
  %3915 = vrot.lane.b32.xlu0 %v3730, 20
  %v3916 = vpop.permute.xlu0 %3915
  %3917 = vrot.lane.b32.xlu0 %v3733, 20
  %v3918 = vpop.permute.xlu0 %3917
  %3919 = vrot.lane.b32.xlu0 %v3737, 20
  %v3920 = vpop.permute.xlu0 %3919
  %3921 = vrot.lane.b32.xlu0 %v3740, 20
  %v3922 = vpop.permute.xlu0 %3921
  %3923 = vrot.lane.b32.xlu0 %v3744, 20
  %v3924 = vpop.permute.xlu0 %3923
  %3925 = vrot.lane.b32.xlu0 %v3747, 20
  %v3926 = vpop.permute.xlu0 %3925
  %3927 = vrot.lane.b32.xlu0 %v3751, 20
  %v3928 = vpop.permute.xlu0 %3927
  %3929 = vrot.lane.b32.xlu0 %v3754, 20
  %v3930 = vpop.permute.xlu0 %3929
  %3931 = vrot.lane.b32.xlu0 %v3758, 20
  %v3932 = vpop.permute.xlu0 %3931
  %3933 = vrot.lane.b32.xlu0 %v3761, 20
  %v3934 = vpop.permute.xlu0 %3933
  %3935 = vrot.lane.b32.xlu0 %v3765, 20
  %v3936 = vpop.permute.xlu0 %3935
  %3937 = vrot.lane.b32.xlu0 %v3768, 20
  %v3938 = vpop.permute.xlu0 %3937
  %3939 = vrot.lane.b32.xlu0 %v3772, 20
  %v3940 = vpop.permute.xlu0 %3939
  %3941 = vrot.lane.b32.xlu0 %v3775, 20
  %v3942 = vpop.permute.xlu0 %3941
  %3943 = vrot.lane.b32.xlu0 %v3779, 20
  %v3944 = vpop.permute.xlu0 %3943
  %3945 = vrot.lane.b32.xlu0 %v3782, 20
  %v3946 = vpop.permute.xlu0 %3945
  %3947 = vrot.lane.b32.xlu0 %v3786, 20
  %v3948 = vpop.permute.xlu0 %3947
  %3949 = vrot.lane.b32.xlu0 %v3789, 20
  %v3950 = vpop.permute.xlu0 %3949
  %3951 = vrot.lane.b32.xlu0 %v3793, 20
  %v3952 = vpop.permute.xlu0 %3951
  %3953 = vrot.lane.b32.xlu0 %v3796, 20
  %v3954 = vpop.permute.xlu0 %3953
  %3955 = vrot.lane.b32.xlu0 %v3800, 20
  %v3956 = vpop.permute.xlu0 %3955
  %3957 = vrot.lane.b32.xlu0 %v3803, 20
  %v3958 = vpop.permute.xlu0 %3957
  %3959 = vrot.lane.b32.xlu0 %v3807, 20
  %v3960 = vpop.permute.xlu0 %3959
  %3961 = vrot.lane.b32.xlu0 %v3810, 20
  %v3962 = vpop.permute.xlu0 %3961
  %3963 = vrot.lane.b32.xlu0 %v3814, 20
  %v3964 = vpop.permute.xlu0 %3963
  %3965 = vrot.lane.b32.xlu0 %v3817, 20
  %v3966 = vpop.permute.xlu0 %3965
  %3967 = vrot.lane.b32.xlu0 %v3821, 20
  %v3968 = vpop.permute.xlu0 %3967
  %3969 = vrot.lane.b32.xlu0 %v3824, 20
  %v3970 = vpop.permute.xlu0 %3969
  %3971 = vrot.lane.b32.xlu0 %v3828, 20
  %v3972 = vpop.permute.xlu0 %3971
  %3973 = vrot.lane.b32.xlu0 %v3831, 20
  %v3974 = vpop.permute.xlu0 %3973
  %3975 = vrot.lane.b32.xlu0 %v3835, 20
  %v3976 = vpop.permute.xlu0 %3975
  %3977 = vrot.lane.b32.xlu0 %v3838, 20
  %v3978 = vpop.permute.xlu0 %3977
  %3979 = vrot.lane.b32.xlu0 %v3842, 20
  %v3980 = vpop.permute.xlu0 %3979
  %3981 = vrot.lane.b32.xlu0 %v3845, 20
  %v3982 = vpop.permute.xlu0 %3981
  %3983 = vrot.lane.b32.xlu0 %v3849, 20
  %v3984 = vpop.permute.xlu0 %3983
  %3985 = vrot.lane.b32.xlu0 %v3852, 20
  %v3986 = vpop.permute.xlu0 %3985
  %3987 = vrot.lane.b32.xlu0 %v3856, 20
  %v3988 = vpop.permute.xlu0 %3987
  %3989 = vrot.lane.b32.xlu0 %v3859, 20
  %v3990 = vpop.permute.xlu0 %3989
  %3991 = vrot.lane.b32.xlu0 %v3863, 20
  %v3992 = vpop.permute.xlu0 %3991
  %3993 = vrot.lane.b32.xlu0 %v3866, 20
  %v3994 = vpop.permute.xlu0 %3993
  %vm4059 = vcmask 191648
  %4060 = vst.msk [vmem:[#allocation2] sm:$0xf] %vm4059, %v3868
  %4061 = vst.msk [vmem:[#allocation2 + $0x4] sm:$0xf] %vm4059, %v3870
  %4062 = vst.msk [vmem:[#allocation2 + $0x8] sm:$0xf] %vm4059, %v3872
  %4063 = vst.msk [vmem:[#allocation2 + $0xc] sm:$0xf] %vm4059, %v3874
  %4064 = vst.msk [vmem:[#allocation2 + $0x10] sm:$0xf] %vm4059, %v3876
  %4065 = vst.msk [vmem:[#allocation2 + $0x14] sm:$0xf] %vm4059, %v3878
  %4066 = vst.msk [vmem:[#allocation2 + $0x18] sm:$0xf] %vm4059, %v3880
  %4067 = vst.msk [vmem:[#allocation2 + $0x1c] sm:$0xf] %vm4059, %v3882
  %4068 = vst.msk [vmem:[#allocation2 + $0x20] sm:$0xf] %vm4059, %v3884
  %4069 = vst.msk [vmem:[#allocation2 + $0x24] sm:$0xf] %vm4059, %v3886
  %4070 = vst.msk [vmem:[#allocation2 + $0x28] sm:$0xf] %vm4059, %v3888
  %4071 = vst.msk [vmem:[#allocation2 + $0x2c] sm:$0xf] %vm4059, %v3890
  %4072 = vst.msk [vmem:[#allocation2 + $0x30] sm:$0xf] %vm4059, %v3892
  %4073 = vst.msk [vmem:[#allocation2 + $0x34] sm:$0xf] %vm4059, %v3894
  %4074 = vst.msk [vmem:[#allocation2 + $0x38] sm:$0xf] %vm4059, %v3896
  %4075 = vst.msk [vmem:[#allocation2 + $0x3c] sm:$0xf] %vm4059, %v3898
  %4076 = vst.msk [vmem:[#allocation2 + $0x40] sm:$0xf] %vm4059, %v3900
  %4077 = vst.msk [vmem:[#allocation2 + $0x44] sm:$0xf] %vm4059, %v3902
  %4078 = vst.msk [vmem:[#allocation2 + $0x48] sm:$0xf] %vm4059, %v3904
  %4079 = vst.msk [vmem:[#allocation2 + $0x4c] sm:$0xf] %vm4059, %v3906
  %4080 = vst.msk [vmem:[#allocation2 + $0x50] sm:$0xf] %vm4059, %v3908
  %4081 = vst.msk [vmem:[#allocation2 + $0x54] sm:$0xf] %vm4059, %v3910
  %4082 = vst.msk [vmem:[#allocation2 + $0x58] sm:$0xf] %vm4059, %v3912
  %4083 = vst.msk [vmem:[#allocation2 + $0x5c] sm:$0xf] %vm4059, %v3914
  %4084 = vst.msk [vmem:[#allocation2 + $0x60] sm:$0xf] %vm4059, %v3916
  %4085 = vst.msk [vmem:[#allocation2 + $0x64] sm:$0xf] %vm4059, %v3918
  %4086 = vst.msk [vmem:[#allocation2 + $0x68] sm:$0xf] %vm4059, %v3920
  %4087 = vst.msk [vmem:[#allocation2 + $0x6c] sm:$0xf] %vm4059, %v3922
  %4088 = vst.msk [vmem:[#allocation2 + $0x70] sm:$0xf] %vm4059, %v3924
  %4089 = vst.msk [vmem:[#allocation2 + $0x74] sm:$0xf] %vm4059, %v3926
  %4090 = vst.msk [vmem:[#allocation2 + $0x78] sm:$0xf] %vm4059, %v3928
  %4091 = vst.msk [vmem:[#allocation2 + $0x7c] sm:$0xf] %vm4059, %v3930
  %4092 = vst.msk [vmem:[#allocation2 + $0x80] sm:$0xf] %vm4059, %v3932
  %4093 = vst.msk [vmem:[#allocation2 + $0x84] sm:$0xf] %vm4059, %v3934
  %4094 = vst.msk [vmem:[#allocation2 + $0x88] sm:$0xf] %vm4059, %v3936
  %4095 = vst.msk [vmem:[#allocation2 + $0x8c] sm:$0xf] %vm4059, %v3938
  %4096 = vst.msk [vmem:[#allocation2 + $0x90] sm:$0xf] %vm4059, %v3940
  %4097 = vst.msk [vmem:[#allocation2 + $0x94] sm:$0xf] %vm4059, %v3942
  %4098 = vst.msk [vmem:[#allocation2 + $0x98] sm:$0xf] %vm4059, %v3944
  %4099 = vst.msk [vmem:[#allocation2 + $0x9c] sm:$0xf] %vm4059, %v3946
  %4100 = vst.msk [vmem:[#allocation2 + $0xa0] sm:$0xf] %vm4059, %v3948
  %4101 = vst.msk [vmem:[#allocation2 + $0xa4] sm:$0xf] %vm4059, %v3950
  %4102 = vst.msk [vmem:[#allocation2 + $0xa8] sm:$0xf] %vm4059, %v3952
  %4103 = vst.msk [vmem:[#allocation2 + $0xac] sm:$0xf] %vm4059, %v3954
  %4104 = vst.msk [vmem:[#allocation2 + $0xb0] sm:$0xf] %vm4059, %v3956
  %4105 = vst.msk [vmem:[#allocation2 + $0xb4] sm:$0xf] %vm4059, %v3958
  %4106 = vst.msk [vmem:[#allocation2 + $0xb8] sm:$0xf] %vm4059, %v3960
  %4107 = vst.msk [vmem:[#allocation2 + $0xbc] sm:$0xf] %vm4059, %v3962
  %4108 = vst.msk [vmem:[#allocation2 + $0xc0] sm:$0xf] %vm4059, %v3964
  %4109 = vst.msk [vmem:[#allocation2 + $0xc4] sm:$0xf] %vm4059, %v3966
  %4110 = vst.msk [vmem:[#allocation2 + $0xc8] sm:$0xf] %vm4059, %v3968
  %4111 = vst.msk [vmem:[#allocation2 + $0xcc] sm:$0xf] %vm4059, %v3970
  %4112 = vst.msk [vmem:[#allocation2 + $0xd0] sm:$0xf] %vm4059, %v3972
  %4113 = vst.msk [vmem:[#allocation2 + $0xd4] sm:$0xf] %vm4059, %v3974
  %4114 = vst.msk [vmem:[#allocation2 + $0xd8] sm:$0xf] %vm4059, %v3976
  %4115 = vst.msk [vmem:[#allocation2 + $0xdc] sm:$0xf] %vm4059, %v3978
  %4116 = vst.msk [vmem:[#allocation2 + $0xe0] sm:$0xf] %vm4059, %v3980
  %4117 = vst.msk [vmem:[#allocation2 + $0xe4] sm:$0xf] %vm4059, %v3982
  %4118 = vst.msk [vmem:[#allocation2 + $0xe8] sm:$0xf] %vm4059, %v3984
  %4119 = vst.msk [vmem:[#allocation2 + $0xec] sm:$0xf] %vm4059, %v3986
  %4120 = vst.msk [vmem:[#allocation2 + $0xf0] sm:$0xf] %vm4059, %v3988
  %4121 = vst.msk [vmem:[#allocation2 + $0xf4] sm:$0xf] %vm4059, %v3990
  %4122 = vst.msk [vmem:[#allocation2 + $0xf8] sm:$0xf] %vm4059, %v3992
  %4123 = vst.msk [vmem:[#allocation2 + $0xfc] sm:$0xf] %vm4059, %v3994
  %s4124 = scalar_lea.vmem %s0, 24
  %v4125 = vld [vmem:[%s4124] sm:$0xf]
  %v4126 = vld [vmem:[%s4124 + $0x4] sm:$0xf]
  %v4127 = vld [vmem:[%s4124 + $0xc] sm:$0xf]
  %v4128 = vld [vmem:[%s4124 + $0x10] sm:$0xf]
  %v4129 = vld [vmem:[%s4124 + $0x18] sm:$0xf]
  %v4130 = vld [vmem:[%s4124 + $0x1c] sm:$0xf]
  %v4131 = vld [vmem:[%s4124 + $0x24] sm:$0xf]
  %v4132 = vld [vmem:[%s4124 + $0x28] sm:$0xf]
  %v4133 = vld [vmem:[%s4124 + $0x30] sm:$0xf]
  %v4134 = vld [vmem:[%s4124 + $0x34] sm:$0xf]
  %v4135 = vld [vmem:[%s4124 + $0x3c] sm:$0xf]
  %v4136 = vld [vmem:[%s4124 + $0x40] sm:$0xf]
  %v4137 = vld [vmem:[%s4124 + $0x48] sm:$0xf]
  %v4138 = vld [vmem:[%s4124 + $0x4c] sm:$0xf]
  %v4139 = vld [vmem:[%s4124 + $0x54] sm:$0xf]
  %v4140 = vld [vmem:[%s4124 + $0x58] sm:$0xf]
  %v4141 = vld [vmem:[%s4124 + $0x60] sm:$0xf]
  %v4142 = vld [vmem:[%s4124 + $0x64] sm:$0xf]
  %v4143 = vld [vmem:[%s4124 + $0x6c] sm:$0xf]
  %v4144 = vld [vmem:[%s4124 + $0x70] sm:$0xf]
  %v4145 = vld [vmem:[%s4124 + $0x78] sm:$0xf]
  %v4146 = vld [vmem:[%s4124 + $0x7c] sm:$0xf]
  %v4147 = vld [vmem:[%s4124 + $0x84] sm:$0xf]
  %v4148 = vld [vmem:[%s4124 + $0x88] sm:$0xf]
  %v4149 = vld [vmem:[%s4124 + $0x90] sm:$0xf]
  %v4150 = vld [vmem:[%s4124 + $0x94] sm:$0xf]
  %v4151 = vld [vmem:[%s4124 + $0x9c] sm:$0xf]
  %v4152 = vld [vmem:[%s4124 + $0xa0] sm:$0xf]
  %v4153 = vld [vmem:[%s4124 + $0xa8] sm:$0xf]
  %v4154 = vld [vmem:[%s4124 + $0xac] sm:$0xf]
  %v4155 = vld [vmem:[%s4124 + $0xb4] sm:$0xf]
  %v4156 = vld [vmem:[%s4124 + $0xb8] sm:$0xf]
  %v4157 = vld [vmem:[%s4124 + $0xd8] sm:$0xf]
  %v4158 = vld [vmem:[%s4124 + $0xdc] sm:$0xf]
  %v4159 = vld [vmem:[%s4124 + $0xe4] sm:$0xf]
  %v4160 = vld [vmem:[%s4124 + $0xe8] sm:$0xf]
  %v4161 = vld [vmem:[%s4124 + $0xf0] sm:$0xf]
  %v4162 = vld [vmem:[%s4124 + $0xf4] sm:$0xf]
  %v4163 = vld [vmem:[%s4124 + $0xfc] sm:$0xf]
  %v4164 = vld [vmem:[%s4124 + $0x100] sm:$0xf]
  %v4165 = vld [vmem:[%s4124 + $0x108] sm:$0xf]
  %v4166 = vld [vmem:[%s4124 + $0x10c] sm:$0xf]
  %v4167 = vld [vmem:[%s4124 + $0x114] sm:$0xf]
  %v4168 = vld [vmem:[%s4124 + $0x118] sm:$0xf]
  %v4169 = vld [vmem:[%s4124 + $0x120] sm:$0xf]
  %v4170 = vld [vmem:[%s4124 + $0x124] sm:$0xf]
  %v4171 = vld [vmem:[%s4124 + $0x12c] sm:$0xf]
  %v4172 = vld [vmem:[%s4124 + $0x130] sm:$0xf]
  %v4173 = vld [vmem:[%s4124 + $0x138] sm:$0xf]
  %v4174 = vld [vmem:[%s4124 + $0x13c] sm:$0xf]
  %v4175 = vld [vmem:[%s4124 + $0x144] sm:$0xf]
  %v4176 = vld [vmem:[%s4124 + $0x148] sm:$0xf]
  %v4177 = vld [vmem:[%s4124 + $0x150] sm:$0xf]
  %v4178 = vld [vmem:[%s4124 + $0x154] sm:$0xf]
  %v4179 = vld [vmem:[%s4124 + $0x15c] sm:$0xf]
  %v4180 = vld [vmem:[%s4124 + $0x160] sm:$0xf]
  %v4181 = vld [vmem:[%s4124 + $0x168] sm:$0xf]
  %v4182 = vld [vmem:[%s4124 + $0x16c] sm:$0xf]
  %v4183 = vld [vmem:[%s4124 + $0x174] sm:$0xf]
  %v4184 = vld [vmem:[%s4124 + $0x178] sm:$0xf]
  %v4185 = vld [vmem:[%s4124 + $0x180] sm:$0xf]
  %v4186 = vld [vmem:[%s4124 + $0x184] sm:$0xf]
  %v4187 = vld [vmem:[%s4124 + $0x18c] sm:$0xf]
  %v4188 = vld [vmem:[%s4124 + $0x190] sm:$0xf]
  %4253 = vrot.lane.b32.xlu0 %v4125, 24
  %v4254 = vpop.permute.xlu0 %4253
  %4255 = vrot.lane.b32.xlu0 %v4126, 24
  %v4256 = vpop.permute.xlu0 %4255
  %4257 = vrot.lane.b32.xlu0 %v4127, 24
  %v4258 = vpop.permute.xlu0 %4257
  %4259 = vrot.lane.b32.xlu0 %v4128, 24
  %v4260 = vpop.permute.xlu0 %4259
  %4261 = vrot.lane.b32.xlu0 %v4129, 24
  %v4262 = vpop.permute.xlu0 %4261
  %4263 = vrot.lane.b32.xlu0 %v4130, 24
  %v4264 = vpop.permute.xlu0 %4263
  %4265 = vrot.lane.b32.xlu0 %v4131, 24
  %v4266 = vpop.permute.xlu0 %4265
  %4267 = vrot.lane.b32.xlu0 %v4132, 24
  %v4268 = vpop.permute.xlu0 %4267
  %4269 = vrot.lane.b32.xlu0 %v4133, 24
  %v4270 = vpop.permute.xlu0 %4269
  %4271 = vrot.lane.b32.xlu0 %v4134, 24
  %v4272 = vpop.permute.xlu0 %4271
  %4273 = vrot.lane.b32.xlu0 %v4135, 24
  %v4274 = vpop.permute.xlu0 %4273
  %4275 = vrot.lane.b32.xlu0 %v4136, 24
  %v4276 = vpop.permute.xlu0 %4275
  %4277 = vrot.lane.b32.xlu0 %v4137, 24
  %v4278 = vpop.permute.xlu0 %4277
  %4279 = vrot.lane.b32.xlu0 %v4138, 24
  %v4280 = vpop.permute.xlu0 %4279
  %4281 = vrot.lane.b32.xlu0 %v4139, 24
  %v4282 = vpop.permute.xlu0 %4281
  %4283 = vrot.lane.b32.xlu0 %v4140, 24
  %v4284 = vpop.permute.xlu0 %4283
  %4285 = vrot.lane.b32.xlu0 %v4141, 24
  %v4286 = vpop.permute.xlu0 %4285
  %4287 = vrot.lane.b32.xlu0 %v4142, 24
  %v4288 = vpop.permute.xlu0 %4287
  %4289 = vrot.lane.b32.xlu0 %v4143, 24
  %v4290 = vpop.permute.xlu0 %4289
  %4291 = vrot.lane.b32.xlu0 %v4144, 24
  %v4292 = vpop.permute.xlu0 %4291
  %4293 = vrot.lane.b32.xlu0 %v4145, 24
  %v4294 = vpop.permute.xlu0 %4293
  %4295 = vrot.lane.b32.xlu0 %v4146, 24
  %v4296 = vpop.permute.xlu0 %4295
  %4297 = vrot.lane.b32.xlu0 %v4147, 24
  %v4298 = vpop.permute.xlu0 %4297
  %4299 = vrot.lane.b32.xlu0 %v4148, 24
  %v4300 = vpop.permute.xlu0 %4299
  %4301 = vrot.lane.b32.xlu0 %v4149, 24
  %v4302 = vpop.permute.xlu0 %4301
  %4303 = vrot.lane.b32.xlu0 %v4150, 24
  %v4304 = vpop.permute.xlu0 %4303
  %4305 = vrot.lane.b32.xlu0 %v4151, 24
  %v4306 = vpop.permute.xlu0 %4305
  %4307 = vrot.lane.b32.xlu0 %v4152, 24
  %v4308 = vpop.permute.xlu0 %4307
  %4309 = vrot.lane.b32.xlu0 %v4153, 24
  %v4310 = vpop.permute.xlu0 %4309
  %4311 = vrot.lane.b32.xlu0 %v4154, 24
  %v4312 = vpop.permute.xlu0 %4311
  %4313 = vrot.lane.b32.xlu0 %v4155, 24
  %v4314 = vpop.permute.xlu0 %4313
  %4315 = vrot.lane.b32.xlu0 %v4156, 24
  %v4316 = vpop.permute.xlu0 %4315
  %4317 = vrot.lane.b32.xlu0 %v4157, 24
  %v4318 = vpop.permute.xlu0 %4317
  %4319 = vrot.lane.b32.xlu0 %v4158, 24
  %v4320 = vpop.permute.xlu0 %4319
  %4321 = vrot.lane.b32.xlu0 %v4159, 24
  %v4322 = vpop.permute.xlu0 %4321
  %4323 = vrot.lane.b32.xlu0 %v4160, 24
  %v4324 = vpop.permute.xlu0 %4323
  %4325 = vrot.lane.b32.xlu0 %v4161, 24
  %v4326 = vpop.permute.xlu0 %4325
  %4327 = vrot.lane.b32.xlu0 %v4162, 24
  %v4328 = vpop.permute.xlu0 %4327
  %4329 = vrot.lane.b32.xlu0 %v4163, 24
  %v4330 = vpop.permute.xlu0 %4329
  %4331 = vrot.lane.b32.xlu0 %v4164, 24
  %v4332 = vpop.permute.xlu0 %4331
  %4333 = vrot.lane.b32.xlu0 %v4165, 24
  %v4334 = vpop.permute.xlu0 %4333
  %4335 = vrot.lane.b32.xlu0 %v4166, 24
  %v4336 = vpop.permute.xlu0 %4335
  %4337 = vrot.lane.b32.xlu0 %v4167, 24
  %v4338 = vpop.permute.xlu0 %4337
  %4339 = vrot.lane.b32.xlu0 %v4168, 24
  %v4340 = vpop.permute.xlu0 %4339
  %4341 = vrot.lane.b32.xlu0 %v4169, 24
  %v4342 = vpop.permute.xlu0 %4341
  %4343 = vrot.lane.b32.xlu0 %v4170, 24
  %v4344 = vpop.permute.xlu0 %4343
  %4345 = vrot.lane.b32.xlu0 %v4171, 24
  %v4346 = vpop.permute.xlu0 %4345
  %4347 = vrot.lane.b32.xlu0 %v4172, 24
  %v4348 = vpop.permute.xlu0 %4347
  %4349 = vrot.lane.b32.xlu0 %v4173, 24
  %v4350 = vpop.permute.xlu0 %4349
  %4351 = vrot.lane.b32.xlu0 %v4174, 24
  %v4352 = vpop.permute.xlu0 %4351
  %4353 = vrot.lane.b32.xlu0 %v4175, 24
  %v4354 = vpop.permute.xlu0 %4353
  %4355 = vrot.lane.b32.xlu0 %v4176, 24
  %v4356 = vpop.permute.xlu0 %4355
  %4357 = vrot.lane.b32.xlu0 %v4177, 24
  %v4358 = vpop.permute.xlu0 %4357
  %4359 = vrot.lane.b32.xlu0 %v4178, 24
  %v4360 = vpop.permute.xlu0 %4359
  %4361 = vrot.lane.b32.xlu0 %v4179, 24
  %v4362 = vpop.permute.xlu0 %4361
  %4363 = vrot.lane.b32.xlu0 %v4180, 24
  %v4364 = vpop.permute.xlu0 %4363
  %4365 = vrot.lane.b32.xlu0 %v4181, 24
  %v4366 = vpop.permute.xlu0 %4365
  %4367 = vrot.lane.b32.xlu0 %v4182, 24
  %v4368 = vpop.permute.xlu0 %4367
  %4369 = vrot.lane.b32.xlu0 %v4183, 24
  %v4370 = vpop.permute.xlu0 %4369
  %4371 = vrot.lane.b32.xlu0 %v4184, 24
  %v4372 = vpop.permute.xlu0 %4371
  %4373 = vrot.lane.b32.xlu0 %v4185, 24
  %v4374 = vpop.permute.xlu0 %4373
  %4375 = vrot.lane.b32.xlu0 %v4186, 24
  %v4376 = vpop.permute.xlu0 %4375
  %4377 = vrot.lane.b32.xlu0 %v4187, 24
  %v4378 = vpop.permute.xlu0 %4377
  %4379 = vrot.lane.b32.xlu0 %v4188, 24
  %v4380 = vpop.permute.xlu0 %4379
  %vm4445 = vcmask 224448
  %4446 = vst.msk [vmem:[#allocation2] sm:$0xf] %vm4445, %v4254
  %4447 = vst.msk [vmem:[#allocation2 + $0x4] sm:$0xf] %vm4445, %v4256
  %4448 = vst.msk [vmem:[#allocation2 + $0x8] sm:$0xf] %vm4445, %v4258
  %4449 = vst.msk [vmem:[#allocation2 + $0xc] sm:$0xf] %vm4445, %v4260
  %4450 = vst.msk [vmem:[#allocation2 + $0x10] sm:$0xf] %vm4445, %v4262
  %4451 = vst.msk [vmem:[#allocation2 + $0x14] sm:$0xf] %vm4445, %v4264
  %4452 = vst.msk [vmem:[#allocation2 + $0x18] sm:$0xf] %vm4445, %v4266
  %4453 = vst.msk [vmem:[#allocation2 + $0x1c] sm:$0xf] %vm4445, %v4268
  %4454 = vst.msk [vmem:[#allocation2 + $0x20] sm:$0xf] %vm4445, %v4270
  %4455 = vst.msk [vmem:[#allocation2 + $0x24] sm:$0xf] %vm4445, %v4272
  %4456 = vst.msk [vmem:[#allocation2 + $0x28] sm:$0xf] %vm4445, %v4274
  %4457 = vst.msk [vmem:[#allocation2 + $0x2c] sm:$0xf] %vm4445, %v4276
  %4458 = vst.msk [vmem:[#allocation2 + $0x30] sm:$0xf] %vm4445, %v4278
  %4459 = vst.msk [vmem:[#allocation2 + $0x34] sm:$0xf] %vm4445, %v4280
  %4460 = vst.msk [vmem:[#allocation2 + $0x38] sm:$0xf] %vm4445, %v4282
  %4461 = vst.msk [vmem:[#allocation2 + $0x3c] sm:$0xf] %vm4445, %v4284
  %4462 = vst.msk [vmem:[#allocation2 + $0x40] sm:$0xf] %vm4445, %v4286
  %4463 = vst.msk [vmem:[#allocation2 + $0x44] sm:$0xf] %vm4445, %v4288
  %4464 = vst.msk [vmem:[#allocation2 + $0x48] sm:$0xf] %vm4445, %v4290
  %4465 = vst.msk [vmem:[#allocation2 + $0x4c] sm:$0xf] %vm4445, %v4292
  %4466 = vst.msk [vmem:[#allocation2 + $0x50] sm:$0xf] %vm4445, %v4294
  %4467 = vst.msk [vmem:[#allocation2 + $0x54] sm:$0xf] %vm4445, %v4296
  %4468 = vst.msk [vmem:[#allocation2 + $0x58] sm:$0xf] %vm4445, %v4298
  %4469 = vst.msk [vmem:[#allocation2 + $0x5c] sm:$0xf] %vm4445, %v4300
  %4470 = vst.msk [vmem:[#allocation2 + $0x60] sm:$0xf] %vm4445, %v4302
  %4471 = vst.msk [vmem:[#allocation2 + $0x64] sm:$0xf] %vm4445, %v4304
  %4472 = vst.msk [vmem:[#allocation2 + $0x68] sm:$0xf] %vm4445, %v4306
  %4473 = vst.msk [vmem:[#allocation2 + $0x6c] sm:$0xf] %vm4445, %v4308
  %4474 = vst.msk [vmem:[#allocation2 + $0x70] sm:$0xf] %vm4445, %v4310
  %4475 = vst.msk [vmem:[#allocation2 + $0x74] sm:$0xf] %vm4445, %v4312
  %4476 = vst.msk [vmem:[#allocation2 + $0x78] sm:$0xf] %vm4445, %v4314
  %4477 = vst.msk [vmem:[#allocation2 + $0x7c] sm:$0xf] %vm4445, %v4316
  %4478 = vst.msk [vmem:[#allocation2 + $0x80] sm:$0xf] %vm4445, %v4318
  %4479 = vst.msk [vmem:[#allocation2 + $0x84] sm:$0xf] %vm4445, %v4320
  %4480 = vst.msk [vmem:[#allocation2 + $0x88] sm:$0xf] %vm4445, %v4322
  %4481 = vst.msk [vmem:[#allocation2 + $0x8c] sm:$0xf] %vm4445, %v4324
  %4482 = vst.msk [vmem:[#allocation2 + $0x90] sm:$0xf] %vm4445, %v4326
  %4483 = vst.msk [vmem:[#allocation2 + $0x94] sm:$0xf] %vm4445, %v4328
  %4484 = vst.msk [vmem:[#allocation2 + $0x98] sm:$0xf] %vm4445, %v4330
  %4485 = vst.msk [vmem:[#allocation2 + $0x9c] sm:$0xf] %vm4445, %v4332
  %4486 = vst.msk [vmem:[#allocation2 + $0xa0] sm:$0xf] %vm4445, %v4334
  %4487 = vst.msk [vmem:[#allocation2 + $0xa4] sm:$0xf] %vm4445, %v4336
  %4488 = vst.msk [vmem:[#allocation2 + $0xa8] sm:$0xf] %vm4445, %v4338
  %4489 = vst.msk [vmem:[#allocation2 + $0xac] sm:$0xf] %vm4445, %v4340
  %4490 = vst.msk [vmem:[#allocation2 + $0xb0] sm:$0xf] %vm4445, %v4342
  %4491 = vst.msk [vmem:[#allocation2 + $0xb4] sm:$0xf] %vm4445, %v4344
  %4492 = vst.msk [vmem:[#allocation2 + $0xb8] sm:$0xf] %vm4445, %v4346
  %4493 = vst.msk [vmem:[#allocation2 + $0xbc] sm:$0xf] %vm4445, %v4348
  %4494 = vst.msk [vmem:[#allocation2 + $0xc0] sm:$0xf] %vm4445, %v4350
  %4495 = vst.msk [vmem:[#allocation2 + $0xc4] sm:$0xf] %vm4445, %v4352
  %4496 = vst.msk [vmem:[#allocation2 + $0xc8] sm:$0xf] %vm4445, %v4354
  %4497 = vst.msk [vmem:[#allocation2 + $0xcc] sm:$0xf] %vm4445, %v4356
  %4498 = vst.msk [vmem:[#allocation2 + $0xd0] sm:$0xf] %vm4445, %v4358
  %4499 = vst.msk [vmem:[#allocation2 + $0xd4] sm:$0xf] %vm4445, %v4360
  %4500 = vst.msk [vmem:[#allocation2 + $0xd8] sm:$0xf] %vm4445, %v4362
  %4501 = vst.msk [vmem:[#allocation2 + $0xdc] sm:$0xf] %vm4445, %v4364
  %4502 = vst.msk [vmem:[#allocation2 + $0xe0] sm:$0xf] %vm4445, %v4366
  %4503 = vst.msk [vmem:[#allocation2 + $0xe4] sm:$0xf] %vm4445, %v4368
  %4504 = vst.msk [vmem:[#allocation2 + $0xe8] sm:$0xf] %vm4445, %v4370
  %4505 = vst.msk [vmem:[#allocation2 + $0xec] sm:$0xf] %vm4445, %v4372
  %4506 = vst.msk [vmem:[#allocation2 + $0xf0] sm:$0xf] %vm4445, %v4374
  %4507 = vst.msk [vmem:[#allocation2 + $0xf4] sm:$0xf] %vm4445, %v4376
  %4508 = vst.msk [vmem:[#allocation2 + $0xf8] sm:$0xf] %vm4445, %v4378
  %4509 = vst.msk [vmem:[#allocation2 + $0xfc] sm:$0xf] %vm4445, %v4380
  %v4510 = vld [vmem:[%s4124] sm:$0xf]
  %v4511 = vld [vmem:[%s4124 + $0x4] sm:$0xf]
  %v4512 = vld [vmem:[%s4124 + $0x8] sm:$0x1]
  %v4513 = vld [vmem:[%s4124 + $0xc] sm:$0xf]
  %v4514 = vld [vmem:[%s4124 + $0x10] sm:$0xf]
  %v4515 = vld [vmem:[%s4124 + $0x14] sm:$0x1]
  %v4516 = vld [vmem:[%s4124 + $0x18] sm:$0xf]
  %v4517 = vld [vmem:[%s4124 + $0x1c] sm:$0xf]
  %v4518 = vld [vmem:[%s4124 + $0x20] sm:$0x1]
  %v4519 = vld [vmem:[%s4124 + $0x24] sm:$0xf]
  %v4520 = vld [vmem:[%s4124 + $0x28] sm:$0xf]
  %v4521 = vld [vmem:[%s4124 + $0x2c] sm:$0x1]
  %v4522 = vld [vmem:[%s4124 + $0x30] sm:$0xf]
  %v4523 = vld [vmem:[%s4124 + $0x34] sm:$0xf]
  %v4524 = vld [vmem:[%s4124 + $0x38] sm:$0x1]
  %v4525 = vld [vmem:[%s4124 + $0x3c] sm:$0xf]
  %v4526 = vld [vmem:[%s4124 + $0x40] sm:$0xf]
  %v4527 = vld [vmem:[%s4124 + $0x44] sm:$0x1]
  %v4528 = vld [vmem:[%s4124 + $0x48] sm:$0xf]
  %v4529 = vld [vmem:[%s4124 + $0x4c] sm:$0xf]
  %v4530 = vld [vmem:[%s4124 + $0x50] sm:$0x1]
  %v4531 = vld [vmem:[%s4124 + $0x54] sm:$0xf]
  %v4532 = vld [vmem:[%s4124 + $0x58] sm:$0xf]
  %v4533 = vld [vmem:[%s4124 + $0x5c] sm:$0x1]
  %v4534 = vld [vmem:[%s4124 + $0x60] sm:$0xf]
  %v4535 = vld [vmem:[%s4124 + $0x64] sm:$0xf]
  %v4536 = vld [vmem:[%s4124 + $0x68] sm:$0x1]
  %v4537 = vld [vmem:[%s4124 + $0x6c] sm:$0xf]
  %v4538 = vld [vmem:[%s4124 + $0x70] sm:$0xf]
  %v4539 = vld [vmem:[%s4124 + $0x74] sm:$0x1]
  %v4540 = vld [vmem:[%s4124 + $0x78] sm:$0xf]
  %v4541 = vld [vmem:[%s4124 + $0x7c] sm:$0xf]
  %v4542 = vld [vmem:[%s4124 + $0x80] sm:$0x1]
  %v4543 = vld [vmem:[%s4124 + $0x84] sm:$0xf]
  %v4544 = vld [vmem:[%s4124 + $0x88] sm:$0xf]
  %v4545 = vld [vmem:[%s4124 + $0x8c] sm:$0x1]
  %v4546 = vld [vmem:[%s4124 + $0x90] sm:$0xf]
  %v4547 = vld [vmem:[%s4124 + $0x94] sm:$0xf]
  %v4548 = vld [vmem:[%s4124 + $0x98] sm:$0x1]
  %v4549 = vld [vmem:[%s4124 + $0x9c] sm:$0xf]
  %v4550 = vld [vmem:[%s4124 + $0xa0] sm:$0xf]
  %v4551 = vld [vmem:[%s4124 + $0xa4] sm:$0x1]
  %v4552 = vld [vmem:[%s4124 + $0xa8] sm:$0xf]
  %v4553 = vld [vmem:[%s4124 + $0xac] sm:$0xf]
  %v4554 = vld [vmem:[%s4124 + $0xb0] sm:$0x1]
  %v4555 = vld [vmem:[%s4124 + $0xb4] sm:$0xf]
  %v4556 = vld [vmem:[%s4124 + $0xb8] sm:$0xf]
  %v4557 = vld [vmem:[%s4124 + $0xbc] sm:$0x1]
  %v4558 = vld [vmem:[%s4124 + $0xd8] sm:$0xf]
  %v4559 = vld [vmem:[%s4124 + $0xdc] sm:$0xf]
  %v4560 = vld [vmem:[%s4124 + $0xe0] sm:$0x1]
  %v4561 = vld [vmem:[%s4124 + $0xe4] sm:$0xf]
  %v4562 = vld [vmem:[%s4124 + $0xe8] sm:$0xf]
  %v4563 = vld [vmem:[%s4124 + $0xec] sm:$0x1]
  %v4564 = vld [vmem:[%s4124 + $0xf0] sm:$0xf]
  %v4565 = vld [vmem:[%s4124 + $0xf4] sm:$0xf]
  %v4566 = vld [vmem:[%s4124 + $0xf8] sm:$0x1]
  %v4567 = vld [vmem:[%s4124 + $0xfc] sm:$0xf]
  %v4568 = vld [vmem:[%s4124 + $0x100] sm:$0xf]
  %v4569 = vld [vmem:[%s4124 + $0x104] sm:$0x1]
  %v4570 = vld [vmem:[%s4124 + $0x108] sm:$0xf]
  %v4571 = vld [vmem:[%s4124 + $0x10c] sm:$0xf]
  %v4572 = vld [vmem:[%s4124 + $0x110] sm:$0x1]
  %v4573 = vld [vmem:[%s4124 + $0x114] sm:$0xf]
  %v4574 = vld [vmem:[%s4124 + $0x118] sm:$0xf]
  %v4575 = vld [vmem:[%s4124 + $0x11c] sm:$0x1]
  %v4576 = vld [vmem:[%s4124 + $0x120] sm:$0xf]
  %v4577 = vld [vmem:[%s4124 + $0x124] sm:$0xf]
  %v4578 = vld [vmem:[%s4124 + $0x128] sm:$0x1]
  %v4579 = vld [vmem:[%s4124 + $0x12c] sm:$0xf]
  %v4580 = vld [vmem:[%s4124 + $0x130] sm:$0xf]
  %v4581 = vld [vmem:[%s4124 + $0x134] sm:$0x1]
  %v4582 = vld [vmem:[%s4124 + $0x138] sm:$0xf]
  %v4583 = vld [vmem:[%s4124 + $0x13c] sm:$0xf]
  %v4584 = vld [vmem:[%s4124 + $0x140] sm:$0x1]
  %v4585 = vld [vmem:[%s4124 + $0x144] sm:$0xf]
  %v4586 = vld [vmem:[%s4124 + $0x148] sm:$0xf]
  %v4587 = vld [vmem:[%s4124 + $0x14c] sm:$0x1]
  %v4588 = vld [vmem:[%s4124 + $0x150] sm:$0xf]
  %v4589 = vld [vmem:[%s4124 + $0x154] sm:$0xf]
  %v4590 = vld [vmem:[%s4124 + $0x158] sm:$0x1]
  %v4591 = vld [vmem:[%s4124 + $0x15c] sm:$0xf]
  %v4592 = vld [vmem:[%s4124 + $0x160] sm:$0xf]
  %v4593 = vld [vmem:[%s4124 + $0x164] sm:$0x1]
  %v4594 = vld [vmem:[%s4124 + $0x168] sm:$0xf]
  %v4595 = vld [vmem:[%s4124 + $0x16c] sm:$0xf]
  %v4596 = vld [vmem:[%s4124 + $0x170] sm:$0x1]
  %v4597 = vld [vmem:[%s4124 + $0x174] sm:$0xf]
  %v4598 = vld [vmem:[%s4124 + $0x178] sm:$0xf]
  %v4599 = vld [vmem:[%s4124 + $0x17c] sm:$0x1]
  %v4600 = vld [vmem:[%s4124 + $0x180] sm:$0xf]
  %v4601 = vld [vmem:[%s4124 + $0x184] sm:$0xf]
  %v4602 = vld [vmem:[%s4124 + $0x188] sm:$0x1]
  %v4603 = vld [vmem:[%s4124 + $0x18c] sm:$0xf]
  %v4604 = vld [vmem:[%s4124 + $0x190] sm:$0xf]
  %v4605 = vld [vmem:[%s4124 + $0x194] sm:$0x1]
  %v4607 = vshrl.u32 %v4510, 16
  %v4609 = vrot.slane %v4607, 4
  %v4610 = vshll.u32 %v4510, 16
  %v4612 = vrot.slane %v4610, 5
  %v4613 = vor.u32 %v4609, %v4612
  %v4614 = vrot.slane %v4613, 4
  %v4616 = vshll.u32 %v4511, 16
  %v4618 = vrot.slane %v4616, 5
  %v4619 = vsel %vm242, %v4614, %v4618
  %v4620 = vshrl.u32 %v4511, 16
  %v4622 = vrot.slane %v4620, 4
  %v4623 = vor.u32 %v4622, %v4618
  %v4624 = vrot.slane %v4623, 4
  %v4626 = vshll.u32 %v4512, 16
  %v4628 = vrot.slane %v4626, 5
  %v4629 = vsel %vm242, %v4624, %v4628
  %v4631 = vshrl.u32 %v4513, 16
  %v4633 = vrot.slane %v4631, 4
  %v4634 = vshll.u32 %v4513, 16
  %v4636 = vrot.slane %v4634, 5
  %v4637 = vor.u32 %v4633, %v4636
  %v4638 = vrot.slane %v4637, 4
  %v4640 = vshll.u32 %v4514, 16
  %v4642 = vrot.slane %v4640, 5
  %v4643 = vsel %vm242, %v4638, %v4642
  %v4644 = vshrl.u32 %v4514, 16
  %v4646 = vrot.slane %v4644, 4
  %v4647 = vor.u32 %v4646, %v4642
  %v4648 = vrot.slane %v4647, 4
  %v4650 = vshll.u32 %v4515, 16
  %v4652 = vrot.slane %v4650, 5
  %v4653 = vsel %vm242, %v4648, %v4652
  %v4655 = vshrl.u32 %v4516, 16
  %v4657 = vrot.slane %v4655, 4
  %v4658 = vshll.u32 %v4516, 16
  %v4660 = vrot.slane %v4658, 5
  %v4661 = vor.u32 %v4657, %v4660
  %v4662 = vrot.slane %v4661, 4
  %v4664 = vshll.u32 %v4517, 16
  %v4666 = vrot.slane %v4664, 5
  %v4667 = vsel %vm242, %v4662, %v4666
  %v4668 = vshrl.u32 %v4517, 16
  %v4670 = vrot.slane %v4668, 4
  %v4671 = vor.u32 %v4670, %v4666
  %v4672 = vrot.slane %v4671, 4
  %v4674 = vshll.u32 %v4518, 16
  %v4676 = vrot.slane %v4674, 5
  %v4677 = vsel %vm242, %v4672, %v4676
  %v4679 = vshrl.u32 %v4519, 16
  %v4681 = vrot.slane %v4679, 4
  %v4682 = vshll.u32 %v4519, 16
  %v4684 = vrot.slane %v4682, 5
  %v4685 = vor.u32 %v4681, %v4684
  %v4686 = vrot.slane %v4685, 4
  %v4688 = vshll.u32 %v4520, 16
  %v4690 = vrot.slane %v4688, 5
  %v4691 = vsel %vm242, %v4686, %v4690
  %v4692 = vshrl.u32 %v4520, 16
  %v4694 = vrot.slane %v4692, 4
  %v4695 = vor.u32 %v4694, %v4690
  %v4696 = vrot.slane %v4695, 4
  %v4698 = vshll.u32 %v4521, 16
  %v4700 = vrot.slane %v4698, 5
  %v4701 = vsel %vm242, %v4696, %v4700
  %v4703 = vshrl.u32 %v4522, 16
  %v4705 = vrot.slane %v4703, 4
  %v4706 = vshll.u32 %v4522, 16
  %v4708 = vrot.slane %v4706, 5
  %v4709 = vor.u32 %v4705, %v4708
  %v4710 = vrot.slane %v4709, 4
  %v4712 = vshll.u32 %v4523, 16
  %v4714 = vrot.slane %v4712, 5
  %v4715 = vsel %vm242, %v4710, %v4714
  %v4716 = vshrl.u32 %v4523, 16
  %v4718 = vrot.slane %v4716, 4
  %v4719 = vor.u32 %v4718, %v4714
  %v4720 = vrot.slane %v4719, 4
  %v4722 = vshll.u32 %v4524, 16
  %v4724 = vrot.slane %v4722, 5
  %v4725 = vsel %vm242, %v4720, %v4724
  %v4727 = vshrl.u32 %v4525, 16
  %v4729 = vrot.slane %v4727, 4
  %v4730 = vshll.u32 %v4525, 16
  %v4732 = vrot.slane %v4730, 5
  %v4733 = vor.u32 %v4729, %v4732
  %v4734 = vrot.slane %v4733, 4
  %v4736 = vshll.u32 %v4526, 16
  %v4738 = vrot.slane %v4736, 5
  %v4739 = vsel %vm242, %v4734, %v4738
  %v4740 = vshrl.u32 %v4526, 16
  %v4742 = vrot.slane %v4740, 4
  %v4743 = vor.u32 %v4742, %v4738
  %v4744 = vrot.slane %v4743, 4
  %v4746 = vshll.u32 %v4527, 16
  %v4748 = vrot.slane %v4746, 5
  %v4749 = vsel %vm242, %v4744, %v4748
  %v4751 = vshrl.u32 %v4528, 16
  %v4753 = vrot.slane %v4751, 4
  %v4754 = vshll.u32 %v4528, 16
  %v4756 = vrot.slane %v4754, 5
  %v4757 = vor.u32 %v4753, %v4756
  %v4758 = vrot.slane %v4757, 4
  %v4760 = vshll.u32 %v4529, 16
  %v4762 = vrot.slane %v4760, 5
  %v4763 = vsel %vm242, %v4758, %v4762
  %v4764 = vshrl.u32 %v4529, 16
  %v4766 = vrot.slane %v4764, 4
  %v4767 = vor.u32 %v4766, %v4762
  %v4768 = vrot.slane %v4767, 4
  %v4770 = vshll.u32 %v4530, 16
  %v4772 = vrot.slane %v4770, 5
  %v4773 = vsel %vm242, %v4768, %v4772
  %v4775 = vshrl.u32 %v4531, 16
  %v4777 = vrot.slane %v4775, 4
  %v4778 = vshll.u32 %v4531, 16
  %v4780 = vrot.slane %v4778, 5
  %v4781 = vor.u32 %v4777, %v4780
  %v4782 = vrot.slane %v4781, 4
  %v4784 = vshll.u32 %v4532, 16
  %v4786 = vrot.slane %v4784, 5
  %v4787 = vsel %vm242, %v4782, %v4786
  %v4788 = vshrl.u32 %v4532, 16
  %v4790 = vrot.slane %v4788, 4
  %v4791 = vor.u32 %v4790, %v4786
  %v4792 = vrot.slane %v4791, 4
  %v4794 = vshll.u32 %v4533, 16
  %v4796 = vrot.slane %v4794, 5
  %v4797 = vsel %vm242, %v4792, %v4796
  %v4799 = vshrl.u32 %v4534, 16
  %v4801 = vrot.slane %v4799, 4
  %v4802 = vshll.u32 %v4534, 16
  %v4804 = vrot.slane %v4802, 5
  %v4805 = vor.u32 %v4801, %v4804
  %v4806 = vrot.slane %v4805, 4
  %v4808 = vshll.u32 %v4535, 16
  %v4810 = vrot.slane %v4808, 5
  %v4811 = vsel %vm242, %v4806, %v4810
  %v4812 = vshrl.u32 %v4535, 16
  %v4814 = vrot.slane %v4812, 4
  %v4815 = vor.u32 %v4814, %v4810
  %v4816 = vrot.slane %v4815, 4
  %v4818 = vshll.u32 %v4536, 16
  %v4820 = vrot.slane %v4818, 5
  %v4821 = vsel %vm242, %v4816, %v4820
  %v4823 = vshrl.u32 %v4537, 16
  %v4825 = vrot.slane %v4823, 4
  %v4826 = vshll.u32 %v4537, 16
  %v4828 = vrot.slane %v4826, 5
  %v4829 = vor.u32 %v4825, %v4828
  %v4830 = vrot.slane %v4829, 4
  %v4832 = vshll.u32 %v4538, 16
  %v4834 = vrot.slane %v4832, 5
  %v4835 = vsel %vm242, %v4830, %v4834
  %v4836 = vshrl.u32 %v4538, 16
  %v4838 = vrot.slane %v4836, 4
  %v4839 = vor.u32 %v4838, %v4834
  %v4840 = vrot.slane %v4839, 4
  %v4842 = vshll.u32 %v4539, 16
  %v4844 = vrot.slane %v4842, 5
  %v4845 = vsel %vm242, %v4840, %v4844
  %v4847 = vshrl.u32 %v4540, 16
  %v4849 = vrot.slane %v4847, 4
  %v4850 = vshll.u32 %v4540, 16
  %v4852 = vrot.slane %v4850, 5
  %v4853 = vor.u32 %v4849, %v4852
  %v4854 = vrot.slane %v4853, 4
  %v4856 = vshll.u32 %v4541, 16
  %v4858 = vrot.slane %v4856, 5
  %v4859 = vsel %vm242, %v4854, %v4858
  %v4860 = vshrl.u32 %v4541, 16
  %v4862 = vrot.slane %v4860, 4
  %v4863 = vor.u32 %v4862, %v4858
  %v4864 = vrot.slane %v4863, 4
  %v4866 = vshll.u32 %v4542, 16
  %v4868 = vrot.slane %v4866, 5
  %v4869 = vsel %vm242, %v4864, %v4868
  %v4871 = vshrl.u32 %v4543, 16
  %v4873 = vrot.slane %v4871, 4
  %v4874 = vshll.u32 %v4543, 16
  %v4876 = vrot.slane %v4874, 5
  %v4877 = vor.u32 %v4873, %v4876
  %v4878 = vrot.slane %v4877, 4
  %v4880 = vshll.u32 %v4544, 16
  %v4882 = vrot.slane %v4880, 5
  %v4883 = vsel %vm242, %v4878, %v4882
  %v4884 = vshrl.u32 %v4544, 16
  %v4886 = vrot.slane %v4884, 4
  %v4887 = vor.u32 %v4886, %v4882
  %v4888 = vrot.slane %v4887, 4
  %v4890 = vshll.u32 %v4545, 16
  %v4892 = vrot.slane %v4890, 5
  %v4893 = vsel %vm242, %v4888, %v4892
  %v4895 = vshrl.u32 %v4546, 16
  %v4897 = vrot.slane %v4895, 4
  %v4898 = vshll.u32 %v4546, 16
  %v4900 = vrot.slane %v4898, 5
  %v4901 = vor.u32 %v4897, %v4900
  %v4902 = vrot.slane %v4901, 4
  %v4904 = vshll.u32 %v4547, 16
  %v4906 = vrot.slane %v4904, 5
  %v4907 = vsel %vm242, %v4902, %v4906
  %v4908 = vshrl.u32 %v4547, 16
  %v4910 = vrot.slane %v4908, 4
  %v4911 = vor.u32 %v4910, %v4906
  %v4912 = vrot.slane %v4911, 4
  %v4914 = vshll.u32 %v4548, 16
  %v4916 = vrot.slane %v4914, 5
  %v4917 = vsel %vm242, %v4912, %v4916
  %v4919 = vshrl.u32 %v4549, 16
  %v4921 = vrot.slane %v4919, 4
  %v4922 = vshll.u32 %v4549, 16
  %v4924 = vrot.slane %v4922, 5
  %v4925 = vor.u32 %v4921, %v4924
  %v4926 = vrot.slane %v4925, 4
  %v4928 = vshll.u32 %v4550, 16
  %v4930 = vrot.slane %v4928, 5
  %v4931 = vsel %vm242, %v4926, %v4930
  %v4932 = vshrl.u32 %v4550, 16
  %v4934 = vrot.slane %v4932, 4
  %v4935 = vor.u32 %v4934, %v4930
  %v4936 = vrot.slane %v4935, 4
  %v4938 = vshll.u32 %v4551, 16
  %v4940 = vrot.slane %v4938, 5
  %v4941 = vsel %vm242, %v4936, %v4940
  %v4943 = vshrl.u32 %v4552, 16
  %v4945 = vrot.slane %v4943, 4
  %v4946 = vshll.u32 %v4552, 16
  %v4948 = vrot.slane %v4946, 5
  %v4949 = vor.u32 %v4945, %v4948
  %v4950 = vrot.slane %v4949, 4
  %v4952 = vshll.u32 %v4553, 16
  %v4954 = vrot.slane %v4952, 5
  %v4955 = vsel %vm242, %v4950, %v4954
  %v4956 = vshrl.u32 %v4553, 16
  %v4958 = vrot.slane %v4956, 4
  %v4959 = vor.u32 %v4958, %v4954
  %v4960 = vrot.slane %v4959, 4
  %v4962 = vshll.u32 %v4554, 16
  %v4964 = vrot.slane %v4962, 5
  %v4965 = vsel %vm242, %v4960, %v4964
  %v4967 = vshrl.u32 %v4555, 16
  %v4969 = vrot.slane %v4967, 4
  %v4970 = vshll.u32 %v4555, 16
  %v4972 = vrot.slane %v4970, 5
  %v4973 = vor.u32 %v4969, %v4972
  %v4974 = vrot.slane %v4973, 4
  %v4976 = vshll.u32 %v4556, 16
  %v4978 = vrot.slane %v4976, 5
  %v4979 = vsel %vm242, %v4974, %v4978
  %v4980 = vshrl.u32 %v4556, 16
  %v4982 = vrot.slane %v4980, 4
  %v4983 = vor.u32 %v4982, %v4978
  %v4984 = vrot.slane %v4983, 4
  %v4986 = vshll.u32 %v4557, 16
  %v4988 = vrot.slane %v4986, 5
  %v4989 = vsel %vm242, %v4984, %v4988
  %v4991 = vshrl.u32 %v4558, 16
  %v4993 = vrot.slane %v4991, 4
  %v4994 = vshll.u32 %v4558, 16
  %v4996 = vrot.slane %v4994, 5
  %v4997 = vor.u32 %v4993, %v4996
  %v4998 = vrot.slane %v4997, 4
  %v5000 = vshll.u32 %v4559, 16
  %v5002 = vrot.slane %v5000, 5
  %v5003 = vsel %vm242, %v4998, %v5002
  %v5004 = vshrl.u32 %v4559, 16
  %v5006 = vrot.slane %v5004, 4
  %v5007 = vor.u32 %v5006, %v5002
  %v5008 = vrot.slane %v5007, 4
  %v5010 = vshll.u32 %v4560, 16
  %v5012 = vrot.slane %v5010, 5
  %v5013 = vsel %vm242, %v5008, %v5012
  %v5015 = vshrl.u32 %v4561, 16
  %v5017 = vrot.slane %v5015, 4
  %v5018 = vshll.u32 %v4561, 16
  %v5020 = vrot.slane %v5018, 5
  %v5021 = vor.u32 %v5017, %v5020
  %v5022 = vrot.slane %v5021, 4
  %v5024 = vshll.u32 %v4562, 16
  %v5026 = vrot.slane %v5024, 5
  %v5027 = vsel %vm242, %v5022, %v5026
  %v5028 = vshrl.u32 %v4562, 16
  %v5030 = vrot.slane %v5028, 4
  %v5031 = vor.u32 %v5030, %v5026
  %v5032 = vrot.slane %v5031, 4
  %v5034 = vshll.u32 %v4563, 16
  %v5036 = vrot.slane %v5034, 5
  %v5037 = vsel %vm242, %v5032, %v5036
  %v5039 = vshrl.u32 %v4564, 16
  %v5041 = vrot.slane %v5039, 4
  %v5042 = vshll.u32 %v4564, 16
  %v5044 = vrot.slane %v5042, 5
  %v5045 = vor.u32 %v5041, %v5044
  %v5046 = vrot.slane %v5045, 4
  %v5048 = vshll.u32 %v4565, 16
  %v5050 = vrot.slane %v5048, 5
  %v5051 = vsel %vm242, %v5046, %v5050
  %v5052 = vshrl.u32 %v4565, 16
  %v5054 = vrot.slane %v5052, 4
  %v5055 = vor.u32 %v5054, %v5050
  %v5056 = vrot.slane %v5055, 4
  %v5058 = vshll.u32 %v4566, 16
  %v5060 = vrot.slane %v5058, 5
  %v5061 = vsel %vm242, %v5056, %v5060
  %v5063 = vshrl.u32 %v4567, 16
  %v5065 = vrot.slane %v5063, 4
  %v5066 = vshll.u32 %v4567, 16
  %v5068 = vrot.slane %v5066, 5
  %v5069 = vor.u32 %v5065, %v5068
  %v5070 = vrot.slane %v5069, 4
  %v5072 = vshll.u32 %v4568, 16
  %v5074 = vrot.slane %v5072, 5
  %v5075 = vsel %vm242, %v5070, %v5074
  %v5076 = vshrl.u32 %v4568, 16
  %v5078 = vrot.slane %v5076, 4
  %v5079 = vor.u32 %v5078, %v5074
  %v5080 = vrot.slane %v5079, 4
  %v5082 = vshll.u32 %v4569, 16
  %v5084 = vrot.slane %v5082, 5
  %v5085 = vsel %vm242, %v5080, %v5084
  %v5087 = vshrl.u32 %v4570, 16
  %v5089 = vrot.slane %v5087, 4
  %v5090 = vshll.u32 %v4570, 16
  %v5092 = vrot.slane %v5090, 5
  %v5093 = vor.u32 %v5089, %v5092
  %v5094 = vrot.slane %v5093, 4
  %v5096 = vshll.u32 %v4571, 16
  %v5098 = vrot.slane %v5096, 5
  %v5099 = vsel %vm242, %v5094, %v5098
  %v5100 = vshrl.u32 %v4571, 16
  %v5102 = vrot.slane %v5100, 4
  %v5103 = vor.u32 %v5102, %v5098
  %v5104 = vrot.slane %v5103, 4
  %v5106 = vshll.u32 %v4572, 16
  %v5108 = vrot.slane %v5106, 5
  %v5109 = vsel %vm242, %v5104, %v5108
  %v5111 = vshrl.u32 %v4573, 16
  %v5113 = vrot.slane %v5111, 4
  %v5114 = vshll.u32 %v4573, 16
  %v5116 = vrot.slane %v5114, 5
  %v5117 = vor.u32 %v5113, %v5116
  %v5118 = vrot.slane %v5117, 4
  %v5120 = vshll.u32 %v4574, 16
  %v5122 = vrot.slane %v5120, 5
  %v5123 = vsel %vm242, %v5118, %v5122
  %v5124 = vshrl.u32 %v4574, 16
  %v5126 = vrot.slane %v5124, 4
  %v5127 = vor.u32 %v5126, %v5122
  %v5128 = vrot.slane %v5127, 4
  %v5130 = vshll.u32 %v4575, 16
  %v5132 = vrot.slane %v5130, 5
  %v5133 = vsel %vm242, %v5128, %v5132
  %v5135 = vshrl.u32 %v4576, 16
  %v5137 = vrot.slane %v5135, 4
  %v5138 = vshll.u32 %v4576, 16
  %v5140 = vrot.slane %v5138, 5
  %v5141 = vor.u32 %v5137, %v5140
  %v5142 = vrot.slane %v5141, 4
  %v5144 = vshll.u32 %v4577, 16
  %v5146 = vrot.slane %v5144, 5
  %v5147 = vsel %vm242, %v5142, %v5146
  %v5148 = vshrl.u32 %v4577, 16
  %v5150 = vrot.slane %v5148, 4
  %v5151 = vor.u32 %v5150, %v5146
  %v5152 = vrot.slane %v5151, 4
  %v5154 = vshll.u32 %v4578, 16
  %v5156 = vrot.slane %v5154, 5
  %v5157 = vsel %vm242, %v5152, %v5156
  %v5159 = vshrl.u32 %v4579, 16
  %v5161 = vrot.slane %v5159, 4
  %v5162 = vshll.u32 %v4579, 16
  %v5164 = vrot.slane %v5162, 5
  %v5165 = vor.u32 %v5161, %v5164
  %v5166 = vrot.slane %v5165, 4
  %v5168 = vshll.u32 %v4580, 16
  %v5170 = vrot.slane %v5168, 5
  %v5171 = vsel %vm242, %v5166, %v5170
  %v5172 = vshrl.u32 %v4580, 16
  %v5174 = vrot.slane %v5172, 4
  %v5175 = vor.u32 %v5174, %v5170
  %v5176 = vrot.slane %v5175, 4
  %v5178 = vshll.u32 %v4581, 16
  %v5180 = vrot.slane %v5178, 5
  %v5181 = vsel %vm242, %v5176, %v5180
  %v5183 = vshrl.u32 %v4582, 16
  %v5185 = vrot.slane %v5183, 4
  %v5186 = vshll.u32 %v4582, 16
  %v5188 = vrot.slane %v5186, 5
  %v5189 = vor.u32 %v5185, %v5188
  %v5190 = vrot.slane %v5189, 4
  %v5192 = vshll.u32 %v4583, 16
  %v5194 = vrot.slane %v5192, 5
  %v5195 = vsel %vm242, %v5190, %v5194
  %v5196 = vshrl.u32 %v4583, 16
  %v5198 = vrot.slane %v5196, 4
  %v5199 = vor.u32 %v5198, %v5194
  %v5200 = vrot.slane %v5199, 4
  %v5202 = vshll.u32 %v4584, 16
  %v5204 = vrot.slane %v5202, 5
  %v5205 = vsel %vm242, %v5200, %v5204
  %v5207 = vshrl.u32 %v4585, 16
  %v5209 = vrot.slane %v5207, 4
  %v5210 = vshll.u32 %v4585, 16
  %v5212 = vrot.slane %v5210, 5
  %v5213 = vor.u32 %v5209, %v5212
  %v5214 = vrot.slane %v5213, 4
  %v5216 = vshll.u32 %v4586, 16
  %v5218 = vrot.slane %v5216, 5
  %v5219 = vsel %vm242, %v5214, %v5218
  %v5220 = vshrl.u32 %v4586, 16
  %v5222 = vrot.slane %v5220, 4
  %v5223 = vor.u32 %v5222, %v5218
  %v5224 = vrot.slane %v5223, 4
  %v5226 = vshll.u32 %v4587, 16
  %v5228 = vrot.slane %v5226, 5
  %v5229 = vsel %vm242, %v5224, %v5228
  %v5231 = vshrl.u32 %v4588, 16
  %v5233 = vrot.slane %v5231, 4
  %v5234 = vshll.u32 %v4588, 16
  %v5236 = vrot.slane %v5234, 5
  %v5237 = vor.u32 %v5233, %v5236
  %v5238 = vrot.slane %v5237, 4
  %v5240 = vshll.u32 %v4589, 16
  %v5242 = vrot.slane %v5240, 5
  %v5243 = vsel %vm242, %v5238, %v5242
  %v5244 = vshrl.u32 %v4589, 16
  %v5246 = vrot.slane %v5244, 4
  %v5247 = vor.u32 %v5246, %v5242
  %v5248 = vrot.slane %v5247, 4
  %v5250 = vshll.u32 %v4590, 16
  %v5252 = vrot.slane %v5250, 5
  %v5253 = vsel %vm242, %v5248, %v5252
  %v5255 = vshrl.u32 %v4591, 16
  %v5257 = vrot.slane %v5255, 4
  %v5258 = vshll.u32 %v4591, 16
  %v5260 = vrot.slane %v5258, 5
  %v5261 = vor.u32 %v5257, %v5260
  %v5262 = vrot.slane %v5261, 4
  %v5264 = vshll.u32 %v4592, 16
  %v5266 = vrot.slane %v5264, 5
  %v5267 = vsel %vm242, %v5262, %v5266
  %v5268 = vshrl.u32 %v4592, 16
  %v5270 = vrot.slane %v5268, 4
  %v5271 = vor.u32 %v5270, %v5266
  %v5272 = vrot.slane %v5271, 4
  %v5274 = vshll.u32 %v4593, 16
  %v5276 = vrot.slane %v5274, 5
  %v5277 = vsel %vm242, %v5272, %v5276
  %v5279 = vshrl.u32 %v4594, 16
  %v5281 = vrot.slane %v5279, 4
  %v5282 = vshll.u32 %v4594, 16
  %v5284 = vrot.slane %v5282, 5
  %v5285 = vor.u32 %v5281, %v5284
  %v5286 = vrot.slane %v5285, 4
  %v5288 = vshll.u32 %v4595, 16
  %v5290 = vrot.slane %v5288, 5
  %v5291 = vsel %vm242, %v5286, %v5290
  %v5292 = vshrl.u32 %v4595, 16
  %v5294 = vrot.slane %v5292, 4
  %v5295 = vor.u32 %v5294, %v5290
  %v5296 = vrot.slane %v5295, 4
  %v5298 = vshll.u32 %v4596, 16
  %v5300 = vrot.slane %v5298, 5
  %v5301 = vsel %vm242, %v5296, %v5300
  %v5303 = vshrl.u32 %v4597, 16
  %v5305 = vrot.slane %v5303, 4
  %v5306 = vshll.u32 %v4597, 16
  %v5308 = vrot.slane %v5306, 5
  %v5309 = vor.u32 %v5305, %v5308
  %v5310 = vrot.slane %v5309, 4
  %v5312 = vshll.u32 %v4598, 16
  %v5314 = vrot.slane %v5312, 5
  %v5315 = vsel %vm242, %v5310, %v5314
  %v5316 = vshrl.u32 %v4598, 16
  %v5318 = vrot.slane %v5316, 4
  %v5319 = vor.u32 %v5318, %v5314
  %v5320 = vrot.slane %v5319, 4
  %v5322 = vshll.u32 %v4599, 16
  %v5324 = vrot.slane %v5322, 5
  %v5325 = vsel %vm242, %v5320, %v5324
  %v5327 = vshrl.u32 %v4600, 16
  %v5329 = vrot.slane %v5327, 4
  %v5330 = vshll.u32 %v4600, 16
  %v5332 = vrot.slane %v5330, 5
  %v5333 = vor.u32 %v5329, %v5332
  %v5334 = vrot.slane %v5333, 4
  %v5336 = vshll.u32 %v4601, 16
  %v5338 = vrot.slane %v5336, 5
  %v5339 = vsel %vm242, %v5334, %v5338
  %v5340 = vshrl.u32 %v4601, 16
  %v5342 = vrot.slane %v5340, 4
  %v5343 = vor.u32 %v5342, %v5338
  %v5344 = vrot.slane %v5343, 4
  %v5346 = vshll.u32 %v4602, 16
  %v5348 = vrot.slane %v5346, 5
  %v5349 = vsel %vm242, %v5344, %v5348
  %v5351 = vshrl.u32 %v4603, 16
  %v5353 = vrot.slane %v5351, 4
  %v5354 = vshll.u32 %v4603, 16
  %v5356 = vrot.slane %v5354, 5
  %v5357 = vor.u32 %v5353, %v5356
  %v5358 = vrot.slane %v5357, 4
  %v5360 = vshll.u32 %v4604, 16
  %v5362 = vrot.slane %v5360, 5
  %v5363 = vsel %vm242, %v5358, %v5362
  %v5364 = vshrl.u32 %v4604, 16
  %v5366 = vrot.slane %v5364, 4
  %v5367 = vor.u32 %v5366, %v5362
  %v5368 = vrot.slane %v5367, 4
  %v5370 = vshll.u32 %v4605, 16
  %v5372 = vrot.slane %v5370, 5
  %v5373 = vsel %vm242, %v5368, %v5372
  %5374 = vrot.lane.b32.xlu0 %v4619, 28
  %v5375 = vpop.permute.xlu0 %5374
  %5376 = vrot.lane.b32.xlu0 %v4629, 28
  %v5377 = vpop.permute.xlu0 %5376
  %5378 = vrot.lane.b32.xlu0 %v4643, 28
  %v5379 = vpop.permute.xlu0 %5378
  %5380 = vrot.lane.b32.xlu0 %v4653, 28
  %v5381 = vpop.permute.xlu0 %5380
  %5382 = vrot.lane.b32.xlu0 %v4667, 28
  %v5383 = vpop.permute.xlu0 %5382
  %5384 = vrot.lane.b32.xlu0 %v4677, 28
  %v5385 = vpop.permute.xlu0 %5384
  %5386 = vrot.lane.b32.xlu0 %v4691, 28
  %v5387 = vpop.permute.xlu0 %5386
  %5388 = vrot.lane.b32.xlu0 %v4701, 28
  %v5389 = vpop.permute.xlu0 %5388
  %5390 = vrot.lane.b32.xlu0 %v4715, 28
  %v5391 = vpop.permute.xlu0 %5390
  %5392 = vrot.lane.b32.xlu0 %v4725, 28
  %v5393 = vpop.permute.xlu0 %5392
  %5394 = vrot.lane.b32.xlu0 %v4739, 28
  %v5395 = vpop.permute.xlu0 %5394
  %5396 = vrot.lane.b32.xlu0 %v4749, 28
  %v5397 = vpop.permute.xlu0 %5396
  %5398 = vrot.lane.b32.xlu0 %v4763, 28
  %v5399 = vpop.permute.xlu0 %5398
  %5400 = vrot.lane.b32.xlu0 %v4773, 28
  %v5401 = vpop.permute.xlu0 %5400
  %5402 = vrot.lane.b32.xlu0 %v4787, 28
  %v5403 = vpop.permute.xlu0 %5402
  %5404 = vrot.lane.b32.xlu0 %v4797, 28
  %v5405 = vpop.permute.xlu0 %5404
  %5406 = vrot.lane.b32.xlu0 %v4811, 28
  %v5407 = vpop.permute.xlu0 %5406
  %5408 = vrot.lane.b32.xlu0 %v4821, 28
  %v5409 = vpop.permute.xlu0 %5408
  %5410 = vrot.lane.b32.xlu0 %v4835, 28
  %v5411 = vpop.permute.xlu0 %5410
  %5412 = vrot.lane.b32.xlu0 %v4845, 28
  %v5413 = vpop.permute.xlu0 %5412
  %5414 = vrot.lane.b32.xlu0 %v4859, 28
  %v5415 = vpop.permute.xlu0 %5414
  %5416 = vrot.lane.b32.xlu0 %v4869, 28
  %v5417 = vpop.permute.xlu0 %5416
  %5418 = vrot.lane.b32.xlu0 %v4883, 28
  %v5419 = vpop.permute.xlu0 %5418
  %5420 = vrot.lane.b32.xlu0 %v4893, 28
  %v5421 = vpop.permute.xlu0 %5420
  %5422 = vrot.lane.b32.xlu0 %v4907, 28
  %v5423 = vpop.permute.xlu0 %5422
  %5424 = vrot.lane.b32.xlu0 %v4917, 28
  %v5425 = vpop.permute.xlu0 %5424
  %5426 = vrot.lane.b32.xlu0 %v4931, 28
  %v5427 = vpop.permute.xlu0 %5426
  %5428 = vrot.lane.b32.xlu0 %v4941, 28
  %v5429 = vpop.permute.xlu0 %5428
  %5430 = vrot.lane.b32.xlu0 %v4955, 28
  %v5431 = vpop.permute.xlu0 %5430
  %5432 = vrot.lane.b32.xlu0 %v4965, 28
  %v5433 = vpop.permute.xlu0 %5432
  %5434 = vrot.lane.b32.xlu0 %v4979, 28
  %v5435 = vpop.permute.xlu0 %5434
  %5436 = vrot.lane.b32.xlu0 %v4989, 28
  %v5437 = vpop.permute.xlu0 %5436
  %5438 = vrot.lane.b32.xlu0 %v5003, 28
  %v5439 = vpop.permute.xlu0 %5438
  %5440 = vrot.lane.b32.xlu0 %v5013, 28
  %v5441 = vpop.permute.xlu0 %5440
  %5442 = vrot.lane.b32.xlu0 %v5027, 28
  %v5443 = vpop.permute.xlu0 %5442
  %5444 = vrot.lane.b32.xlu0 %v5037, 28
  %v5445 = vpop.permute.xlu0 %5444
  %5446 = vrot.lane.b32.xlu0 %v5051, 28
  %v5447 = vpop.permute.xlu0 %5446
  %5448 = vrot.lane.b32.xlu0 %v5061, 28
  %v5449 = vpop.permute.xlu0 %5448
  %5450 = vrot.lane.b32.xlu0 %v5075, 28
  %v5451 = vpop.permute.xlu0 %5450
  %5452 = vrot.lane.b32.xlu0 %v5085, 28
  %v5453 = vpop.permute.xlu0 %5452
  %5454 = vrot.lane.b32.xlu0 %v5099, 28
  %v5455 = vpop.permute.xlu0 %5454
  %5456 = vrot.lane.b32.xlu0 %v5109, 28
  %v5457 = vpop.permute.xlu0 %5456
  %5458 = vrot.lane.b32.xlu0 %v5123, 28
  %v5459 = vpop.permute.xlu0 %5458
  %5460 = vrot.lane.b32.xlu0 %v5133, 28
  %v5461 = vpop.permute.xlu0 %5460
  %5462 = vrot.lane.b32.xlu0 %v5147, 28
  %v5463 = vpop.permute.xlu0 %5462
  %5464 = vrot.lane.b32.xlu0 %v5157, 28
  %v5465 = vpop.permute.xlu0 %5464
  %5466 = vrot.lane.b32.xlu0 %v5171, 28
  %v5467 = vpop.permute.xlu0 %5466
  %5468 = vrot.lane.b32.xlu0 %v5181, 28
  %v5469 = vpop.permute.xlu0 %5468
  %5470 = vrot.lane.b32.xlu0 %v5195, 28
  %v5471 = vpop.permute.xlu0 %5470
  %5472 = vrot.lane.b32.xlu0 %v5205, 28
  %v5473 = vpop.permute.xlu0 %5472
  %5474 = vrot.lane.b32.xlu0 %v5219, 28
  %v5475 = vpop.permute.xlu0 %5474
  %5476 = vrot.lane.b32.xlu0 %v5229, 28
  %v5477 = vpop.permute.xlu0 %5476
  %5478 = vrot.lane.b32.xlu0 %v5243, 28
  %v5479 = vpop.permute.xlu0 %5478
  %5480 = vrot.lane.b32.xlu0 %v5253, 28
  %v5481 = vpop.permute.xlu0 %5480
  %5482 = vrot.lane.b32.xlu0 %v5267, 28
  %v5483 = vpop.permute.xlu0 %5482
  %5484 = vrot.lane.b32.xlu0 %v5277, 28
  %v5485 = vpop.permute.xlu0 %5484
  %5486 = vrot.lane.b32.xlu0 %v5291, 28
  %v5487 = vpop.permute.xlu0 %5486
  %5488 = vrot.lane.b32.xlu0 %v5301, 28
  %v5489 = vpop.permute.xlu0 %5488
  %5490 = vrot.lane.b32.xlu0 %v5315, 28
  %v5491 = vpop.permute.xlu0 %5490
  %5492 = vrot.lane.b32.xlu0 %v5325, 28
  %v5493 = vpop.permute.xlu0 %5492
  %5494 = vrot.lane.b32.xlu0 %v5339, 28
  %v5495 = vpop.permute.xlu0 %5494
  %5496 = vrot.lane.b32.xlu0 %v5349, 28
  %v5497 = vpop.permute.xlu0 %5496
  %5498 = vrot.lane.b32.xlu0 %v5363, 28
  %v5499 = vpop.permute.xlu0 %5498
  %5500 = vrot.lane.b32.xlu0 %v5373, 28
  %v5501 = vpop.permute.xlu0 %5500
  %vm5566 = vcmask 257248
  %5567 = vst.msk [vmem:[#allocation2] sm:$0xf] %vm5566, %v5375
  %5568 = vst.msk [vmem:[#allocation2 + $0x4] sm:$0xf] %vm5566, %v5377
  %5569 = vst.msk [vmem:[#allocation2 + $0x8] sm:$0xf] %vm5566, %v5379
  %5570 = vst.msk [vmem:[#allocation2 + $0xc] sm:$0xf] %vm5566, %v5381
  %5571 = vst.msk [vmem:[#allocation2 + $0x10] sm:$0xf] %vm5566, %v5383
  %5572 = vst.msk [vmem:[#allocation2 + $0x14] sm:$0xf] %vm5566, %v5385
  %5573 = vst.msk [vmem:[#allocation2 + $0x18] sm:$0xf] %vm5566, %v5387
  %5574 = vst.msk [vmem:[#allocation2 + $0x1c] sm:$0xf] %vm5566, %v5389
  %5575 = vst.msk [vmem:[#allocation2 + $0x20] sm:$0xf] %vm5566, %v5391
  %5576 = vst.msk [vmem:[#allocation2 + $0x24] sm:$0xf] %vm5566, %v5393
  %5577 = vst.msk [vmem:[#allocation2 + $0x28] sm:$0xf] %vm5566, %v5395
  %5578 = vst.msk [vmem:[#allocation2 + $0x2c] sm:$0xf] %vm5566, %v5397
  %5579 = vst.msk [vmem:[#allocation2 + $0x30] sm:$0xf] %vm5566, %v5399
  %5580 = vst.msk [vmem:[#allocation2 + $0x34] sm:$0xf] %vm5566, %v5401
  %5581 = vst.msk [vmem:[#allocation2 + $0x38] sm:$0xf] %vm5566, %v5403
  %5582 = vst.msk [vmem:[#allocation2 + $0x3c] sm:$0xf] %vm5566, %v5405
  %5583 = vst.msk [vmem:[#allocation2 + $0x40] sm:$0xf] %vm5566, %v5407
  %5584 = vst.msk [vmem:[#allocation2 + $0x44] sm:$0xf] %vm5566, %v5409
  %5585 = vst.msk [vmem:[#allocation2 + $0x48] sm:$0xf] %vm5566, %v5411
  %5586 = vst.msk [vmem:[#allocation2 + $0x4c] sm:$0xf] %vm5566, %v5413
  %5587 = vst.msk [vmem:[#allocation2 + $0x50] sm:$0xf] %vm5566, %v5415
  %5588 = vst.msk [vmem:[#allocation2 + $0x54] sm:$0xf] %vm5566, %v5417
  %5589 = vst.msk [vmem:[#allocation2 + $0x58] sm:$0xf] %vm5566, %v5419
  %5590 = vst.msk [vmem:[#allocation2 + $0x5c] sm:$0xf] %vm5566, %v5421
  %5591 = vst.msk [vmem:[#allocation2 + $0x60] sm:$0xf] %vm5566, %v5423
  %5592 = vst.msk [vmem:[#allocation2 + $0x64] sm:$0xf] %vm5566, %v5425
  %5593 = vst.msk [vmem:[#allocation2 + $0x68] sm:$0xf] %vm5566, %v5427
  %5594 = vst.msk [vmem:[#allocation2 + $0x6c] sm:$0xf] %vm5566, %v5429
  %5595 = vst.msk [vmem:[#allocation2 + $0x70] sm:$0xf] %vm5566, %v5431
  %5596 = vst.msk [vmem:[#allocation2 + $0x74] sm:$0xf] %vm5566, %v5433
  %5597 = vst.msk [vmem:[#allocation2 + $0x78] sm:$0xf] %vm5566, %v5435
  %5598 = vst.msk [vmem:[#allocation2 + $0x7c] sm:$0xf] %vm5566, %v5437
  %5599 = vst.msk [vmem:[#allocation2 + $0x80] sm:$0xf] %vm5566, %v5439
  %5600 = vst.msk [vmem:[#allocation2 + $0x84] sm:$0xf] %vm5566, %v5441
  %5601 = vst.msk [vmem:[#allocation2 + $0x88] sm:$0xf] %vm5566, %v5443
  %5602 = vst.msk [vmem:[#allocation2 + $0x8c] sm:$0xf] %vm5566, %v5445
  %5603 = vst.msk [vmem:[#allocation2 + $0x90] sm:$0xf] %vm5566, %v5447
  %5604 = vst.msk [vmem:[#allocation2 + $0x94] sm:$0xf] %vm5566, %v5449
  %5605 = vst.msk [vmem:[#allocation2 + $0x98] sm:$0xf] %vm5566, %v5451
  %5606 = vst.msk [vmem:[#allocation2 + $0x9c] sm:$0xf] %vm5566, %v5453
  %5607 = vst.msk [vmem:[#allocation2 + $0xa0] sm:$0xf] %vm5566, %v5455
  %5608 = vst.msk [vmem:[#allocation2 + $0xa4] sm:$0xf] %vm5566, %v5457
  %5609 = vst.msk [vmem:[#allocation2 + $0xa8] sm:$0xf] %vm5566, %v5459
  %5610 = vst.msk [vmem:[#allocation2 + $0xac] sm:$0xf] %vm5566, %v5461
  %5611 = vst.msk [vmem:[#allocation2 + $0xb0] sm:$0xf] %vm5566, %v5463
  %5612 = vst.msk [vmem:[#allocation2 + $0xb4] sm:$0xf] %vm5566, %v5465
  %5613 = vst.msk [vmem:[#allocation2 + $0xb8] sm:$0xf] %vm5566, %v5467
  %5614 = vst.msk [vmem:[#allocation2 + $0xbc] sm:$0xf] %vm5566, %v5469
  %5615 = vst.msk [vmem:[#allocation2 + $0xc0] sm:$0xf] %vm5566, %v5471
  %5616 = vst.msk [vmem:[#allocation2 + $0xc4] sm:$0xf] %vm5566, %v5473
  %5617 = vst.msk [vmem:[#allocation2 + $0xc8] sm:$0xf] %vm5566, %v5475
  %5618 = vst.msk [vmem:[#allocation2 + $0xcc] sm:$0xf] %vm5566, %v5477
  %5619 = vst.msk [vmem:[#allocation2 + $0xd0] sm:$0xf] %vm5566, %v5479
  %5620 = vst.msk [vmem:[#allocation2 + $0xd4] sm:$0xf] %vm5566, %v5481
  %5621 = vst.msk [vmem:[#allocation2 + $0xd8] sm:$0xf] %vm5566, %v5483
  %5622 = vst.msk [vmem:[#allocation2 + $0xdc] sm:$0xf] %vm5566, %v5485
  %5623 = vst.msk [vmem:[#allocation2 + $0xe0] sm:$0xf] %vm5566, %v5487
  %5624 = vst.msk [vmem:[#allocation2 + $0xe4] sm:$0xf] %vm5566, %v5489
  %5625 = vst.msk [vmem:[#allocation2 + $0xe8] sm:$0xf] %vm5566, %v5491
  %5626 = vst.msk [vmem:[#allocation2 + $0xec] sm:$0xf] %vm5566, %v5493
  %5627 = vst.msk [vmem:[#allocation2 + $0xf0] sm:$0xf] %vm5566, %v5495
  %5628 = vst.msk [vmem:[#allocation2 + $0xf4] sm:$0xf] %vm5566, %v5497
  %5629 = vst.msk [vmem:[#allocation2 + $0xf8] sm:$0xf] %vm5566, %v5499
  %5630 = vst.msk [vmem:[#allocation2 + $0xfc] sm:$0xf] %vm5566, %v5501
  %v5631 = vld [vmem:[%s4124] sm:$0xe]
  %v5632 = vld [vmem:[%s4124 + $0x4] sm:$0xf]
  %v5633 = vld [vmem:[%s4124 + $0x8] sm:$0x1]
  %v5634 = vld [vmem:[%s4124 + $0xc] sm:$0xe]
  %v5635 = vld [vmem:[%s4124 + $0x10] sm:$0xf]
  %v5636 = vld [vmem:[%s4124 + $0x14] sm:$0x1]
  %v5637 = vld [vmem:[%s4124 + $0x18] sm:$0xe]
  %v5638 = vld [vmem:[%s4124 + $0x1c] sm:$0xf]
  %v5639 = vld [vmem:[%s4124 + $0x20] sm:$0x1]
  %v5640 = vld [vmem:[%s4124 + $0x24] sm:$0xe]
  %v5641 = vld [vmem:[%s4124 + $0x28] sm:$0xf]
  %v5642 = vld [vmem:[%s4124 + $0x2c] sm:$0x1]
  %v5643 = vld [vmem:[%s4124 + $0x30] sm:$0xe]
  %v5644 = vld [vmem:[%s4124 + $0x34] sm:$0xf]
  %v5645 = vld [vmem:[%s4124 + $0x38] sm:$0x1]
  %v5646 = vld [vmem:[%s4124 + $0x3c] sm:$0xe]
  %v5647 = vld [vmem:[%s4124 + $0x40] sm:$0xf]
  %v5648 = vld [vmem:[%s4124 + $0x44] sm:$0x1]
  %v5649 = vld [vmem:[%s4124 + $0x48] sm:$0xe]
  %v5650 = vld [vmem:[%s4124 + $0x4c] sm:$0xf]
  %v5651 = vld [vmem:[%s4124 + $0x50] sm:$0x1]
  %v5652 = vld [vmem:[%s4124 + $0x54] sm:$0xe]
  %v5653 = vld [vmem:[%s4124 + $0x58] sm:$0xf]
  %v5654 = vld [vmem:[%s4124 + $0x5c] sm:$0x1]
  %v5655 = vld [vmem:[%s4124 + $0x60] sm:$0xe]
  %v5656 = vld [vmem:[%s4124 + $0x64] sm:$0xf]
  %v5657 = vld [vmem:[%s4124 + $0x68] sm:$0x1]
  %v5658 = vld [vmem:[%s4124 + $0x6c] sm:$0xe]
  %v5659 = vld [vmem:[%s4124 + $0x70] sm:$0xf]
  %v5660 = vld [vmem:[%s4124 + $0x74] sm:$0x1]
  %v5661 = vld [vmem:[%s4124 + $0x78] sm:$0xe]
  %v5662 = vld [vmem:[%s4124 + $0x7c] sm:$0xf]
  %v5663 = vld [vmem:[%s4124 + $0x80] sm:$0x1]
  %v5664 = vld [vmem:[%s4124 + $0x84] sm:$0xe]
  %v5665 = vld [vmem:[%s4124 + $0x88] sm:$0xf]
  %v5666 = vld [vmem:[%s4124 + $0x8c] sm:$0x1]
  %v5667 = vld [vmem:[%s4124 + $0x90] sm:$0xe]
  %v5668 = vld [vmem:[%s4124 + $0x94] sm:$0xf]
  %v5669 = vld [vmem:[%s4124 + $0x98] sm:$0x1]
  %v5670 = vld [vmem:[%s4124 + $0x9c] sm:$0xe]
  %v5671 = vld [vmem:[%s4124 + $0xa0] sm:$0xf]
  %v5672 = vld [vmem:[%s4124 + $0xa4] sm:$0x1]
  %v5673 = vld [vmem:[%s4124 + $0xa8] sm:$0xe]
  %v5674 = vld [vmem:[%s4124 + $0xac] sm:$0xf]
  %v5675 = vld [vmem:[%s4124 + $0xb0] sm:$0x1]
  %v5676 = vld [vmem:[%s4124 + $0xb4] sm:$0xe]
  %v5677 = vld [vmem:[%s4124 + $0xb8] sm:$0xf]
  %v5678 = vld [vmem:[%s4124 + $0xbc] sm:$0x1]
  %v5679 = vld [vmem:[%s4124 + $0xd8] sm:$0xe]
  %v5680 = vld [vmem:[%s4124 + $0xdc] sm:$0xf]
  %v5681 = vld [vmem:[%s4124 + $0xe0] sm:$0x1]
  %v5682 = vld [vmem:[%s4124 + $0xe4] sm:$0xe]
  %v5683 = vld [vmem:[%s4124 + $0xe8] sm:$0xf]
  %v5684 = vld [vmem:[%s4124 + $0xec] sm:$0x1]
  %v5685 = vld [vmem:[%s4124 + $0xf0] sm:$0xe]
  %v5686 = vld [vmem:[%s4124 + $0xf4] sm:$0xf]
  %v5687 = vld [vmem:[%s4124 + $0xf8] sm:$0x1]
  %v5688 = vld [vmem:[%s4124 + $0xfc] sm:$0xe]
  %v5689 = vld [vmem:[%s4124 + $0x100] sm:$0xf]
  %v5690 = vld [vmem:[%s4124 + $0x104] sm:$0x1]
  %v5691 = vld [vmem:[%s4124 + $0x108] sm:$0xe]
  %v5692 = vld [vmem:[%s4124 + $0x10c] sm:$0xf]
  %v5693 = vld [vmem:[%s4124 + $0x110] sm:$0x1]
  %v5694 = vld [vmem:[%s4124 + $0x114] sm:$0xe]
  %v5695 = vld [vmem:[%s4124 + $0x118] sm:$0xf]
  %v5696 = vld [vmem:[%s4124 + $0x11c] sm:$0x1]
  %v5697 = vld [vmem:[%s4124 + $0x120] sm:$0xe]
  %v5698 = vld [vmem:[%s4124 + $0x124] sm:$0xf]
  %v5699 = vld [vmem:[%s4124 + $0x128] sm:$0x1]
  %v5700 = vld [vmem:[%s4124 + $0x12c] sm:$0xe]
  %v5701 = vld [vmem:[%s4124 + $0x130] sm:$0xf]
  %v5702 = vld [vmem:[%s4124 + $0x134] sm:$0x1]
  %v5703 = vld [vmem:[%s4124 + $0x138] sm:$0xe]
  %v5704 = vld [vmem:[%s4124 + $0x13c] sm:$0xf]
  %v5705 = vld [vmem:[%s4124 + $0x140] sm:$0x1]
  %v5706 = vld [vmem:[%s4124 + $0x144] sm:$0xe]
  %v5707 = vld [vmem:[%s4124 + $0x148] sm:$0xf]
  %v5708 = vld [vmem:[%s4124 + $0x14c] sm:$0x1]
  %v5709 = vld [vmem:[%s4124 + $0x150] sm:$0xe]
  %v5710 = vld [vmem:[%s4124 + $0x154] sm:$0xf]
  %v5711 = vld [vmem:[%s4124 + $0x158] sm:$0x1]
  %v5712 = vld [vmem:[%s4124 + $0x15c] sm:$0xe]
  %v5713 = vld [vmem:[%s4124 + $0x160] sm:$0xf]
  %v5714 = vld [vmem:[%s4124 + $0x164] sm:$0x1]
  %v5715 = vld [vmem:[%s4124 + $0x168] sm:$0xe]
  %v5716 = vld [vmem:[%s4124 + $0x16c] sm:$0xf]
  %v5717 = vld [vmem:[%s4124 + $0x170] sm:$0x1]
  %v5718 = vld [vmem:[%s4124 + $0x174] sm:$0xe]
  %v5719 = vld [vmem:[%s4124 + $0x178] sm:$0xf]
  %v5720 = vld [vmem:[%s4124 + $0x17c] sm:$0x1]
  %v5721 = vld [vmem:[%s4124 + $0x180] sm:$0xe]
  %v5722 = vld [vmem:[%s4124 + $0x184] sm:$0xf]
  %v5723 = vld [vmem:[%s4124 + $0x188] sm:$0x1]
  %v5724 = vld [vmem:[%s4124 + $0x18c] sm:$0xe]
  %v5725 = vld [vmem:[%s4124 + $0x190] sm:$0xf]
  %v5726 = vld [vmem:[%s4124 + $0x194] sm:$0x1]
  %v5823 = vrot.slane %v5631, 5
  %v5824 = vrot.slane %v5823, 4
  %v5825 = vrot.slane %v5632, 5
  %v5826 = vsel %vm1462, %v5824, %v5825
  %v5827 = vrot.slane %v5825, 4
  %v5828 = vrot.slane %v5633, 5
  %v5829 = vsel %vm1462, %v5827, %v5828
  %v5830 = vrot.slane %v5634, 5
  %v5831 = vrot.slane %v5830, 4
  %v5832 = vrot.slane %v5635, 5
  %v5833 = vsel %vm1462, %v5831, %v5832
  %v5834 = vrot.slane %v5832, 4
  %v5835 = vrot.slane %v5636, 5
  %v5836 = vsel %vm1462, %v5834, %v5835
  %v5837 = vrot.slane %v5637, 5
  %v5838 = vrot.slane %v5837, 4
  %v5839 = vrot.slane %v5638, 5
  %v5840 = vsel %vm1462, %v5838, %v5839
  %v5841 = vrot.slane %v5839, 4
  %v5842 = vrot.slane %v5639, 5
  %v5843 = vsel %vm1462, %v5841, %v5842
  %v5844 = vrot.slane %v5640, 5
  %v5845 = vrot.slane %v5844, 4
  %v5846 = vrot.slane %v5641, 5
  %v5847 = vsel %vm1462, %v5845, %v5846
  %v5848 = vrot.slane %v5846, 4
  %v5849 = vrot.slane %v5642, 5
  %v5850 = vsel %vm1462, %v5848, %v5849
  %v5851 = vrot.slane %v5643, 5
  %v5852 = vrot.slane %v5851, 4
  %v5853 = vrot.slane %v5644, 5
  %v5854 = vsel %vm1462, %v5852, %v5853
  %v5855 = vrot.slane %v5853, 4
  %v5856 = vrot.slane %v5645, 5
  %v5857 = vsel %vm1462, %v5855, %v5856
  %v5858 = vrot.slane %v5646, 5
  %v5859 = vrot.slane %v5858, 4
  %v5860 = vrot.slane %v5647, 5
  %v5861 = vsel %vm1462, %v5859, %v5860
  %v5862 = vrot.slane %v5860, 4
  %v5863 = vrot.slane %v5648, 5
  %v5864 = vsel %vm1462, %v5862, %v5863
  %v5865 = vrot.slane %v5649, 5
  %v5866 = vrot.slane %v5865, 4
  %v5867 = vrot.slane %v5650, 5
  %v5868 = vsel %vm1462, %v5866, %v5867
  %v5869 = vrot.slane %v5867, 4
  %v5870 = vrot.slane %v5651, 5
  %v5871 = vsel %vm1462, %v5869, %v5870
  %v5872 = vrot.slane %v5652, 5
  %v5873 = vrot.slane %v5872, 4
  %v5874 = vrot.slane %v5653, 5
  %v5875 = vsel %vm1462, %v5873, %v5874
  %v5876 = vrot.slane %v5874, 4
  %v5877 = vrot.slane %v5654, 5
  %v5878 = vsel %vm1462, %v5876, %v5877
  %v5879 = vrot.slane %v5655, 5
  %v5880 = vrot.slane %v5879, 4
  %v5881 = vrot.slane %v5656, 5
  %v5882 = vsel %vm1462, %v5880, %v5881
  %v5883 = vrot.slane %v5881, 4
  %v5884 = vrot.slane %v5657, 5
  %v5885 = vsel %vm1462, %v5883, %v5884
  %v5886 = vrot.slane %v5658, 5
  %v5887 = vrot.slane %v5886, 4
  %v5888 = vrot.slane %v5659, 5
  %v5889 = vsel %vm1462, %v5887, %v5888
  %v5890 = vrot.slane %v5888, 4
  %v5891 = vrot.slane %v5660, 5
  %v5892 = vsel %vm1462, %v5890, %v5891
  %v5893 = vrot.slane %v5661, 5
  %v5894 = vrot.slane %v5893, 4
  %v5895 = vrot.slane %v5662, 5
  %v5896 = vsel %vm1462, %v5894, %v5895
  %v5897 = vrot.slane %v5895, 4
  %v5898 = vrot.slane %v5663, 5
  %v5899 = vsel %vm1462, %v5897, %v5898
  %v5900 = vrot.slane %v5664, 5
  %v5901 = vrot.slane %v5900, 4
  %v5902 = vrot.slane %v5665, 5
  %v5903 = vsel %vm1462, %v5901, %v5902
  %v5904 = vrot.slane %v5902, 4
  %v5905 = vrot.slane %v5666, 5
  %v5906 = vsel %vm1462, %v5904, %v5905
  %v5907 = vrot.slane %v5667, 5
  %v5908 = vrot.slane %v5907, 4
  %v5909 = vrot.slane %v5668, 5
  %v5910 = vsel %vm1462, %v5908, %v5909
  %v5911 = vrot.slane %v5909, 4
  %v5912 = vrot.slane %v5669, 5
  %v5913 = vsel %vm1462, %v5911, %v5912
  %v5914 = vrot.slane %v5670, 5
  %v5915 = vrot.slane %v5914, 4
  %v5916 = vrot.slane %v5671, 5
  %v5917 = vsel %vm1462, %v5915, %v5916
  %v5918 = vrot.slane %v5916, 4
  %v5919 = vrot.slane %v5672, 5
  %v5920 = vsel %vm1462, %v5918, %v5919
  %v5921 = vrot.slane %v5673, 5
  %v5922 = vrot.slane %v5921, 4
  %v5923 = vrot.slane %v5674, 5
  %v5924 = vsel %vm1462, %v5922, %v5923
  %v5925 = vrot.slane %v5923, 4
  %v5926 = vrot.slane %v5675, 5
  %v5927 = vsel %vm1462, %v5925, %v5926
  %v5928 = vrot.slane %v5676, 5
  %v5929 = vrot.slane %v5928, 4
  %v5930 = vrot.slane %v5677, 5
  %v5931 = vsel %vm1462, %v5929, %v5930
  %v5932 = vrot.slane %v5930, 4
  %v5933 = vrot.slane %v5678, 5
  %v5934 = vsel %vm1462, %v5932, %v5933
  %v5935 = vrot.slane %v5679, 5
  %v5936 = vrot.slane %v5935, 4
  %v5937 = vrot.slane %v5680, 5
  %v5938 = vsel %vm1462, %v5936, %v5937
  %v5939 = vrot.slane %v5937, 4
  %v5940 = vrot.slane %v5681, 5
  %v5941 = vsel %vm1462, %v5939, %v5940
  %v5942 = vrot.slane %v5682, 5
  %v5943 = vrot.slane %v5942, 4
  %v5944 = vrot.slane %v5683, 5
  %v5945 = vsel %vm1462, %v5943, %v5944
  %v5946 = vrot.slane %v5944, 4
  %v5947 = vrot.slane %v5684, 5
  %v5948 = vsel %vm1462, %v5946, %v5947
  %v5949 = vrot.slane %v5685, 5
  %v5950 = vrot.slane %v5949, 4
  %v5951 = vrot.slane %v5686, 5
  %v5952 = vsel %vm1462, %v5950, %v5951
  %v5953 = vrot.slane %v5951, 4
  %v5954 = vrot.slane %v5687, 5
  %v5955 = vsel %vm1462, %v5953, %v5954
  %v5956 = vrot.slane %v5688, 5
  %v5957 = vrot.slane %v5956, 4
  %v5958 = vrot.slane %v5689, 5
  %v5959 = vsel %vm1462, %v5957, %v5958
  %v5960 = vrot.slane %v5958, 4
  %v5961 = vrot.slane %v5690, 5
  %v5962 = vsel %vm1462, %v5960, %v5961
  %v5963 = vrot.slane %v5691, 5
  %v5964 = vrot.slane %v5963, 4
  %v5965 = vrot.slane %v5692, 5
  %v5966 = vsel %vm1462, %v5964, %v5965
  %v5967 = vrot.slane %v5965, 4
  %v5968 = vrot.slane %v5693, 5
  %v5969 = vsel %vm1462, %v5967, %v5968
  %v5970 = vrot.slane %v5694, 5
  %v5971 = vrot.slane %v5970, 4
  %v5972 = vrot.slane %v5695, 5
  %v5973 = vsel %vm1462, %v5971, %v5972
  %v5974 = vrot.slane %v5972, 4
  %v5975 = vrot.slane %v5696, 5
  %v5976 = vsel %vm1462, %v5974, %v5975
  %v5977 = vrot.slane %v5697, 5
  %v5978 = vrot.slane %v5977, 4
  %v5979 = vrot.slane %v5698, 5
  %v5980 = vsel %vm1462, %v5978, %v5979
  %v5981 = vrot.slane %v5979, 4
  %v5982 = vrot.slane %v5699, 5
  %v5983 = vsel %vm1462, %v5981, %v5982
  %v5984 = vrot.slane %v5700, 5
  %v5985 = vrot.slane %v5984, 4
  %v5986 = vrot.slane %v5701, 5
  %v5987 = vsel %vm1462, %v5985, %v5986
  %v5988 = vrot.slane %v5986, 4
  %v5989 = vrot.slane %v5702, 5
  %v5990 = vsel %vm1462, %v5988, %v5989
  %v5991 = vrot.slane %v5703, 5
  %v5992 = vrot.slane %v5991, 4
  %v5993 = vrot.slane %v5704, 5
  %v5994 = vsel %vm1462, %v5992, %v5993
  %v5995 = vrot.slane %v5993, 4
  %v5996 = vrot.slane %v5705, 5
  %v5997 = vsel %vm1462, %v5995, %v5996
  %v5998 = vrot.slane %v5706, 5
  %v5999 = vrot.slane %v5998, 4
  %v6000 = vrot.slane %v5707, 5
  %v6001 = vsel %vm1462, %v5999, %v6000
  %v6002 = vrot.slane %v6000, 4
  %v6003 = vrot.slane %v5708, 5
  %v6004 = vsel %vm1462, %v6002, %v6003
  %v6005 = vrot.slane %v5709, 5
  %v6006 = vrot.slane %v6005, 4
  %v6007 = vrot.slane %v5710, 5
  %v6008 = vsel %vm1462, %v6006, %v6007
  %v6009 = vrot.slane %v6007, 4
  %v6010 = vrot.slane %v5711, 5
  %v6011 = vsel %vm1462, %v6009, %v6010
  %v6012 = vrot.slane %v5712, 5
  %v6013 = vrot.slane %v6012, 4
  %v6014 = vrot.slane %v5713, 5
  %v6015 = vsel %vm1462, %v6013, %v6014
  %v6016 = vrot.slane %v6014, 4
  %v6017 = vrot.slane %v5714, 5
  %v6018 = vsel %vm1462, %v6016, %v6017
  %v6019 = vrot.slane %v5715, 5
  %v6020 = vrot.slane %v6019, 4
  %v6021 = vrot.slane %v5716, 5
  %v6022 = vsel %vm1462, %v6020, %v6021
  %v6023 = vrot.slane %v6021, 4
  %v6024 = vrot.slane %v5717, 5
  %v6025 = vsel %vm1462, %v6023, %v6024
  %v6026 = vrot.slane %v5718, 5
  %v6027 = vrot.slane %v6026, 4
  %v6028 = vrot.slane %v5719, 5
  %v6029 = vsel %vm1462, %v6027, %v6028
  %v6030 = vrot.slane %v6028, 4
  %v6031 = vrot.slane %v5720, 5
  %v6032 = vsel %vm1462, %v6030, %v6031
  %v6033 = vrot.slane %v5721, 5
  %v6034 = vrot.slane %v6033, 4
  %v6035 = vrot.slane %v5722, 5
  %v6036 = vsel %vm1462, %v6034, %v6035
  %v6037 = vrot.slane %v6035, 4
  %v6038 = vrot.slane %v5723, 5
  %v6039 = vsel %vm1462, %v6037, %v6038
  %v6040 = vrot.slane %v5724, 5
  %v6041 = vrot.slane %v6040, 4
  %v6042 = vrot.slane %v5725, 5
  %v6043 = vsel %vm1462, %v6041, %v6042
  %v6044 = vrot.slane %v6042, 4
  %v6045 = vrot.slane %v5726, 5
  %v6046 = vsel %vm1462, %v6044, %v6045
  %6047 = vrot.lane.b32.xlu0 %v5826, 32
  %v6048 = vpop.permute.xlu0 %6047
  %6049 = vrot.lane.b32.xlu0 %v5829, 32
  %v6050 = vpop.permute.xlu0 %6049
  %6051 = vrot.lane.b32.xlu0 %v5833, 32
  %v6052 = vpop.permute.xlu0 %6051
  %6053 = vrot.lane.b32.xlu0 %v5836, 32
  %v6054 = vpop.permute.xlu0 %6053
  %6055 = vrot.lane.b32.xlu0 %v5840, 32
  %v6056 = vpop.permute.xlu0 %6055
  %6057 = vrot.lane.b32.xlu0 %v5843, 32
  %v6058 = vpop.permute.xlu0 %6057
  %6059 = vrot.lane.b32.xlu0 %v5847, 32
  %v6060 = vpop.permute.xlu0 %6059
  %6061 = vrot.lane.b32.xlu0 %v5850, 32
  %v6062 = vpop.permute.xlu0 %6061
  %6063 = vrot.lane.b32.xlu0 %v5854, 32
  %v6064 = vpop.permute.xlu0 %6063
  %6065 = vrot.lane.b32.xlu0 %v5857, 32
  %v6066 = vpop.permute.xlu0 %6065
  %6067 = vrot.lane.b32.xlu0 %v5861, 32
  %v6068 = vpop.permute.xlu0 %6067
  %6069 = vrot.lane.b32.xlu0 %v5864, 32
  %v6070 = vpop.permute.xlu0 %6069
  %6071 = vrot.lane.b32.xlu0 %v5868, 32
  %v6072 = vpop.permute.xlu0 %6071
  %6073 = vrot.lane.b32.xlu0 %v5871, 32
  %v6074 = vpop.permute.xlu0 %6073
  %6075 = vrot.lane.b32.xlu0 %v5875, 32
  %v6076 = vpop.permute.xlu0 %6075
  %6077 = vrot.lane.b32.xlu0 %v5878, 32
  %v6078 = vpop.permute.xlu0 %6077
  %6079 = vrot.lane.b32.xlu0 %v5882, 32
  %v6080 = vpop.permute.xlu0 %6079
  %6081 = vrot.lane.b32.xlu0 %v5885, 32
  %v6082 = vpop.permute.xlu0 %6081
  %6083 = vrot.lane.b32.xlu0 %v5889, 32
  %v6084 = vpop.permute.xlu0 %6083
  %6085 = vrot.lane.b32.xlu0 %v5892, 32
  %v6086 = vpop.permute.xlu0 %6085
  %6087 = vrot.lane.b32.xlu0 %v5896, 32
  %v6088 = vpop.permute.xlu0 %6087
  %6089 = vrot.lane.b32.xlu0 %v5899, 32
  %v6090 = vpop.permute.xlu0 %6089
  %6091 = vrot.lane.b32.xlu0 %v5903, 32
  %v6092 = vpop.permute.xlu0 %6091
  %6093 = vrot.lane.b32.xlu0 %v5906, 32
  %v6094 = vpop.permute.xlu0 %6093
  %6095 = vrot.lane.b32.xlu0 %v5910, 32
  %v6096 = vpop.permute.xlu0 %6095
  %6097 = vrot.lane.b32.xlu0 %v5913, 32
  %v6098 = vpop.permute.xlu0 %6097
  %6099 = vrot.lane.b32.xlu0 %v5917, 32
  %v6100 = vpop.permute.xlu0 %6099
  %6101 = vrot.lane.b32.xlu0 %v5920, 32
  %v6102 = vpop.permute.xlu0 %6101
  %6103 = vrot.lane.b32.xlu0 %v5924, 32
  %v6104 = vpop.permute.xlu0 %6103
  %6105 = vrot.lane.b32.xlu0 %v5927, 32
  %v6106 = vpop.permute.xlu0 %6105
  %6107 = vrot.lane.b32.xlu0 %v5931, 32
  %v6108 = vpop.permute.xlu0 %6107
  %6109 = vrot.lane.b32.xlu0 %v5934, 32
  %v6110 = vpop.permute.xlu0 %6109
  %6111 = vrot.lane.b32.xlu0 %v5938, 32
  %v6112 = vpop.permute.xlu0 %6111
  %6113 = vrot.lane.b32.xlu0 %v5941, 32
  %v6114 = vpop.permute.xlu0 %6113
  %6115 = vrot.lane.b32.xlu0 %v5945, 32
  %v6116 = vpop.permute.xlu0 %6115
  %6117 = vrot.lane.b32.xlu0 %v5948, 32
  %v6118 = vpop.permute.xlu0 %6117
  %6119 = vrot.lane.b32.xlu0 %v5952, 32
  %v6120 = vpop.permute.xlu0 %6119
  %6121 = vrot.lane.b32.xlu0 %v5955, 32
  %v6122 = vpop.permute.xlu0 %6121
  %6123 = vrot.lane.b32.xlu0 %v5959, 32
  %v6124 = vpop.permute.xlu0 %6123
  %6125 = vrot.lane.b32.xlu0 %v5962, 32
  %v6126 = vpop.permute.xlu0 %6125
  %6127 = vrot.lane.b32.xlu0 %v5966, 32
  %v6128 = vpop.permute.xlu0 %6127
  %6129 = vrot.lane.b32.xlu0 %v5969, 32
  %v6130 = vpop.permute.xlu0 %6129
  %6131 = vrot.lane.b32.xlu0 %v5973, 32
  %v6132 = vpop.permute.xlu0 %6131
  %6133 = vrot.lane.b32.xlu0 %v5976, 32
  %v6134 = vpop.permute.xlu0 %6133
  %6135 = vrot.lane.b32.xlu0 %v5980, 32
  %v6136 = vpop.permute.xlu0 %6135
  %6137 = vrot.lane.b32.xlu0 %v5983, 32
  %v6138 = vpop.permute.xlu0 %6137
  %6139 = vrot.lane.b32.xlu0 %v5987, 32
  %v6140 = vpop.permute.xlu0 %6139
  %6141 = vrot.lane.b32.xlu0 %v5990, 32
  %v6142 = vpop.permute.xlu0 %6141
  %6143 = vrot.lane.b32.xlu0 %v5994, 32
  %v6144 = vpop.permute.xlu0 %6143
  %6145 = vrot.lane.b32.xlu0 %v5997, 32
  %v6146 = vpop.permute.xlu0 %6145
  %6147 = vrot.lane.b32.xlu0 %v6001, 32
  %v6148 = vpop.permute.xlu0 %6147
  %6149 = vrot.lane.b32.xlu0 %v6004, 32
  %v6150 = vpop.permute.xlu0 %6149
  %6151 = vrot.lane.b32.xlu0 %v6008, 32
  %v6152 = vpop.permute.xlu0 %6151
  %6153 = vrot.lane.b32.xlu0 %v6011, 32
  %v6154 = vpop.permute.xlu0 %6153
  %6155 = vrot.lane.b32.xlu0 %v6015, 32
  %v6156 = vpop.permute.xlu0 %6155
  %6157 = vrot.lane.b32.xlu0 %v6018, 32
  %v6158 = vpop.permute.xlu0 %6157
  %6159 = vrot.lane.b32.xlu0 %v6022, 32
  %v6160 = vpop.permute.xlu0 %6159
  %6161 = vrot.lane.b32.xlu0 %v6025, 32
  %v6162 = vpop.permute.xlu0 %6161
  %6163 = vrot.lane.b32.xlu0 %v6029, 32
  %v6164 = vpop.permute.xlu0 %6163
  %6165 = vrot.lane.b32.xlu0 %v6032, 32
  %v6166 = vpop.permute.xlu0 %6165
  %6167 = vrot.lane.b32.xlu0 %v6036, 32
  %v6168 = vpop.permute.xlu0 %6167
  %6169 = vrot.lane.b32.xlu0 %v6039, 32
  %v6170 = vpop.permute.xlu0 %6169
  %6171 = vrot.lane.b32.xlu0 %v6043, 32
  %v6172 = vpop.permute.xlu0 %6171
  %6173 = vrot.lane.b32.xlu0 %v6046, 32
  %v6174 = vpop.permute.xlu0 %6173
  %vm6239 = vcmask 290048
  %6240 = vst.msk [vmem:[#allocation2] sm:$0xf] %vm6239, %v6048
  %6241 = vst.msk [vmem:[#allocation2 + $0x4] sm:$0xf] %vm6239, %v6050
  %6242 = vst.msk [vmem:[#allocation2 + $0x8] sm:$0xf] %vm6239, %v6052
  %6243 = vst.msk [vmem:[#allocation2 + $0xc] sm:$0xf] %vm6239, %v6054
  %6244 = vst.msk [vmem:[#allocation2 + $0x10] sm:$0xf] %vm6239, %v6056
  %6245 = vst.msk [vmem:[#allocation2 + $0x14] sm:$0xf] %vm6239, %v6058
  %6246 = vst.msk [vmem:[#allocation2 + $0x18] sm:$0xf] %vm6239, %v6060
  %6247 = vst.msk [vmem:[#allocation2 + $0x1c] sm:$0xf] %vm6239, %v6062
  %6248 = vst.msk [vmem:[#allocation2 + $0x20] sm:$0xf] %vm6239, %v6064
  %6249 = vst.msk [vmem:[#allocation2 + $0x24] sm:$0xf] %vm6239, %v6066
  %6250 = vst.msk [vmem:[#allocation2 + $0x28] sm:$0xf] %vm6239, %v6068
  %6251 = vst.msk [vmem:[#allocation2 + $0x2c] sm:$0xf] %vm6239, %v6070
  %6252 = vst.msk [vmem:[#allocation2 + $0x30] sm:$0xf] %vm6239, %v6072
  %6253 = vst.msk [vmem:[#allocation2 + $0x34] sm:$0xf] %vm6239, %v6074
  %6254 = vst.msk [vmem:[#allocation2 + $0x38] sm:$0xf] %vm6239, %v6076
  %6255 = vst.msk [vmem:[#allocation2 + $0x3c] sm:$0xf] %vm6239, %v6078
  %6256 = vst.msk [vmem:[#allocation2 + $0x40] sm:$0xf] %vm6239, %v6080
  %6257 = vst.msk [vmem:[#allocation2 + $0x44] sm:$0xf] %vm6239, %v6082
  %6258 = vst.msk [vmem:[#allocation2 + $0x48] sm:$0xf] %vm6239, %v6084
  %6259 = vst.msk [vmem:[#allocation2 + $0x4c] sm:$0xf] %vm6239, %v6086
  %6260 = vst.msk [vmem:[#allocation2 + $0x50] sm:$0xf] %vm6239, %v6088
  %6261 = vst.msk [vmem:[#allocation2 + $0x54] sm:$0xf] %vm6239, %v6090
  %6262 = vst.msk [vmem:[#allocation2 + $0x58] sm:$0xf] %vm6239, %v6092
  %6263 = vst.msk [vmem:[#allocation2 + $0x5c] sm:$0xf] %vm6239, %v6094
  %6264 = vst.msk [vmem:[#allocation2 + $0x60] sm:$0xf] %vm6239, %v6096
  %6265 = vst.msk [vmem:[#allocation2 + $0x64] sm:$0xf] %vm6239, %v6098
  %6266 = vst.msk [vmem:[#allocation2 + $0x68] sm:$0xf] %vm6239, %v6100
  %6267 = vst.msk [vmem:[#allocation2 + $0x6c] sm:$0xf] %vm6239, %v6102
  %6268 = vst.msk [vmem:[#allocation2 + $0x70] sm:$0xf] %vm6239, %v6104
  %6269 = vst.msk [vmem:[#allocation2 + $0x74] sm:$0xf] %vm6239, %v6106
  %6270 = vst.msk [vmem:[#allocation2 + $0x78] sm:$0xf] %vm6239, %v6108
  %6271 = vst.msk [vmem:[#allocation2 + $0x7c] sm:$0xf] %vm6239, %v6110
  %6272 = vst.msk [vmem:[#allocation2 + $0x80] sm:$0xf] %vm6239, %v6112
  %6273 = vst.msk [vmem:[#allocation2 + $0x84] sm:$0xf] %vm6239, %v6114
  %6274 = vst.msk [vmem:[#allocation2 + $0x88] sm:$0xf] %vm6239, %v6116
  %6275 = vst.msk [vmem:[#allocation2 + $0x8c] sm:$0xf] %vm6239, %v6118
  %6276 = vst.msk [vmem:[#allocation2 + $0x90] sm:$0xf] %vm6239, %v6120
  %6277 = vst.msk [vmem:[#allocation2 + $0x94] sm:$0xf] %vm6239, %v6122
  %6278 = vst.msk [vmem:[#allocation2 + $0x98] sm:$0xf] %vm6239, %v6124
  %6279 = vst.msk [vmem:[#allocation2 + $0x9c] sm:$0xf] %vm6239, %v6126
  %6280 = vst.msk [vmem:[#allocation2 + $0xa0] sm:$0xf] %vm6239, %v6128
  %6281 = vst.msk [vmem:[#allocation2 + $0xa4] sm:$0xf] %vm6239, %v6130
  %6282 = vst.msk [vmem:[#allocation2 + $0xa8] sm:$0xf] %vm6239, %v6132
  %6283 = vst.msk [vmem:[#allocation2 + $0xac] sm:$0xf] %vm6239, %v6134
  %6284 = vst.msk [vmem:[#allocation2 + $0xb0] sm:$0xf] %vm6239, %v6136
  %6285 = vst.msk [vmem:[#allocation2 + $0xb4] sm:$0xf] %vm6239, %v6138
  %6286 = vst.msk [vmem:[#allocation2 + $0xb8] sm:$0xf] %vm6239, %v6140
  %6287 = vst.msk [vmem:[#allocation2 + $0xbc] sm:$0xf] %vm6239, %v6142
  %6288 = vst.msk [vmem:[#allocation2 + $0xc0] sm:$0xf] %vm6239, %v6144
  %6289 = vst.msk [vmem:[#allocation2 + $0xc4] sm:$0xf] %vm6239, %v6146
  %6290 = vst.msk [vmem:[#allocation2 + $0xc8] sm:$0xf] %vm6239, %v6148
  %6291 = vst.msk [vmem:[#allocation2 + $0xcc] sm:$0xf] %vm6239, %v6150
  %6292 = vst.msk [vmem:[#allocation2 + $0xd0] sm:$0xf] %vm6239, %v6152
  %6293 = vst.msk [vmem:[#allocation2 + $0xd4] sm:$0xf] %vm6239, %v6154
  %6294 = vst.msk [vmem:[#allocation2 + $0xd8] sm:$0xf] %vm6239, %v6156
  %6295 = vst.msk [vmem:[#allocation2 + $0xdc] sm:$0xf] %vm6239, %v6158
  %6296 = vst.msk [vmem:[#allocation2 + $0xe0] sm:$0xf] %vm6239, %v6160
  %6297 = vst.msk [vmem:[#allocation2 + $0xe4] sm:$0xf] %vm6239, %v6162
  %6298 = vst.msk [vmem:[#allocation2 + $0xe8] sm:$0xf] %vm6239, %v6164
  %6299 = vst.msk [vmem:[#allocation2 + $0xec] sm:$0xf] %vm6239, %v6166
  %6300 = vst.msk [vmem:[#allocation2 + $0xf0] sm:$0xf] %vm6239, %v6168
  %6301 = vst.msk [vmem:[#allocation2 + $0xf4] sm:$0xf] %vm6239, %v6170
  %6302 = vst.msk [vmem:[#allocation2 + $0xf8] sm:$0xf] %vm6239, %v6172
  %6303 = vst.msk [vmem:[#allocation2 + $0xfc] sm:$0xf] %vm6239, %v6174
  %v6304 = vld [vmem:[#allocation2] sm:$0xf]
  %v6305 = vld [vmem:[#allocation2 + $0x4] sm:$0xf]
  %v6306 = vld [vmem:[#allocation2 + $0x8] sm:$0xf]
  %v6307 = vld [vmem:[#allocation2 + $0xc] sm:$0xf]
  %v6308 = vld [vmem:[#allocation2 + $0x10] sm:$0xf]
  %v6309 = vld [vmem:[#allocation2 + $0x14] sm:$0xf]
  %v6310 = vld [vmem:[#allocation2 + $0x18] sm:$0xf]
  %v6311 = vld [vmem:[#allocation2 + $0x1c] sm:$0xf]
  %v6312 = vld [vmem:[#allocation2 + $0x20] sm:$0xf]
  %v6313 = vld [vmem:[#allocation2 + $0x24] sm:$0xf]
  %v6314 = vld [vmem:[#allocation2 + $0x28] sm:$0xf]
  %v6315 = vld [vmem:[#allocation2 + $0x2c] sm:$0xf]
  %v6316 = vld [vmem:[#allocation2 + $0x30] sm:$0xf]
  %v6317 = vld [vmem:[#allocation2 + $0x34] sm:$0xf]
  %v6318 = vld [vmem:[#allocation2 + $0x38] sm:$0xf]
  %v6319 = vld [vmem:[#allocation2 + $0x3c] sm:$0xf]
  %v6320 = vld [vmem:[#allocation2 + $0x40] sm:$0xf]
  %v6321 = vld [vmem:[#allocation2 + $0x44] sm:$0xf]
  %v6322 = vld [vmem:[#allocation2 + $0x48] sm:$0xf]
  %v6323 = vld [vmem:[#allocation2 + $0x4c] sm:$0xf]
  %v6324 = vld [vmem:[#allocation2 + $0x50] sm:$0xf]
  %v6325 = vld [vmem:[#allocation2 + $0x54] sm:$0xf]
  %v6326 = vld [vmem:[#allocation2 + $0x58] sm:$0xf]
  %v6327 = vld [vmem:[#allocation2 + $0x5c] sm:$0xf]
  %v6328 = vld [vmem:[#allocation2 + $0x60] sm:$0xf]
  %v6329 = vld [vmem:[#allocation2 + $0x64] sm:$0xf]
  %v6330 = vld [vmem:[#allocation2 + $0x68] sm:$0xf]
  %v6331 = vld [vmem:[#allocation2 + $0x6c] sm:$0xf]
  %v6332 = vld [vmem:[#allocation2 + $0x70] sm:$0xf]
  %v6333 = vld [vmem:[#allocation2 + $0x74] sm:$0xf]
  %v6334 = vld [vmem:[#allocation2 + $0x78] sm:$0xf]
  %v6335 = vld [vmem:[#allocation2 + $0x7c] sm:$0xf]
  %v6336 = vld [vmem:[#allocation2 + $0x80] sm:$0xf]
  %v6337 = vld [vmem:[#allocation2 + $0x84] sm:$0xf]
  %v6338 = vld [vmem:[#allocation2 + $0x88] sm:$0xf]
  %v6339 = vld [vmem:[#allocation2 + $0x8c] sm:$0xf]
  %v6340 = vld [vmem:[#allocation2 + $0x90] sm:$0xf]
  %v6341 = vld [vmem:[#allocation2 + $0x94] sm:$0xf]
  %v6342 = vld [vmem:[#allocation2 + $0x98] sm:$0xf]
  %v6343 = vld [vmem:[#allocation2 + $0x9c] sm:$0xf]
  %v6344 = vld [vmem:[#allocation2 + $0xa0] sm:$0xf]
  %v6345 = vld [vmem:[#allocation2 + $0xa4] sm:$0xf]
  %v6346 = vld [vmem:[#allocation2 + $0xa8] sm:$0xf]
  %v6347 = vld [vmem:[#allocation2 + $0xac] sm:$0xf]
  %v6348 = vld [vmem:[#allocation2 + $0xb0] sm:$0xf]
  %v6349 = vld [vmem:[#allocation2 + $0xb4] sm:$0xf]
  %v6350 = vld [vmem:[#allocation2 + $0xb8] sm:$0xf]
  %v6351 = vld [vmem:[#allocation2 + $0xbc] sm:$0xf]
  %v6352 = vld [vmem:[#allocation2 + $0xc0] sm:$0xf]
  %v6353 = vld [vmem:[#allocation2 + $0xc4] sm:$0xf]
  %v6354 = vld [vmem:[#allocation2 + $0xc8] sm:$0xf]
  %v6355 = vld [vmem:[#allocation2 + $0xcc] sm:$0xf]
  %v6356 = vld [vmem:[#allocation2 + $0xd0] sm:$0xf]
  %v6357 = vld [vmem:[#allocation2 + $0xd4] sm:$0xf]
  %v6358 = vld [vmem:[#allocation2 + $0xd8] sm:$0xf]
  %v6359 = vld [vmem:[#allocation2 + $0xdc] sm:$0xf]
  %v6360 = vld [vmem:[#allocation2 + $0xe0] sm:$0xf]
  %v6361 = vld [vmem:[#allocation2 + $0xe4] sm:$0xf]
  %v6362 = vld [vmem:[#allocation2 + $0xe8] sm:$0xf]
  %v6363 = vld [vmem:[#allocation2 + $0xec] sm:$0xf]
  %v6364 = vld [vmem:[#allocation2 + $0xf0] sm:$0xf]
  %v6365 = vld [vmem:[#allocation2 + $0xf4] sm:$0xf]
  %v6366 = vld [vmem:[#allocation2 + $0xf8] sm:$0xf]
  %v6367 = vld [vmem:[#allocation2 + $0xfc] sm:$0xf]
  %v6368 = vld [vmem:[%s1] sm:$0xf]
  %v6369 = vld [vmem:[%s1 + $0x4] sm:$0xf]
  %v6370 = vld [vmem:[%s1 + $0x8] sm:$0xf]
  %v6371 = vld [vmem:[%s1 + $0xc] sm:$0xf]
  %v6372 = vld [vmem:[%s1 + $0x10] sm:$0x3]
  %v6437 = vunpack.c.l.b16 %v6304
  %v6438 = vunpack.c.l.b16 %v6305
  %v6439 = vunpack.c.l.b16 %v6306
  %v6440 = vunpack.c.l.b16 %v6307
  %v6441 = vunpack.c.l.b16 %v6308
  %v6442 = vunpack.c.l.b16 %v6309
  %v6443 = vunpack.c.l.b16 %v6310
  %v6444 = vunpack.c.l.b16 %v6311
  %v6445 = vunpack.c.l.b16 %v6312
  %v6446 = vunpack.c.l.b16 %v6313
  %v6447 = vunpack.c.l.b16 %v6314
  %v6448 = vunpack.c.l.b16 %v6315
  %v6449 = vunpack.c.l.b16 %v6316
  %v6450 = vunpack.c.l.b16 %v6317
  %v6451 = vunpack.c.l.b16 %v6318
  %v6452 = vunpack.c.l.b16 %v6319
  %v6453 = vunpack.c.l.b16 %v6320
  %v6454 = vunpack.c.l.b16 %v6321
  %v6455 = vunpack.c.l.b16 %v6322
  %v6456 = vunpack.c.l.b16 %v6323
  %v6457 = vunpack.c.l.b16 %v6324
  %v6458 = vunpack.c.l.b16 %v6325
  %v6459 = vunpack.c.l.b16 %v6326
  %v6460 = vunpack.c.l.b16 %v6327
  %v6461 = vunpack.c.l.b16 %v6328
  %v6462 = vunpack.c.l.b16 %v6329
  %v6463 = vunpack.c.l.b16 %v6330
  %v6464 = vunpack.c.l.b16 %v6331
  %v6465 = vunpack.c.l.b16 %v6332
  %v6466 = vunpack.c.l.b16 %v6333
  %v6467 = vunpack.c.l.b16 %v6334
  %v6468 = vunpack.c.l.b16 %v6335
  %v6469 = vunpack.c.l.b16 %v6336
  %v6470 = vunpack.c.l.b16 %v6337
  %v6471 = vunpack.c.l.b16 %v6338
  %v6472 = vunpack.c.l.b16 %v6339
  %v6473 = vunpack.c.l.b16 %v6340
  %v6474 = vunpack.c.l.b16 %v6341
  %v6475 = vunpack.c.l.b16 %v6342
  %v6476 = vunpack.c.l.b16 %v6343
  %v6477 = vunpack.c.l.b16 %v6344
  %v6478 = vunpack.c.l.b16 %v6345
  %v6479 = vunpack.c.l.b16 %v6346
  %v6480 = vunpack.c.l.b16 %v6347
  %v6481 = vunpack.c.l.b16 %v6348
  %v6482 = vunpack.c.l.b16 %v6349
  %v6483 = vunpack.c.l.b16 %v6350
  %v6484 = vunpack.c.l.b16 %v6351
  %v6485 = vunpack.c.l.b16 %v6352
  %v6486 = vunpack.c.l.b16 %v6353
  %v6487 = vunpack.c.l.b16 %v6354
  %v6488 = vunpack.c.l.b16 %v6355
  %v6489 = vunpack.c.l.b16 %v6356
  %v6490 = vunpack.c.l.b16 %v6357
  %v6491 = vunpack.c.l.b16 %v6358
  %v6492 = vunpack.c.l.b16 %v6359
  %v6493 = vunpack.c.l.b16 %v6360
  %v6494 = vunpack.c.l.b16 %v6361
  %v6495 = vunpack.c.l.b16 %v6362
  %v6496 = vunpack.c.l.b16 %v6363
  %v6497 = vunpack.c.l.b16 %v6364
  %v6498 = vunpack.c.l.b16 %v6365
  %v6499 = vunpack.c.l.b16 %v6366
  %v6500 = vunpack.c.l.b16 %v6367
  %v6501 = vpack.c.b16 %v6438, %v6437
  %v6502 = vpack.c.b16 %v6440, %v6439
  %v6503 = vpack.c.b16 %v6442, %v6441
  %v6504 = vpack.c.b16 %v6444, %v6443
  %v6505 = vpack.c.b16 %v6446, %v6445
  %v6506 = vpack.c.b16 %v6448, %v6447
  %v6507 = vpack.c.b16 %v6450, %v6449
  %v6508 = vpack.c.b16 %v6452, %v6451
  %v6509 = vpack.c.b16 %v6454, %v6453
  %v6510 = vpack.c.b16 %v6456, %v6455
  %v6511 = vpack.c.b16 %v6458, %v6457
  %v6512 = vpack.c.b16 %v6460, %v6459
  %v6513 = vpack.c.b16 %v6462, %v6461
  %v6514 = vpack.c.b16 %v6464, %v6463
  %v6515 = vpack.c.b16 %v6466, %v6465
  %v6516 = vpack.c.b16 %v6468, %v6467
  %v6517 = vpack.c.b16 %v6470, %v6469
  %v6518 = vpack.c.b16 %v6472, %v6471
  %v6519 = vpack.c.b16 %v6474, %v6473
  %v6520 = vpack.c.b16 %v6476, %v6475
  %v6521 = vpack.c.b16 %v6478, %v6477
  %v6522 = vpack.c.b16 %v6480, %v6479
  %v6523 = vpack.c.b16 %v6482, %v6481
  %v6524 = vpack.c.b16 %v6484, %v6483
  %v6525 = vpack.c.b16 %v6486, %v6485
  %v6526 = vpack.c.b16 %v6488, %v6487
  %v6527 = vpack.c.b16 %v6490, %v6489
  %v6528 = vpack.c.b16 %v6492, %v6491
  %v6529 = vpack.c.b16 %v6494, %v6493
  %v6530 = vpack.c.b16 %v6496, %v6495
  %v6531 = vpack.c.b16 %v6498, %v6497
  %v6532 = vpack.c.b16 %v6500, %v6499
  %v6538 = vunpack.c.l.b16 %v6368
  %v6539 = vunpack.c.l.b16 %v6369
  %v6540 = vunpack.c.l.b16 %v6370
  %v6541 = vunpack.c.l.b16 %v6371
  %v6542 = vunpack.c.l.b16 %v6372
  %v6543 = vpack.c.b16 %v6539, %v6538
  %v6544 = vpack.c.b16 %v6541, %v6540
  %v6545 = vpack.c.b16 %v6542, %v6542
  %vm6548 = vcmask 293888
  %v6550 = vsel %vm6548, %v6501, 0
  %v6553 = vsel %vm6548, %v6502, 0
  %v6556 = vsel %vm6548, %v6503, 0
  %v6559 = vsel %vm6548, %v6504, 0
  %v6562 = vsel %vm6548, %v6505, 0
  %v6565 = vsel %vm6548, %v6506, 0
  %v6568 = vsel %vm6548, %v6507, 0
  %v6571 = vsel %vm6548, %v6508, 0
  %v6574 = vsel %vm6548, %v6509, 0
  %v6577 = vsel %vm6548, %v6510, 0
  %v6580 = vsel %vm6548, %v6511, 0
  %v6583 = vsel %vm6548, %v6512, 0
  %v6586 = vsel %vm6548, %v6513, 0
  %v6589 = vsel %vm6548, %v6514, 0
  %v6592 = vsel %vm6548, %v6515, 0
  %v6595 = vsel %vm6548, %v6516, 0
  %v6598 = vsel %vm6548, %v6517, 0
  %v6601 = vsel %vm6548, %v6518, 0
  %v6604 = vsel %vm6548, %v6519, 0
  %v6607 = vsel %vm6548, %v6520, 0
  %v6610 = vsel %vm6548, %v6521, 0
  %v6613 = vsel %vm6548, %v6522, 0
  %v6616 = vsel %vm6548, %v6523, 0
  %v6619 = vsel %vm6548, %v6524, 0
  %v6622 = vsel %vm6548, %v6525, 0
  %v6625 = vsel %vm6548, %v6526, 0
  %v6628 = vsel %vm6548, %v6527, 0
  %v6631 = vsel %vm6548, %v6528, 0
  %v6634 = vsel %vm6548, %v6529, 0
  %v6637 = vsel %vm6548, %v6530, 0
  %v6640 = vsel %vm6548, %v6531, 0
  %v6643 = vsel %vm6548, %v6532, 0
  %vm6645 = vcmask 1041408
  %v6647 = vsel %vm6645, %v6545, 0
  %6649 = vmatpush.bf16.msra.mxu0 0
  %6650 = vmatpush.bf16.msra.mxu0 0
  %6651 = vmatpush.bf16.msra.mxu0 0
  %6652 = vmatpush.bf16.msra.mxu0 0
  %6653 = vmatpush.bf16.msra.mxu0 0
  %6654 = vmatpush.bf16.msra.mxu0 %v6647
  %6655 = vmatpush.bf16.msra.mxu0 %v6544
  %6656 = vmatpush.bf16.msra.mxu0 %v6543
  %6657 = vmatmul.bf16.gmra.mxu0 %v6550
  %v6658 = vpop.f32.mrf.mxu0
  %v6659 = vadd.f32 0.0, %v6658
  %v6660 = vpop.f32.mrf.mxu0
  %v6661 = vadd.f32 0.0, %v6660
  %6662 = vmatmul.bf16.gmra.mxu0 %v6553
  %v6663 = vpop.f32.mrf.mxu0
  %v6664 = vadd.f32 0.0, %v6663
  %v6665 = vpop.f32.mrf.mxu0
  %v6666 = vadd.f32 0.0, %v6665
  %6667 = vmatmul.bf16.gmra.mxu0 %v6556
  %v6668 = vpop.f32.mrf.mxu0
  %v6669 = vadd.f32 0.0, %v6668
  %v6670 = vpop.f32.mrf.mxu0
  %v6671 = vadd.f32 0.0, %v6670
  %6672 = vmatmul.bf16.gmra.mxu0 %v6559
  %v6673 = vpop.f32.mrf.mxu0
  %v6674 = vadd.f32 0.0, %v6673
  %v6675 = vpop.f32.mrf.mxu0
  %v6676 = vadd.f32 0.0, %v6675
  %6677 = vmatmul.bf16.gmra.mxu0 %v6562
  %v6678 = vpop.f32.mrf.mxu0
  %v6679 = vadd.f32 0.0, %v6678
  %v6680 = vpop.f32.mrf.mxu0
  %v6681 = vadd.f32 0.0, %v6680
  %6682 = vmatmul.bf16.gmra.mxu0 %v6565
  %v6683 = vpop.f32.mrf.mxu0
  %v6684 = vadd.f32 0.0, %v6683
  %v6685 = vpop.f32.mrf.mxu0
  %v6686 = vadd.f32 0.0, %v6685
  %6687 = vmatmul.bf16.gmra.mxu0 %v6568
  %v6688 = vpop.f32.mrf.mxu0
  %v6689 = vadd.f32 0.0, %v6688
  %v6690 = vpop.f32.mrf.mxu0
  %v6691 = vadd.f32 0.0, %v6690
  %6692 = vmatmul.bf16.gmra.mxu0 %v6571
  %v6693 = vpop.f32.mrf.mxu0
  %v6694 = vadd.f32 0.0, %v6693
  %v6695 = vpop.f32.mrf.mxu0
  %v6696 = vadd.f32 0.0, %v6695
  %6697 = vmatmul.bf16.gmra.mxu0 %v6574
  %v6698 = vpop.f32.mrf.mxu0
  %v6699 = vadd.f32 0.0, %v6698
  %v6700 = vpop.f32.mrf.mxu0
  %v6701 = vadd.f32 0.0, %v6700
  %6702 = vmatmul.bf16.gmra.mxu0 %v6577
  %v6703 = vpop.f32.mrf.mxu0
  %v6704 = vadd.f32 0.0, %v6703
  %v6705 = vpop.f32.mrf.mxu0
  %v6706 = vadd.f32 0.0, %v6705
  %6707 = vmatmul.bf16.gmra.mxu0 %v6580
  %v6708 = vpop.f32.mrf.mxu0
  %v6709 = vadd.f32 0.0, %v6708
  %v6710 = vpop.f32.mrf.mxu0
  %v6711 = vadd.f32 0.0, %v6710
  %6712 = vmatmul.bf16.gmra.mxu0 %v6583
  %v6713 = vpop.f32.mrf.mxu0
  %v6714 = vadd.f32 0.0, %v6713
  %v6715 = vpop.f32.mrf.mxu0
  %v6716 = vadd.f32 0.0, %v6715
  %6717 = vmatmul.bf16.gmra.mxu0 %v6586
  %v6718 = vpop.f32.mrf.mxu0
  %v6719 = vadd.f32 0.0, %v6718
  %v6720 = vpop.f32.mrf.mxu0
  %v6721 = vadd.f32 0.0, %v6720
  %6722 = vmatmul.bf16.gmra.mxu0 %v6589
  %v6723 = vpop.f32.mrf.mxu0
  %v6724 = vadd.f32 0.0, %v6723
  %v6725 = vpop.f32.mrf.mxu0
  %v6726 = vadd.f32 0.0, %v6725
  %6727 = vmatmul.bf16.gmra.mxu0 %v6592
  %v6728 = vpop.f32.mrf.mxu0
  %v6729 = vadd.f32 0.0, %v6728
  %v6730 = vpop.f32.mrf.mxu0
  %v6731 = vadd.f32 0.0, %v6730
  %6732 = vmatmul.bf16.gmra.mxu0 %v6595
  %v6733 = vpop.f32.mrf.mxu0
  %v6734 = vadd.f32 0.0, %v6733
  %v6735 = vpop.f32.mrf.mxu0
  %v6736 = vadd.f32 0.0, %v6735
  %6737 = vmatmul.bf16.gmra.mxu0 %v6598
  %v6738 = vpop.f32.mrf.mxu0
  %v6739 = vadd.f32 0.0, %v6738
  %v6740 = vpop.f32.mrf.mxu0
  %v6741 = vadd.f32 0.0, %v6740
  %6742 = vmatmul.bf16.gmra.mxu0 %v6601
  %v6743 = vpop.f32.mrf.mxu0
  %v6744 = vadd.f32 0.0, %v6743
  %v6745 = vpop.f32.mrf.mxu0
  %v6746 = vadd.f32 0.0, %v6745
  %6747 = vmatmul.bf16.gmra.mxu0 %v6604
  %v6748 = vpop.f32.mrf.mxu0
  %v6749 = vadd.f32 0.0, %v6748
  %v6750 = vpop.f32.mrf.mxu0
  %v6751 = vadd.f32 0.0, %v6750
  %6752 = vmatmul.bf16.gmra.mxu0 %v6607
  %v6753 = vpop.f32.mrf.mxu0
  %v6754 = vadd.f32 0.0, %v6753
  %v6755 = vpop.f32.mrf.mxu0
  %v6756 = vadd.f32 0.0, %v6755
  %6757 = vmatmul.bf16.gmra.mxu0 %v6610
  %v6758 = vpop.f32.mrf.mxu0
  %v6759 = vadd.f32 0.0, %v6758
  %v6760 = vpop.f32.mrf.mxu0
  %v6761 = vadd.f32 0.0, %v6760
  %6762 = vmatmul.bf16.gmra.mxu0 %v6613
  %v6763 = vpop.f32.mrf.mxu0
  %v6764 = vadd.f32 0.0, %v6763
  %v6765 = vpop.f32.mrf.mxu0
  %v6766 = vadd.f32 0.0, %v6765
  %6767 = vmatmul.bf16.gmra.mxu0 %v6616
  %v6768 = vpop.f32.mrf.mxu0
  %v6769 = vadd.f32 0.0, %v6768
  %v6770 = vpop.f32.mrf.mxu0
  %v6771 = vadd.f32 0.0, %v6770
  %6772 = vmatmul.bf16.gmra.mxu0 %v6619
  %v6773 = vpop.f32.mrf.mxu0
  %v6774 = vadd.f32 0.0, %v6773
  %v6775 = vpop.f32.mrf.mxu0
  %v6776 = vadd.f32 0.0, %v6775
  %6777 = vmatmul.bf16.gmra.mxu0 %v6622
  %v6778 = vpop.f32.mrf.mxu0
  %v6779 = vadd.f32 0.0, %v6778
  %v6780 = vpop.f32.mrf.mxu0
  %v6781 = vadd.f32 0.0, %v6780
  %6782 = vmatmul.bf16.gmra.mxu0 %v6625
  %v6783 = vpop.f32.mrf.mxu0
  %v6784 = vadd.f32 0.0, %v6783
  %v6785 = vpop.f32.mrf.mxu0
  %v6786 = vadd.f32 0.0, %v6785
  %6787 = vmatmul.bf16.gmra.mxu0 %v6628
  %v6788 = vpop.f32.mrf.mxu0
  %v6789 = vadd.f32 0.0, %v6788
  %v6790 = vpop.f32.mrf.mxu0
  %v6791 = vadd.f32 0.0, %v6790
  %6792 = vmatmul.bf16.gmra.mxu0 %v6631
  %v6793 = vpop.f32.mrf.mxu0
  %v6794 = vadd.f32 0.0, %v6793
  %v6795 = vpop.f32.mrf.mxu0
  %v6796 = vadd.f32 0.0, %v6795
  %6797 = vmatmul.bf16.gmra.mxu0 %v6634
  %v6798 = vpop.f32.mrf.mxu0
  %v6799 = vadd.f32 0.0, %v6798
  %v6800 = vpop.f32.mrf.mxu0
  %v6801 = vadd.f32 0.0, %v6800
  %6802 = vmatmul.bf16.gmra.mxu0 %v6637
  %v6803 = vpop.f32.mrf.mxu0
  %v6804 = vadd.f32 0.0, %v6803
  %v6805 = vpop.f32.mrf.mxu0
  %v6806 = vadd.f32 0.0, %v6805
  %6807 = vmatmul.bf16.gmra.mxu0 %v6640
  %v6808 = vpop.f32.mrf.mxu0
  %v6809 = vadd.f32 0.0, %v6808
  %v6810 = vpop.f32.mrf.mxu0
  %v6811 = vadd.f32 0.0, %v6810
  %6812 = vmatmul.bf16.gmra.mxu0 %v6643
  %v6813 = vpop.f32.mrf.mxu0
  %v6814 = vadd.f32 0.0, %v6813
  %v6815 = vpop.f32.mrf.mxu0
  %v6816 = vadd.f32 0.0, %v6815
  %6817 = vdwg.mxu0
  %v6818 = vpack.c.bf16 %v6659, %v6659
  %v6819 = vpack.c.bf16 %v6661, %v6661
  %v6820 = vpack.c.bf16 %v6664, %v6664
  %v6821 = vpack.c.bf16 %v6666, %v6666
  %v6822 = vpack.c.bf16 %v6669, %v6669
  %v6823 = vpack.c.bf16 %v6671, %v6671
  %v6824 = vpack.c.bf16 %v6674, %v6674
  %v6825 = vpack.c.bf16 %v6676, %v6676
  %v6826 = vpack.c.bf16 %v6679, %v6679
  %v6827 = vpack.c.bf16 %v6681, %v6681
  %v6828 = vpack.c.bf16 %v6684, %v6684
  %v6829 = vpack.c.bf16 %v6686, %v6686
  %v6830 = vpack.c.bf16 %v6689, %v6689
  %v6831 = vpack.c.bf16 %v6691, %v6691
  %v6832 = vpack.c.bf16 %v6694, %v6694
  %v6833 = vpack.c.bf16 %v6696, %v6696
  %v6834 = vpack.c.bf16 %v6699, %v6699
  %v6835 = vpack.c.bf16 %v6701, %v6701
  %v6836 = vpack.c.bf16 %v6704, %v6704
  %v6837 = vpack.c.bf16 %v6706, %v6706
  %v6838 = vpack.c.bf16 %v6709, %v6709
  %v6839 = vpack.c.bf16 %v6711, %v6711
  %v6840 = vpack.c.bf16 %v6714, %v6714
  %v6841 = vpack.c.bf16 %v6716, %v6716
  %v6842 = vpack.c.bf16 %v6719, %v6719
  %v6843 = vpack.c.bf16 %v6721, %v6721
  %v6844 = vpack.c.bf16 %v6724, %v6724
  %v6845 = vpack.c.bf16 %v6726, %v6726
  %v6846 = vpack.c.bf16 %v6729, %v6729
  %v6847 = vpack.c.bf16 %v6731, %v6731
  %v6848 = vpack.c.bf16 %v6734, %v6734
  %v6849 = vpack.c.bf16 %v6736, %v6736
  %v6850 = vpack.c.bf16 %v6739, %v6739
  %v6851 = vpack.c.bf16 %v6741, %v6741
  %v6852 = vpack.c.bf16 %v6744, %v6744
  %v6853 = vpack.c.bf16 %v6746, %v6746
  %v6854 = vpack.c.bf16 %v6749, %v6749
  %v6855 = vpack.c.bf16 %v6751, %v6751
  %v6856 = vpack.c.bf16 %v6754, %v6754
  %v6857 = vpack.c.bf16 %v6756, %v6756
  %v6858 = vpack.c.bf16 %v6759, %v6759
  %v6859 = vpack.c.bf16 %v6761, %v6761
  %v6860 = vpack.c.bf16 %v6764, %v6764
  %v6861 = vpack.c.bf16 %v6766, %v6766
  %v6862 = vpack.c.bf16 %v6769, %v6769
  %v6863 = vpack.c.bf16 %v6771, %v6771
  %v6864 = vpack.c.bf16 %v6774, %v6774
  %v6865 = vpack.c.bf16 %v6776, %v6776
  %v6866 = vpack.c.bf16 %v6779, %v6779
  %v6867 = vpack.c.bf16 %v6781, %v6781
  %v6868 = vpack.c.bf16 %v6784, %v6784
  %v6869 = vpack.c.bf16 %v6786, %v6786
  %v6870 = vpack.c.bf16 %v6789, %v6789
  %v6871 = vpack.c.bf16 %v6791, %v6791
  %v6872 = vpack.c.bf16 %v6794, %v6794
  %v6873 = vpack.c.bf16 %v6796, %v6796
  %v6874 = vpack.c.bf16 %v6799, %v6799
  %v6875 = vpack.c.bf16 %v6801, %v6801
  %v6876 = vpack.c.bf16 %v6804, %v6804
  %v6877 = vpack.c.bf16 %v6806, %v6806
  %v6878 = vpack.c.bf16 %v6809, %v6809
  %v6879 = vpack.c.bf16 %v6811, %v6811
  %v6880 = vpack.c.bf16 %v6814, %v6814
  %v6881 = vpack.c.bf16 %v6816, %v6816
  %6882 = vst [vmem:[%s2] sm:$0xf] %v6818
  %6883 = vst [vmem:[%s2 + $0x4] sm:$0xf] %v6819
  %6884 = vst [vmem:[%s2 + $0x8] sm:$0xf] %v6820
  %6885 = vst [vmem:[%s2 + $0xc] sm:$0xf] %v6821
  %6886 = vst [vmem:[%s2 + $0x10] sm:$0xf] %v6822
  %6887 = vst [vmem:[%s2 + $0x14] sm:$0xf] %v6823
  %6888 = vst [vmem:[%s2 + $0x18] sm:$0xf] %v6824
  %6889 = vst [vmem:[%s2 + $0x1c] sm:$0xf] %v6825
  %6890 = vst [vmem:[%s2 + $0x20] sm:$0xf] %v6826
  %6891 = vst [vmem:[%s2 + $0x24] sm:$0xf] %v6827
  %6892 = vst [vmem:[%s2 + $0x28] sm:$0xf] %v6828
  %6893 = vst [vmem:[%s2 + $0x2c] sm:$0xf] %v6829
  %6894 = vst [vmem:[%s2 + $0x30] sm:$0xf] %v6830
  %6895 = vst [vmem:[%s2 + $0x34] sm:$0xf] %v6831
  %6896 = vst [vmem:[%s2 + $0x38] sm:$0xf] %v6832
  %6897 = vst [vmem:[%s2 + $0x3c] sm:$0xf] %v6833
  %6898 = vst [vmem:[%s2 + $0x40] sm:$0xf] %v6834
  %6899 = vst [vmem:[%s2 + $0x44] sm:$0xf] %v6835
  %6900 = vst [vmem:[%s2 + $0x48] sm:$0xf] %v6836
  %6901 = vst [vmem:[%s2 + $0x4c] sm:$0xf] %v6837
  %6902 = vst [vmem:[%s2 + $0x50] sm:$0xf] %v6838
  %6903 = vst [vmem:[%s2 + $0x54] sm:$0xf] %v6839
  %6904 = vst [vmem:[%s2 + $0x58] sm:$0xf] %v6840
  %6905 = vst [vmem:[%s2 + $0x5c] sm:$0xf] %v6841
  %6906 = vst [vmem:[%s2 + $0x60] sm:$0xf] %v6842
  %6907 = vst [vmem:[%s2 + $0x64] sm:$0xf] %v6843
  %6908 = vst [vmem:[%s2 + $0x68] sm:$0xf] %v6844
  %6909 = vst [vmem:[%s2 + $0x6c] sm:$0xf] %v6845
  %6910 = vst [vmem:[%s2 + $0x70] sm:$0xf] %v6846
  %6911 = vst [vmem:[%s2 + $0x74] sm:$0xf] %v6847
  %6912 = vst [vmem:[%s2 + $0x78] sm:$0xf] %v6848
  %6913 = vst [vmem:[%s2 + $0x7c] sm:$0xf] %v6849
  %6914 = vst [vmem:[%s2 + $0x80] sm:$0xf] %v6850
  %6915 = vst [vmem:[%s2 + $0x84] sm:$0xf] %v6851
  %6916 = vst [vmem:[%s2 + $0x88] sm:$0xf] %v6852
  %6917 = vst [vmem:[%s2 + $0x8c] sm:$0xf] %v6853
  %6918 = vst [vmem:[%s2 + $0x90] sm:$0xf] %v6854
  %6919 = vst [vmem:[%s2 + $0x94] sm:$0xf] %v6855
  %6920 = vst [vmem:[%s2 + $0x98] sm:$0xf] %v6856
  %6921 = vst [vmem:[%s2 + $0x9c] sm:$0xf] %v6857
  %6922 = vst [vmem:[%s2 + $0xa0] sm:$0xf] %v6858
  %6923 = vst [vmem:[%s2 + $0xa4] sm:$0xf] %v6859
  %6924 = vst [vmem:[%s2 + $0xa8] sm:$0xf] %v6860
  %6925 = vst [vmem:[%s2 + $0xac] sm:$0xf] %v6861
  %6926 = vst [vmem:[%s2 + $0xb0] sm:$0xf] %v6862
  %6927 = vst [vmem:[%s2 + $0xb4] sm:$0xf] %v6863
  %6928 = vst [vmem:[%s2 + $0xb8] sm:$0xf] %v6864
  %6929 = vst [vmem:[%s2 + $0xbc] sm:$0xf] %v6865
  %6930 = vst [vmem:[%s2 + $0xc0] sm:$0xf] %v6866
  %6931 = vst [vmem:[%s2 + $0xc4] sm:$0xf] %v6867
  %6932 = vst [vmem:[%s2 + $0xc8] sm:$0xf] %v6868
  %6933 = vst [vmem:[%s2 + $0xcc] sm:$0xf] %v6869
  %6934 = vst [vmem:[%s2 + $0xd0] sm:$0xf] %v6870
  %6935 = vst [vmem:[%s2 + $0xd4] sm:$0xf] %v6871
  %6936 = vst [vmem:[%s2 + $0xd8] sm:$0xf] %v6872
  %6937 = vst [vmem:[%s2 + $0xdc] sm:$0xf] %v6873
  %6938 = vst [vmem:[%s2 + $0xe0] sm:$0xf] %v6874
  %6939 = vst [vmem:[%s2 + $0xe4] sm:$0xf] %v6875
  %6940 = vst [vmem:[%s2 + $0xe8] sm:$0xf] %v6876
  %6941 = vst [vmem:[%s2 + $0xec] sm:$0xf] %v6877
  %6942 = vst [vmem:[%s2 + $0xf0] sm:$0xf] %v6878
  %6943 = vst [vmem:[%s2 + $0xf4] sm:$0xf] %v6879
  %6944 = vst [vmem:[%s2 + $0xf8] sm:$0xf] %v6880
  %6945 = vst [vmem:[%s2 + $0xfc] sm:$0xf] %v6881
  %v6946 = vadd.f32 %v6659, %v6661
  %v6947 = vadd.f32 %v6946, %v6664
  %v6948 = vadd.f32 %v6947, %v6666
  %v6949 = vadd.f32 %v6948, %v6669
  %v6950 = vadd.f32 %v6949, %v6671
  %v6951 = vadd.f32 %v6950, %v6674
  %v6952 = vadd.f32 %v6951, %v6676
  %v6953 = vadd.f32 %v6952, %v6679
  %v6954 = vadd.f32 %v6953, %v6681
  %v6955 = vadd.f32 %v6954, %v6684
  %v6956 = vadd.f32 %v6955, %v6686
  %v6957 = vadd.f32 %v6956, %v6689
  %v6958 = vadd.f32 %v6957, %v6691
  %v6959 = vadd.f32 %v6958, %v6694
  %v6960 = vadd.f32 %v6959, %v6696
  %v6961 = vadd.f32 %v6960, %v6699
  %v6962 = vadd.f32 %v6961, %v6701
  %v6963 = vadd.f32 %v6962, %v6704
  %v6964 = vadd.f32 %v6963, %v6706
  %v6965 = vadd.f32 %v6964, %v6709
  %v6966 = vadd.f32 %v6965, %v6711
  %v6967 = vadd.f32 %v6966, %v6714
  %v6968 = vadd.f32 %v6967, %v6716
  %v6969 = vadd.f32 %v6968, %v6719
  %v6970 = vadd.f32 %v6969, %v6721
  %v6971 = vadd.f32 %v6970, %v6724
  %v6972 = vadd.f32 %v6971, %v6726
  %v6973 = vadd.f32 %v6972, %v6729
  %v6974 = vadd.f32 %v6973, %v6731
  %v6975 = vadd.f32 %v6974, %v6734
  %v6976 = vadd.f32 %v6975, %v6736
  %v6977 = vadd.f32 %v6976, %v6739
  %v6978 = vadd.f32 %v6977, %v6741
  %v6979 = vadd.f32 %v6978, %v6744
  %v6980 = vadd.f32 %v6979, %v6746
  %v6981 = vadd.f32 %v6980, %v6749
  %v6982 = vadd.f32 %v6981, %v6751
  %v6983 = vadd.f32 %v6982, %v6754
  %v6984 = vadd.f32 %v6983, %v6756
  %v6985 = vadd.f32 %v6984, %v6759
  %v6986 = vadd.f32 %v6985, %v6761
  %v6987 = vadd.f32 %v6986, %v6764
  %v6988 = vadd.f32 %v6987, %v6766
  %v6989 = vadd.f32 %v6988, %v6769
  %v6990 = vadd.f32 %v6989, %v6771
  %v6991 = vadd.f32 %v6990, %v6774
  %v6992 = vadd.f32 %v6991, %v6776
  %v6993 = vadd.f32 %v6992, %v6779
  %v6994 = vadd.f32 %v6993, %v6781
  %v6995 = vadd.f32 %v6994, %v6784
  %v6996 = vadd.f32 %v6995, %v6786
  %v6997 = vadd.f32 %v6996, %v6789
  %v6998 = vadd.f32 %v6997, %v6791
  %v6999 = vadd.f32 %v6998, %v6794
  %v7000 = vadd.f32 %v6999, %v6796
  %v7001 = vadd.f32 %v7000, %v6799
  %v7002 = vadd.f32 %v7001, %v6801
  %v7003 = vadd.f32 %v7002, %v6804
  %v7004 = vadd.f32 %v7003, %v6806
  %v7005 = vadd.f32 %v7004, %v6809
  %v7006 = vadd.f32 %v7005, %v6811
  %v7007 = vadd.f32 %v7006, %v6814
  %v7008 = vadd.f32 %v7007, %v6816
  %v7009 = vrot.slane %v7008, 4
  %v7010 = vadd.f32 %v7008, %v7009
  %v7011 = vrot.slane %v7010, 2
  %v7012 = vadd.f32 %v7010, %v7011
  %v7013 = vrot.slane %v7012, 1
  %v7014 = vadd.f32 %v7012, %v7013
  %v7015 = vmul.f32 %v7014, 0.001953125
  %v7016 = vsub.f32 %v6659, %v7015
  %v7017 = vsub.f32 %v6661, %v7015
  %v7018 = vsub.f32 %v6664, %v7015
  %v7019 = vsub.f32 %v6666, %v7015
  %v7020 = vsub.f32 %v6669, %v7015
  %v7021 = vsub.f32 %v6671, %v7015
  %v7022 = vsub.f32 %v6674, %v7015
  %v7023 = vsub.f32 %v6676, %v7015
  %v7024 = vsub.f32 %v6679, %v7015
  %v7025 = vsub.f32 %v6681, %v7015
  %v7026 = vsub.f32 %v6684, %v7015
  %v7027 = vsub.f32 %v6686, %v7015
  %v7028 = vsub.f32 %v6689, %v7015
  %v7029 = vsub.f32 %v6691, %v7015
  %v7030 = vsub.f32 %v6694, %v7015
  %v7031 = vsub.f32 %v6696, %v7015
  %v7032 = vsub.f32 %v6699, %v7015
  %v7033 = vsub.f32 %v6701, %v7015
  %v7034 = vsub.f32 %v6704, %v7015
  %v7035 = vsub.f32 %v6706, %v7015
  %v7036 = vsub.f32 %v6709, %v7015
  %v7037 = vsub.f32 %v6711, %v7015
  %v7038 = vsub.f32 %v6714, %v7015
  %v7039 = vsub.f32 %v6716, %v7015
  %v7040 = vsub.f32 %v6719, %v7015
  %v7041 = vsub.f32 %v6721, %v7015
  %v7042 = vsub.f32 %v6724, %v7015
  %v7043 = vsub.f32 %v6726, %v7015
  %v7044 = vsub.f32 %v6729, %v7015
  %v7045 = vsub.f32 %v6731, %v7015
  %v7046 = vsub.f32 %v6734, %v7015
  %v7047 = vsub.f32 %v6736, %v7015
  %v7048 = vsub.f32 %v6739, %v7015
  %v7049 = vsub.f32 %v6741, %v7015
  %v7050 = vsub.f32 %v6744, %v7015
  %v7051 = vsub.f32 %v6746, %v7015
  %v7052 = vsub.f32 %v6749, %v7015
  %v7053 = vsub.f32 %v6751, %v7015
  %v7054 = vsub.f32 %v6754, %v7015
  %v7055 = vsub.f32 %v6756, %v7015
  %v7056 = vsub.f32 %v6759, %v7015
  %v7057 = vsub.f32 %v6761, %v7015
  %v7058 = vsub.f32 %v6764, %v7015
  %v7059 = vsub.f32 %v6766, %v7015
  %v7060 = vsub.f32 %v6769, %v7015
  %v7061 = vsub.f32 %v6771, %v7015
  %v7062 = vsub.f32 %v6774, %v7015
  %v7063 = vsub.f32 %v6776, %v7015
  %v7064 = vsub.f32 %v6779, %v7015
  %v7065 = vsub.f32 %v6781, %v7015
  %v7066 = vsub.f32 %v6784, %v7015
  %v7067 = vsub.f32 %v6786, %v7015
  %v7068 = vsub.f32 %v6789, %v7015
  %v7069 = vsub.f32 %v6791, %v7015
  %v7070 = vsub.f32 %v6794, %v7015
  %v7071 = vsub.f32 %v6796, %v7015
  %v7072 = vsub.f32 %v6799, %v7015
  %v7073 = vsub.f32 %v6801, %v7015
  %v7074 = vsub.f32 %v6804, %v7015
  %v7075 = vsub.f32 %v6806, %v7015
  %v7076 = vsub.f32 %v6809, %v7015
  %v7077 = vsub.f32 %v6811, %v7015
  %v7078 = vsub.f32 %v6814, %v7015
  %v7079 = vsub.f32 %v6816, %v7015
  %7080 = vst [vmem:[%s3] sm:$0x1] %v7014
  %v7081 = vmul.f32 %v7016, %v7016
  %v7082 = vmul.f32 %v7017, %v7017
  %v7083 = vmul.f32 %v7018, %v7018
  %v7084 = vmul.f32 %v7019, %v7019
  %v7085 = vmul.f32 %v7020, %v7020
  %v7086 = vmul.f32 %v7021, %v7021
  %v7087 = vmul.f32 %v7022, %v7022
  %v7088 = vmul.f32 %v7023, %v7023
  %v7089 = vmul.f32 %v7024, %v7024
  %v7090 = vmul.f32 %v7025, %v7025
  %v7091 = vmul.f32 %v7026, %v7026
  %v7092 = vmul.f32 %v7027, %v7027
  %v7093 = vmul.f32 %v7028, %v7028
  %v7094 = vmul.f32 %v7029, %v7029
  %v7095 = vmul.f32 %v7030, %v7030
  %v7096 = vmul.f32 %v7031, %v7031
  %v7097 = vmul.f32 %v7032, %v7032
  %v7098 = vmul.f32 %v7033, %v7033
  %v7099 = vmul.f32 %v7034, %v7034
  %v7100 = vmul.f32 %v7035, %v7035
  %v7101 = vmul.f32 %v7036, %v7036
  %v7102 = vmul.f32 %v7037, %v7037
  %v7103 = vmul.f32 %v7038, %v7038
  %v7104 = vmul.f32 %v7039, %v7039
  %v7105 = vmul.f32 %v7040, %v7040
  %v7106 = vmul.f32 %v7041, %v7041
  %v7107 = vmul.f32 %v7042, %v7042
  %v7108 = vmul.f32 %v7043, %v7043
  %v7109 = vmul.f32 %v7044, %v7044
  %v7110 = vmul.f32 %v7045, %v7045
  %v7111 = vmul.f32 %v7046, %v7046
  %v7112 = vmul.f32 %v7047, %v7047
  %v7113 = vmul.f32 %v7048, %v7048
  %v7114 = vmul.f32 %v7049, %v7049
  %v7115 = vmul.f32 %v7050, %v7050
  %v7116 = vmul.f32 %v7051, %v7051
  %v7117 = vmul.f32 %v7052, %v7052
  %v7118 = vmul.f32 %v7053, %v7053
  %v7119 = vmul.f32 %v7054, %v7054
  %v7120 = vmul.f32 %v7055, %v7055
  %v7121 = vmul.f32 %v7056, %v7056
  %v7122 = vmul.f32 %v7057, %v7057
  %v7123 = vmul.f32 %v7058, %v7058
  %v7124 = vmul.f32 %v7059, %v7059
  %v7125 = vmul.f32 %v7060, %v7060
  %v7126 = vmul.f32 %v7061, %v7061
  %v7127 = vmul.f32 %v7062, %v7062
  %v7128 = vmul.f32 %v7063, %v7063
  %v7129 = vmul.f32 %v7064, %v7064
  %v7130 = vmul.f32 %v7065, %v7065
  %v7131 = vmul.f32 %v7066, %v7066
  %v7132 = vmul.f32 %v7067, %v7067
  %v7133 = vmul.f32 %v7068, %v7068
  %v7134 = vmul.f32 %v7069, %v7069
  %v7135 = vmul.f32 %v7070, %v7070
  %v7136 = vmul.f32 %v7071, %v7071
  %v7137 = vmul.f32 %v7072, %v7072
  %v7138 = vmul.f32 %v7073, %v7073
  %v7139 = vmul.f32 %v7074, %v7074
  %v7140 = vmul.f32 %v7075, %v7075
  %v7141 = vmul.f32 %v7076, %v7076
  %v7142 = vmul.f32 %v7077, %v7077
  %v7143 = vmul.f32 %v7078, %v7078
  %v7144 = vmul.f32 %v7079, %v7079
  %v7145 = vadd.f32 %v7081, %v7082
  %v7146 = vadd.f32 %v7145, %v7083
  %v7147 = vadd.f32 %v7146, %v7084
  %v7148 = vadd.f32 %v7147, %v7085
  %v7149 = vadd.f32 %v7148, %v7086
  %v7150 = vadd.f32 %v7149, %v7087
  %v7151 = vadd.f32 %v7150, %v7088
  %v7152 = vadd.f32 %v7151, %v7089
  %v7153 = vadd.f32 %v7152, %v7090
  %v7154 = vadd.f32 %v7153, %v7091
  %v7155 = vadd.f32 %v7154, %v7092
  %v7156 = vadd.f32 %v7155, %v7093
  %v7157 = vadd.f32 %v7156, %v7094
  %v7158 = vadd.f32 %v7157, %v7095
  %v7159 = vadd.f32 %v7158, %v7096
  %v7160 = vadd.f32 %v7159, %v7097
  %v7161 = vadd.f32 %v7160, %v7098
  %v7162 = vadd.f32 %v7161, %v7099
  %v7163 = vadd.f32 %v7162, %v7100
  %v7164 = vadd.f32 %v7163, %v7101
  %v7165 = vadd.f32 %v7164, %v7102
  %v7166 = vadd.f32 %v7165, %v7103
  %v7167 = vadd.f32 %v7166, %v7104
  %v7168 = vadd.f32 %v7167, %v7105
  %v7169 = vadd.f32 %v7168, %v7106
  %v7170 = vadd.f32 %v7169, %v7107
  %v7171 = vadd.f32 %v7170, %v7108
  %v7172 = vadd.f32 %v7171, %v7109
  %v7173 = vadd.f32 %v7172, %v7110
  %v7174 = vadd.f32 %v7173, %v7111
  %v7175 = vadd.f32 %v7174, %v7112
  %v7176 = vadd.f32 %v7175, %v7113
  %v7177 = vadd.f32 %v7176, %v7114
  %v7178 = vadd.f32 %v7177, %v7115
  %v7179 = vadd.f32 %v7178, %v7116
  %v7180 = vadd.f32 %v7179, %v7117
  %v7181 = vadd.f32 %v7180, %v7118
  %v7182 = vadd.f32 %v7181, %v7119
  %v7183 = vadd.f32 %v7182, %v7120
  %v7184 = vadd.f32 %v7183, %v7121
  %v7185 = vadd.f32 %v7184, %v7122
  %v7186 = vadd.f32 %v7185, %v7123
  %v7187 = vadd.f32 %v7186, %v7124
  %v7188 = vadd.f32 %v7187, %v7125
  %v7189 = vadd.f32 %v7188, %v7126
  %v7190 = vadd.f32 %v7189, %v7127
  %v7191 = vadd.f32 %v7190, %v7128
  %v7192 = vadd.f32 %v7191, %v7129
  %v7193 = vadd.f32 %v7192, %v7130
  %v7194 = vadd.f32 %v7193, %v7131
  %v7195 = vadd.f32 %v7194, %v7132
  %v7196 = vadd.f32 %v7195, %v7133
  %v7197 = vadd.f32 %v7196, %v7134
  %v7198 = vadd.f32 %v7197, %v7135
  %v7199 = vadd.f32 %v7198, %v7136
  %v7200 = vadd.f32 %v7199, %v7137
  %v7201 = vadd.f32 %v7200, %v7138
  %v7202 = vadd.f32 %v7201, %v7139
  %v7203 = vadd.f32 %v7202, %v7140
  %v7204 = vadd.f32 %v7203, %v7141
  %v7205 = vadd.f32 %v7204, %v7142
  %v7206 = vadd.f32 %v7205, %v7143
  %v7207 = vadd.f32 %v7206, %v7144
  %v7208 = vrot.slane %v7207, 4
  %v7209 = vadd.f32 %v7207, %v7208
  %v7210 = vrot.slane %v7209, 2
  %v7211 = vadd.f32 %v7209, %v7210
  %v7212 = vrot.slane %v7211, 1
  %v7213 = vadd.f32 %v7211, %v7212
  %7214 = vst [vmem:[%s4] sm:$0x1] %v7213
  // Predicated region
  $region10: #{bnlrcnn_forward.2} parent=0 // pred_check
    _
  $region11: #{bnlrcnn_forward.2} parent=0 // pred_check_branch
    %7216 = sbr.rel (0) target = $region13
  $region12: #{bnlrcnn_forward.2} parent=0 // pred_region
    _
  $region13: #{bnlrcnn_forward.2} parent=0 // pred_fallthru
    _
  // Predicated region
  $region14: #{bnlrcnn_forward.2} parent=0 // pred_check
    _
  $region15: #{bnlrcnn_forward.2} parent=0 // pred_check_branch
    %7218 = sbr.rel (0) target = $region17
  $region16: #{bnlrcnn_forward.2} parent=0 // pred_region
    _
  $region17: #{bnlrcnn_forward.2} parent=0 // pred_fallthru
    _
  // Predicated region
  $region18: #{bnlrcnn_forward.2} parent=0 // pred_check
    _
  $region19: #{bnlrcnn_forward.2} parent=0 // pred_check_branch
    %7220 = sbr.rel (0) target = $region21
  $region20: #{bnlrcnn_forward.2} parent=0 // pred_region
    _
  $region21: #{bnlrcnn_forward.2} parent=0 // pred_fallthru
    _
  // Predicated region
  $region22: #{bnlrcnn_forward.2} parent=0 // pred_check
    _
  $region23: #{bnlrcnn_forward.2} parent=0 // pred_check_branch
    %7222 = sbr.rel (0) target = $region25
  $region24: #{bnlrcnn_forward.2} parent=0 // pred_region
    _
  $region25: #{bnlrcnn_forward.2} parent=0 // pred_fallthru
    _
  // Predicated region
  $region26: #{bnlrcnn_forward.2} parent=0 // pred_check
    _
  $region27: #{bnlrcnn_forward.2} parent=0 // pred_check_branch
    %7224 = sbr.rel (0) target = $region29
  $region28: #{bnlrcnn_forward.2} parent=0 // pred_region
    _
  $region29: #{bnlrcnn_forward.2} parent=0 // pred_fallthru
    _
  // Predicated region
  $region30: #{bnlrcnn_forward.2} parent=0 // pred_check
    _
  $region31: #{bnlrcnn_forward.2} parent=0 // pred_check_branch
    %7226 = sbr.rel (0) target = $region33
  $region32: #{bnlrcnn_forward.2} parent=0 // pred_region
    _
  $region33: #{bnlrcnn_forward.2} parent=0 // pred_fallthru
    _

</llo_original>
